<compile_context>
chip_gen: v7x
topology: tpu7x:2x2x1
jax: 0.10.0
libtpu: 0.0.40
codegen_flags: <defaults>
</compile_context>

<pallas_src>
import jax
import jax.numpy as jnp
from jax import lax
from jax.experimental import pallas as pl
from jax.experimental.pallas import tpu as pltpu


# --------------------------------------------------------------------------- #
# Helpers
# --------------------------------------------------------------------------- #
def _group_avg_matrix(C, num_groups, hw):
    """S[c', c] = 1/(HW*Cg) if channels c' and c share a GroupNorm group.

    (1, C) per-channel sums @ S  ==  per-channel group means.
    """
    if C < num_groups:          # mirrors create_conv's fallback
        num_groups = 1
    assert C % num_groups == 0
    cg = C // num_groups
    gid = jnp.arange(C, dtype=jnp.int32) // cg
    same = (gid[:, None] == gid[None, :]).astype(jnp.float32)
    return same / float(hw * cg)


def nearest_upsample_nchw(x, out_hw):
    """F.interpolate(x, size=out_hw, mode='nearest') for NCHW input."""
    _, _, Hx, Wx = x.shape
    Ho, Wo = out_hw
    hi = (jnp.arange(Ho) * Hx // Ho).astype(jnp.int32)
    wi = (jnp.arange(Wo) * Wx // Wo).astype(jnp.int32)
    return x[:, :, hi, :][:, :, :, wi]


# --------------------------------------------------------------------------- #
# Fused Decoder kernel: concat + GN1 + conv1 + ReLU + GN2 + conv2 + ReLU
# --------------------------------------------------------------------------- #
def _make_decoder_kernel(H, W, Ce, Cx, C_out, eps):
    HW = H * W
    C_in = Ce + Cx
    TAPS = [(dy, dx) for dy in range(3) for dx in range(3)]

    def kernel(enc_ref, xup_ref, s1_ref, g1_ref, b1_ref, w1_ref,
               s2_ref, g2_ref, b2_ref, w2t_ref, o_ref, pad1, pad2):
        # ---- re-zero only the 1-pixel halo borders (interior is fully
        # overwritten below).  Cheap (O(H+W) per step) and megacore-safe.
        pad1[0:1, :, :] = jnp.zeros((1, W + 2, C_in), jnp.bfloat16)
        pad1[H + 1:H + 2, :, :] = jnp.zeros((1, W + 2, C_in), jnp.bfloat16)
        pad1[:, 0:1, :] = jnp.zeros((H + 2, 1, C_in), jnp.bfloat16)
        pad1[:, W + 1:W + 2, :] = jnp.zeros((H + 2, 1, C_in), jnp.bfloat16)
        pad2[0:1, :, :] = jnp.zeros((1, W + 2, C_out), jnp.bfloat16)
        pad2[H + 1:H + 2, :, :] = jnp.zeros((1, W + 2, C_out), jnp.bfloat16)
        pad2[:, 0:1, :] = jnp.zeros((H + 2, 1, C_out), jnp.bfloat16)
        pad2[:, W + 1:W + 2, :] = jnp.zeros((H + 2, 1, C_out), jnp.bfloat16)

        # ---- join: [encoder_features, upsample(x)] along channels (in-register)
        e = enc_ref[0].reshape(HW, Ce).astype(jnp.float32)       # (HW, Ce)
        u = xup_ref[0].reshape(HW, Cx).astype(jnp.float32)       # (HW, Cx)
        xcat = jnp.concatenate([e, u], axis=1)                   # (HW, C_in)

        # ---- GroupNorm 1 (centered two-pass variance, all f32) ----
        s1 = s1_ref[...]
        mean1 = jnp.dot(jnp.sum(xcat, axis=0, keepdims=True), s1,
                        preferred_element_type=jnp.float32)       # (1, C_in)
        xc = xcat - mean1
        var1 = jnp.dot(jnp.sum(xc * xc, axis=0, keepdims=True), s1,
                       preferred_element_type=jnp.float32)
        xn = xc * (lax.rsqrt(var1 + eps) * g1_ref[...]) + b1_ref[...]

        # ---- conv1 + ReLU: single bf16 write into the zero-halo scratch,
        # then nine accumulated K=C_in matmuls (bf16 operands, f32 acc).
        pad1[1:H + 1, 1:W + 1, :] = xn.reshape(H, W, C_in).astype(jnp.bfloat16)
        acc1 = jnp.zeros((HW, C_out), jnp.float32)
        for t, (dy, dx) in enumerate(TAPS):
            tap = pad1[dy:dy + H, dx:dx + W, :].reshape(HW, C_in)
            acc1 = acc1 + jnp.dot(tap, w1_ref[t],
                                  preferred_element_type=jnp.float32)
        h1 = jnp.maximum(acc1, 0.0)                               # (HW, C_out)

        # ---- GroupNorm 2 (on the ReLU output of conv1) ----
        s2 = s2_ref[...]
        mean2 = jnp.dot(jnp.sum(h1, axis=0, keepdims=True), s2,
                        preferred_element_type=jnp.float32)
        hc = h1 - mean2
        var2 = jnp.dot(jnp.sum(hc * hc, axis=0, keepdims=True), s2,
                       preferred_element_type=jnp.float32)
        hn = hc * (lax.rsqrt(var2 + eps) * g2_ref[...]) + b2_ref[...]

        # ---- conv2 + ReLU: channels-major accumulation so the HBM store is
        # lane-dense (HW lanes, unmasked) and already NCHW-flat.
        pad2[1:H + 1, 1:W + 1, :] = hn.reshape(H, W, C_out).astype(jnp.bfloat16)
        acc2 = jnp.zeros((C_out, HW), jnp.float32)
        for t, (dy, dx) in enumerate(TAPS):
            tap = pad2[dy:dy + H, dx:dx + W, :].reshape(HW, C_out)
            acc2 = acc2 + lax.dot_general(
                w2t_ref[t], tap,
                dimension_numbers=(((1,), (1,)), ((), ())),
                preferred_element_type=jnp.float32)               # (C_out, HW)
        o_ref[0] = jnp.maximum(acc2, 0.0).astype(o_ref.dtype)

    return kernel


@jax.jit
def decoder_forward(encoder_features, x, params):
    """Decoder.forward(encoder_features, x) — inputs/outputs are NCHW."""
    num_groups, eps = 8, 1e-5
    B, Ce, He, We = encoder_features.shape
    _, Cx, Hx, Wx = x.shape
    C_in = Ce + Cx
    C_out = params["w1"].shape[-1]
    HW = He * We

    # Wrapper glue: nearest upsample + NCHW->NHWC for the two kernel inputs.
    # (See TODO(synk) at top: fold these into the kernel for large shapes.)
    x_up = nearest_upsample_nchw(x, (He, We))
    enc_nhwc = jnp.transpose(encoder_features, (0, 2, 3, 1))      # (B, He, We, Ce)
    xup_nhwc = jnp.transpose(x_up, (0, 2, 3, 1))                  # (B, He, We, Cx)

    # Hoisted GroupNorm group-average matrices + per-tap bf16 weight slices.
    s1 = _group_avg_matrix(C_in, num_groups, HW)                  # (C_in, C_in)
    s2 = _group_avg_matrix(C_out, num_groups, HW)                 # (C_out, C_out)
    w1 = params["w1"].reshape(9, C_in, C_out).astype(jnp.bfloat16)
    w2t = jnp.transpose(params["w2"].reshape(9, C_out, C_out),
                        (0, 2, 1)).astype(jnp.bfloat16)           # (9, C_out_o, C_in)
    g1 = params["g1"].reshape(1, C_in).astype(jnp.float32)
    b1 = params["b1"].reshape(1, C_in).astype(jnp.float32)
    g2 = params["g2"].reshape(1, C_out).astype(jnp.float32)
    b2 = params["b2"].reshape(1, C_out).astype(jnp.float32)

    kernel = _make_decoder_kernel(He, We, Ce, Cx, C_out, eps)

    # Explicit scoped-VMEM budget: double-buffered blocks + weights + bf16
    # halo scratch + headroom, capped to ~3/4 of this generation's VMEM.
    F32, BF16 = 4, 2
    est = 2 * ((He * We * Ce + He * We * Cx) * F32        # input blocks
               + C_out * HW * F32                          # output block
               + (C_in * C_in + C_out * C_out) * F32       # GN avg matrices
               + 9 * (C_in * C_out + C_out * C_out) * BF16 # conv weights
               + 2 * (C_in + C_out) * F32)                  # gamma/beta
    est += (He + 2) * (We + 2) * (C_in + C_out) * BF16      # halo scratch
    try:
        vmem_cap = int(pltpu.get_tpu_info().vmem_capacity_bytes)
    except Exception:
        vmem_cap = 64 << 20                                  # v7x per-core VMEM
    vmem_limit = min(max(2 * est + (12 << 20), 16 << 20), (vmem_cap * 3) // 4)

    out = pl.pallas_call(
        kernel,
        out_shape=jax.ShapeDtypeStruct((B, C_out, HW), encoder_features.dtype),
        grid=(B,),
        in_specs=[
            pl.BlockSpec((1, He, We, Ce), lambda b: (b, 0, 0, 0)),
            pl.BlockSpec((1, He, We, Cx), lambda b: (b, 0, 0, 0)),
            pl.BlockSpec((C_in, C_in), lambda b: (0, 0)),         # VMEM-resident
            pl.BlockSpec((1, C_in), lambda b: (0, 0)),
            pl.BlockSpec((1, C_in), lambda b: (0, 0)),
            pl.BlockSpec((9, C_in, C_out), lambda b: (0, 0, 0)),
            pl.BlockSpec((C_out, C_out), lambda b: (0, 0)),
            pl.BlockSpec((1, C_out), lambda b: (0, 0)),
            pl.BlockSpec((1, C_out), lambda b: (0, 0)),
            pl.BlockSpec((9, C_out, C_out), lambda b: (0, 0, 0)),
        ],
        out_specs=pl.BlockSpec((1, C_out, HW), lambda b: (b, 0, 0)),
        scratch_shapes=[
            pltpu.VMEM((He + 2, We + 2, C_in), jnp.bfloat16),     # conv1 halo
            pltpu.VMEM((He + 2, We + 2, C_out), jnp.bfloat16),    # conv2 halo
        ],
        compiler_params=pltpu.CompilerParams(
            dimension_semantics=("parallel",),    # megacore-shard batch
            vmem_limit_bytes=int(vmem_limit)),
    )(enc_nhwc, xup_nhwc, s1, g1, b1, w1, s2, g2, b2, w2t)

    # (B, C_out, H*W) -> NCHW, free reshape.
    return out.reshape(B, C_out, He, We)


# ------------------------------ reference (pure JAX, NCHW, f32) -------------
def _ref_groupnorm(x, gamma, beta, num_groups, eps=1e-5):
    B, C, H, W = x.shape
    if C < num_groups:
        num_groups = 1
    xg = x.reshape(B, num_groups, (C // num_groups) * H * W)
    mean = xg.mean(axis=-1, keepdims=True)
    var = xg.var(axis=-1, keepdims=True)
    xn = ((xg - mean) / jnp.sqrt(var + eps)).reshape(B, C, H, W)
    return xn * gamma[None, :, None, None] + beta[None, :, None, None]


def _ref_single_conv(x, gamma, beta, w_hwio, num_groups):
    xn = _ref_groupnorm(x, gamma, beta, num_groups)
    w_oihw = jnp.transpose(w_hwio, (3, 2, 0, 1))
    y = lax.conv_general_dilated(
        xn, w_oihw, window_strides=(1, 1), padding=((1, 1), (1, 1)),
        dimension_numbers=("NCHW", "OIHW", "NCHW"))
    return jnp.maximum(y, 0.0)


def decoder_reference(encoder_features, x, params):
    _, _, He, We = encoder_features.shape
    x_up = nearest_upsample_nchw(x, (He, We))
    cat = jnp.concatenate([encoder_features, x_up], axis=1)
    h = _ref_single_conv(cat, params["g1"], params["b1"], params["w1"], 8)
    h = _ref_single_conv(h, params["g2"], params["b2"], params["w2"], 8)
    return h


# ----------------------------------- main ------------------------------------
if __name__ == "__main__":
    key = jax.random.PRNGKey(0)
    k_enc, k_x, k_g1, k_b1, k_w1, k_g2, k_b2, k_w2 = jax.random.split(key, 8)

    # Decoder joins encoder skip (B,8,16,16) with upsampled x (B,8,8,8):
    # concat channels = 16 = Decoder in_channels; out_channels = 8.
    B, C_enc, He, We = 2, 8, 16, 16
    C_x, Hx, Wx = 8, 8, 8
    C_in, C_out = C_enc + C_x, 8

    encoder_features = jax.random.normal(k_enc, (B, C_enc, He, We), jnp.float32)
    x = jax.random.normal(k_x, (B, C_x, Hx, Wx), jnp.float32)

    params = {
        "g1": 1.0 + 0.1 * jax.random.normal(k_g1, (C_in,), jnp.float32),
        "b1": 0.1 * jax.random.normal(k_b1, (C_in,), jnp.float32),
        "w1": jax.random.normal(k_w1, (3, 3, C_in, C_out), jnp.float32)
              / jnp.sqrt(9.0 * C_in),
        "g2": 1.0 + 0.1 * jax.random.normal(k_g2, (C_out,), jnp.float32),
        "b2": 0.1 * jax.random.normal(k_b2, (C_out,), jnp.float32),
        "w2": jax.random.normal(k_w2, (3, 3, C_out, C_out), jnp.float32)
              / jnp.sqrt(9.0 * C_out),
    }

    out = decoder_forward(encoder_features, x, params)
    out = jax.block_until_ready(out)

    ref = decoder_reference(encoder_features, x, params)
    assert out.shape == (B, C_out, He, We), out.shape
    # bf16 MXU operands with f32 accumulation -> slightly looser tolerance
    # than an all-f32 conv (documented precision trade, not a bug).
    assert jnp.allclose(out, ref, atol=3e-2, rtol=3e-2), float(
        jnp.max(jnp.abs(out - ref)))

    print("KERNEL_OK")
</pallas_src>

<mosaic_0001>
module attributes {stable_mosaic.version = 11 : i64} {
  func.func @kernel(%arg0: i32, %arg1: memref<1x16x16x8xf32, #tpu.memory_space<vmem>>, %arg2: memref<1x16x16x8xf32, #tpu.memory_space<vmem>>, %arg3: memref<16x16xf32, #tpu.memory_space<vmem>>, %arg4: memref<1x16xf32, #tpu.memory_space<vmem>>, %arg5: memref<1x16xf32, #tpu.memory_space<vmem>>, %arg6: memref<9x16x8xbf16, #tpu.memory_space<vmem>>, %arg7: memref<8x8xf32, #tpu.memory_space<vmem>>, %arg8: memref<1x8xf32, #tpu.memory_space<vmem>>, %arg9: memref<1x8xf32, #tpu.memory_space<vmem>>, %arg10: memref<9x8x8xbf16, #tpu.memory_space<vmem>>, %arg11: memref<1x8x256xf32, #tpu.memory_space<vmem>>, %arg12: memref<18x18x16xbf16, #tpu.memory_space<vmem>>, %arg13: memref<18x18x8xbf16, #tpu.memory_space<vmem>>) attributes {dimension_semantics = [#tpu.dimension_semantics<parallel>], iteration_bounds = array<i64: 2>, scalar_prefetch = 0 : i64, scratch_operands = 2 : i64, tpu.core_type = #tpu.core_type<tc>, window_params = [{transform_indices = @transform_0, window_bounds = array<i64: 1, 16, 16, 8>}, {transform_indices = @transform_1, window_bounds = array<i64: 1, 16, 16, 8>}, {pipeline_mode = #tpu.pipeline_mode<synchronous>, transform_indices = @transform_2, window_bounds = array<i64: 16, 16>}, {pipeline_mode = #tpu.pipeline_mode<synchronous>, transform_indices = @transform_3, window_bounds = array<i64: 1, 16>}, {pipeline_mode = #tpu.pipeline_mode<synchronous>, transform_indices = @transform_4, window_bounds = array<i64: 1, 16>}, {pipeline_mode = #tpu.pipeline_mode<synchronous>, transform_indices = @transform_5, window_bounds = array<i64: 9, 16, 8>}, {pipeline_mode = #tpu.pipeline_mode<synchronous>, transform_indices = @transform_6, window_bounds = array<i64: 8, 8>}, {pipeline_mode = #tpu.pipeline_mode<synchronous>, transform_indices = @transform_7, window_bounds = array<i64: 1, 8>}, {pipeline_mode = #tpu.pipeline_mode<synchronous>, transform_indices = @transform_8, window_bounds = array<i64: 1, 8>}, {pipeline_mode = #tpu.pipeline_mode<synchronous>, transform_indices = @transform_9, window_bounds = array<i64: 9, 8, 8>}, {transform_indices = @transform_10, window_bounds = array<i64: 1, 8, 256>}]} {
    %cst = arith.constant 0.000000e+00 : bf16
    %0 = vector.broadcast %cst : bf16 to vector<1x18x16xbf16>
    %c0 = arith.constant 0 : index
    %c0_0 = arith.constant 0 : index
    %c0_1 = arith.constant 0 : index
    %1 = vector.load %arg12[%c0, %c0_0, %c0_1] : memref<18x18x16xbf16, #tpu.memory_space<vmem>>, vector<1x18x16xbf16>
    tpu.vector_store %arg12[%c0, %c0_0, %c0_1], %0 {strides = array<i32>} : memref<18x18x16xbf16, #tpu.memory_space<vmem>>, vector<1x18x16xbf16>,
    %cst_2 = arith.constant 0.000000e+00 : bf16
    %2 = vector.broadcast %cst_2 : bf16 to vector<1x18x16xbf16>
    %c17 = arith.constant 17 : index
    %c0_3 = arith.constant 0 : index
    %c0_4 = arith.constant 0 : index
    %3 = vector.load %arg12[%c17, %c0_3, %c0_4] : memref<18x18x16xbf16, #tpu.memory_space<vmem>>, vector<1x18x16xbf16>
    tpu.vector_store %arg12[%c17, %c0_3, %c0_4], %2 {strides = array<i32>} : memref<18x18x16xbf16, #tpu.memory_space<vmem>>, vector<1x18x16xbf16>,
    %cst_5 = arith.constant 0.000000e+00 : bf16
    %4 = vector.broadcast %cst_5 : bf16 to vector<18x1x16xbf16>
    %c0_6 = arith.constant 0 : index
    %c0_7 = arith.constant 0 : index
    %c0_8 = arith.constant 0 : index
    %5 = vector.load %arg12[%c0_6, %c0_7, %c0_8] : memref<18x18x16xbf16, #tpu.memory_space<vmem>>, vector<18x1x16xbf16>
    tpu.vector_store %arg12[%c0_6, %c0_7, %c0_8], %4 {strides = array<i32>} : memref<18x18x16xbf16, #tpu.memory_space<vmem>>, vector<18x1x16xbf16>,
    %cst_9 = arith.constant 0.000000e+00 : bf16
    %6 = vector.broadcast %cst_9 : bf16 to vector<18x1x16xbf16>
    %c0_10 = arith.constant 0 : index
    %c17_11 = arith.constant 17 : index
    %c0_12 = arith.constant 0 : index
    %7 = vector.load %arg12[%c0_10, %c17_11, %c0_12] : memref<18x18x16xbf16, #tpu.memory_space<vmem>>, vector<18x1x16xbf16>
    tpu.vector_store %arg12[%c0_10, %c17_11, %c0_12], %6 {strides = array<i32>} : memref<18x18x16xbf16, #tpu.memory_space<vmem>>, vector<18x1x16xbf16>,
    %cst_13 = arith.constant 0.000000e+00 : bf16
    %8 = vector.broadcast %cst_13 : bf16 to vector<1x18x8xbf16>
    %c0_14 = arith.constant 0 : index
    %c0_15 = arith.constant 0 : index
    %c0_16 = arith.constant 0 : index
    %9 = vector.load %arg13[%c0_14, %c0_15, %c0_16] : memref<18x18x8xbf16, #tpu.memory_space<vmem>>, vector<1x18x8xbf16>
    tpu.vector_store %arg13[%c0_14, %c0_15, %c0_16], %8 {strides = array<i32>} : memref<18x18x8xbf16, #tpu.memory_space<vmem>>, vector<1x18x8xbf16>,
    %cst_17 = arith.constant 0.000000e+00 : bf16
    %10 = vector.broadcast %cst_17 : bf16 to vector<1x18x8xbf16>
    %c17_18 = arith.constant 17 : index
    %c0_19 = arith.constant 0 : index
    %c0_20 = arith.constant 0 : index
    %11 = vector.load %arg13[%c17_18, %c0_19, %c0_20] : memref<18x18x8xbf16, #tpu.memory_space<vmem>>, vector<1x18x8xbf16>
    tpu.vector_store %arg13[%c17_18, %c0_19, %c0_20], %10 {strides = array<i32>} : memref<18x18x8xbf16, #tpu.memory_space<vmem>>, vector<1x18x8xbf16>,
    %cst_21 = arith.constant 0.000000e+00 : bf16
    %12 = vector.broadcast %cst_21 : bf16 to vector<18x1x8xbf16>
    %c0_22 = arith.constant 0 : index
    %c0_23 = arith.constant 0 : index
    %c0_24 = arith.constant 0 : index
    %13 = vector.load %arg13[%c0_22, %c0_23, %c0_24] : memref<18x18x8xbf16, #tpu.memory_space<vmem>>, vector<18x1x8xbf16>
    tpu.vector_store %arg13[%c0_22, %c0_23, %c0_24], %12 {strides = array<i32>} : memref<18x18x8xbf16, #tpu.memory_space<vmem>>, vector<18x1x8xbf16>,
    %cst_25 = arith.constant 0.000000e+00 : bf16
    %14 = vector.broadcast %cst_25 : bf16 to vector<18x1x8xbf16>
    %c0_26 = arith.constant 0 : index
    %c17_27 = arith.constant 17 : index
    %c0_28 = arith.constant 0 : index
    %15 = vector.load %arg13[%c0_26, %c17_27, %c0_28] : memref<18x18x8xbf16, #tpu.memory_space<vmem>>, vector<18x1x8xbf16>
    tpu.vector_store %arg13[%c0_26, %c17_27, %c0_28], %14 {strides = array<i32>} : memref<18x18x8xbf16, #tpu.memory_space<vmem>>, vector<18x1x8xbf16>,
    %c0_29 = arith.constant 0 : index
    %c0_30 = arith.constant 0 : index
    %c0_31 = arith.constant 0 : index
    %c0_32 = arith.constant 0 : index
    %16 = vector.load %arg1[%c0_29, %c0_30, %c0_31, %c0_32] : memref<1x16x16x8xf32, #tpu.memory_space<vmem>>, vector<1x16x16x8xf32>
    %17 = vector.shape_cast %16 : vector<1x16x16x8xf32> to vector<16x16x8xf32>
    %18 = vector.shape_cast %17 : vector<16x16x8xf32> to vector<256x8xf32>
    %c0_33 = arith.constant 0 : index
    %c0_34 = arith.constant 0 : index
    %c0_35 = arith.constant 0 : index
    %c0_36 = arith.constant 0 : index
    %19 = vector.load %arg2[%c0_33, %c0_34, %c0_35, %c0_36] : memref<1x16x16x8xf32, #tpu.memory_space<vmem>>, vector<1x16x16x8xf32>
    %20 = vector.shape_cast %19 : vector<1x16x16x8xf32> to vector<16x16x8xf32>
    %21 = vector.shape_cast %20 : vector<16x16x8xf32> to vector<256x8xf32>
    %22 = tpu.concatenate %18, %21 in 1 : vector<256x8xf32>, vector<256x8xf32> -> vector<256x16xf32>
    %c0_37 = arith.constant 0 : index
    %c0_38 = arith.constant 0 : index
    %23 = vector.load %arg3[%c0_37, %c0_38] : memref<16x16xf32, #tpu.memory_space<vmem>>, vector<16x16xf32>
    %cst_39 = arith.constant dense<0.000000e+00> : vector<16xf32>
    %24 = vector.multi_reduction <add>, %22, %cst_39 [0] : vector<256x16xf32> to vector<16xf32>
    %25 = vector.shape_cast %24 : vector<16xf32> to vector<1x16xf32>
    %cst_40 = arith.constant dense<0.000000e+00> : vector<1x16xf32>
    %26 = tpu.matmul %25, %23, %cst_40 {dimension_numbers = #tpu.dot_dimension_numbers<[1], [0], [0], [1], [0, 0, 1, 1], [], []>} : vector<1x16xf32>, vector<16x16xf32>, vector<1x16xf32> -> vector<1x16xf32>
    %27 = vector.broadcast %26 : vector<1x16xf32> to vector<256x16xf32>
    %28 = arith.subf %22, %27 : vector<256x16xf32>
    %29 = arith.mulf %28, %28 : vector<256x16xf32>
    %cst_41 = arith.constant dense<0.000000e+00> : vector<16xf32>
    %30 = vector.multi_reduction <add>, %29, %cst_41 [0] : vector<256x16xf32> to vector<16xf32>
    %31 = vector.shape_cast %30 : vector<16xf32> to vector<1x16xf32>
    %cst_42 = arith.constant dense<0.000000e+00> : vector<1x16xf32>
    %32 = tpu.matmul %31, %23, %cst_42 {dimension_numbers = #tpu.dot_dimension_numbers<[1], [0], [0], [1], [0, 0, 1, 1], [], []>} : vector<1x16xf32>, vector<16x16xf32>, vector<1x16xf32> -> vector<1x16xf32>
    %cst_43 = arith.constant 9.99999974E-6 : f32
    %33 = vector.broadcast %cst_43 : f32 to vector<1x16xf32>
    %34 = arith.addf %32, %33 : vector<1x16xf32>
    %35 = math.rsqrt %34 : vector<1x16xf32>
    %c0_44 = arith.constant 0 : index
    %c0_45 = arith.constant 0 : index
    %36 = vector.load %arg4[%c0_44, %c0_45] : memref<1x16xf32, #tpu.memory_space<vmem>>, vector<1x16xf32>
    %37 = arith.mulf %35, %36 : vector<1x16xf32>
    %38 = vector.broadcast %37 : vector<1x16xf32> to vector<256x16xf32>
    %39 = arith.mulf %28, %38 : vector<256x16xf32>
    %c0_46 = arith.constant 0 : index
    %c0_47 = arith.constant 0 : index
    %40 = vector.load %arg5[%c0_46, %c0_47] : memref<1x16xf32, #tpu.memory_space<vmem>>, vector<1x16xf32>
    %41 = vector.broadcast %40 : vector<1x16xf32> to vector<256x16xf32>
    %42 = arith.addf %39, %41 : vector<256x16xf32>
    %43 = vector.shape_cast %42 : vector<256x16xf32> to vector<16x16x16xf32>
    %44 = arith.truncf %43 : vector<16x16x16xf32> to vector<16x16x16xbf16>
    %c1 = arith.constant 1 : index
    %c1_48 = arith.constant 1 : index
    %c0_49 = arith.constant 0 : index
    %45 = vector.load %arg12[%c1, %c1_48, %c0_49] : memref<18x18x16xbf16, #tpu.memory_space<vmem>>, vector<16x16x16xbf16>
    tpu.vector_store %arg12[%c1, %c1_48, %c0_49], %44 {strides = array<i32>} : memref<18x18x16xbf16, #tpu.memory_space<vmem>>, vector<16x16x16xbf16>,
    %cst_50 = arith.constant 0.000000e+00 : f32
    %46 = vector.broadcast %cst_50 : f32 to vector<256x8xf32>
    %c0_51 = arith.constant 0 : index
    %c0_52 = arith.constant 0 : index
    %c0_53 = arith.constant 0 : index
    %47 = vector.load %arg12[%c0_51, %c0_52, %c0_53] : memref<18x18x16xbf16, #tpu.memory_space<vmem>>, vector<16x16x16xbf16>
    %48 = vector.shape_cast %47 : vector<16x16x16xbf16> to vector<256x16xbf16>
    %c0_54 = arith.constant 0 : index
    %c0_55 = arith.constant 0 : index
    %c0_56 = arith.constant 0 : index
    %49 = vector.load %arg6[%c0_54, %c0_55, %c0_56] : memref<9x16x8xbf16, #tpu.memory_space<vmem>>, vector<1x16x8xbf16>
    %50 = vector.shape_cast %49 : vector<1x16x8xbf16> to vector<16x8xbf16>
    %cst_57 = arith.constant dense<0.000000e+00> : vector<256x8xf32>
    %51 = tpu.matmul %48, %50, %cst_57 {dimension_numbers = #tpu.dot_dimension_numbers<[1], [0], [0], [1], [0, 0, 1, 1], [], []>} : vector<256x16xbf16>, vector<16x8xbf16>, vector<256x8xf32> -> vector<256x8xf32>
    %52 = arith.addf %46, %51 : vector<256x8xf32>
    %c0_58 = arith.constant 0 : index
    %c1_59 = arith.constant 1 : index
    %c0_60 = arith.constant 0 : index
    %53 = vector.load %arg12[%c0_58, %c1_59, %c0_60] : memref<18x18x16xbf16, #tpu.memory_space<vmem>>, vector<16x16x16xbf16>
    %54 = vector.shape_cast %53 : vector<16x16x16xbf16> to vector<256x16xbf16>
    %c1_61 = arith.constant 1 : index
    %c0_62 = arith.constant 0 : index
    %c0_63 = arith.constant 0 : index
    %55 = vector.load %arg6[%c1_61, %c0_62, %c0_63] : memref<9x16x8xbf16, #tpu.memory_space<vmem>>, vector<1x16x8xbf16>
    %56 = vector.shape_cast %55 : vector<1x16x8xbf16> to vector<16x8xbf16>
    %cst_64 = arith.constant dense<0.000000e+00> : vector<256x8xf32>
    %57 = tpu.matmul %54, %56, %cst_64 {dimension_numbers = #tpu.dot_dimension_numbers<[1], [0], [0], [1], [0, 0, 1, 1], [], []>} : vector<256x16xbf16>, vector<16x8xbf16>, vector<256x8xf32> -> vector<256x8xf32>
    %58 = arith.addf %52, %57 : vector<256x8xf32>
    %c0_65 = arith.constant 0 : index
    %c2 = arith.constant 2 : index
    %c0_66 = arith.constant 0 : index
    %59 = vector.load %arg12[%c0_65, %c2, %c0_66] : memref<18x18x16xbf16, #tpu.memory_space<vmem>>, vector<16x16x16xbf16>
    %60 = vector.shape_cast %59 : vector<16x16x16xbf16> to vector<256x16xbf16>
    %c2_67 = arith.constant 2 : index
    %c0_68 = arith.constant 0 : index
    %c0_69 = arith.constant 0 : index
    %61 = vector.load %arg6[%c2_67, %c0_68, %c0_69] : memref<9x16x8xbf16, #tpu.memory_space<vmem>>, vector<1x16x8xbf16>
    %62 = vector.shape_cast %61 : vector<1x16x8xbf16> to vector<16x8xbf16>
    %cst_70 = arith.constant dense<0.000000e+00> : vector<256x8xf32>
    %63 = tpu.matmul %60, %62, %cst_70 {dimension_numbers = #tpu.dot_dimension_numbers<[1], [0], [0], [1], [0, 0, 1, 1], [], []>} : vector<256x16xbf16>, vector<16x8xbf16>, vector<256x8xf32> -> vector<256x8xf32>
    %64 = arith.addf %58, %63 : vector<256x8xf32>
    %c1_71 = arith.constant 1 : index
    %c0_72 = arith.constant 0 : index
    %c0_73 = arith.constant 0 : index
    %65 = vector.load %arg12[%c1_71, %c0_72, %c0_73] : memref<18x18x16xbf16, #tpu.memory_space<vmem>>, vector<16x16x16xbf16>
    %66 = vector.shape_cast %65 : vector<16x16x16xbf16> to vector<256x16xbf16>
    %c3 = arith.constant 3 : index
    %c0_74 = arith.constant 0 : index
    %c0_75 = arith.constant 0 : index
    %67 = vector.load %arg6[%c3, %c0_74, %c0_75] : memref<9x16x8xbf16, #tpu.memory_space<vmem>>, vector<1x16x8xbf16>
    %68 = vector.shape_cast %67 : vector<1x16x8xbf16> to vector<16x8xbf16>
    %cst_76 = arith.constant dense<0.000000e+00> : vector<256x8xf32>
    %69 = tpu.matmul %66, %68, %cst_76 {dimension_numbers = #tpu.dot_dimension_numbers<[1], [0], [0], [1], [0, 0, 1, 1], [], []>} : vector<256x16xbf16>, vector<16x8xbf16>, vector<256x8xf32> -> vector<256x8xf32>
    %70 = arith.addf %64, %69 : vector<256x8xf32>
    %c1_77 = arith.constant 1 : index
    %c1_78 = arith.constant 1 : index
    %c0_79 = arith.constant 0 : index
    %71 = vector.load %arg12[%c1_77, %c1_78, %c0_79] : memref<18x18x16xbf16, #tpu.memory_space<vmem>>, vector<16x16x16xbf16>
    %72 = vector.shape_cast %71 : vector<16x16x16xbf16> to vector<256x16xbf16>
    %c4 = arith.constant 4 : index
    %c0_80 = arith.constant 0 : index
    %c0_81 = arith.constant 0 : index
    %73 = vector.load %arg6[%c4, %c0_80, %c0_81] : memref<9x16x8xbf16, #tpu.memory_space<vmem>>, vector<1x16x8xbf16>
    %74 = vector.shape_cast %73 : vector<1x16x8xbf16> to vector<16x8xbf16>
    %cst_82 = arith.constant dense<0.000000e+00> : vector<256x8xf32>
    %75 = tpu.matmul %72, %74, %cst_82 {dimension_numbers = #tpu.dot_dimension_numbers<[1], [0], [0], [1], [0, 0, 1, 1], [], []>} : vector<256x16xbf16>, vector<16x8xbf16>, vector<256x8xf32> -> vector<256x8xf32>
    %76 = arith.addf %70, %75 : vector<256x8xf32>
    %c1_83 = arith.constant 1 : index
    %c2_84 = arith.constant 2 : index
    %c0_85 = arith.constant 0 : index
    %77 = vector.load %arg12[%c1_83, %c2_84, %c0_85] : memref<18x18x16xbf16, #tpu.memory_space<vmem>>, vector<16x16x16xbf16>
    %78 = vector.shape_cast %77 : vector<16x16x16xbf16> to vector<256x16xbf16>
    %c5 = arith.constant 5 : index
    %c0_86 = arith.constant 0 : index
    %c0_87 = arith.constant 0 : index
    %79 = vector.load %arg6[%c5, %c0_86, %c0_87] : memref<9x16x8xbf16, #tpu.memory_space<vmem>>, vector<1x16x8xbf16>
    %80 = vector.shape_cast %79 : vector<1x16x8xbf16> to vector<16x8xbf16>
    %cst_88 = arith.constant dense<0.000000e+00> : vector<256x8xf32>
    %81 = tpu.matmul %78, %80, %cst_88 {dimension_numbers = #tpu.dot_dimension_numbers<[1], [0], [0], [1], [0, 0, 1, 1], [], []>} : vector<256x16xbf16>, vector<16x8xbf16>, vector<256x8xf32> -> vector<256x8xf32>
    %82 = arith.addf %76, %81 : vector<256x8xf32>
    %c2_89 = arith.constant 2 : index
    %c0_90 = arith.constant 0 : index
    %c0_91 = arith.constant 0 : index
    %83 = vector.load %arg12[%c2_89, %c0_90, %c0_91] : memref<18x18x16xbf16, #tpu.memory_space<vmem>>, vector<16x16x16xbf16>
    %84 = vector.shape_cast %83 : vector<16x16x16xbf16> to vector<256x16xbf16>
    %c6 = arith.constant 6 : index
    %c0_92 = arith.constant 0 : index
    %c0_93 = arith.constant 0 : index
    %85 = vector.load %arg6[%c6, %c0_92, %c0_93] : memref<9x16x8xbf16, #tpu.memory_space<vmem>>, vector<1x16x8xbf16>
    %86 = vector.shape_cast %85 : vector<1x16x8xbf16> to vector<16x8xbf16>
    %cst_94 = arith.constant dense<0.000000e+00> : vector<256x8xf32>
    %87 = tpu.matmul %84, %86, %cst_94 {dimension_numbers = #tpu.dot_dimension_numbers<[1], [0], [0], [1], [0, 0, 1, 1], [], []>} : vector<256x16xbf16>, vector<16x8xbf16>, vector<256x8xf32> -> vector<256x8xf32>
    %88 = arith.addf %82, %87 : vector<256x8xf32>
    %c2_95 = arith.constant 2 : index
    %c1_96 = arith.constant 1 : index
    %c0_97 = arith.constant 0 : index
    %89 = vector.load %arg12[%c2_95, %c1_96, %c0_97] : memref<18x18x16xbf16, #tpu.memory_space<vmem>>, vector<16x16x16xbf16>
    %90 = vector.shape_cast %89 : vector<16x16x16xbf16> to vector<256x16xbf16>
    %c7 = arith.constant 7 : index
    %c0_98 = arith.constant 0 : index
    %c0_99 = arith.constant 0 : index
    %91 = vector.load %arg6[%c7, %c0_98, %c0_99] : memref<9x16x8xbf16, #tpu.memory_space<vmem>>, vector<1x16x8xbf16>
    %92 = vector.shape_cast %91 : vector<1x16x8xbf16> to vector<16x8xbf16>
    %cst_100 = arith.constant dense<0.000000e+00> : vector<256x8xf32>
    %93 = tpu.matmul %90, %92, %cst_100 {dimension_numbers = #tpu.dot_dimension_numbers<[1], [0], [0], [1], [0, 0, 1, 1], [], []>} : vector<256x16xbf16>, vector<16x8xbf16>, vector<256x8xf32> -> vector<256x8xf32>
    %94 = arith.addf %88, %93 : vector<256x8xf32>
    %c2_101 = arith.constant 2 : index
    %c2_102 = arith.constant 2 : index
    %c0_103 = arith.constant 0 : index
    %95 = vector.load %arg12[%c2_101, %c2_102, %c0_103] : memref<18x18x16xbf16, #tpu.memory_space<vmem>>, vector<16x16x16xbf16>
    %96 = vector.shape_cast %95 : vector<16x16x16xbf16> to vector<256x16xbf16>
    %c8 = arith.constant 8 : index
    %c0_104 = arith.constant 0 : index
    %c0_105 = arith.constant 0 : index
    %97 = vector.load %arg6[%c8, %c0_104, %c0_105] : memref<9x16x8xbf16, #tpu.memory_space<vmem>>, vector<1x16x8xbf16>
    %98 = vector.shape_cast %97 : vector<1x16x8xbf16> to vector<16x8xbf16>
    %cst_106 = arith.constant dense<0.000000e+00> : vector<256x8xf32>
    %99 = tpu.matmul %96, %98, %cst_106 {dimension_numbers = #tpu.dot_dimension_numbers<[1], [0], [0], [1], [0, 0, 1, 1], [], []>} : vector<256x16xbf16>, vector<16x8xbf16>, vector<256x8xf32> -> vector<256x8xf32>
    %100 = arith.addf %94, %99 : vector<256x8xf32>
    %cst_107 = arith.constant 0.000000e+00 : f32
    %101 = vector.broadcast %cst_107 : f32 to vector<256x8xf32>
    %102 = arith.maximumf %100, %101 : vector<256x8xf32>
    %c0_108 = arith.constant 0 : index
    %c0_109 = arith.constant 0 : index
    %103 = vector.load %arg7[%c0_108, %c0_109] : memref<8x8xf32, #tpu.memory_space<vmem>>, vector<8x8xf32>
    %cst_110 = arith.constant dense<0.000000e+00> : vector<8xf32>
    %104 = vector.multi_reduction <add>, %102, %cst_110 [0] : vector<256x8xf32> to vector<8xf32>
    %105 = vector.shape_cast %104 : vector<8xf32> to vector<1x8xf32>
    %cst_111 = arith.constant dense<0.000000e+00> : vector<1x8xf32>
    %106 = tpu.matmul %105, %103, %cst_111 {dimension_numbers = #tpu.dot_dimension_numbers<[1], [0], [0], [1], [0, 0, 1, 1], [], []>} : vector<1x8xf32>, vector<8x8xf32>, vector<1x8xf32> -> vector<1x8xf32>
    %107 = vector.broadcast %106 : vector<1x8xf32> to vector<256x8xf32>
    %108 = arith.subf %102, %107 : vector<256x8xf32>
    %109 = arith.mulf %108, %108 : vector<256x8xf32>
    %cst_112 = arith.constant dense<0.000000e+00> : vector<8xf32>
    %110 = vector.multi_reduction <add>, %109, %cst_112 [0] : vector<256x8xf32> to vector<8xf32>
    %111 = vector.shape_cast %110 : vector<8xf32> to vector<1x8xf32>
    %cst_113 = arith.constant dense<0.000000e+00> : vector<1x8xf32>
    %112 = tpu.matmul %111, %103, %cst_113 {dimension_numbers = #tpu.dot_dimension_numbers<[1], [0], [0], [1], [0, 0, 1, 1], [], []>} : vector<1x8xf32>, vector<8x8xf32>, vector<1x8xf32> -> vector<1x8xf32>
    %cst_114 = arith.constant 9.99999974E-6 : f32
    %113 = vector.broadcast %cst_114 : f32 to vector<1x8xf32>
    %114 = arith.addf %112, %113 : vector<1x8xf32>
    %115 = math.rsqrt %114 : vector<1x8xf32>
    %c0_115 = arith.constant 0 : index
    %c0_116 = arith.constant 0 : index
    %116 = vector.load %arg8[%c0_115, %c0_116] : memref<1x8xf32, #tpu.memory_space<vmem>>, vector<1x8xf32>
    %117 = arith.mulf %115, %116 : vector<1x8xf32>
    %118 = vector.broadcast %117 : vector<1x8xf32> to vector<256x8xf32>
    %119 = arith.mulf %108, %118 : vector<256x8xf32>
    %c0_117 = arith.constant 0 : index
    %c0_118 = arith.constant 0 : index
    %120 = vector.load %arg9[%c0_117, %c0_118] : memref<1x8xf32, #tpu.memory_space<vmem>>, vector<1x8xf32>
    %121 = vector.broadcast %120 : vector<1x8xf32> to vector<256x8xf32>
    %122 = arith.addf %119, %121 : vector<256x8xf32>
    %123 = vector.shape_cast %122 : vector<256x8xf32> to vector<16x16x8xf32>
    %124 = arith.truncf %123 : vector<16x16x8xf32> to vector<16x16x8xbf16>
    %c1_119 = arith.constant 1 : index
    %c1_120 = arith.constant 1 : index
    %c0_121 = arith.constant 0 : index
    %125 = vector.load %arg13[%c1_119, %c1_120, %c0_121] : memref<18x18x8xbf16, #tpu.memory_space<vmem>>, vector<16x16x8xbf16>
    tpu.vector_store %arg13[%c1_119, %c1_120, %c0_121], %124 {strides = array<i32>} : memref<18x18x8xbf16, #tpu.memory_space<vmem>>, vector<16x16x8xbf16>,
    %cst_122 = arith.constant 0.000000e+00 : f32
    %126 = vector.broadcast %cst_122 : f32 to vector<8x256xf32>
    %c0_123 = arith.constant 0 : index
    %c0_124 = arith.constant 0 : index
    %c0_125 = arith.constant 0 : index
    %127 = vector.load %arg13[%c0_123, %c0_124, %c0_125] : memref<18x18x8xbf16, #tpu.memory_space<vmem>>, vector<16x16x8xbf16>
    %128 = vector.shape_cast %127 : vector<16x16x8xbf16> to vector<256x8xbf16>
    %c0_126 = arith.constant 0 : index
    %c0_127 = arith.constant 0 : index
    %c0_128 = arith.constant 0 : index
    %129 = vector.load %arg10[%c0_126, %c0_127, %c0_128] : memref<9x8x8xbf16, #tpu.memory_space<vmem>>, vector<1x8x8xbf16>
    %130 = vector.shape_cast %129 : vector<1x8x8xbf16> to vector<8x8xbf16>
    %cst_129 = arith.constant dense<0.000000e+00> : vector<8x256xf32>
    %131 = tpu.matmul %130, %128, %cst_129 {dimension_numbers = #tpu.dot_dimension_numbers<[1], [1], [0], [0], [0, 0, 1, 0], [], []>} : vector<8x8xbf16>, vector<256x8xbf16>, vector<8x256xf32> -> vector<8x256xf32>
    %132 = arith.addf %126, %131 : vector<8x256xf32>
    %c0_130 = arith.constant 0 : index
    %c1_131 = arith.constant 1 : index
    %c0_132 = arith.constant 0 : index
    %133 = vector.load %arg13[%c0_130, %c1_131, %c0_132] : memref<18x18x8xbf16, #tpu.memory_space<vmem>>, vector<16x16x8xbf16>
    %134 = vector.shape_cast %133 : vector<16x16x8xbf16> to vector<256x8xbf16>
    %c1_133 = arith.constant 1 : index
    %c0_134 = arith.constant 0 : index
    %c0_135 = arith.constant 0 : index
    %135 = vector.load %arg10[%c1_133, %c0_134, %c0_135] : memref<9x8x8xbf16, #tpu.memory_space<vmem>>, vector<1x8x8xbf16>
    %136 = vector.shape_cast %135 : vector<1x8x8xbf16> to vector<8x8xbf16>
    %cst_136 = arith.constant dense<0.000000e+00> : vector<8x256xf32>
    %137 = tpu.matmul %136, %134, %cst_136 {dimension_numbers = #tpu.dot_dimension_numbers<[1], [1], [0], [0], [0, 0, 1, 0], [], []>} : vector<8x8xbf16>, vector<256x8xbf16>, vector<8x256xf32> -> vector<8x256xf32>
    %138 = arith.addf %132, %137 : vector<8x256xf32>
    %c0_137 = arith.constant 0 : index
    %c2_138 = arith.constant 2 : index
    %c0_139 = arith.constant 0 : index
    %139 = vector.load %arg13[%c0_137, %c2_138, %c0_139] : memref<18x18x8xbf16, #tpu.memory_space<vmem>>, vector<16x16x8xbf16>
    %140 = vector.shape_cast %139 : vector<16x16x8xbf16> to vector<256x8xbf16>
    %c2_140 = arith.constant 2 : index
    %c0_141 = arith.constant 0 : index
    %c0_142 = arith.constant 0 : index
    %141 = vector.load %arg10[%c2_140, %c0_141, %c0_142] : memref<9x8x8xbf16, #tpu.memory_space<vmem>>, vector<1x8x8xbf16>
    %142 = vector.shape_cast %141 : vector<1x8x8xbf16> to vector<8x8xbf16>
    %cst_143 = arith.constant dense<0.000000e+00> : vector<8x256xf32>
    %143 = tpu.matmul %142, %140, %cst_143 {dimension_numbers = #tpu.dot_dimension_numbers<[1], [1], [0], [0], [0, 0, 1, 0], [], []>} : vector<8x8xbf16>, vector<256x8xbf16>, vector<8x256xf32> -> vector<8x256xf32>
    %144 = arith.addf %138, %143 : vector<8x256xf32>
    %c1_144 = arith.constant 1 : index
    %c0_145 = arith.constant 0 : index
    %c0_146 = arith.constant 0 : index
    %145 = vector.load %arg13[%c1_144, %c0_145, %c0_146] : memref<18x18x8xbf16, #tpu.memory_space<vmem>>, vector<16x16x8xbf16>
    %146 = vector.shape_cast %145 : vector<16x16x8xbf16> to vector<256x8xbf16>
    %c3_147 = arith.constant 3 : index
    %c0_148 = arith.constant 0 : index
    %c0_149 = arith.constant 0 : index
    %147 = vector.load %arg10[%c3_147, %c0_148, %c0_149] : memref<9x8x8xbf16, #tpu.memory_space<vmem>>, vector<1x8x8xbf16>
    %148 = vector.shape_cast %147 : vector<1x8x8xbf16> to vector<8x8xbf16>
    %cst_150 = arith.constant dense<0.000000e+00> : vector<8x256xf32>
    %149 = tpu.matmul %148, %146, %cst_150 {dimension_numbers = #tpu.dot_dimension_numbers<[1], [1], [0], [0], [0, 0, 1, 0], [], []>} : vector<8x8xbf16>, vector<256x8xbf16>, vector<8x256xf32> -> vector<8x256xf32>
    %150 = arith.addf %144, %149 : vector<8x256xf32>
    %c1_151 = arith.constant 1 : index
    %c1_152 = arith.constant 1 : index
    %c0_153 = arith.constant 0 : index
    %151 = vector.load %arg13[%c1_151, %c1_152, %c0_153] : memref<18x18x8xbf16, #tpu.memory_space<vmem>>, vector<16x16x8xbf16>
    %152 = vector.shape_cast %151 : vector<16x16x8xbf16> to vector<256x8xbf16>
    %c4_154 = arith.constant 4 : index
    %c0_155 = arith.constant 0 : index
    %c0_156 = arith.constant 0 : index
    %153 = vector.load %arg10[%c4_154, %c0_155, %c0_156] : memref<9x8x8xbf16, #tpu.memory_space<vmem>>, vector<1x8x8xbf16>
    %154 = vector.shape_cast %153 : vector<1x8x8xbf16> to vector<8x8xbf16>
    %cst_157 = arith.constant dense<0.000000e+00> : vector<8x256xf32>
    %155 = tpu.matmul %154, %152, %cst_157 {dimension_numbers = #tpu.dot_dimension_numbers<[1], [1], [0], [0], [0, 0, 1, 0], [], []>} : vector<8x8xbf16>, vector<256x8xbf16>, vector<8x256xf32> -> vector<8x256xf32>
    %156 = arith.addf %150, %155 : vector<8x256xf32>
    %c1_158 = arith.constant 1 : index
    %c2_159 = arith.constant 2 : index
    %c0_160 = arith.constant 0 : index
    %157 = vector.load %arg13[%c1_158, %c2_159, %c0_160] : memref<18x18x8xbf16, #tpu.memory_space<vmem>>, vector<16x16x8xbf16>
    %158 = vector.shape_cast %157 : vector<16x16x8xbf16> to vector<256x8xbf16>
    %c5_161 = arith.constant 5 : index
    %c0_162 = arith.constant 0 : index
    %c0_163 = arith.constant 0 : index
    %159 = vector.load %arg10[%c5_161, %c0_162, %c0_163] : memref<9x8x8xbf16, #tpu.memory_space<vmem>>, vector<1x8x8xbf16>
    %160 = vector.shape_cast %159 : vector<1x8x8xbf16> to vector<8x8xbf16>
    %cst_164 = arith.constant dense<0.000000e+00> : vector<8x256xf32>
    %161 = tpu.matmul %160, %158, %cst_164 {dimension_numbers = #tpu.dot_dimension_numbers<[1], [1], [0], [0], [0, 0, 1, 0], [], []>} : vector<8x8xbf16>, vector<256x8xbf16>, vector<8x256xf32> -> vector<8x256xf32>
    %162 = arith.addf %156, %161 : vector<8x256xf32>
    %c2_165 = arith.constant 2 : index
    %c0_166 = arith.constant 0 : index
    %c0_167 = arith.constant 0 : index
    %163 = vector.load %arg13[%c2_165, %c0_166, %c0_167] : memref<18x18x8xbf16, #tpu.memory_space<vmem>>, vector<16x16x8xbf16>
    %164 = vector.shape_cast %163 : vector<16x16x8xbf16> to vector<256x8xbf16>
    %c6_168 = arith.constant 6 : index
    %c0_169 = arith.constant 0 : index
    %c0_170 = arith.constant 0 : index
    %165 = vector.load %arg10[%c6_168, %c0_169, %c0_170] : memref<9x8x8xbf16, #tpu.memory_space<vmem>>, vector<1x8x8xbf16>
    %166 = vector.shape_cast %165 : vector<1x8x8xbf16> to vector<8x8xbf16>
    %cst_171 = arith.constant dense<0.000000e+00> : vector<8x256xf32>
    %167 = tpu.matmul %166, %164, %cst_171 {dimension_numbers = #tpu.dot_dimension_numbers<[1], [1], [0], [0], [0, 0, 1, 0], [], []>} : vector<8x8xbf16>, vector<256x8xbf16>, vector<8x256xf32> -> vector<8x256xf32>
    %168 = arith.addf %162, %167 : vector<8x256xf32>
    %c2_172 = arith.constant 2 : index
    %c1_173 = arith.constant 1 : index
    %c0_174 = arith.constant 0 : index
    %169 = vector.load %arg13[%c2_172, %c1_173, %c0_174] : memref<18x18x8xbf16, #tpu.memory_space<vmem>>, vector<16x16x8xbf16>
    %170 = vector.shape_cast %169 : vector<16x16x8xbf16> to vector<256x8xbf16>
    %c7_175 = arith.constant 7 : index
    %c0_176 = arith.constant 0 : index
    %c0_177 = arith.constant 0 : index
    %171 = vector.load %arg10[%c7_175, %c0_176, %c0_177] : memref<9x8x8xbf16, #tpu.memory_space<vmem>>, vector<1x8x8xbf16>
    %172 = vector.shape_cast %171 : vector<1x8x8xbf16> to vector<8x8xbf16>
    %cst_178 = arith.constant dense<0.000000e+00> : vector<8x256xf32>
    %173 = tpu.matmul %172, %170, %cst_178 {dimension_numbers = #tpu.dot_dimension_numbers<[1], [1], [0], [0], [0, 0, 1, 0], [], []>} : vector<8x8xbf16>, vector<256x8xbf16>, vector<8x256xf32> -> vector<8x256xf32>
    %174 = arith.addf %168, %173 : vector<8x256xf32>
    %c2_179 = arith.constant 2 : index
    %c2_180 = arith.constant 2 : index
    %c0_181 = arith.constant 0 : index
    %175 = vector.load %arg13[%c2_179, %c2_180, %c0_181] : memref<18x18x8xbf16, #tpu.memory_space<vmem>>, vector<16x16x8xbf16>
    %176 = vector.shape_cast %175 : vector<16x16x8xbf16> to vector<256x8xbf16>
    %c8_182 = arith.constant 8 : index
    %c0_183 = arith.constant 0 : index
    %c0_184 = arith.constant 0 : index
    %177 = vector.load %arg10[%c8_182, %c0_183, %c0_184] : memref<9x8x8xbf16, #tpu.memory_space<vmem>>, vector<1x8x8xbf16>
    %178 = vector.shape_cast %177 : vector<1x8x8xbf16> to vector<8x8xbf16>
    %cst_185 = arith.constant dense<0.000000e+00> : vector<8x256xf32>
    %179 = tpu.matmul %178, %176, %cst_185 {dimension_numbers = #tpu.dot_dimension_numbers<[1], [1], [0], [0], [0, 0, 1, 0], [], []>} : vector<8x8xbf16>, vector<256x8xbf16>, vector<8x256xf32> -> vector<8x256xf32>
    %180 = arith.addf %174, %179 : vector<8x256xf32>
    %cst_186 = arith.constant 0.000000e+00 : f32
    %181 = vector.broadcast %cst_186 : f32 to vector<8x256xf32>
    %182 = arith.maximumf %180, %181 : vector<8x256xf32>
    %c0_187 = arith.constant 0 : index
    %c0_188 = arith.constant 0 : index
    %c0_189 = arith.constant 0 : index
    %183 = vector.load %arg11[%c0_187, %c0_188, %c0_189] : memref<1x8x256xf32, #tpu.memory_space<vmem>>, vector<1x8x256xf32>
    %184 = vector.shape_cast %183 : vector<1x8x256xf32> to vector<8x256xf32>
    %185 = vector.shape_cast %182 : vector<8x256xf32> to vector<1x8x256xf32>
    tpu.vector_store %arg11[%c0_187, %c0_188, %c0_189], %185 {strides = array<i32>} : memref<1x8x256xf32, #tpu.memory_space<vmem>>, vector<1x8x256xf32>,
    return
  }
  func.func @transform_0(%arg0: i32) -> (i32, i32, i32, i32) {
    %c0_i32 = arith.constant 0 : i32
    %c0_i32_0 = arith.constant 0 : i32
    %c0_i32_1 = arith.constant 0 : i32
    %c0_i32_2 = arith.constant 0 : i32
    return %arg0, %c0_i32, %c0_i32_0, %c0_i32_1 : i32, i32, i32, i32
  }
  func.func @transform_1(%arg0: i32) -> (i32, i32, i32, i32) {
    %c0_i32 = arith.constant 0 : i32
    %c0_i32_0 = arith.constant 0 : i32
    %c0_i32_1 = arith.constant 0 : i32
    %c0_i32_2 = arith.constant 0 : i32
    return %arg0, %c0_i32, %c0_i32_0, %c0_i32_1 : i32, i32, i32, i32
  }
  func.func @transform_2(%arg0: i32) -> (i32, i32) {
    %c0_i32 = arith.constant 0 : i32
    %c0_i32_0 = arith.constant 0 : i32
    %c0_i32_1 = arith.constant 0 : i32
    return %c0_i32, %c0_i32_0 : i32, i32
  }
  func.func @transform_3(%arg0: i32) -> (i32, i32) {
    %c0_i32 = arith.constant 0 : i32
    %c0_i32_0 = arith.constant 0 : i32
    %c0_i32_1 = arith.constant 0 : i32
    return %c0_i32, %c0_i32_0 : i32, i32
  }
  func.func @transform_4(%arg0: i32) -> (i32, i32) {
    %c0_i32 = arith.constant 0 : i32
    %c0_i32_0 = arith.constant 0 : i32
    %c0_i32_1 = arith.constant 0 : i32
    return %c0_i32, %c0_i32_0 : i32, i32
  }
  func.func @transform_5(%arg0: i32) -> (i32, i32, i32) {
    %c0_i32 = arith.constant 0 : i32
    %c0_i32_0 = arith.constant 0 : i32
    %c0_i32_1 = arith.constant 0 : i32
    %c0_i32_2 = arith.constant 0 : i32
    return %c0_i32, %c0_i32_0, %c0_i32_1 : i32, i32, i32
  }
  func.func @transform_6(%arg0: i32) -> (i32, i32) {
    %c0_i32 = arith.constant 0 : i32
    %c0_i32_0 = arith.constant 0 : i32
    %c0_i32_1 = arith.constant 0 : i32
    return %c0_i32, %c0_i32_0 : i32, i32
  }
  func.func @transform_7(%arg0: i32) -> (i32, i32) {
    %c0_i32 = arith.constant 0 : i32
    %c0_i32_0 = arith.constant 0 : i32
    %c0_i32_1 = arith.constant 0 : i32
    return %c0_i32, %c0_i32_0 : i32, i32
  }
  func.func @transform_8(%arg0: i32) -> (i32, i32) {
    %c0_i32 = arith.constant 0 : i32
    %c0_i32_0 = arith.constant 0 : i32
    %c0_i32_1 = arith.constant 0 : i32
    return %c0_i32, %c0_i32_0 : i32, i32
  }
  func.func @transform_9(%arg0: i32) -> (i32, i32, i32) {
    %c0_i32 = arith.constant 0 : i32
    %c0_i32_0 = arith.constant 0 : i32
    %c0_i32_1 = arith.constant 0 : i32
    %c0_i32_2 = arith.constant 0 : i32
    return %c0_i32, %c0_i32_0, %c0_i32_1 : i32, i32, i32
  }
  func.func @transform_10(%arg0: i32) -> (i32, i32, i32) {
    %c0_i32 = arith.constant 0 : i32
    %c0_i32_0 = arith.constant 0 : i32
    %c0_i32_1 = arith.constant 0 : i32
    return %arg0, %c0_i32, %c0_i32_0 : i32, i32, i32
  }
}

</mosaic_0001>

<llo_original>
// kernel: decoder_forward.1
$region0: #{decoder_forward.1}
  #allocation0 [shape = 'u32[]', space=smem, size = 0x4, offset = 0x4, fixed_abs, tag = 'smem constant byte address 0x4 - core index']
  #allocation1 [shape = 'u32[144,128]{1,0:T(1,128)}', space=vmem, size = 0x12000, scoped, tag = 'internal scratch']
  #allocation2 [shape = 'bf16[18,18,16]{2,1,0:T(8,128)(2,1)}', space=vmem, size = 0x1b000, scoped, tag = 'scratch operand']
  #allocation3 [shape = 'bf16[18,18,8]{2,1,0:T(8,128)(2,1)}', space=vmem, size = 0x1b000, scoped, tag = 'scratch operand']
  %s0 = inlined_call_operand.vmem [shape: f32[2,16,16,8], index: 0, kind: input, shape index: {}]
  %s1 = inlined_call_operand.vmem [shape: f32[2,16,16,8], index: 1, kind: input, shape index: {}]
  %s2 = inlined_call_operand.vmem [shape: f32[16,16], index: 2, kind: input, shape index: {}]
  %s3 = inlined_call_operand.vmem [shape: f32[1,16], index: 3, kind: input, shape index: {}]
  %s4 = inlined_call_operand.vmem [shape: f32[1,16], index: 4, kind: input, shape index: {}]
  %s5 = inlined_call_operand.vmem [shape: bf16[9,16,8], index: 5, kind: input, shape index: {}]
  %s6 = inlined_call_operand.vmem [shape: f32[8,8], index: 6, kind: input, shape index: {}]
  %s7 = inlined_call_operand.vmem [shape: f32[1,8], index: 7, kind: input, shape index: {}]
  %s8 = inlined_call_operand.vmem [shape: f32[1,8], index: 8, kind: input, shape index: {}]
  %s9 = inlined_call_operand.vmem [shape: bf16[9,8,8], index: 9, kind: input, shape index: {}]
  %s10 = inlined_call_operand.vmem [shape: f32[2,8,256], index: 10, kind: output, shape index: {}]
  %s11 = sld [smem:[#allocation0]]
  $region73: #{decoder_forward.1} parent=0
    _
  %s13 = ssub.s32 1, %s11
  %s14 = scalar_select 0, %s13, %s11
  loop: start=0, step=1, limit=4
  $region2: #{decoder_forward.1} parent=0 // loop_pre_header
    _
  $region3: #{decoder_forward.1} parent=0 // loop_header
    %s16 = sphi 0, %s20
    %p17 = scmp.ge.s32.totalorder %s16, 4
    %s26 = sphi 0, %s28
    %s29 = sphi 0, %s26
    %s30 = sphi 0, %s29
    %s46 = sphi 0, %s30
    %s52 = sphi 0, %s54
    %s55 = sphi 0, %s52
    %s56 = sphi 0, %s55
    %s72 = sphi 0, %s56
    %s76 = sphi 0, %s76
    %s78 = sphi 0, %s76
    %s79 = sphi 0, %s78
    %s93 = sphi 0, %s79
    %s97 = sphi 0, %s97
    %s99 = sphi 0, %s97
    %s100 = sphi 0, %s99
    %s114 = sphi 0, %s100
    %s118 = sphi 0, %s118
    %s120 = sphi 0, %s118
    %s121 = sphi 0, %s120
    %s135 = sphi 0, %s121
    %s139 = sphi 0, %s139
    %s141 = sphi 0, %s139
    %s142 = sphi 0, %s141
    %s156 = sphi 0, %s142
    %s160 = sphi 0, %s160
    %s162 = sphi 0, %s160
    %s163 = sphi 0, %s162
    %s177 = sphi 0, %s163
    %s181 = sphi 0, %s181
    %s183 = sphi 0, %s181
    %s184 = sphi 0, %s183
    %s198 = sphi 0, %s184
    %s202 = sphi 0, %s202
    %s204 = sphi 0, %s202
    %s205 = sphi 0, %s204
    %s219 = sphi 0, %s205
    %s223 = sphi 0, %s223
    %s225 = sphi 0, %s223
    %s226 = sphi 0, %s225
    %s240 = sphi 0, %s226
    %s246 = sphi 0, %s248
    %s249 = sphi 0, %s246
    %s250 = sphi 0, %s249
    %s266 = sphi 0, %s250
  $region4: #{decoder_forward.1} parent=0 // loop_header_branch
    %19 = sbr.rel (%p17) target = $region8
  $region5: #{decoder_forward.1} parent=0 // loop_body
    %s21 = ssub.s32 %s16, 1
    %s22 = ssub.s32 %s16, 2
    %s23 = sadd.s32 %s16, 1
    %s24 = ssub.s32 %s16, %s23
    %p25 = scmp.eq.s32.totalorder %s24, 0
    %s27 = sadd.s32 %s26, 1
    %s28 = scalar_select %p25, %s26, %s27
    %p31 = pneg %p25
    %p32 = scmp.eq.s32.totalorder %s16, 1
    %p33 = por %p31, %p32
    %p34 = scmp.ne.s32.totalorder %s26, %s29
    %p35 = scmp.eq.s32.totalorder %s16, 0
    %p36 = por %p34, %p35
    %p37 = scmp.ne.s32.totalorder %s26, %s29
    %p38 = scmp.eq.s32.totalorder %s21, 1
    %p39 = por %p37, %p38
    %p40 = scmp.ne.s32.totalorder %s29, %s30
    %p41 = scmp.eq.s32.totalorder %s21, 0
    %p42 = por %p40, %p41
    %p43 = scmp.ne.s32.totalorder %s29, %s30
    %p44 = scmp.eq.s32.totalorder %s22, 1
    %p45 = por %p43, %p44
    %p47 = scmp.ne.s32.totalorder %s30, %s46
    %p48 = scmp.eq.s32.totalorder %s22, 0
    %p49 = por %p47, %p48
    %s50 = ssub.s32 %s16, %s23
    %p51 = scmp.eq.s32.totalorder %s50, 0
    %s53 = sadd.s32 %s52, 1
    %s54 = scalar_select %p51, %s52, %s53
    %p57 = pneg %p51
    %p58 = scmp.eq.s32.totalorder %s16, 1
    %p59 = por %p57, %p58
    %p60 = scmp.ne.s32.totalorder %s52, %s55
    %p61 = scmp.eq.s32.totalorder %s16, 0
    %p62 = por %p60, %p61
    %p63 = scmp.ne.s32.totalorder %s52, %s55
    %p64 = scmp.eq.s32.totalorder %s21, 1
    %p65 = por %p63, %p64
    %p66 = scmp.ne.s32.totalorder %s55, %s56
    %p67 = scmp.eq.s32.totalorder %s21, 0
    %p68 = por %p66, %p67
    %p69 = scmp.ne.s32.totalorder %s55, %s56
    %p70 = scmp.eq.s32.totalorder %s22, 1
    %p71 = por %p69, %p70
    %p73 = scmp.ne.s32.totalorder %s56, %s72
    %p74 = scmp.eq.s32.totalorder %s22, 0
    %p75 = por %p73, %p74
    %s77 = sadd.s32 %s76, 1
    %p80 = scmp.eq.s32.totalorder %s16, 1
    %p81 = scmp.ne.s32.totalorder %s76, %s78
    %p82 = scmp.eq.s32.totalorder %s16, 0
    %p83 = por %p81, %p82
    %p84 = scmp.ne.s32.totalorder %s76, %s78
    %p85 = scmp.eq.s32.totalorder %s21, 1
    %p86 = por %p84, %p85
    %p87 = scmp.ne.s32.totalorder %s78, %s79
    %p88 = scmp.eq.s32.totalorder %s21, 0
    %p89 = por %p87, %p88
    %p90 = scmp.ne.s32.totalorder %s78, %s79
    %p91 = scmp.eq.s32.totalorder %s22, 1
    %p92 = por %p90, %p91
    %p94 = scmp.ne.s32.totalorder %s79, %s93
    %p95 = scmp.eq.s32.totalorder %s22, 0
    %p96 = por %p94, %p95
    %s98 = sadd.s32 %s97, 1
    %p101 = scmp.eq.s32.totalorder %s16, 1
    %p102 = scmp.ne.s32.totalorder %s97, %s99
    %p103 = scmp.eq.s32.totalorder %s16, 0
    %p104 = por %p102, %p103
    %p105 = scmp.ne.s32.totalorder %s97, %s99
    %p106 = scmp.eq.s32.totalorder %s21, 1
    %p107 = por %p105, %p106
    %p108 = scmp.ne.s32.totalorder %s99, %s100
    %p109 = scmp.eq.s32.totalorder %s21, 0
    %p110 = por %p108, %p109
    %p111 = scmp.ne.s32.totalorder %s99, %s100
    %p112 = scmp.eq.s32.totalorder %s22, 1
    %p113 = por %p111, %p112
    %p115 = scmp.ne.s32.totalorder %s100, %s114
    %p116 = scmp.eq.s32.totalorder %s22, 0
    %p117 = por %p115, %p116
    %s119 = sadd.s32 %s118, 1
    %p122 = scmp.eq.s32.totalorder %s16, 1
    %p123 = scmp.ne.s32.totalorder %s118, %s120
    %p124 = scmp.eq.s32.totalorder %s16, 0
    %p125 = por %p123, %p124
    %p126 = scmp.ne.s32.totalorder %s118, %s120
    %p127 = scmp.eq.s32.totalorder %s21, 1
    %p128 = por %p126, %p127
    %p129 = scmp.ne.s32.totalorder %s120, %s121
    %p130 = scmp.eq.s32.totalorder %s21, 0
    %p131 = por %p129, %p130
    %p132 = scmp.ne.s32.totalorder %s120, %s121
    %p133 = scmp.eq.s32.totalorder %s22, 1
    %p134 = por %p132, %p133
    %p136 = scmp.ne.s32.totalorder %s121, %s135
    %p137 = scmp.eq.s32.totalorder %s22, 0
    %p138 = por %p136, %p137
    %s140 = sadd.s32 %s139, 1
    %p143 = scmp.eq.s32.totalorder %s16, 1
    %p144 = scmp.ne.s32.totalorder %s139, %s141
    %p145 = scmp.eq.s32.totalorder %s16, 0
    %p146 = por %p144, %p145
    %p147 = scmp.ne.s32.totalorder %s139, %s141
    %p148 = scmp.eq.s32.totalorder %s21, 1
    %p149 = por %p147, %p148
    %p150 = scmp.ne.s32.totalorder %s141, %s142
    %p151 = scmp.eq.s32.totalorder %s21, 0
    %p152 = por %p150, %p151
    %p153 = scmp.ne.s32.totalorder %s141, %s142
    %p154 = scmp.eq.s32.totalorder %s22, 1
    %p155 = por %p153, %p154
    %p157 = scmp.ne.s32.totalorder %s142, %s156
    %p158 = scmp.eq.s32.totalorder %s22, 0
    %p159 = por %p157, %p158
    %s161 = sadd.s32 %s160, 1
    %p164 = scmp.eq.s32.totalorder %s16, 1
    %p165 = scmp.ne.s32.totalorder %s160, %s162
    %p166 = scmp.eq.s32.totalorder %s16, 0
    %p167 = por %p165, %p166
    %p168 = scmp.ne.s32.totalorder %s160, %s162
    %p169 = scmp.eq.s32.totalorder %s21, 1
    %p170 = por %p168, %p169
    %p171 = scmp.ne.s32.totalorder %s162, %s163
    %p172 = scmp.eq.s32.totalorder %s21, 0
    %p173 = por %p171, %p172
    %p174 = scmp.ne.s32.totalorder %s162, %s163
    %p175 = scmp.eq.s32.totalorder %s22, 1
    %p176 = por %p174, %p175
    %p178 = scmp.ne.s32.totalorder %s163, %s177
    %p179 = scmp.eq.s32.totalorder %s22, 0
    %p180 = por %p178, %p179
    %s182 = sadd.s32 %s181, 1
    %p185 = scmp.eq.s32.totalorder %s16, 1
    %p186 = scmp.ne.s32.totalorder %s181, %s183
    %p187 = scmp.eq.s32.totalorder %s16, 0
    %p188 = por %p186, %p187
    %p189 = scmp.ne.s32.totalorder %s181, %s183
    %p190 = scmp.eq.s32.totalorder %s21, 1
    %p191 = por %p189, %p190
    %p192 = scmp.ne.s32.totalorder %s183, %s184
    %p193 = scmp.eq.s32.totalorder %s21, 0
    %p194 = por %p192, %p193
    %p195 = scmp.ne.s32.totalorder %s183, %s184
    %p196 = scmp.eq.s32.totalorder %s22, 1
    %p197 = por %p195, %p196
    %p199 = scmp.ne.s32.totalorder %s184, %s198
    %p200 = scmp.eq.s32.totalorder %s22, 0
    %p201 = por %p199, %p200
    %s203 = sadd.s32 %s202, 1
    %p206 = scmp.eq.s32.totalorder %s16, 1
    %p207 = scmp.ne.s32.totalorder %s202, %s204
    %p208 = scmp.eq.s32.totalorder %s16, 0
    %p209 = por %p207, %p208
    %p210 = scmp.ne.s32.totalorder %s202, %s204
    %p211 = scmp.eq.s32.totalorder %s21, 1
    %p212 = por %p210, %p211
    %p213 = scmp.ne.s32.totalorder %s204, %s205
    %p214 = scmp.eq.s32.totalorder %s21, 0
    %p215 = por %p213, %p214
    %p216 = scmp.ne.s32.totalorder %s204, %s205
    %p217 = scmp.eq.s32.totalorder %s22, 1
    %p218 = por %p216, %p217
    %p220 = scmp.ne.s32.totalorder %s205, %s219
    %p221 = scmp.eq.s32.totalorder %s22, 0
    %p222 = por %p220, %p221
    %s224 = sadd.s32 %s223, 1
    %p227 = scmp.eq.s32.totalorder %s16, 1
    %p228 = scmp.ne.s32.totalorder %s223, %s225
    %p229 = scmp.eq.s32.totalorder %s16, 0
    %p230 = por %p228, %p229
    %p231 = scmp.ne.s32.totalorder %s223, %s225
    %p232 = scmp.eq.s32.totalorder %s21, 1
    %p233 = por %p231, %p232
    %p234 = scmp.ne.s32.totalorder %s225, %s226
    %p235 = scmp.eq.s32.totalorder %s21, 0
    %p236 = por %p234, %p235
    %p237 = scmp.ne.s32.totalorder %s225, %s226
    %p238 = scmp.eq.s32.totalorder %s22, 1
    %p239 = por %p237, %p238
    %p241 = scmp.ne.s32.totalorder %s226, %s240
    %p242 = scmp.eq.s32.totalorder %s22, 0
    %p243 = por %p241, %p242
    %s244 = ssub.s32 %s16, %s23
    %p245 = scmp.eq.s32.totalorder %s244, 0
    %s247 = sadd.s32 %s246, 1
    %s248 = scalar_select %p245, %s246, %s247
    %p251 = pneg %p245
    %p252 = scmp.eq.s32.totalorder %s16, 1
    %p253 = por %p251, %p252
    %p254 = scmp.ne.s32.totalorder %s246, %s249
    %p255 = scmp.eq.s32.totalorder %s16, 0
    %p256 = por %p254, %p255
    %p257 = scmp.ne.s32.totalorder %s246, %s249
    %p258 = scmp.eq.s32.totalorder %s21, 1
    %p259 = por %p257, %p258
    %p260 = scmp.ne.s32.totalorder %s249, %s250
    %p261 = scmp.eq.s32.totalorder %s21, 0
    %p262 = por %p260, %p261
    %p263 = scmp.ne.s32.totalorder %s249, %s250
    %p264 = scmp.eq.s32.totalorder %s22, 1
    %p265 = por %p263, %p264
    %p267 = scmp.ne.s32.totalorder %s250, %s266
    %p268 = scmp.eq.s32.totalorder %s22, 0
    %p269 = por %p267, %p268
    %p270 = scmp.le.s32.totalorder 1, %s16
    %p271 = scmp.lt.s32.totalorder %s16, 3
    %p272 = pnand %p270, %p271
    %p273 = pneg %p272
    // Predicated region
    $region9: #{decoder_forward.1} parent=5 // pred_check
      _
    $region10: #{decoder_forward.1} parent=5 // pred_check_branch
      %275 = sbr.rel (%p272) target = $region12
    $region11: #{decoder_forward.1} parent=5 // pred_region
      %s276 = ssub.s32 %s16, 1
      // Predicated region
      $region13: #{decoder_forward.1} parent=11 // pred_check
        %p277 = pneg %p89
      $region14: #{decoder_forward.1} parent=11 // pred_check_branch
        %279 = sbr.rel (%p277) target = $region16
      $region15: #{decoder_forward.1} parent=11 // pred_region
        _
      $region16: #{decoder_forward.1} parent=11 // pred_fallthru
        _
      // Predicated region
      $region17: #{decoder_forward.1} parent=11 // pred_check
        %p280 = pneg %p110
      $region18: #{decoder_forward.1} parent=11 // pred_check_branch
        %282 = sbr.rel (%p280) target = $region20
      $region19: #{decoder_forward.1} parent=11 // pred_region
        _
      $region20: #{decoder_forward.1} parent=11 // pred_fallthru
        _
      // Predicated region
      $region21: #{decoder_forward.1} parent=11 // pred_check
        %p283 = pneg %p131
      $region22: #{decoder_forward.1} parent=11 // pred_check_branch
        %285 = sbr.rel (%p283) target = $region24
      $region23: #{decoder_forward.1} parent=11 // pred_region
        _
      $region24: #{decoder_forward.1} parent=11 // pred_fallthru
        _
      // Predicated region
      $region25: #{decoder_forward.1} parent=11 // pred_check
        %p286 = pneg %p152
      $region26: #{decoder_forward.1} parent=11 // pred_check_branch
        %288 = sbr.rel (%p286) target = $region28
      $region27: #{decoder_forward.1} parent=11 // pred_region
        _
      $region28: #{decoder_forward.1} parent=11 // pred_fallthru
        _
      // Predicated region
      $region29: #{decoder_forward.1} parent=11 // pred_check
        %p289 = pneg %p173
      $region30: #{decoder_forward.1} parent=11 // pred_check_branch
        %291 = sbr.rel (%p289) target = $region32
      $region31: #{decoder_forward.1} parent=11 // pred_region
        _
      $region32: #{decoder_forward.1} parent=11 // pred_fallthru
        _
      // Predicated region
      $region33: #{decoder_forward.1} parent=11 // pred_check
        %p292 = pneg %p194
      $region34: #{decoder_forward.1} parent=11 // pred_check_branch
        %294 = sbr.rel (%p292) target = $region36
      $region35: #{decoder_forward.1} parent=11 // pred_region
        _
      $region36: #{decoder_forward.1} parent=11 // pred_fallthru
        _
      // Predicated region
      $region37: #{decoder_forward.1} parent=11 // pred_check
        %p295 = pneg %p215
      $region38: #{decoder_forward.1} parent=11 // pred_check_branch
        %297 = sbr.rel (%p295) target = $region40
      $region39: #{decoder_forward.1} parent=11 // pred_region
        _
      $region40: #{decoder_forward.1} parent=11 // pred_fallthru
        _
      // Predicated region
      $region41: #{decoder_forward.1} parent=11 // pred_check
        %p298 = pneg %p236
      $region42: #{decoder_forward.1} parent=11 // pred_check_branch
        %300 = sbr.rel (%p298) target = $region44
      $region43: #{decoder_forward.1} parent=11 // pred_region
        _
      $region44: #{decoder_forward.1} parent=11 // pred_fallthru
        _
    $region12: #{decoder_forward.1} parent=5 // pred_fallthru
      _
    %p301 = scmp.lt.s32.totalorder %s16, 2
    // Predicated region
    $region45: #{decoder_forward.1} parent=5 // pred_check
      %p302 = pneg %p301
    $region46: #{decoder_forward.1} parent=5 // pred_check_branch
      %304 = sbr.rel (%p302) target = $region48
    $region47: #{decoder_forward.1} parent=5 // pred_region
      // Predicated region
      $region49: #{decoder_forward.1} parent=47 // pred_check
        %p305 = pneg %p36
      $region50: #{decoder_forward.1} parent=47 // pred_check_branch
        %307 = sbr.rel (%p305) target = $region52
      $region51: #{decoder_forward.1} parent=47 // pred_region
        %p308 = scmp.lt.s32.totalorder %s16, 1
        %s309 = scalar_select %p308, %s16, 1
        %s310 = smul.addr %s309, 32
        %s311 = smul.addr %s310, 8
        %s312 = scalar_lea.vmem %s0, %s311
      $region52: #{decoder_forward.1} parent=47 // pred_fallthru
        _
      // Predicated region
      $region53: #{decoder_forward.1} parent=47 // pred_check
        %p313 = pneg %p62
      $region54: #{decoder_forward.1} parent=47 // pred_check_branch
        %315 = sbr.rel (%p313) target = $region56
      $region55: #{decoder_forward.1} parent=47 // pred_region
        %p316 = scmp.lt.s32.totalorder %s16, 1
        %s317 = scalar_select %p316, %s16, 1
        %s318 = smul.addr %s317, 32
        %s319 = smul.addr %s318, 8
        %s320 = scalar_lea.vmem %s1, %s319
      $region56: #{decoder_forward.1} parent=47 // pred_fallthru
        _
    $region48: #{decoder_forward.1} parent=5 // pred_fallthru
      _
    %p321 = scmp.le.s32.totalorder 1, %s16
    %p322 = scmp.lt.s32.totalorder %s16, 3
    %p323 = pnand %p321, %p322
    %p324 = pneg %p323
    // Predicated region
    $region57: #{decoder_forward.1} parent=5 // pred_check
      _
    $region58: #{decoder_forward.1} parent=5 // pred_check_branch
      %326 = sbr.rel (%p323) target = $region60
    $region59: #{decoder_forward.1} parent=5 // pred_region
      %s327 = ssub.s32 %s16, 1
      %p328 = scmp.lt.s32.totalorder %s21, 1
      %s329 = scalar_select %p328, %s21, 1
      %s330 = smul.addr %s329, 32
      %s331 = smul.addr %s330, 8
      %s332 = scalar_lea.vmem %s0, %s331
      %p333 = pneg %p42
      %p334 = pneg %p39
      %p335 = scmp.lt.s32.totalorder %s21, 1
      %s336 = scalar_select %p335, %s21, 1
      %s337 = smul.addr %s336, 32
      %s338 = smul.addr %s337, 8
      %s339 = scalar_lea.vmem %s1, %s338
      %p340 = pneg %p68
      %p341 = pneg %p65
      %p342 = pneg %p89
      %p343 = pneg %p86
      %p344 = pneg %p110
      %p345 = pneg %p107
      %p346 = pneg %p131
      %p347 = pneg %p128
      %p348 = pneg %p152
      %p349 = pneg %p149
      %p350 = pneg %p173
      %p351 = pneg %p170
      %p352 = pneg %p194
      %p353 = pneg %p191
      %p354 = pneg %p215
      %p355 = pneg %p212
      %p356 = pneg %p236
      %p357 = pneg %p233
      %p358 = pneg %p262
      %p359 = pneg %p259
      %p360 = scmp.lt.s32.totalorder %s21, 1
      %s361 = scalar_select %p360, %s21, 1
      %s362 = smul.addr %s361, 2
      %s363 = smul.addr %s362, 8
      %s364 = scalar_lea.vmem %s10, %s363
      %p365 = scmp.lt.s32.totalorder %s21, 1
      %s366 = scalar_select %p365, %s21, 1
      %s367 = smul.addr %s366, 32
      %s368 = smul.addr %s367, 8
      %s369 = scalar_lea.vmem %s0, %s368
      %p370 = scmp.lt.s32.totalorder %s21, 1
      %s371 = scalar_select %p370, %s21, 1
      %s372 = smul.addr %s371, 32
      %s373 = smul.addr %s372, 8
      %s374 = scalar_lea.vmem %s1, %s373
      %p375 = scmp.lt.s32.totalorder %s21, 1
      %s376 = scalar_select %p375, %s21, 1
      %s377 = smul.addr %s376, 2
      %s378 = smul.addr %s377, 8
      %s379 = scalar_lea.vmem %s10, %s378
      %vm381 = vcmask 125952
      %382 = vst.msk [vmem:[#allocation2] sm:$0xf] %vm381, 0
      %383 = vst.msk [vmem:[#allocation2 + $0x4] sm:$0xf] %vm381, 0
      %vm384 = vcmask 122880
      %385 = vst.msk [vmem:[#allocation2 + $0x8] sm:$0x1] %vm384, 0
      %s386 = scalar_lea.vmem [#allocation2], 204
      %387 = vst.msk [vmem:[%s386] sm:$0xf] %vm381, 0
      %388 = vst.msk [vmem:[%s386 + $0x4] sm:$0xf] %vm381, 0
      %389 = vst.msk [vmem:[%s386 + $0x8] sm:$0x1] %vm384, 0
      %vm390 = vcmask 122880
      %vm391 = vsmask.f32 256
      %vm392 = vmand %vm390, %vm391
      %v393 = vld [vmem:[#allocation2] sm:$0x1]
      %v394 = vsel %vm392, 0, %v393
      %395 = vst [vmem:[#allocation2] sm:$0x1] %v394
      %v396 = vld [vmem:[#allocation2 + $0xc] sm:$0x1]
      %v397 = vsel %vm392, 0, %v396
      %398 = vst [vmem:[#allocation2 + $0xc] sm:$0x1] %v397
      %v399 = vld [vmem:[#allocation2 + $0x18] sm:$0x1]
      %v400 = vsel %vm392, 0, %v399
      %401 = vst [vmem:[#allocation2 + $0x18] sm:$0x1] %v400
      %v402 = vld [vmem:[#allocation2 + $0x24] sm:$0x1]
      %v403 = vsel %vm392, 0, %v402
      %404 = vst [vmem:[#allocation2 + $0x24] sm:$0x1] %v403
      %v405 = vld [vmem:[#allocation2 + $0x30] sm:$0x1]
      %v406 = vsel %vm392, 0, %v405
      %407 = vst [vmem:[#allocation2 + $0x30] sm:$0x1] %v406
      %v408 = vld [vmem:[#allocation2 + $0x3c] sm:$0x1]
      %v409 = vsel %vm392, 0, %v408
      %410 = vst [vmem:[#allocation2 + $0x3c] sm:$0x1] %v409
      %v411 = vld [vmem:[#allocation2 + $0x48] sm:$0x1]
      %v412 = vsel %vm392, 0, %v411
      %413 = vst [vmem:[#allocation2 + $0x48] sm:$0x1] %v412
      %v414 = vld [vmem:[#allocation2 + $0x54] sm:$0x1]
      %v415 = vsel %vm392, 0, %v414
      %416 = vst [vmem:[#allocation2 + $0x54] sm:$0x1] %v415
      %v417 = vld [vmem:[#allocation2 + $0x60] sm:$0x1]
      %v418 = vsel %vm392, 0, %v417
      %419 = vst [vmem:[#allocation2 + $0x60] sm:$0x1] %v418
      %v420 = vld [vmem:[#allocation2 + $0x6c] sm:$0x1]
      %v421 = vsel %vm392, 0, %v420
      %422 = vst [vmem:[#allocation2 + $0x6c] sm:$0x1] %v421
      %v423 = vld [vmem:[#allocation2 + $0x78] sm:$0x1]
      %v424 = vsel %vm392, 0, %v423
      %425 = vst [vmem:[#allocation2 + $0x78] sm:$0x1] %v424
      %v426 = vld [vmem:[#allocation2 + $0x84] sm:$0x1]
      %v427 = vsel %vm392, 0, %v426
      %428 = vst [vmem:[#allocation2 + $0x84] sm:$0x1] %v427
      %v429 = vld [vmem:[#allocation2 + $0x90] sm:$0x1]
      %v430 = vsel %vm392, 0, %v429
      %431 = vst [vmem:[#allocation2 + $0x90] sm:$0x1] %v430
      %v432 = vld [vmem:[#allocation2 + $0x9c] sm:$0x1]
      %v433 = vsel %vm392, 0, %v432
      %434 = vst [vmem:[#allocation2 + $0x9c] sm:$0x1] %v433
      %v435 = vld [vmem:[#allocation2 + $0xa8] sm:$0x1]
      %v436 = vsel %vm392, 0, %v435
      %437 = vst [vmem:[#allocation2 + $0xa8] sm:$0x1] %v436
      %v438 = vld [vmem:[#allocation2 + $0xb4] sm:$0x1]
      %v439 = vsel %vm392, 0, %v438
      %440 = vst [vmem:[#allocation2 + $0xb4] sm:$0x1] %v439
      %v441 = vld [vmem:[#allocation2 + $0xc0] sm:$0x1]
      %v442 = vsel %vm392, 0, %v441
      %443 = vst [vmem:[#allocation2 + $0xc0] sm:$0x1] %v442
      %v444 = vld [vmem:[#allocation2 + $0xcc] sm:$0x1]
      %v445 = vsel %vm392, 0, %v444
      %446 = vst [vmem:[#allocation2 + $0xcc] sm:$0x1] %v445
      %vm447 = vsmask.f32 7938
      %vm448 = vmand %vm390, %vm447
      %v449 = vld [vmem:[#allocation2 + $0x8] sm:$0x1]
      %v450 = vsel %vm448, 0, %v449
      %451 = vst [vmem:[#allocation2 + $0x8] sm:$0x1] %v450
      %v452 = vld [vmem:[#allocation2 + $0x14] sm:$0x1]
      %v453 = vsel %vm448, 0, %v452
      %454 = vst [vmem:[#allocation2 + $0x14] sm:$0x1] %v453
      %v455 = vld [vmem:[#allocation2 + $0x20] sm:$0x1]
      %v456 = vsel %vm448, 0, %v455
      %457 = vst [vmem:[#allocation2 + $0x20] sm:$0x1] %v456
      %v458 = vld [vmem:[#allocation2 + $0x2c] sm:$0x1]
      %v459 = vsel %vm448, 0, %v458
      %460 = vst [vmem:[#allocation2 + $0x2c] sm:$0x1] %v459
      %v461 = vld [vmem:[#allocation2 + $0x38] sm:$0x1]
      %v462 = vsel %vm448, 0, %v461
      %463 = vst [vmem:[#allocation2 + $0x38] sm:$0x1] %v462
      %v464 = vld [vmem:[#allocation2 + $0x44] sm:$0x1]
      %v465 = vsel %vm448, 0, %v464
      %466 = vst [vmem:[#allocation2 + $0x44] sm:$0x1] %v465
      %v467 = vld [vmem:[#allocation2 + $0x50] sm:$0x1]
      %v468 = vsel %vm448, 0, %v467
      %469 = vst [vmem:[#allocation2 + $0x50] sm:$0x1] %v468
      %v470 = vld [vmem:[#allocation2 + $0x5c] sm:$0x1]
      %v471 = vsel %vm448, 0, %v470
      %472 = vst [vmem:[#allocation2 + $0x5c] sm:$0x1] %v471
      %v473 = vld [vmem:[#allocation2 + $0x68] sm:$0x1]
      %v474 = vsel %vm448, 0, %v473
      %475 = vst [vmem:[#allocation2 + $0x68] sm:$0x1] %v474
      %v476 = vld [vmem:[#allocation2 + $0x74] sm:$0x1]
      %v477 = vsel %vm448, 0, %v476
      %478 = vst [vmem:[#allocation2 + $0x74] sm:$0x1] %v477
      %v479 = vld [vmem:[#allocation2 + $0x80] sm:$0x1]
      %v480 = vsel %vm448, 0, %v479
      %481 = vst [vmem:[#allocation2 + $0x80] sm:$0x1] %v480
      %v482 = vld [vmem:[#allocation2 + $0x8c] sm:$0x1]
      %v483 = vsel %vm448, 0, %v482
      %484 = vst [vmem:[#allocation2 + $0x8c] sm:$0x1] %v483
      %v485 = vld [vmem:[#allocation2 + $0x98] sm:$0x1]
      %v486 = vsel %vm448, 0, %v485
      %487 = vst [vmem:[#allocation2 + $0x98] sm:$0x1] %v486
      %v488 = vld [vmem:[#allocation2 + $0xa4] sm:$0x1]
      %v489 = vsel %vm448, 0, %v488
      %490 = vst [vmem:[#allocation2 + $0xa4] sm:$0x1] %v489
      %v491 = vld [vmem:[#allocation2 + $0xb0] sm:$0x1]
      %v492 = vsel %vm448, 0, %v491
      %493 = vst [vmem:[#allocation2 + $0xb0] sm:$0x1] %v492
      %v494 = vld [vmem:[#allocation2 + $0xbc] sm:$0x1]
      %v495 = vsel %vm448, 0, %v494
      %496 = vst [vmem:[#allocation2 + $0xbc] sm:$0x1] %v495
      %v497 = vld [vmem:[#allocation2 + $0xc8] sm:$0x1]
      %v498 = vsel %vm448, 0, %v497
      %499 = vst [vmem:[#allocation2 + $0xc8] sm:$0x1] %v498
      %v500 = vld [vmem:[#allocation2 + $0xd4] sm:$0x1]
      %v501 = vsel %vm448, 0, %v500
      %502 = vst [vmem:[#allocation2 + $0xd4] sm:$0x1] %v501
      %vm503 = vcmask 60416
      %504 = vst.msk [vmem:[#allocation3] sm:$0xf] %vm503, 0
      %505 = vst.msk [vmem:[#allocation3 + $0x4] sm:$0xf] %vm503, 0
      %vm506 = vcmask 57344
      %507 = vst.msk [vmem:[#allocation3 + $0x8] sm:$0x1] %vm506, 0
      %s508 = scalar_lea.vmem [#allocation3], 204
      %509 = vst.msk [vmem:[%s508] sm:$0xf] %vm503, 0
      %510 = vst.msk [vmem:[%s508 + $0x4] sm:$0xf] %vm503, 0
      %511 = vst.msk [vmem:[%s508 + $0x8] sm:$0x1] %vm506, 0
      %vm512 = vcmask 57344
      %vm513 = vmand %vm512, %vm391
      %v514 = vld [vmem:[#allocation3] sm:$0x1]
      %v515 = vsel %vm513, 0, %v514
      %516 = vst [vmem:[#allocation3] sm:$0x1] %v515
      %v517 = vld [vmem:[#allocation3 + $0xc] sm:$0x1]
      %v518 = vsel %vm513, 0, %v517
      %519 = vst [vmem:[#allocation3 + $0xc] sm:$0x1] %v518
      %v520 = vld [vmem:[#allocation3 + $0x18] sm:$0x1]
      %v521 = vsel %vm513, 0, %v520
      %522 = vst [vmem:[#allocation3 + $0x18] sm:$0x1] %v521
      %v523 = vld [vmem:[#allocation3 + $0x24] sm:$0x1]
      %v524 = vsel %vm513, 0, %v523
      %525 = vst [vmem:[#allocation3 + $0x24] sm:$0x1] %v524
      %v526 = vld [vmem:[#allocation3 + $0x30] sm:$0x1]
      %v527 = vsel %vm513, 0, %v526
      %528 = vst [vmem:[#allocation3 + $0x30] sm:$0x1] %v527
      %v529 = vld [vmem:[#allocation3 + $0x3c] sm:$0x1]
      %v530 = vsel %vm513, 0, %v529
      %531 = vst [vmem:[#allocation3 + $0x3c] sm:$0x1] %v530
      %v532 = vld [vmem:[#allocation3 + $0x48] sm:$0x1]
      %v533 = vsel %vm513, 0, %v532
      %534 = vst [vmem:[#allocation3 + $0x48] sm:$0x1] %v533
      %v535 = vld [vmem:[#allocation3 + $0x54] sm:$0x1]
      %v536 = vsel %vm513, 0, %v535
      %537 = vst [vmem:[#allocation3 + $0x54] sm:$0x1] %v536
      %v538 = vld [vmem:[#allocation3 + $0x60] sm:$0x1]
      %v539 = vsel %vm513, 0, %v538
      %540 = vst [vmem:[#allocation3 + $0x60] sm:$0x1] %v539
      %v541 = vld [vmem:[#allocation3 + $0x6c] sm:$0x1]
      %v542 = vsel %vm513, 0, %v541
      %543 = vst [vmem:[#allocation3 + $0x6c] sm:$0x1] %v542
      %v544 = vld [vmem:[#allocation3 + $0x78] sm:$0x1]
      %v545 = vsel %vm513, 0, %v544
      %546 = vst [vmem:[#allocation3 + $0x78] sm:$0x1] %v545
      %v547 = vld [vmem:[#allocation3 + $0x84] sm:$0x1]
      %v548 = vsel %vm513, 0, %v547
      %549 = vst [vmem:[#allocation3 + $0x84] sm:$0x1] %v548
      %v550 = vld [vmem:[#allocation3 + $0x90] sm:$0x1]
      %v551 = vsel %vm513, 0, %v550
      %552 = vst [vmem:[#allocation3 + $0x90] sm:$0x1] %v551
      %v553 = vld [vmem:[#allocation3 + $0x9c] sm:$0x1]
      %v554 = vsel %vm513, 0, %v553
      %555 = vst [vmem:[#allocation3 + $0x9c] sm:$0x1] %v554
      %v556 = vld [vmem:[#allocation3 + $0xa8] sm:$0x1]
      %v557 = vsel %vm513, 0, %v556
      %558 = vst [vmem:[#allocation3 + $0xa8] sm:$0x1] %v557
      %v559 = vld [vmem:[#allocation3 + $0xb4] sm:$0x1]
      %v560 = vsel %vm513, 0, %v559
      %561 = vst [vmem:[#allocation3 + $0xb4] sm:$0x1] %v560
      %v562 = vld [vmem:[#allocation3 + $0xc0] sm:$0x1]
      %v563 = vsel %vm513, 0, %v562
      %564 = vst [vmem:[#allocation3 + $0xc0] sm:$0x1] %v563
      %v565 = vld [vmem:[#allocation3 + $0xcc] sm:$0x1]
      %v566 = vsel %vm513, 0, %v565
      %567 = vst [vmem:[#allocation3 + $0xcc] sm:$0x1] %v566
      %vm568 = vmand %vm512, %vm447
      %v569 = vld [vmem:[#allocation3 + $0x8] sm:$0x1]
      %v570 = vsel %vm568, 0, %v569
      %571 = vst [vmem:[#allocation3 + $0x8] sm:$0x1] %v570
      %v572 = vld [vmem:[#allocation3 + $0x14] sm:$0x1]
      %v573 = vsel %vm568, 0, %v572
      %574 = vst [vmem:[#allocation3 + $0x14] sm:$0x1] %v573
      %v575 = vld [vmem:[#allocation3 + $0x20] sm:$0x1]
      %v576 = vsel %vm568, 0, %v575
      %577 = vst [vmem:[#allocation3 + $0x20] sm:$0x1] %v576
      %v578 = vld [vmem:[#allocation3 + $0x2c] sm:$0x1]
      %v579 = vsel %vm568, 0, %v578
      %580 = vst [vmem:[#allocation3 + $0x2c] sm:$0x1] %v579
      %v581 = vld [vmem:[#allocation3 + $0x38] sm:$0x1]
      %v582 = vsel %vm568, 0, %v581
      %583 = vst [vmem:[#allocation3 + $0x38] sm:$0x1] %v582
      %v584 = vld [vmem:[#allocation3 + $0x44] sm:$0x1]
      %v585 = vsel %vm568, 0, %v584
      %586 = vst [vmem:[#allocation3 + $0x44] sm:$0x1] %v585
      %v587 = vld [vmem:[#allocation3 + $0x50] sm:$0x1]
      %v588 = vsel %vm568, 0, %v587
      %589 = vst [vmem:[#allocation3 + $0x50] sm:$0x1] %v588
      %v590 = vld [vmem:[#allocation3 + $0x5c] sm:$0x1]
      %v591 = vsel %vm568, 0, %v590
      %592 = vst [vmem:[#allocation3 + $0x5c] sm:$0x1] %v591
      %v593 = vld [vmem:[#allocation3 + $0x68] sm:$0x1]
      %v594 = vsel %vm568, 0, %v593
      %595 = vst [vmem:[#allocation3 + $0x68] sm:$0x1] %v594
      %v596 = vld [vmem:[#allocation3 + $0x74] sm:$0x1]
      %v597 = vsel %vm568, 0, %v596
      %598 = vst [vmem:[#allocation3 + $0x74] sm:$0x1] %v597
      %v599 = vld [vmem:[#allocation3 + $0x80] sm:$0x1]
      %v600 = vsel %vm568, 0, %v599
      %601 = vst [vmem:[#allocation3 + $0x80] sm:$0x1] %v600
      %v602 = vld [vmem:[#allocation3 + $0x8c] sm:$0x1]
      %v603 = vsel %vm568, 0, %v602
      %604 = vst [vmem:[#allocation3 + $0x8c] sm:$0x1] %v603
      %v605 = vld [vmem:[#allocation3 + $0x98] sm:$0x1]
      %v606 = vsel %vm568, 0, %v605
      %607 = vst [vmem:[#allocation3 + $0x98] sm:$0x1] %v606
      %v608 = vld [vmem:[#allocation3 + $0xa4] sm:$0x1]
      %v609 = vsel %vm568, 0, %v608
      %610 = vst [vmem:[#allocation3 + $0xa4] sm:$0x1] %v609
      %v611 = vld [vmem:[#allocation3 + $0xb0] sm:$0x1]
      %v612 = vsel %vm568, 0, %v611
      %613 = vst [vmem:[#allocation3 + $0xb0] sm:$0x1] %v612
      %v614 = vld [vmem:[#allocation3 + $0xbc] sm:$0x1]
      %v615 = vsel %vm568, 0, %v614
      %616 = vst [vmem:[#allocation3 + $0xbc] sm:$0x1] %v615
      %v617 = vld [vmem:[#allocation3 + $0xc8] sm:$0x1]
      %v618 = vsel %vm568, 0, %v617
      %619 = vst [vmem:[#allocation3 + $0xc8] sm:$0x1] %v618
      %v620 = vld [vmem:[#allocation3 + $0xd4] sm:$0x1]
      %v621 = vsel %vm568, 0, %v620
      %622 = vst [vmem:[#allocation3 + $0xd4] sm:$0x1] %v621
      %v623 = vld [vmem:[%s369] sm:$0xff]
      %v624 = vld [vmem:[%s369 + $0x8] sm:$0xff]
      %v625 = vld [vmem:[%s369 + $0x10] sm:$0xff]
      %v626 = vld [vmem:[%s369 + $0x18] sm:$0xff]
      %v627 = vld [vmem:[%s369 + $0x20] sm:$0xff]
      %v628 = vld [vmem:[%s369 + $0x28] sm:$0xff]
      %v629 = vld [vmem:[%s369 + $0x30] sm:$0xff]
      %v630 = vld [vmem:[%s369 + $0x38] sm:$0xff]
      %v631 = vld [vmem:[%s369 + $0x40] sm:$0xff]
      %v632 = vld [vmem:[%s369 + $0x48] sm:$0xff]
      %v633 = vld [vmem:[%s369 + $0x50] sm:$0xff]
      %v634 = vld [vmem:[%s369 + $0x58] sm:$0xff]
      %v635 = vld [vmem:[%s369 + $0x60] sm:$0xff]
      %v636 = vld [vmem:[%s369 + $0x68] sm:$0xff]
      %v637 = vld [vmem:[%s369 + $0x70] sm:$0xff]
      %v638 = vld [vmem:[%s369 + $0x78] sm:$0xff]
      %v639 = vld [vmem:[%s369 + $0x80] sm:$0xff]
      %v640 = vld [vmem:[%s369 + $0x88] sm:$0xff]
      %v641 = vld [vmem:[%s369 + $0x90] sm:$0xff]
      %v642 = vld [vmem:[%s369 + $0x98] sm:$0xff]
      %v643 = vld [vmem:[%s369 + $0xa0] sm:$0xff]
      %v644 = vld [vmem:[%s369 + $0xa8] sm:$0xff]
      %v645 = vld [vmem:[%s369 + $0xb0] sm:$0xff]
      %v646 = vld [vmem:[%s369 + $0xb8] sm:$0xff]
      %v647 = vld [vmem:[%s369 + $0xc0] sm:$0xff]
      %v648 = vld [vmem:[%s369 + $0xc8] sm:$0xff]
      %v649 = vld [vmem:[%s369 + $0xd0] sm:$0xff]
      %v650 = vld [vmem:[%s369 + $0xd8] sm:$0xff]
      %v651 = vld [vmem:[%s369 + $0xe0] sm:$0xff]
      %v652 = vld [vmem:[%s369 + $0xe8] sm:$0xff]
      %v653 = vld [vmem:[%s369 + $0xf0] sm:$0xff]
      %v654 = vld [vmem:[%s369 + $0xf8] sm:$0xff]
      %v655 = vld [vmem:[%s374] sm:$0xff]
      %v656 = vld [vmem:[%s374 + $0x8] sm:$0xff]
      %v657 = vld [vmem:[%s374 + $0x10] sm:$0xff]
      %v658 = vld [vmem:[%s374 + $0x18] sm:$0xff]
      %v659 = vld [vmem:[%s374 + $0x20] sm:$0xff]
      %v660 = vld [vmem:[%s374 + $0x28] sm:$0xff]
      %v661 = vld [vmem:[%s374 + $0x30] sm:$0xff]
      %v662 = vld [vmem:[%s374 + $0x38] sm:$0xff]
      %v663 = vld [vmem:[%s374 + $0x40] sm:$0xff]
      %v664 = vld [vmem:[%s374 + $0x48] sm:$0xff]
      %v665 = vld [vmem:[%s374 + $0x50] sm:$0xff]
      %v666 = vld [vmem:[%s374 + $0x58] sm:$0xff]
      %v667 = vld [vmem:[%s374 + $0x60] sm:$0xff]
      %v668 = vld [vmem:[%s374 + $0x68] sm:$0xff]
      %v669 = vld [vmem:[%s374 + $0x70] sm:$0xff]
      %v670 = vld [vmem:[%s374 + $0x78] sm:$0xff]
      %v671 = vld [vmem:[%s374 + $0x80] sm:$0xff]
      %v672 = vld [vmem:[%s374 + $0x88] sm:$0xff]
      %v673 = vld [vmem:[%s374 + $0x90] sm:$0xff]
      %v674 = vld [vmem:[%s374 + $0x98] sm:$0xff]
      %v675 = vld [vmem:[%s374 + $0xa0] sm:$0xff]
      %v676 = vld [vmem:[%s374 + $0xa8] sm:$0xff]
      %v677 = vld [vmem:[%s374 + $0xb0] sm:$0xff]
      %v678 = vld [vmem:[%s374 + $0xb8] sm:$0xff]
      %v679 = vld [vmem:[%s374 + $0xc0] sm:$0xff]
      %v680 = vld [vmem:[%s374 + $0xc8] sm:$0xff]
      %v681 = vld [vmem:[%s374 + $0xd0] sm:$0xff]
      %v682 = vld [vmem:[%s374 + $0xd8] sm:$0xff]
      %v683 = vld [vmem:[%s374 + $0xe0] sm:$0xff]
      %v684 = vld [vmem:[%s374 + $0xe8] sm:$0xff]
      %v685 = vld [vmem:[%s374 + $0xf0] sm:$0xff]
      %v686 = vld [vmem:[%s374 + $0xf8] sm:$0xff]
      %719 = vrot.lane.b32.xlu0 %v655, 8
      %v720 = vpop.permute.xlu0 %719
      %721 = vrot.lane.b32.xlu0 %v656, 8
      %v722 = vpop.permute.xlu0 %721
      %723 = vrot.lane.b32.xlu0 %v657, 8
      %v724 = vpop.permute.xlu0 %723
      %725 = vrot.lane.b32.xlu0 %v658, 8
      %v726 = vpop.permute.xlu0 %725
      %727 = vrot.lane.b32.xlu0 %v659, 8
      %v728 = vpop.permute.xlu0 %727
      %729 = vrot.lane.b32.xlu0 %v660, 8
      %v730 = vpop.permute.xlu0 %729
      %731 = vrot.lane.b32.xlu0 %v661, 8
      %v732 = vpop.permute.xlu0 %731
      %733 = vrot.lane.b32.xlu0 %v662, 8
      %v734 = vpop.permute.xlu0 %733
      %735 = vrot.lane.b32.xlu0 %v663, 8
      %v736 = vpop.permute.xlu0 %735
      %737 = vrot.lane.b32.xlu0 %v664, 8
      %v738 = vpop.permute.xlu0 %737
      %739 = vrot.lane.b32.xlu0 %v665, 8
      %v740 = vpop.permute.xlu0 %739
      %741 = vrot.lane.b32.xlu0 %v666, 8
      %v742 = vpop.permute.xlu0 %741
      %743 = vrot.lane.b32.xlu0 %v667, 8
      %v744 = vpop.permute.xlu0 %743
      %745 = vrot.lane.b32.xlu0 %v668, 8
      %v746 = vpop.permute.xlu0 %745
      %747 = vrot.lane.b32.xlu0 %v669, 8
      %v748 = vpop.permute.xlu0 %747
      %749 = vrot.lane.b32.xlu0 %v670, 8
      %v750 = vpop.permute.xlu0 %749
      %751 = vrot.lane.b32.xlu0 %v671, 8
      %v752 = vpop.permute.xlu0 %751
      %753 = vrot.lane.b32.xlu0 %v672, 8
      %v754 = vpop.permute.xlu0 %753
      %755 = vrot.lane.b32.xlu0 %v673, 8
      %v756 = vpop.permute.xlu0 %755
      %757 = vrot.lane.b32.xlu0 %v674, 8
      %v758 = vpop.permute.xlu0 %757
      %759 = vrot.lane.b32.xlu0 %v675, 8
      %v760 = vpop.permute.xlu0 %759
      %761 = vrot.lane.b32.xlu0 %v676, 8
      %v762 = vpop.permute.xlu0 %761
      %763 = vrot.lane.b32.xlu0 %v677, 8
      %v764 = vpop.permute.xlu0 %763
      %765 = vrot.lane.b32.xlu0 %v678, 8
      %v766 = vpop.permute.xlu0 %765
      %767 = vrot.lane.b32.xlu0 %v679, 8
      %v768 = vpop.permute.xlu0 %767
      %769 = vrot.lane.b32.xlu0 %v680, 8
      %v770 = vpop.permute.xlu0 %769
      %771 = vrot.lane.b32.xlu0 %v681, 8
      %v772 = vpop.permute.xlu0 %771
      %773 = vrot.lane.b32.xlu0 %v682, 8
      %v774 = vpop.permute.xlu0 %773
      %775 = vrot.lane.b32.xlu0 %v683, 8
      %v776 = vpop.permute.xlu0 %775
      %777 = vrot.lane.b32.xlu0 %v684, 8
      %v778 = vpop.permute.xlu0 %777
      %779 = vrot.lane.b32.xlu0 %v685, 8
      %v780 = vpop.permute.xlu0 %779
      %781 = vrot.lane.b32.xlu0 %v686, 8
      %v782 = vpop.permute.xlu0 %781
      %vm815 = vcmask 64512
      %v816 = vsel %vm815, %v623, %v720
      %v817 = vsel %vm815, %v624, %v722
      %v818 = vsel %vm815, %v625, %v724
      %v819 = vsel %vm815, %v626, %v726
      %v820 = vsel %vm815, %v627, %v728
      %v821 = vsel %vm815, %v628, %v730
      %v822 = vsel %vm815, %v629, %v732
      %v823 = vsel %vm815, %v630, %v734
      %v824 = vsel %vm815, %v631, %v736
      %v825 = vsel %vm815, %v632, %v738
      %v826 = vsel %vm815, %v633, %v740
      %v827 = vsel %vm815, %v634, %v742
      %v828 = vsel %vm815, %v635, %v744
      %v829 = vsel %vm815, %v636, %v746
      %v830 = vsel %vm815, %v637, %v748
      %v831 = vsel %vm815, %v638, %v750
      %v832 = vsel %vm815, %v639, %v752
      %v833 = vsel %vm815, %v640, %v754
      %v834 = vsel %vm815, %v641, %v756
      %v835 = vsel %vm815, %v642, %v758
      %v836 = vsel %vm815, %v643, %v760
      %v837 = vsel %vm815, %v644, %v762
      %v838 = vsel %vm815, %v645, %v764
      %v839 = vsel %vm815, %v646, %v766
      %v840 = vsel %vm815, %v647, %v768
      %v841 = vsel %vm815, %v648, %v770
      %v842 = vsel %vm815, %v649, %v772
      %v843 = vsel %vm815, %v650, %v774
      %v844 = vsel %vm815, %v651, %v776
      %v845 = vsel %vm815, %v652, %v778
      %v846 = vsel %vm815, %v653, %v780
      %v847 = vsel %vm815, %v654, %v782
      %v848 = vld [vmem:[%s2] sm:$0xff]
      %v849 = vld [vmem:[%s2 + $0x8] sm:$0xff]
      %vm850 = vcmask 130048
      %v851 = vsel %vm850, %v816, 0.0
      %v852 = vsel %vm850, %v817, 0.0
      %v853 = vadd.f32 %v851, %v852
      %v854 = vsel %vm850, %v818, 0.0
      %v855 = vadd.f32 %v853, %v854
      %v856 = vsel %vm850, %v819, 0.0
      %v857 = vadd.f32 %v855, %v856
      %v858 = vsel %vm850, %v820, 0.0
      %v859 = vadd.f32 %v857, %v858
      %v860 = vsel %vm850, %v821, 0.0
      %v861 = vadd.f32 %v859, %v860
      %v862 = vsel %vm850, %v822, 0.0
      %v863 = vadd.f32 %v861, %v862
      %v864 = vsel %vm850, %v823, 0.0
      %v865 = vadd.f32 %v863, %v864
      %v866 = vsel %vm850, %v824, 0.0
      %v867 = vadd.f32 %v865, %v866
      %v868 = vsel %vm850, %v825, 0.0
      %v869 = vadd.f32 %v867, %v868
      %v870 = vsel %vm850, %v826, 0.0
      %v871 = vadd.f32 %v869, %v870
      %v872 = vsel %vm850, %v827, 0.0
      %v873 = vadd.f32 %v871, %v872
      %v874 = vsel %vm850, %v828, 0.0
      %v875 = vadd.f32 %v873, %v874
      %v876 = vsel %vm850, %v829, 0.0
      %v877 = vadd.f32 %v875, %v876
      %v878 = vsel %vm850, %v830, 0.0
      %v879 = vadd.f32 %v877, %v878
      %v880 = vsel %vm850, %v831, 0.0
      %v881 = vadd.f32 %v879, %v880
      %v882 = vsel %vm850, %v832, 0.0
      %v883 = vadd.f32 %v881, %v882
      %v884 = vsel %vm850, %v833, 0.0
      %v885 = vadd.f32 %v883, %v884
      %v886 = vsel %vm850, %v834, 0.0
      %v887 = vadd.f32 %v885, %v886
      %v888 = vsel %vm850, %v835, 0.0
      %v889 = vadd.f32 %v887, %v888
      %v890 = vsel %vm850, %v836, 0.0
      %v891 = vadd.f32 %v889, %v890
      %v892 = vsel %vm850, %v837, 0.0
      %v893 = vadd.f32 %v891, %v892
      %v894 = vsel %vm850, %v838, 0.0
      %v895 = vadd.f32 %v893, %v894
      %v896 = vsel %vm850, %v839, 0.0
      %v897 = vadd.f32 %v895, %v896
      %v898 = vsel %vm850, %v840, 0.0
      %v899 = vadd.f32 %v897, %v898
      %v900 = vsel %vm850, %v841, 0.0
      %v901 = vadd.f32 %v899, %v900
      %v902 = vsel %vm850, %v842, 0.0
      %v903 = vadd.f32 %v901, %v902
      %v904 = vsel %vm850, %v843, 0.0
      %v905 = vadd.f32 %v903, %v904
      %v906 = vsel %vm850, %v844, 0.0
      %v907 = vadd.f32 %v905, %v906
      %v908 = vsel %vm850, %v845, 0.0
      %v909 = vadd.f32 %v907, %v908
      %v910 = vsel %vm850, %v846, 0.0
      %v911 = vadd.f32 %v909, %v910
      %v912 = vsel %vm850, %v847, 0.0
      %v913 = vadd.f32 %v911, %v912
      %v914 = vrot.slane %v913, 4
      %v915 = vadd.f32 %v913, %v914
      %v916 = vrot.slane %v915, 2
      %v917 = vadd.f32 %v915, %v916
      %v918 = vrot.slane %v917, 1
      %v919 = vadd.f32 %v917, %v918
      %v921 = vsel %vm850, %v919, 0
      %923 = vmatprep.subr.mxu0 0.0
      %924 = vmatpush1.msra.mxu0 %v848
      %925 = vmatprep.subr.mxu0 0.0
      %926 = vmatpush1.msra.mxu0 %v849
      %927 = vmatprep.subr.mxu0 0.0
      %928 = vmatpush1.msra.mxu0 0.0
      %929 = vmatprep.subr.mxu0 0.0
      %930 = vmatpush1.msra.mxu0 0.0
      %931 = vmatprep.subr.mxu0 0.0
      %932 = vmatpush1.msra.mxu0 0.0
      %933 = vmatprep.subr.mxu0 0.0
      %934 = vmatpush1.msra.mxu0 0.0
      %935 = vmatprep.subr.mxu0 0.0
      %936 = vmatpush1.msra.mxu0 0.0
      %937 = vmatprep.subr.mxu0 0.0
      %938 = vmatpush1.msra.mxu0 0.0
      %939 = vmatprep.subr.mxu0 0.0
      %940 = vmatpush1.msra.mxu0 0.0
      %941 = vmatprep.subr.mxu0 0.0
      %942 = vmatpush1.msra.mxu0 0.0
      %943 = vmatprep.subr.mxu0 0.0
      %944 = vmatpush1.msra.mxu0 0.0
      %945 = vmatprep.subr.mxu0 0.0
      %946 = vmatpush1.msra.mxu0 0.0
      %947 = vmatprep.subr.mxu0 0.0
      %948 = vmatpush1.msra.mxu0 0.0
      %949 = vmatprep.subr.mxu0 0.0
      %950 = vmatpush1.msra.mxu0 0.0
      %951 = vmatprep.subr.mxu0 0.0
      %952 = vmatpush1.msra.mxu0 0.0
      %953 = vmatprep.subr.mxu0 0.0
      %954 = vmatpush1.msra.mxu0 0.0
      %955 = vmatprep.subr.mxu0 0.0
      %956 = vmatpush1.msra.mxu0 0.0
      %957 = vmatprep.subr.mxu0 0.0
      %958 = vmatpush1.msra.mxu0 0.0
      %959 = vmatprep.subr.mxu0 0.0
      %960 = vmatpush1.msra.mxu0 0.0
      %961 = vmatprep.subr.mxu0 0.0
      %962 = vmatpush1.msra.mxu0 0.0
      %963 = vmatprep.subr.mxu0 0.0
      %964 = vmatpush1.msra.mxu0 0.0
      %965 = vmatprep.subr.mxu0 0.0
      %966 = vmatpush1.msra.mxu0 0.0
      %967 = vmatprep.subr.mxu0 0.0
      %968 = vmatpush1.msra.mxu0 0.0
      %969 = vmatprep.subr.mxu0 0.0
      %970 = vmatpush1.msra.mxu0 0.0
      %971 = vmatprep.subr.mxu0 0.0
      %972 = vmatpush1.msra.mxu0 0.0
      %973 = vmatprep.subr.mxu0 0.0
      %974 = vmatpush1.msra.mxu0 0.0
      %975 = vmatprep.subr.mxu0 0.0
      %976 = vmatpush1.msra.mxu0 0.0
      %977 = vmatprep.subr.mxu0 0.0
      %978 = vmatpush1.msra.mxu0 0.0
      %979 = vmatprep.subr.mxu0 0.0
      %980 = vmatpush1.msra.mxu0 0.0
      %981 = vmatprep.subr.mxu0 0.0
      %982 = vmatpush1.msra.mxu0 0.0
      %983 = vmatprep.subr.mxu0 0.0
      %984 = vmatpush1.msra.mxu0 0.0
      %985 = vmatprep.subr.mxu0 0.0
      %986 = vmatpush1.msra.mxu0 0.0
      %987 = vmatprep.mubr.f32.mxu0 0.0
      %988 = vmatmul.mubr.f32.gmra.mrb[0].mxu0 %v921
      %v989 = vpop.f32.mrb[0].mxu0
      %v990 = vadd.f32 0.0, %v989
      %v991 = vpop.f32.mrb[0].mxu0
      %992 = vdwg.mxu0
      %v993 = vlaneseq
      %v994 = vshrl.u32 %v993, 7
      %v995 = vsub.s32 0, %v994
      %v996 = vrot.slane %v990, %v995
      %v997 = vsub.f32 %v816, %v996
      %v998 = vsub.f32 %v817, %v996
      %v999 = vsub.f32 %v818, %v996
      %v1000 = vsub.f32 %v819, %v996
      %v1001 = vsub.f32 %v820, %v996
      %v1002 = vsub.f32 %v821, %v996
      %v1003 = vsub.f32 %v822, %v996
      %v1004 = vsub.f32 %v823, %v996
      %v1005 = vsub.f32 %v824, %v996
      %v1006 = vsub.f32 %v825, %v996
      %v1007 = vsub.f32 %v826, %v996
      %v1008 = vsub.f32 %v827, %v996
      %v1009 = vsub.f32 %v828, %v996
      %v1010 = vsub.f32 %v829, %v996
      %v1011 = vsub.f32 %v830, %v996
      %v1012 = vsub.f32 %v831, %v996
      %v1013 = vsub.f32 %v832, %v996
      %v1014 = vsub.f32 %v833, %v996
      %v1015 = vsub.f32 %v834, %v996
      %v1016 = vsub.f32 %v835, %v996
      %v1017 = vsub.f32 %v836, %v996
      %v1018 = vsub.f32 %v837, %v996
      %v1019 = vsub.f32 %v838, %v996
      %v1020 = vsub.f32 %v839, %v996
      %v1021 = vsub.f32 %v840, %v996
      %v1022 = vsub.f32 %v841, %v996
      %v1023 = vsub.f32 %v842, %v996
      %v1024 = vsub.f32 %v843, %v996
      %v1025 = vsub.f32 %v844, %v996
      %v1026 = vsub.f32 %v845, %v996
      %v1027 = vsub.f32 %v846, %v996
      %v1028 = vsub.f32 %v847, %v996
      %v1029 = vmul.f32 %v997, %v997
      %v1030 = vmul.f32 %v998, %v998
      %v1031 = vmul.f32 %v999, %v999
      %v1032 = vmul.f32 %v1000, %v1000
      %v1033 = vmul.f32 %v1001, %v1001
      %v1034 = vmul.f32 %v1002, %v1002
      %v1035 = vmul.f32 %v1003, %v1003
      %v1036 = vmul.f32 %v1004, %v1004
      %v1037 = vmul.f32 %v1005, %v1005
      %v1038 = vmul.f32 %v1006, %v1006
      %v1039 = vmul.f32 %v1007, %v1007
      %v1040 = vmul.f32 %v1008, %v1008
      %v1041 = vmul.f32 %v1009, %v1009
      %v1042 = vmul.f32 %v1010, %v1010
      %v1043 = vmul.f32 %v1011, %v1011
      %v1044 = vmul.f32 %v1012, %v1012
      %v1045 = vmul.f32 %v1013, %v1013
      %v1046 = vmul.f32 %v1014, %v1014
      %v1047 = vmul.f32 %v1015, %v1015
      %v1048 = vmul.f32 %v1016, %v1016
      %v1049 = vmul.f32 %v1017, %v1017
      %v1050 = vmul.f32 %v1018, %v1018
      %v1051 = vmul.f32 %v1019, %v1019
      %v1052 = vmul.f32 %v1020, %v1020
      %v1053 = vmul.f32 %v1021, %v1021
      %v1054 = vmul.f32 %v1022, %v1022
      %v1055 = vmul.f32 %v1023, %v1023
      %v1056 = vmul.f32 %v1024, %v1024
      %v1057 = vmul.f32 %v1025, %v1025
      %v1058 = vmul.f32 %v1026, %v1026
      %v1059 = vmul.f32 %v1027, %v1027
      %v1060 = vmul.f32 %v1028, %v1028
      %v1061 = vsel %vm850, %v1029, 0.0
      %v1062 = vsel %vm850, %v1030, 0.0
      %v1063 = vadd.f32 %v1061, %v1062
      %v1064 = vsel %vm850, %v1031, 0.0
      %v1065 = vadd.f32 %v1063, %v1064
      %v1066 = vsel %vm850, %v1032, 0.0
      %v1067 = vadd.f32 %v1065, %v1066
      %v1068 = vsel %vm850, %v1033, 0.0
      %v1069 = vadd.f32 %v1067, %v1068
      %v1070 = vsel %vm850, %v1034, 0.0
      %v1071 = vadd.f32 %v1069, %v1070
      %v1072 = vsel %vm850, %v1035, 0.0
      %v1073 = vadd.f32 %v1071, %v1072
      %v1074 = vsel %vm850, %v1036, 0.0
      %v1075 = vadd.f32 %v1073, %v1074
      %v1076 = vsel %vm850, %v1037, 0.0
      %v1077 = vadd.f32 %v1075, %v1076
      %v1078 = vsel %vm850, %v1038, 0.0
      %v1079 = vadd.f32 %v1077, %v1078
      %v1080 = vsel %vm850, %v1039, 0.0
      %v1081 = vadd.f32 %v1079, %v1080
      %v1082 = vsel %vm850, %v1040, 0.0
      %v1083 = vadd.f32 %v1081, %v1082
      %v1084 = vsel %vm850, %v1041, 0.0
      %v1085 = vadd.f32 %v1083, %v1084
      %v1086 = vsel %vm850, %v1042, 0.0
      %v1087 = vadd.f32 %v1085, %v1086
      %v1088 = vsel %vm850, %v1043, 0.0
      %v1089 = vadd.f32 %v1087, %v1088
      %v1090 = vsel %vm850, %v1044, 0.0
      %v1091 = vadd.f32 %v1089, %v1090
      %v1092 = vsel %vm850, %v1045, 0.0
      %v1093 = vadd.f32 %v1091, %v1092
      %v1094 = vsel %vm850, %v1046, 0.0
      %v1095 = vadd.f32 %v1093, %v1094
      %v1096 = vsel %vm850, %v1047, 0.0
      %v1097 = vadd.f32 %v1095, %v1096
      %v1098 = vsel %vm850, %v1048, 0.0
      %v1099 = vadd.f32 %v1097, %v1098
      %v1100 = vsel %vm850, %v1049, 0.0
      %v1101 = vadd.f32 %v1099, %v1100
      %v1102 = vsel %vm850, %v1050, 0.0
      %v1103 = vadd.f32 %v1101, %v1102
      %v1104 = vsel %vm850, %v1051, 0.0
      %v1105 = vadd.f32 %v1103, %v1104
      %v1106 = vsel %vm850, %v1052, 0.0
      %v1107 = vadd.f32 %v1105, %v1106
      %v1108 = vsel %vm850, %v1053, 0.0
      %v1109 = vadd.f32 %v1107, %v1108
      %v1110 = vsel %vm850, %v1054, 0.0
      %v1111 = vadd.f32 %v1109, %v1110
      %v1112 = vsel %vm850, %v1055, 0.0
      %v1113 = vadd.f32 %v1111, %v1112
      %v1114 = vsel %vm850, %v1056, 0.0
      %v1115 = vadd.f32 %v1113, %v1114
      %v1116 = vsel %vm850, %v1057, 0.0
      %v1117 = vadd.f32 %v1115, %v1116
      %v1118 = vsel %vm850, %v1058, 0.0
      %v1119 = vadd.f32 %v1117, %v1118
      %v1120 = vsel %vm850, %v1059, 0.0
      %v1121 = vadd.f32 %v1119, %v1120
      %v1122 = vsel %vm850, %v1060, 0.0
      %v1123 = vadd.f32 %v1121, %v1122
      %v1124 = vrot.slane %v1123, 4
      %v1125 = vadd.f32 %v1123, %v1124
      %v1126 = vrot.slane %v1125, 2
      %v1127 = vadd.f32 %v1125, %v1126
      %v1128 = vrot.slane %v1127, 1
      %v1129 = vadd.f32 %v1127, %v1128
      %v1131 = vsel %vm850, %v1129, 0
      %1133 = vmatprep.subr.mxu0 0.0
      %1134 = vmatpush1.msra.mxu0 %v848
      %1135 = vmatprep.subr.mxu0 0.0
      %1136 = vmatpush1.msra.mxu0 %v849
      %1137 = vmatprep.subr.mxu0 0.0
      %1138 = vmatpush1.msra.mxu0 0.0
      %1139 = vmatprep.subr.mxu0 0.0
      %1140 = vmatpush1.msra.mxu0 0.0
      %1141 = vmatprep.subr.mxu0 0.0
      %1142 = vmatpush1.msra.mxu0 0.0
      %1143 = vmatprep.subr.mxu0 0.0
      %1144 = vmatpush1.msra.mxu0 0.0
      %1145 = vmatprep.subr.mxu0 0.0
      %1146 = vmatpush1.msra.mxu0 0.0
      %1147 = vmatprep.subr.mxu0 0.0
      %1148 = vmatpush1.msra.mxu0 0.0
      %1149 = vmatprep.subr.mxu0 0.0
      %1150 = vmatpush1.msra.mxu0 0.0
      %1151 = vmatprep.subr.mxu0 0.0
      %1152 = vmatpush1.msra.mxu0 0.0
      %1153 = vmatprep.subr.mxu0 0.0
      %1154 = vmatpush1.msra.mxu0 0.0
      %1155 = vmatprep.subr.mxu0 0.0
      %1156 = vmatpush1.msra.mxu0 0.0
      %1157 = vmatprep.subr.mxu0 0.0
      %1158 = vmatpush1.msra.mxu0 0.0
      %1159 = vmatprep.subr.mxu0 0.0
      %1160 = vmatpush1.msra.mxu0 0.0
      %1161 = vmatprep.subr.mxu0 0.0
      %1162 = vmatpush1.msra.mxu0 0.0
      %1163 = vmatprep.subr.mxu0 0.0
      %1164 = vmatpush1.msra.mxu0 0.0
      %1165 = vmatprep.subr.mxu0 0.0
      %1166 = vmatpush1.msra.mxu0 0.0
      %1167 = vmatprep.subr.mxu0 0.0
      %1168 = vmatpush1.msra.mxu0 0.0
      %1169 = vmatprep.subr.mxu0 0.0
      %1170 = vmatpush1.msra.mxu0 0.0
      %1171 = vmatprep.subr.mxu0 0.0
      %1172 = vmatpush1.msra.mxu0 0.0
      %1173 = vmatprep.subr.mxu0 0.0
      %1174 = vmatpush1.msra.mxu0 0.0
      %1175 = vmatprep.subr.mxu0 0.0
      %1176 = vmatpush1.msra.mxu0 0.0
      %1177 = vmatprep.subr.mxu0 0.0
      %1178 = vmatpush1.msra.mxu0 0.0
      %1179 = vmatprep.subr.mxu0 0.0
      %1180 = vmatpush1.msra.mxu0 0.0
      %1181 = vmatprep.subr.mxu0 0.0
      %1182 = vmatpush1.msra.mxu0 0.0
      %1183 = vmatprep.subr.mxu0 0.0
      %1184 = vmatpush1.msra.mxu0 0.0
      %1185 = vmatprep.subr.mxu0 0.0
      %1186 = vmatpush1.msra.mxu0 0.0
      %1187 = vmatprep.subr.mxu0 0.0
      %1188 = vmatpush1.msra.mxu0 0.0
      %1189 = vmatprep.subr.mxu0 0.0
      %1190 = vmatpush1.msra.mxu0 0.0
      %1191 = vmatprep.subr.mxu0 0.0
      %1192 = vmatpush1.msra.mxu0 0.0
      %1193 = vmatprep.subr.mxu0 0.0
      %1194 = vmatpush1.msra.mxu0 0.0
      %1195 = vmatprep.subr.mxu0 0.0
      %1196 = vmatpush1.msra.mxu0 0.0
      %1197 = vmatprep.mubr.f32.mxu0 0.0
      %1198 = vmatmul.mubr.f32.gmra.mrb[0].mxu0 %v1131
      %v1199 = vpop.f32.mrb[0].mxu0
      %v1200 = vadd.f32 1e-05, %v1199
      %v1201 = vpop.f32.mrb[0].mxu0
      %1202 = vdwg.mxu0
      %v1203 = vrsqrt.pop %v1200
      %v1204 = vld [vmem:[%s3] sm:$0x1]
      %v1205 = vmul.f32 %v1203, %v1204
      %v1206 = vlaneseq
      %v1207 = vshrl.u32 %v1206, 7
      %v1208 = vsub.s32 0, %v1207
      %v1209 = vrot.slane %v1205, %v1208
      %v1210 = vmul.f32 %v997, %v1209
      %v1211 = vmul.f32 %v998, %v1209
      %v1212 = vmul.f32 %v999, %v1209
      %v1213 = vmul.f32 %v1000, %v1209
      %v1214 = vmul.f32 %v1001, %v1209
      %v1215 = vmul.f32 %v1002, %v1209
      %v1216 = vmul.f32 %v1003, %v1209
      %v1217 = vmul.f32 %v1004, %v1209
      %v1218 = vmul.f32 %v1005, %v1209
      %v1219 = vmul.f32 %v1006, %v1209
      %v1220 = vmul.f32 %v1007, %v1209
      %v1221 = vmul.f32 %v1008, %v1209
      %v1222 = vmul.f32 %v1009, %v1209
      %v1223 = vmul.f32 %v1010, %v1209
      %v1224 = vmul.f32 %v1011, %v1209
      %v1225 = vmul.f32 %v1012, %v1209
      %v1226 = vmul.f32 %v1013, %v1209
      %v1227 = vmul.f32 %v1014, %v1209
      %v1228 = vmul.f32 %v1015, %v1209
      %v1229 = vmul.f32 %v1016, %v1209
      %v1230 = vmul.f32 %v1017, %v1209
      %v1231 = vmul.f32 %v1018, %v1209
      %v1232 = vmul.f32 %v1019, %v1209
      %v1233 = vmul.f32 %v1020, %v1209
      %v1234 = vmul.f32 %v1021, %v1209
      %v1235 = vmul.f32 %v1022, %v1209
      %v1236 = vmul.f32 %v1023, %v1209
      %v1237 = vmul.f32 %v1024, %v1209
      %v1238 = vmul.f32 %v1025, %v1209
      %v1239 = vmul.f32 %v1026, %v1209
      %v1240 = vmul.f32 %v1027, %v1209
      %v1241 = vmul.f32 %v1028, %v1209
      %v1242 = vld [vmem:[%s4] sm:$0x1]
      %v1244 = vlaneseq
      %v1245 = vshrl.u32 %v1244, 7
      %v1246 = vsub.s32 0, %v1245
      %v1247 = vrot.slane %v1242, %v1246
      %v1249 = vadd.f32 %v1210, %v1247
      %v1250 = vadd.f32 %v1211, %v1247
      %v1251 = vadd.f32 %v1212, %v1247
      %v1252 = vadd.f32 %v1213, %v1247
      %v1253 = vadd.f32 %v1214, %v1247
      %v1254 = vadd.f32 %v1215, %v1247
      %v1255 = vadd.f32 %v1216, %v1247
      %v1256 = vadd.f32 %v1217, %v1247
      %v1257 = vadd.f32 %v1218, %v1247
      %v1258 = vadd.f32 %v1219, %v1247
      %v1259 = vadd.f32 %v1220, %v1247
      %v1260 = vadd.f32 %v1221, %v1247
      %v1261 = vadd.f32 %v1222, %v1247
      %v1262 = vadd.f32 %v1223, %v1247
      %v1263 = vadd.f32 %v1224, %v1247
      %v1264 = vadd.f32 %v1225, %v1247
      %v1265 = vadd.f32 %v1226, %v1247
      %v1266 = vadd.f32 %v1227, %v1247
      %v1267 = vadd.f32 %v1228, %v1247
      %v1268 = vadd.f32 %v1229, %v1247
      %v1269 = vadd.f32 %v1230, %v1247
      %v1270 = vadd.f32 %v1231, %v1247
      %v1271 = vadd.f32 %v1232, %v1247
      %v1272 = vadd.f32 %v1233, %v1247
      %v1273 = vadd.f32 %v1234, %v1247
      %v1274 = vadd.f32 %v1235, %v1247
      %v1275 = vadd.f32 %v1236, %v1247
      %v1276 = vadd.f32 %v1237, %v1247
      %v1277 = vadd.f32 %v1238, %v1247
      %v1278 = vadd.f32 %v1239, %v1247
      %v1279 = vadd.f32 %v1240, %v1247
      %v1280 = vadd.f32 %v1241, %v1247
      %v1281 = vpack.c.bf16 %v1250, %v1249
      %v1282 = vpack.c.bf16 %v1252, %v1251
      %v1283 = vpack.c.bf16 %v1254, %v1253
      %v1284 = vpack.c.bf16 %v1256, %v1255
      %v1285 = vpack.c.bf16 %v1258, %v1257
      %v1286 = vpack.c.bf16 %v1260, %v1259
      %v1287 = vpack.c.bf16 %v1262, %v1261
      %v1288 = vpack.c.bf16 %v1264, %v1263
      %v1289 = vpack.c.bf16 %v1266, %v1265
      %v1290 = vpack.c.bf16 %v1268, %v1267
      %v1291 = vpack.c.bf16 %v1270, %v1269
      %v1292 = vpack.c.bf16 %v1272, %v1271
      %v1293 = vpack.c.bf16 %v1274, %v1273
      %v1294 = vpack.c.bf16 %v1276, %v1275
      %v1295 = vpack.c.bf16 %v1278, %v1277
      %v1296 = vpack.c.bf16 %v1280, %v1279
      %v1313 = vunpack.c.l.b16 %v1281
      %v1314 = vunpack.c.h.b16 %v1281
      %v1315 = vunpack.c.l.b16 %v1282
      %v1316 = vunpack.c.h.b16 %v1282
      %v1317 = vunpack.c.l.b16 %v1283
      %v1318 = vunpack.c.h.b16 %v1283
      %v1319 = vunpack.c.l.b16 %v1284
      %v1320 = vunpack.c.h.b16 %v1284
      %v1321 = vunpack.c.l.b16 %v1285
      %v1322 = vunpack.c.h.b16 %v1285
      %v1323 = vunpack.c.l.b16 %v1286
      %v1324 = vunpack.c.h.b16 %v1286
      %v1325 = vunpack.c.l.b16 %v1287
      %v1326 = vunpack.c.h.b16 %v1287
      %v1327 = vunpack.c.l.b16 %v1288
      %v1328 = vunpack.c.h.b16 %v1288
      %v1329 = vunpack.c.l.b16 %v1289
      %v1330 = vunpack.c.h.b16 %v1289
      %v1331 = vunpack.c.l.b16 %v1290
      %v1332 = vunpack.c.h.b16 %v1290
      %v1333 = vunpack.c.l.b16 %v1291
      %v1334 = vunpack.c.h.b16 %v1291
      %v1335 = vunpack.c.l.b16 %v1292
      %v1336 = vunpack.c.h.b16 %v1292
      %v1337 = vunpack.c.l.b16 %v1293
      %v1338 = vunpack.c.h.b16 %v1293
      %v1339 = vunpack.c.l.b16 %v1294
      %v1340 = vunpack.c.h.b16 %v1294
      %v1341 = vunpack.c.l.b16 %v1295
      %v1342 = vunpack.c.h.b16 %v1295
      %v1343 = vunpack.c.l.b16 %v1296
      %v1344 = vunpack.c.h.b16 %v1296
      %v1345 = vpack.c.b16 %v1313, %v1313
      %v1346 = vpack.c.b16 %v1314, %v1314
      %v1347 = vpack.c.b16 %v1315, %v1315
      %v1348 = vpack.c.b16 %v1316, %v1316
      %v1349 = vpack.c.b16 %v1317, %v1317
      %v1350 = vpack.c.b16 %v1318, %v1318
      %v1351 = vpack.c.b16 %v1319, %v1319
      %v1352 = vpack.c.b16 %v1320, %v1320
      %v1353 = vpack.c.b16 %v1321, %v1321
      %v1354 = vpack.c.b16 %v1322, %v1322
      %v1355 = vpack.c.b16 %v1323, %v1323
      %v1356 = vpack.c.b16 %v1324, %v1324
      %v1357 = vpack.c.b16 %v1325, %v1325
      %v1358 = vpack.c.b16 %v1326, %v1326
      %v1359 = vpack.c.b16 %v1327, %v1327
      %v1360 = vpack.c.b16 %v1328, %v1328
      %v1361 = vpack.c.b16 %v1329, %v1329
      %v1362 = vpack.c.b16 %v1330, %v1330
      %v1363 = vpack.c.b16 %v1331, %v1331
      %v1364 = vpack.c.b16 %v1332, %v1332
      %v1365 = vpack.c.b16 %v1333, %v1333
      %v1366 = vpack.c.b16 %v1334, %v1334
      %v1367 = vpack.c.b16 %v1335, %v1335
      %v1368 = vpack.c.b16 %v1336, %v1336
      %v1369 = vpack.c.b16 %v1337, %v1337
      %v1370 = vpack.c.b16 %v1338, %v1338
      %v1371 = vpack.c.b16 %v1339, %v1339
      %v1372 = vpack.c.b16 %v1340, %v1340
      %v1373 = vpack.c.b16 %v1341, %v1341
      %v1374 = vpack.c.b16 %v1342, %v1342
      %v1375 = vpack.c.b16 %v1343, %v1343
      %v1376 = vpack.c.b16 %v1344, %v1344
      %vm1377 = vsmask.f32 4368
      %vm1378 = vmor %vm391, %vm1377
      %v1380 = vshrl.u32 %v1345, 16
      %v1382 = vrot.slane %v1380, 7
      %v1383 = vshll.u32 %v1345, 16
      %v1385 = vor.u32 %v1382, %v1383
      %v1386 = vrot.slane %v1382, 4
      %v1388 = vshrl.u32 %v1346, 16
      %v1390 = vrot.slane %v1388, 7
      %v1391 = vshll.u32 %v1346, 16
      %v1393 = vor.u32 %v1390, %v1391
      %v1394 = vsel %vm1378, %v1386, %v1393
      %v1395 = vrot.slane %v1390, 4
      %v1397 = vshrl.u32 %v1347, 16
      %v1399 = vrot.slane %v1397, 7
      %v1400 = vshll.u32 %v1347, 16
      %v1402 = vor.u32 %v1399, %v1400
      %v1403 = vrot.slane %v1399, 4
      %v1405 = vshrl.u32 %v1348, 16
      %v1407 = vrot.slane %v1405, 7
      %v1408 = vshll.u32 %v1348, 16
      %v1410 = vor.u32 %v1407, %v1408
      %v1411 = vsel %vm1378, %v1403, %v1410
      %v1412 = vrot.slane %v1407, 4
      %v1414 = vshrl.u32 %v1349, 16
      %v1416 = vrot.slane %v1414, 7
      %v1417 = vshll.u32 %v1349, 16
      %v1419 = vor.u32 %v1416, %v1417
      %v1420 = vrot.slane %v1416, 4
      %v1422 = vshrl.u32 %v1350, 16
      %v1424 = vrot.slane %v1422, 7
      %v1425 = vshll.u32 %v1350, 16
      %v1427 = vor.u32 %v1424, %v1425
      %v1428 = vsel %vm1378, %v1420, %v1427
      %v1429 = vrot.slane %v1424, 4
      %v1431 = vshrl.u32 %v1351, 16
      %v1433 = vrot.slane %v1431, 7
      %v1434 = vshll.u32 %v1351, 16
      %v1436 = vor.u32 %v1433, %v1434
      %v1437 = vrot.slane %v1433, 4
      %v1439 = vshrl.u32 %v1352, 16
      %v1441 = vrot.slane %v1439, 7
      %v1442 = vshll.u32 %v1352, 16
      %v1444 = vor.u32 %v1441, %v1442
      %v1445 = vsel %vm1378, %v1437, %v1444
      %v1446 = vrot.slane %v1441, 4
      %v1448 = vshrl.u32 %v1353, 16
      %v1450 = vrot.slane %v1448, 7
      %v1451 = vshll.u32 %v1353, 16
      %v1453 = vor.u32 %v1450, %v1451
      %v1454 = vrot.slane %v1450, 4
      %v1456 = vshrl.u32 %v1354, 16
      %v1458 = vrot.slane %v1456, 7
      %v1459 = vshll.u32 %v1354, 16
      %v1461 = vor.u32 %v1458, %v1459
      %v1462 = vsel %vm1378, %v1454, %v1461
      %v1463 = vrot.slane %v1458, 4
      %v1465 = vshrl.u32 %v1355, 16
      %v1467 = vrot.slane %v1465, 7
      %v1468 = vshll.u32 %v1355, 16
      %v1470 = vor.u32 %v1467, %v1468
      %v1471 = vrot.slane %v1467, 4
      %v1473 = vshrl.u32 %v1356, 16
      %v1475 = vrot.slane %v1473, 7
      %v1476 = vshll.u32 %v1356, 16
      %v1478 = vor.u32 %v1475, %v1476
      %v1479 = vsel %vm1378, %v1471, %v1478
      %v1480 = vrot.slane %v1475, 4
      %v1482 = vshrl.u32 %v1357, 16
      %v1484 = vrot.slane %v1482, 7
      %v1485 = vshll.u32 %v1357, 16
      %v1487 = vor.u32 %v1484, %v1485
      %v1488 = vrot.slane %v1484, 4
      %v1490 = vshrl.u32 %v1358, 16
      %v1492 = vrot.slane %v1490, 7
      %v1493 = vshll.u32 %v1358, 16
      %v1495 = vor.u32 %v1492, %v1493
      %v1496 = vsel %vm1378, %v1488, %v1495
      %v1497 = vrot.slane %v1492, 4
      %v1499 = vshrl.u32 %v1359, 16
      %v1501 = vrot.slane %v1499, 7
      %v1502 = vshll.u32 %v1359, 16
      %v1504 = vor.u32 %v1501, %v1502
      %v1505 = vrot.slane %v1501, 4
      %v1507 = vshrl.u32 %v1360, 16
      %v1509 = vrot.slane %v1507, 7
      %v1510 = vshll.u32 %v1360, 16
      %v1512 = vor.u32 %v1509, %v1510
      %v1513 = vsel %vm1378, %v1505, %v1512
      %v1514 = vrot.slane %v1509, 4
      %v1516 = vshrl.u32 %v1361, 16
      %v1518 = vrot.slane %v1516, 7
      %v1519 = vshll.u32 %v1361, 16
      %v1521 = vor.u32 %v1518, %v1519
      %v1522 = vrot.slane %v1518, 4
      %v1524 = vshrl.u32 %v1362, 16
      %v1526 = vrot.slane %v1524, 7
      %v1527 = vshll.u32 %v1362, 16
      %v1529 = vor.u32 %v1526, %v1527
      %v1530 = vsel %vm1378, %v1522, %v1529
      %v1531 = vrot.slane %v1526, 4
      %v1533 = vshrl.u32 %v1363, 16
      %v1535 = vrot.slane %v1533, 7
      %v1536 = vshll.u32 %v1363, 16
      %v1538 = vor.u32 %v1535, %v1536
      %v1539 = vrot.slane %v1535, 4
      %v1541 = vshrl.u32 %v1364, 16
      %v1543 = vrot.slane %v1541, 7
      %v1544 = vshll.u32 %v1364, 16
      %v1546 = vor.u32 %v1543, %v1544
      %v1547 = vsel %vm1378, %v1539, %v1546
      %v1548 = vrot.slane %v1543, 4
      %v1550 = vshrl.u32 %v1365, 16
      %v1552 = vrot.slane %v1550, 7
      %v1553 = vshll.u32 %v1365, 16
      %v1555 = vor.u32 %v1552, %v1553
      %v1556 = vrot.slane %v1552, 4
      %v1558 = vshrl.u32 %v1366, 16
      %v1560 = vrot.slane %v1558, 7
      %v1561 = vshll.u32 %v1366, 16
      %v1563 = vor.u32 %v1560, %v1561
      %v1564 = vsel %vm1378, %v1556, %v1563
      %v1565 = vrot.slane %v1560, 4
      %v1567 = vshrl.u32 %v1367, 16
      %v1569 = vrot.slane %v1567, 7
      %v1570 = vshll.u32 %v1367, 16
      %v1572 = vor.u32 %v1569, %v1570
      %v1573 = vrot.slane %v1569, 4
      %v1575 = vshrl.u32 %v1368, 16
      %v1577 = vrot.slane %v1575, 7
      %v1578 = vshll.u32 %v1368, 16
      %v1580 = vor.u32 %v1577, %v1578
      %v1581 = vsel %vm1378, %v1573, %v1580
      %v1582 = vrot.slane %v1577, 4
      %v1584 = vshrl.u32 %v1369, 16
      %v1586 = vrot.slane %v1584, 7
      %v1587 = vshll.u32 %v1369, 16
      %v1589 = vor.u32 %v1586, %v1587
      %v1590 = vrot.slane %v1586, 4
      %v1592 = vshrl.u32 %v1370, 16
      %v1594 = vrot.slane %v1592, 7
      %v1595 = vshll.u32 %v1370, 16
      %v1597 = vor.u32 %v1594, %v1595
      %v1598 = vsel %vm1378, %v1590, %v1597
      %v1599 = vrot.slane %v1594, 4
      %v1601 = vshrl.u32 %v1371, 16
      %v1603 = vrot.slane %v1601, 7
      %v1604 = vshll.u32 %v1371, 16
      %v1606 = vor.u32 %v1603, %v1604
      %v1607 = vrot.slane %v1603, 4
      %v1609 = vshrl.u32 %v1372, 16
      %v1611 = vrot.slane %v1609, 7
      %v1612 = vshll.u32 %v1372, 16
      %v1614 = vor.u32 %v1611, %v1612
      %v1615 = vsel %vm1378, %v1607, %v1614
      %v1616 = vrot.slane %v1611, 4
      %v1618 = vshrl.u32 %v1373, 16
      %v1620 = vrot.slane %v1618, 7
      %v1621 = vshll.u32 %v1373, 16
      %v1623 = vor.u32 %v1620, %v1621
      %v1624 = vrot.slane %v1620, 4
      %v1626 = vshrl.u32 %v1374, 16
      %v1628 = vrot.slane %v1626, 7
      %v1629 = vshll.u32 %v1374, 16
      %v1631 = vor.u32 %v1628, %v1629
      %v1632 = vsel %vm1378, %v1624, %v1631
      %v1633 = vrot.slane %v1628, 4
      %v1635 = vshrl.u32 %v1375, 16
      %v1637 = vrot.slane %v1635, 7
      %v1638 = vshll.u32 %v1375, 16
      %v1640 = vor.u32 %v1637, %v1638
      %v1641 = vrot.slane %v1637, 4
      %v1643 = vshrl.u32 %v1376, 16
      %v1645 = vrot.slane %v1643, 7
      %v1646 = vshll.u32 %v1376, 16
      %v1648 = vor.u32 %v1645, %v1646
      %v1649 = vsel %vm1378, %v1641, %v1648
      %v1650 = vrot.slane %v1645, 4
      %s1699 = scalar_lea.vmem [#allocation2], 12
      %vm1700 = vcmask 125952
      %vm1701 = vmand %vm1700, %vm447
      %v1702 = vld [vmem:[%s1699] sm:$0xf]
      %v1703 = vsel %vm1701, %v1385, %v1702
      %1704 = vst [vmem:[%s1699] sm:$0xf] %v1703
      %1705 = vst.msk [vmem:[%s1699 + $0x4] sm:$0xf] %vm381, %v1394
      %v1706 = vld [vmem:[%s1699 + $0x8] sm:$0x1]
      %v1707 = vsel %vm392, %v1395, %v1706
      %1708 = vst [vmem:[%s1699 + $0x8] sm:$0x1] %v1707
      %v1709 = vld [vmem:[%s1699 + $0xc] sm:$0xf]
      %v1710 = vsel %vm1701, %v1402, %v1709
      %1711 = vst [vmem:[%s1699 + $0xc] sm:$0xf] %v1710
      %1712 = vst.msk [vmem:[%s1699 + $0x10] sm:$0xf] %vm381, %v1411
      %v1713 = vld [vmem:[%s1699 + $0x14] sm:$0x1]
      %v1714 = vsel %vm392, %v1412, %v1713
      %1715 = vst [vmem:[%s1699 + $0x14] sm:$0x1] %v1714
      %v1716 = vld [vmem:[%s1699 + $0x18] sm:$0xf]
      %v1717 = vsel %vm1701, %v1419, %v1716
      %1718 = vst [vmem:[%s1699 + $0x18] sm:$0xf] %v1717
      %1719 = vst.msk [vmem:[%s1699 + $0x1c] sm:$0xf] %vm381, %v1428
      %v1720 = vld [vmem:[%s1699 + $0x20] sm:$0x1]
      %v1721 = vsel %vm392, %v1429, %v1720
      %1722 = vst [vmem:[%s1699 + $0x20] sm:$0x1] %v1721
      %v1723 = vld [vmem:[%s1699 + $0x24] sm:$0xf]
      %v1724 = vsel %vm1701, %v1436, %v1723
      %1725 = vst [vmem:[%s1699 + $0x24] sm:$0xf] %v1724
      %1726 = vst.msk [vmem:[%s1699 + $0x28] sm:$0xf] %vm381, %v1445
      %v1727 = vld [vmem:[%s1699 + $0x2c] sm:$0x1]
      %v1728 = vsel %vm392, %v1446, %v1727
      %1729 = vst [vmem:[%s1699 + $0x2c] sm:$0x1] %v1728
      %v1730 = vld [vmem:[%s1699 + $0x30] sm:$0xf]
      %v1731 = vsel %vm1701, %v1453, %v1730
      %1732 = vst [vmem:[%s1699 + $0x30] sm:$0xf] %v1731
      %1733 = vst.msk [vmem:[%s1699 + $0x34] sm:$0xf] %vm381, %v1462
      %v1734 = vld [vmem:[%s1699 + $0x38] sm:$0x1]
      %v1735 = vsel %vm392, %v1463, %v1734
      %1736 = vst [vmem:[%s1699 + $0x38] sm:$0x1] %v1735
      %v1737 = vld [vmem:[%s1699 + $0x3c] sm:$0xf]
      %v1738 = vsel %vm1701, %v1470, %v1737
      %1739 = vst [vmem:[%s1699 + $0x3c] sm:$0xf] %v1738
      %1740 = vst.msk [vmem:[%s1699 + $0x40] sm:$0xf] %vm381, %v1479
      %v1741 = vld [vmem:[%s1699 + $0x44] sm:$0x1]
      %v1742 = vsel %vm392, %v1480, %v1741
      %1743 = vst [vmem:[%s1699 + $0x44] sm:$0x1] %v1742
      %v1744 = vld [vmem:[%s1699 + $0x48] sm:$0xf]
      %v1745 = vsel %vm1701, %v1487, %v1744
      %1746 = vst [vmem:[%s1699 + $0x48] sm:$0xf] %v1745
      %1747 = vst.msk [vmem:[%s1699 + $0x4c] sm:$0xf] %vm381, %v1496
      %v1748 = vld [vmem:[%s1699 + $0x50] sm:$0x1]
      %v1749 = vsel %vm392, %v1497, %v1748
      %1750 = vst [vmem:[%s1699 + $0x50] sm:$0x1] %v1749
      %v1751 = vld [vmem:[%s1699 + $0x54] sm:$0xf]
      %v1752 = vsel %vm1701, %v1504, %v1751
      %1753 = vst [vmem:[%s1699 + $0x54] sm:$0xf] %v1752
      %1754 = vst.msk [vmem:[%s1699 + $0x58] sm:$0xf] %vm381, %v1513
      %v1755 = vld [vmem:[%s1699 + $0x5c] sm:$0x1]
      %v1756 = vsel %vm392, %v1514, %v1755
      %1757 = vst [vmem:[%s1699 + $0x5c] sm:$0x1] %v1756
      %v1758 = vld [vmem:[%s1699 + $0x60] sm:$0xf]
      %v1759 = vsel %vm1701, %v1521, %v1758
      %1760 = vst [vmem:[%s1699 + $0x60] sm:$0xf] %v1759
      %1761 = vst.msk [vmem:[%s1699 + $0x64] sm:$0xf] %vm381, %v1530
      %v1762 = vld [vmem:[%s1699 + $0x68] sm:$0x1]
      %v1763 = vsel %vm392, %v1531, %v1762
      %1764 = vst [vmem:[%s1699 + $0x68] sm:$0x1] %v1763
      %v1765 = vld [vmem:[%s1699 + $0x6c] sm:$0xf]
      %v1766 = vsel %vm1701, %v1538, %v1765
      %1767 = vst [vmem:[%s1699 + $0x6c] sm:$0xf] %v1766
      %1768 = vst.msk [vmem:[%s1699 + $0x70] sm:$0xf] %vm381, %v1547
      %v1769 = vld [vmem:[%s1699 + $0x74] sm:$0x1]
      %v1770 = vsel %vm392, %v1548, %v1769
      %1771 = vst [vmem:[%s1699 + $0x74] sm:$0x1] %v1770
      %v1772 = vld [vmem:[%s1699 + $0x78] sm:$0xf]
      %v1773 = vsel %vm1701, %v1555, %v1772
      %1774 = vst [vmem:[%s1699 + $0x78] sm:$0xf] %v1773
      %1775 = vst.msk [vmem:[%s1699 + $0x7c] sm:$0xf] %vm381, %v1564
      %v1776 = vld [vmem:[%s1699 + $0x80] sm:$0x1]
      %v1777 = vsel %vm392, %v1565, %v1776
      %1778 = vst [vmem:[%s1699 + $0x80] sm:$0x1] %v1777
      %v1779 = vld [vmem:[%s1699 + $0x84] sm:$0xf]
      %v1780 = vsel %vm1701, %v1572, %v1779
      %1781 = vst [vmem:[%s1699 + $0x84] sm:$0xf] %v1780
      %1782 = vst.msk [vmem:[%s1699 + $0x88] sm:$0xf] %vm381, %v1581
      %v1783 = vld [vmem:[%s1699 + $0x8c] sm:$0x1]
      %v1784 = vsel %vm392, %v1582, %v1783
      %1785 = vst [vmem:[%s1699 + $0x8c] sm:$0x1] %v1784
      %v1786 = vld [vmem:[%s1699 + $0x90] sm:$0xf]
      %v1787 = vsel %vm1701, %v1589, %v1786
      %1788 = vst [vmem:[%s1699 + $0x90] sm:$0xf] %v1787
      %1789 = vst.msk [vmem:[%s1699 + $0x94] sm:$0xf] %vm381, %v1598
      %v1790 = vld [vmem:[%s1699 + $0x98] sm:$0x1]
      %v1791 = vsel %vm392, %v1599, %v1790
      %1792 = vst [vmem:[%s1699 + $0x98] sm:$0x1] %v1791
      %v1793 = vld [vmem:[%s1699 + $0x9c] sm:$0xf]
      %v1794 = vsel %vm1701, %v1606, %v1793
      %1795 = vst [vmem:[%s1699 + $0x9c] sm:$0xf] %v1794
      %1796 = vst.msk [vmem:[%s1699 + $0xa0] sm:$0xf] %vm381, %v1615
      %v1797 = vld [vmem:[%s1699 + $0xa4] sm:$0x1]
      %v1798 = vsel %vm392, %v1616, %v1797
      %1799 = vst [vmem:[%s1699 + $0xa4] sm:$0x1] %v1798
      %v1800 = vld [vmem:[%s1699 + $0xa8] sm:$0xf]
      %v1801 = vsel %vm1701, %v1623, %v1800
      %1802 = vst [vmem:[%s1699 + $0xa8] sm:$0xf] %v1801
      %1803 = vst.msk [vmem:[%s1699 + $0xac] sm:$0xf] %vm381, %v1632
      %v1804 = vld [vmem:[%s1699 + $0xb0] sm:$0x1]
      %v1805 = vsel %vm392, %v1633, %v1804
      %1806 = vst [vmem:[%s1699 + $0xb0] sm:$0x1] %v1805
      %v1807 = vld [vmem:[%s1699 + $0xb4] sm:$0xf]
      %v1808 = vsel %vm1701, %v1640, %v1807
      %1809 = vst [vmem:[%s1699 + $0xb4] sm:$0xf] %v1808
      %1810 = vst.msk [vmem:[%s1699 + $0xb8] sm:$0xf] %vm381, %v1649
      %v1811 = vld [vmem:[%s1699 + $0xbc] sm:$0x1]
      %v1812 = vsel %vm392, %v1650, %v1811
      %1813 = vst [vmem:[%s1699 + $0xbc] sm:$0x1] %v1812
      %v1814 = vld [vmem:[#allocation2] sm:$0xf]
      %v1815 = vld [vmem:[#allocation2 + $0x4] sm:$0xf]
      %v1816 = vld [vmem:[#allocation2 + $0xc] sm:$0xf]
      %v1817 = vld [vmem:[#allocation2 + $0x10] sm:$0xf]
      %v1818 = vld [vmem:[#allocation2 + $0x18] sm:$0xf]
      %v1819 = vld [vmem:[#allocation2 + $0x1c] sm:$0xf]
      %v1820 = vld [vmem:[#allocation2 + $0x24] sm:$0xf]
      %v1821 = vld [vmem:[#allocation2 + $0x28] sm:$0xf]
      %v1822 = vld [vmem:[#allocation2 + $0x30] sm:$0xf]
      %v1823 = vld [vmem:[#allocation2 + $0x34] sm:$0xf]
      %v1824 = vld [vmem:[#allocation2 + $0x3c] sm:$0xf]
      %v1825 = vld [vmem:[#allocation2 + $0x40] sm:$0xf]
      %v1826 = vld [vmem:[#allocation2 + $0x48] sm:$0xf]
      %v1827 = vld [vmem:[#allocation2 + $0x4c] sm:$0xf]
      %v1828 = vld [vmem:[#allocation2 + $0x54] sm:$0xf]
      %v1829 = vld [vmem:[#allocation2 + $0x58] sm:$0xf]
      %v1830 = vld [vmem:[#allocation2 + $0x60] sm:$0xf]
      %v1831 = vld [vmem:[#allocation2 + $0x64] sm:$0xf]
      %v1832 = vld [vmem:[#allocation2 + $0x6c] sm:$0xf]
      %v1833 = vld [vmem:[#allocation2 + $0x70] sm:$0xf]
      %v1834 = vld [vmem:[#allocation2 + $0x78] sm:$0xf]
      %v1835 = vld [vmem:[#allocation2 + $0x7c] sm:$0xf]
      %v1836 = vld [vmem:[#allocation2 + $0x84] sm:$0xf]
      %v1837 = vld [vmem:[#allocation2 + $0x88] sm:$0xf]
      %v1838 = vld [vmem:[#allocation2 + $0x90] sm:$0xf]
      %v1839 = vld [vmem:[#allocation2 + $0x94] sm:$0xf]
      %v1840 = vld [vmem:[#allocation2 + $0x9c] sm:$0xf]
      %v1841 = vld [vmem:[#allocation2 + $0xa0] sm:$0xf]
      %v1842 = vld [vmem:[#allocation2 + $0xa8] sm:$0xf]
      %v1843 = vld [vmem:[#allocation2 + $0xac] sm:$0xf]
      %v1844 = vld [vmem:[#allocation2 + $0xb4] sm:$0xf]
      %v1845 = vld [vmem:[#allocation2 + $0xb8] sm:$0xf]
      %v1846 = vld [vmem:[%s5] sm:$0xf]
      %v1847 = vld [vmem:[%s5 + $0x4] sm:$0xf]
      %v1848 = vld [vmem:[#allocation2 + $0x8] sm:$0x1]
      %v1849 = vld [vmem:[#allocation2 + $0x14] sm:$0x1]
      %v1850 = vld [vmem:[#allocation2 + $0x20] sm:$0x1]
      %v1851 = vld [vmem:[#allocation2 + $0x2c] sm:$0x1]
      %v1852 = vld [vmem:[#allocation2 + $0x38] sm:$0x1]
      %v1853 = vld [vmem:[#allocation2 + $0x44] sm:$0x1]
      %v1854 = vld [vmem:[#allocation2 + $0x50] sm:$0x1]
      %v1855 = vld [vmem:[#allocation2 + $0x5c] sm:$0x1]
      %v1856 = vld [vmem:[#allocation2 + $0x68] sm:$0x1]
      %v1857 = vld [vmem:[#allocation2 + $0x74] sm:$0x1]
      %v1858 = vld [vmem:[#allocation2 + $0x80] sm:$0x1]
      %v1859 = vld [vmem:[#allocation2 + $0x8c] sm:$0x1]
      %v1860 = vld [vmem:[#allocation2 + $0x98] sm:$0x1]
      %v1861 = vld [vmem:[#allocation2 + $0xa4] sm:$0x1]
      %v1862 = vld [vmem:[#allocation2 + $0xb0] sm:$0x1]
      %v1863 = vld [vmem:[#allocation2 + $0xbc] sm:$0x1]
      %vm1864 = vsmask.f32 3328
      %vm1865 = vsmask.f32 7440
      %vm1866 = vmor %vm1864, %vm1865
      %v1868 = vshrl.u32 %v1814, 16
      %v1870 = vrot.slane %v1868, 4
      %v1871 = vshll.u32 %v1814, 16
      %v1873 = vrot.slane %v1871, 5
      %v1874 = vor.u32 %v1870, %v1873
      %v1875 = vrot.slane %v1874, 4
      %v1877 = vshll.u32 %v1815, 16
      %v1879 = vrot.slane %v1877, 5
      %v1880 = vsel %vm1866, %v1875, %v1879
      %v1881 = vshrl.u32 %v1815, 16
      %v1883 = vrot.slane %v1881, 4
      %v1884 = vor.u32 %v1883, %v1879
      %v1885 = vrot.slane %v1884, 4
      %v1887 = vshll.u32 %v1848, 16
      %v1889 = vrot.slane %v1887, 5
      %v1890 = vsel %vm1866, %v1885, %v1889
      %v1892 = vshrl.u32 %v1816, 16
      %v1894 = vrot.slane %v1892, 4
      %v1895 = vshll.u32 %v1816, 16
      %v1897 = vrot.slane %v1895, 5
      %v1898 = vor.u32 %v1894, %v1897
      %v1899 = vrot.slane %v1898, 4
      %v1901 = vshll.u32 %v1817, 16
      %v1903 = vrot.slane %v1901, 5
      %v1904 = vsel %vm1866, %v1899, %v1903
      %v1905 = vshrl.u32 %v1817, 16
      %v1907 = vrot.slane %v1905, 4
      %v1908 = vor.u32 %v1907, %v1903
      %v1909 = vrot.slane %v1908, 4
      %v1911 = vshll.u32 %v1849, 16
      %v1913 = vrot.slane %v1911, 5
      %v1914 = vsel %vm1866, %v1909, %v1913
      %v1916 = vshrl.u32 %v1818, 16
      %v1918 = vrot.slane %v1916, 4
      %v1919 = vshll.u32 %v1818, 16
      %v1921 = vrot.slane %v1919, 5
      %v1922 = vor.u32 %v1918, %v1921
      %v1923 = vrot.slane %v1922, 4
      %v1925 = vshll.u32 %v1819, 16
      %v1927 = vrot.slane %v1925, 5
      %v1928 = vsel %vm1866, %v1923, %v1927
      %v1929 = vshrl.u32 %v1819, 16
      %v1931 = vrot.slane %v1929, 4
      %v1932 = vor.u32 %v1931, %v1927
      %v1933 = vrot.slane %v1932, 4
      %v1935 = vshll.u32 %v1850, 16
      %v1937 = vrot.slane %v1935, 5
      %v1938 = vsel %vm1866, %v1933, %v1937
      %v1940 = vshrl.u32 %v1820, 16
      %v1942 = vrot.slane %v1940, 4
      %v1943 = vshll.u32 %v1820, 16
      %v1945 = vrot.slane %v1943, 5
      %v1946 = vor.u32 %v1942, %v1945
      %v1947 = vrot.slane %v1946, 4
      %v1949 = vshll.u32 %v1821, 16
      %v1951 = vrot.slane %v1949, 5
      %v1952 = vsel %vm1866, %v1947, %v1951
      %v1953 = vshrl.u32 %v1821, 16
      %v1955 = vrot.slane %v1953, 4
      %v1956 = vor.u32 %v1955, %v1951
      %v1957 = vrot.slane %v1956, 4
      %v1959 = vshll.u32 %v1851, 16
      %v1961 = vrot.slane %v1959, 5
      %v1962 = vsel %vm1866, %v1957, %v1961
      %v1964 = vshrl.u32 %v1822, 16
      %v1966 = vrot.slane %v1964, 4
      %v1967 = vshll.u32 %v1822, 16
      %v1969 = vrot.slane %v1967, 5
      %v1970 = vor.u32 %v1966, %v1969
      %v1971 = vrot.slane %v1970, 4
      %v1973 = vshll.u32 %v1823, 16
      %v1975 = vrot.slane %v1973, 5
      %v1976 = vsel %vm1866, %v1971, %v1975
      %v1977 = vshrl.u32 %v1823, 16
      %v1979 = vrot.slane %v1977, 4
      %v1980 = vor.u32 %v1979, %v1975
      %v1981 = vrot.slane %v1980, 4
      %v1983 = vshll.u32 %v1852, 16
      %v1985 = vrot.slane %v1983, 5
      %v1986 = vsel %vm1866, %v1981, %v1985
      %v1988 = vshrl.u32 %v1824, 16
      %v1990 = vrot.slane %v1988, 4
      %v1991 = vshll.u32 %v1824, 16
      %v1993 = vrot.slane %v1991, 5
      %v1994 = vor.u32 %v1990, %v1993
      %v1995 = vrot.slane %v1994, 4
      %v1997 = vshll.u32 %v1825, 16
      %v1999 = vrot.slane %v1997, 5
      %v2000 = vsel %vm1866, %v1995, %v1999
      %v2001 = vshrl.u32 %v1825, 16
      %v2003 = vrot.slane %v2001, 4
      %v2004 = vor.u32 %v2003, %v1999
      %v2005 = vrot.slane %v2004, 4
      %v2007 = vshll.u32 %v1853, 16
      %v2009 = vrot.slane %v2007, 5
      %v2010 = vsel %vm1866, %v2005, %v2009
      %v2012 = vshrl.u32 %v1826, 16
      %v2014 = vrot.slane %v2012, 4
      %v2015 = vshll.u32 %v1826, 16
      %v2017 = vrot.slane %v2015, 5
      %v2018 = vor.u32 %v2014, %v2017
      %v2019 = vrot.slane %v2018, 4
      %v2021 = vshll.u32 %v1827, 16
      %v2023 = vrot.slane %v2021, 5
      %v2024 = vsel %vm1866, %v2019, %v2023
      %v2025 = vshrl.u32 %v1827, 16
      %v2027 = vrot.slane %v2025, 4
      %v2028 = vor.u32 %v2027, %v2023
      %v2029 = vrot.slane %v2028, 4
      %v2031 = vshll.u32 %v1854, 16
      %v2033 = vrot.slane %v2031, 5
      %v2034 = vsel %vm1866, %v2029, %v2033
      %v2036 = vshrl.u32 %v1828, 16
      %v2038 = vrot.slane %v2036, 4
      %v2039 = vshll.u32 %v1828, 16
      %v2041 = vrot.slane %v2039, 5
      %v2042 = vor.u32 %v2038, %v2041
      %v2043 = vrot.slane %v2042, 4
      %v2045 = vshll.u32 %v1829, 16
      %v2047 = vrot.slane %v2045, 5
      %v2048 = vsel %vm1866, %v2043, %v2047
      %v2049 = vshrl.u32 %v1829, 16
      %v2051 = vrot.slane %v2049, 4
      %v2052 = vor.u32 %v2051, %v2047
      %v2053 = vrot.slane %v2052, 4
      %v2055 = vshll.u32 %v1855, 16
      %v2057 = vrot.slane %v2055, 5
      %v2058 = vsel %vm1866, %v2053, %v2057
      %v2060 = vshrl.u32 %v1830, 16
      %v2062 = vrot.slane %v2060, 4
      %v2063 = vshll.u32 %v1830, 16
      %v2065 = vrot.slane %v2063, 5
      %v2066 = vor.u32 %v2062, %v2065
      %v2067 = vrot.slane %v2066, 4
      %v2069 = vshll.u32 %v1831, 16
      %v2071 = vrot.slane %v2069, 5
      %v2072 = vsel %vm1866, %v2067, %v2071
      %v2073 = vshrl.u32 %v1831, 16
      %v2075 = vrot.slane %v2073, 4
      %v2076 = vor.u32 %v2075, %v2071
      %v2077 = vrot.slane %v2076, 4
      %v2079 = vshll.u32 %v1856, 16
      %v2081 = vrot.slane %v2079, 5
      %v2082 = vsel %vm1866, %v2077, %v2081
      %v2084 = vshrl.u32 %v1832, 16
      %v2086 = vrot.slane %v2084, 4
      %v2087 = vshll.u32 %v1832, 16
      %v2089 = vrot.slane %v2087, 5
      %v2090 = vor.u32 %v2086, %v2089
      %v2091 = vrot.slane %v2090, 4
      %v2093 = vshll.u32 %v1833, 16
      %v2095 = vrot.slane %v2093, 5
      %v2096 = vsel %vm1866, %v2091, %v2095
      %v2097 = vshrl.u32 %v1833, 16
      %v2099 = vrot.slane %v2097, 4
      %v2100 = vor.u32 %v2099, %v2095
      %v2101 = vrot.slane %v2100, 4
      %v2103 = vshll.u32 %v1857, 16
      %v2105 = vrot.slane %v2103, 5
      %v2106 = vsel %vm1866, %v2101, %v2105
      %v2108 = vshrl.u32 %v1834, 16
      %v2110 = vrot.slane %v2108, 4
      %v2111 = vshll.u32 %v1834, 16
      %v2113 = vrot.slane %v2111, 5
      %v2114 = vor.u32 %v2110, %v2113
      %v2115 = vrot.slane %v2114, 4
      %v2117 = vshll.u32 %v1835, 16
      %v2119 = vrot.slane %v2117, 5
      %v2120 = vsel %vm1866, %v2115, %v2119
      %v2121 = vshrl.u32 %v1835, 16
      %v2123 = vrot.slane %v2121, 4
      %v2124 = vor.u32 %v2123, %v2119
      %v2125 = vrot.slane %v2124, 4
      %v2127 = vshll.u32 %v1858, 16
      %v2129 = vrot.slane %v2127, 5
      %v2130 = vsel %vm1866, %v2125, %v2129
      %v2132 = vshrl.u32 %v1836, 16
      %v2134 = vrot.slane %v2132, 4
      %v2135 = vshll.u32 %v1836, 16
      %v2137 = vrot.slane %v2135, 5
      %v2138 = vor.u32 %v2134, %v2137
      %v2139 = vrot.slane %v2138, 4
      %v2141 = vshll.u32 %v1837, 16
      %v2143 = vrot.slane %v2141, 5
      %v2144 = vsel %vm1866, %v2139, %v2143
      %v2145 = vshrl.u32 %v1837, 16
      %v2147 = vrot.slane %v2145, 4
      %v2148 = vor.u32 %v2147, %v2143
      %v2149 = vrot.slane %v2148, 4
      %v2151 = vshll.u32 %v1859, 16
      %v2153 = vrot.slane %v2151, 5
      %v2154 = vsel %vm1866, %v2149, %v2153
      %v2156 = vshrl.u32 %v1838, 16
      %v2158 = vrot.slane %v2156, 4
      %v2159 = vshll.u32 %v1838, 16
      %v2161 = vrot.slane %v2159, 5
      %v2162 = vor.u32 %v2158, %v2161
      %v2163 = vrot.slane %v2162, 4
      %v2165 = vshll.u32 %v1839, 16
      %v2167 = vrot.slane %v2165, 5
      %v2168 = vsel %vm1866, %v2163, %v2167
      %v2169 = vshrl.u32 %v1839, 16
      %v2171 = vrot.slane %v2169, 4
      %v2172 = vor.u32 %v2171, %v2167
      %v2173 = vrot.slane %v2172, 4
      %v2175 = vshll.u32 %v1860, 16
      %v2177 = vrot.slane %v2175, 5
      %v2178 = vsel %vm1866, %v2173, %v2177
      %v2180 = vshrl.u32 %v1840, 16
      %v2182 = vrot.slane %v2180, 4
      %v2183 = vshll.u32 %v1840, 16
      %v2185 = vrot.slane %v2183, 5
      %v2186 = vor.u32 %v2182, %v2185
      %v2187 = vrot.slane %v2186, 4
      %v2189 = vshll.u32 %v1841, 16
      %v2191 = vrot.slane %v2189, 5
      %v2192 = vsel %vm1866, %v2187, %v2191
      %v2193 = vshrl.u32 %v1841, 16
      %v2195 = vrot.slane %v2193, 4
      %v2196 = vor.u32 %v2195, %v2191
      %v2197 = vrot.slane %v2196, 4
      %v2199 = vshll.u32 %v1861, 16
      %v2201 = vrot.slane %v2199, 5
      %v2202 = vsel %vm1866, %v2197, %v2201
      %v2204 = vshrl.u32 %v1842, 16
      %v2206 = vrot.slane %v2204, 4
      %v2207 = vshll.u32 %v1842, 16
      %v2209 = vrot.slane %v2207, 5
      %v2210 = vor.u32 %v2206, %v2209
      %v2211 = vrot.slane %v2210, 4
      %v2213 = vshll.u32 %v1843, 16
      %v2215 = vrot.slane %v2213, 5
      %v2216 = vsel %vm1866, %v2211, %v2215
      %v2217 = vshrl.u32 %v1843, 16
      %v2219 = vrot.slane %v2217, 4
      %v2220 = vor.u32 %v2219, %v2215
      %v2221 = vrot.slane %v2220, 4
      %v2223 = vshll.u32 %v1862, 16
      %v2225 = vrot.slane %v2223, 5
      %v2226 = vsel %vm1866, %v2221, %v2225
      %v2228 = vshrl.u32 %v1844, 16
      %v2230 = vrot.slane %v2228, 4
      %v2231 = vshll.u32 %v1844, 16
      %v2233 = vrot.slane %v2231, 5
      %v2234 = vor.u32 %v2230, %v2233
      %v2235 = vrot.slane %v2234, 4
      %v2237 = vshll.u32 %v1845, 16
      %v2239 = vrot.slane %v2237, 5
      %v2240 = vsel %vm1866, %v2235, %v2239
      %v2241 = vshrl.u32 %v1845, 16
      %v2243 = vrot.slane %v2241, 4
      %v2244 = vor.u32 %v2243, %v2239
      %v2245 = vrot.slane %v2244, 4
      %v2247 = vshll.u32 %v1863, 16
      %v2249 = vrot.slane %v2247, 5
      %v2250 = vsel %vm1866, %v2245, %v2249
      %s2251 = scalar_lea.vmem %s5, 8
      %v2252 = vld [vmem:[%s2251] sm:$0xf]
      %v2253 = vld [vmem:[%s2251 + $0x4] sm:$0xf]
      %v2254 = vunpack.c.l.b16 %v1880
      %v2255 = vunpack.c.l.b16 %v1890
      %v2256 = vunpack.c.l.b16 %v1904
      %v2257 = vunpack.c.l.b16 %v1914
      %v2258 = vunpack.c.l.b16 %v1928
      %v2259 = vunpack.c.l.b16 %v1938
      %v2260 = vunpack.c.l.b16 %v1952
      %v2261 = vunpack.c.l.b16 %v1962
      %v2262 = vunpack.c.l.b16 %v1976
      %v2263 = vunpack.c.l.b16 %v1986
      %v2264 = vunpack.c.l.b16 %v2000
      %v2265 = vunpack.c.l.b16 %v2010
      %v2266 = vunpack.c.l.b16 %v2024
      %v2267 = vunpack.c.l.b16 %v2034
      %v2268 = vunpack.c.l.b16 %v2048
      %v2269 = vunpack.c.l.b16 %v2058
      %v2270 = vunpack.c.l.b16 %v2072
      %v2271 = vunpack.c.l.b16 %v2082
      %v2272 = vunpack.c.l.b16 %v2096
      %v2273 = vunpack.c.l.b16 %v2106
      %v2274 = vunpack.c.l.b16 %v2120
      %v2275 = vunpack.c.l.b16 %v2130
      %v2276 = vunpack.c.l.b16 %v2144
      %v2277 = vunpack.c.l.b16 %v2154
      %v2278 = vunpack.c.l.b16 %v2168
      %v2279 = vunpack.c.l.b16 %v2178
      %v2280 = vunpack.c.l.b16 %v2192
      %v2281 = vunpack.c.l.b16 %v2202
      %v2282 = vunpack.c.l.b16 %v2216
      %v2283 = vunpack.c.l.b16 %v2226
      %v2284 = vunpack.c.l.b16 %v2240
      %v2285 = vunpack.c.l.b16 %v2250
      %v2286 = vpack.c.b16 %v2255, %v2254
      %v2287 = vpack.c.b16 %v2257, %v2256
      %v2288 = vpack.c.b16 %v2259, %v2258
      %v2289 = vpack.c.b16 %v2261, %v2260
      %v2290 = vpack.c.b16 %v2263, %v2262
      %v2291 = vpack.c.b16 %v2265, %v2264
      %v2292 = vpack.c.b16 %v2267, %v2266
      %v2293 = vpack.c.b16 %v2269, %v2268
      %v2294 = vpack.c.b16 %v2271, %v2270
      %v2295 = vpack.c.b16 %v2273, %v2272
      %v2296 = vpack.c.b16 %v2275, %v2274
      %v2297 = vpack.c.b16 %v2277, %v2276
      %v2298 = vpack.c.b16 %v2279, %v2278
      %v2299 = vpack.c.b16 %v2281, %v2280
      %v2300 = vpack.c.b16 %v2283, %v2282
      %v2301 = vpack.c.b16 %v2285, %v2284
      %v2304 = vunpack.c.l.b16 %v2252
      %v2305 = vunpack.c.l.b16 %v2253
      %v2306 = vpack.c.b16 %v2305, %v2304
      %v2309 = vsel %vm850, %v2286, 0
      %v2312 = vsel %vm850, %v2287, 0
      %v2315 = vsel %vm850, %v2288, 0
      %v2318 = vsel %vm850, %v2289, 0
      %v2321 = vsel %vm850, %v2290, 0
      %v2324 = vsel %vm850, %v2291, 0
      %v2327 = vsel %vm850, %v2292, 0
      %v2330 = vsel %vm850, %v2293, 0
      %v2333 = vsel %vm850, %v2294, 0
      %v2336 = vsel %vm850, %v2295, 0
      %v2339 = vsel %vm850, %v2296, 0
      %v2342 = vsel %vm850, %v2297, 0
      %v2345 = vsel %vm850, %v2298, 0
      %v2348 = vsel %vm850, %v2299, 0
      %v2351 = vsel %vm850, %v2300, 0
      %v2354 = vsel %vm850, %v2301, 0
      %2356 = vmatprep.subr.bf16.mxu0 0
      %2357 = vmatpush1.bf16.msra.mxu0 %v2306
      %2358 = vmatprep.subr.bf16.mxu0 0
      %2359 = vmatpush1.bf16.msra.mxu0 0
      %2360 = vmatprep.subr.bf16.mxu0 0
      %2361 = vmatpush1.bf16.msra.mxu0 0
      %2362 = vmatprep.subr.bf16.mxu0 0
      %2363 = vmatpush1.bf16.msra.mxu0 0
      %2364 = vmatprep.subr.bf16.mxu0 0
      %2365 = vmatpush1.bf16.msra.mxu0 0
      %2366 = vmatprep.subr.bf16.mxu0 0
      %2367 = vmatpush1.bf16.msra.mxu0 0
      %2368 = vmatprep.subr.bf16.mxu0 0
      %2369 = vmatpush1.bf16.msra.mxu0 0
      %2370 = vmatprep.subr.bf16.mxu0 0
      %2371 = vmatpush1.bf16.msra.mxu0 0
      %2372 = vmatprep.subr.bf16.mxu0 0
      %2373 = vmatpush1.bf16.msra.mxu0 0
      %2374 = vmatprep.subr.bf16.mxu0 0
      %2375 = vmatpush1.bf16.msra.mxu0 0
      %2376 = vmatprep.subr.bf16.mxu0 0
      %2377 = vmatpush1.bf16.msra.mxu0 0
      %2378 = vmatprep.subr.bf16.mxu0 0
      %2379 = vmatpush1.bf16.msra.mxu0 0
      %2380 = vmatprep.subr.bf16.mxu0 0
      %2381 = vmatpush1.bf16.msra.mxu0 0
      %2382 = vmatprep.subr.bf16.mxu0 0
      %2383 = vmatpush1.bf16.msra.mxu0 0
      %2384 = vmatprep.subr.bf16.mxu0 0
      %2385 = vmatpush1.bf16.msra.mxu0 0
      %2386 = vmatprep.subr.bf16.mxu0 0
      %2387 = vmatpush1.bf16.msra.mxu0 0
      %2388 = vmatprep.mubr.bf16.mxu0 0
      %2389 = vmatmul.mubr.bf16.gmra.mrb[0].mxu0 %v2309
      %v2390 = vpop.f32.mrb[0].mxu0
      %v2391 = vadd.f32 0.0, %v2390
      %v2392 = vpop.f32.mrb[0].mxu0
      %v2393 = vpop.f32.mrb[0].mxu0
      %v2394 = vadd.f32 0.0, %v2393
      %v2395 = vpop.f32.mrb[0].mxu0
      %2396 = vmatprep.mubr.bf16.mxu0 0
      %2397 = vmatmul.mubr.bf16.gmra.mrb[0].mxu0 %v2312
      %v2398 = vpop.f32.mrb[0].mxu0
      %v2399 = vadd.f32 0.0, %v2398
      %v2400 = vpop.f32.mrb[0].mxu0
      %v2401 = vpop.f32.mrb[0].mxu0
      %v2402 = vadd.f32 0.0, %v2401
      %v2403 = vpop.f32.mrb[0].mxu0
      %2404 = vmatprep.mubr.bf16.mxu0 0
      %2405 = vmatmul.mubr.bf16.gmra.mrb[0].mxu0 %v2315
      %v2406 = vpop.f32.mrb[0].mxu0
      %v2407 = vadd.f32 0.0, %v2406
      %v2408 = vpop.f32.mrb[0].mxu0
      %v2409 = vpop.f32.mrb[0].mxu0
      %v2410 = vadd.f32 0.0, %v2409
      %v2411 = vpop.f32.mrb[0].mxu0
      %2412 = vmatprep.mubr.bf16.mxu0 0
      %2413 = vmatmul.mubr.bf16.gmra.mrb[0].mxu0 %v2318
      %v2414 = vpop.f32.mrb[0].mxu0
      %v2415 = vadd.f32 0.0, %v2414
      %v2416 = vpop.f32.mrb[0].mxu0
      %v2417 = vpop.f32.mrb[0].mxu0
      %v2418 = vadd.f32 0.0, %v2417
      %v2419 = vpop.f32.mrb[0].mxu0
      %2420 = vmatprep.mubr.bf16.mxu0 0
      %2421 = vmatmul.mubr.bf16.gmra.mrb[0].mxu0 %v2321
      %v2422 = vpop.f32.mrb[0].mxu0
      %v2423 = vadd.f32 0.0, %v2422
      %v2424 = vpop.f32.mrb[0].mxu0
      %v2425 = vpop.f32.mrb[0].mxu0
      %v2426 = vadd.f32 0.0, %v2425
      %v2427 = vpop.f32.mrb[0].mxu0
      %2428 = vmatprep.mubr.bf16.mxu0 0
      %2429 = vmatmul.mubr.bf16.gmra.mrb[0].mxu0 %v2324
      %v2430 = vpop.f32.mrb[0].mxu0
      %v2431 = vadd.f32 0.0, %v2430
      %v2432 = vpop.f32.mrb[0].mxu0
      %v2433 = vpop.f32.mrb[0].mxu0
      %v2434 = vadd.f32 0.0, %v2433
      %v2435 = vpop.f32.mrb[0].mxu0
      %2436 = vmatprep.mubr.bf16.mxu0 0
      %2437 = vmatmul.mubr.bf16.gmra.mrb[0].mxu0 %v2327
      %v2438 = vpop.f32.mrb[0].mxu0
      %v2439 = vadd.f32 0.0, %v2438
      %v2440 = vpop.f32.mrb[0].mxu0
      %v2441 = vpop.f32.mrb[0].mxu0
      %v2442 = vadd.f32 0.0, %v2441
      %v2443 = vpop.f32.mrb[0].mxu0
      %2444 = vmatprep.mubr.bf16.mxu0 0
      %2445 = vmatmul.mubr.bf16.gmra.mrb[0].mxu0 %v2330
      %v2446 = vpop.f32.mrb[0].mxu0
      %v2447 = vadd.f32 0.0, %v2446
      %v2448 = vpop.f32.mrb[0].mxu0
      %v2449 = vpop.f32.mrb[0].mxu0
      %v2450 = vadd.f32 0.0, %v2449
      %v2451 = vpop.f32.mrb[0].mxu0
      %2452 = vmatprep.mubr.bf16.mxu0 0
      %2453 = vmatmul.mubr.bf16.gmra.mrb[0].mxu0 %v2333
      %v2454 = vpop.f32.mrb[0].mxu0
      %v2455 = vadd.f32 0.0, %v2454
      %v2456 = vpop.f32.mrb[0].mxu0
      %v2457 = vpop.f32.mrb[0].mxu0
      %v2458 = vadd.f32 0.0, %v2457
      %v2459 = vpop.f32.mrb[0].mxu0
      %2460 = vmatprep.mubr.bf16.mxu0 0
      %2461 = vmatmul.mubr.bf16.gmra.mrb[0].mxu0 %v2336
      %v2462 = vpop.f32.mrb[0].mxu0
      %v2463 = vadd.f32 0.0, %v2462
      %v2464 = vpop.f32.mrb[0].mxu0
      %v2465 = vpop.f32.mrb[0].mxu0
      %v2466 = vadd.f32 0.0, %v2465
      %v2467 = vpop.f32.mrb[0].mxu0
      %2468 = vmatprep.mubr.bf16.mxu0 0
      %2469 = vmatmul.mubr.bf16.gmra.mrb[0].mxu0 %v2339
      %v2470 = vpop.f32.mrb[0].mxu0
      %v2471 = vadd.f32 0.0, %v2470
      %v2472 = vpop.f32.mrb[0].mxu0
      %v2473 = vpop.f32.mrb[0].mxu0
      %v2474 = vadd.f32 0.0, %v2473
      %v2475 = vpop.f32.mrb[0].mxu0
      %2476 = vmatprep.mubr.bf16.mxu0 0
      %2477 = vmatmul.mubr.bf16.gmra.mrb[0].mxu0 %v2342
      %v2478 = vpop.f32.mrb[0].mxu0
      %v2479 = vadd.f32 0.0, %v2478
      %v2480 = vpop.f32.mrb[0].mxu0
      %v2481 = vpop.f32.mrb[0].mxu0
      %v2482 = vadd.f32 0.0, %v2481
      %v2483 = vpop.f32.mrb[0].mxu0
      %2484 = vmatprep.mubr.bf16.mxu0 0
      %2485 = vmatmul.mubr.bf16.gmra.mrb[0].mxu0 %v2345
      %v2486 = vpop.f32.mrb[0].mxu0
      %v2487 = vadd.f32 0.0, %v2486
      %v2488 = vpop.f32.mrb[0].mxu0
      %v2489 = vpop.f32.mrb[0].mxu0
      %v2490 = vadd.f32 0.0, %v2489
      %v2491 = vpop.f32.mrb[0].mxu0
      %2492 = vmatprep.mubr.bf16.mxu0 0
      %2493 = vmatmul.mubr.bf16.gmra.mrb[0].mxu0 %v2348
      %v2494 = vpop.f32.mrb[0].mxu0
      %v2495 = vadd.f32 0.0, %v2494
      %v2496 = vpop.f32.mrb[0].mxu0
      %v2497 = vpop.f32.mrb[0].mxu0
      %v2498 = vadd.f32 0.0, %v2497
      %v2499 = vpop.f32.mrb[0].mxu0
      %2500 = vmatprep.mubr.bf16.mxu0 0
      %2501 = vmatmul.mubr.bf16.gmra.mrb[0].mxu0 %v2351
      %v2502 = vpop.f32.mrb[0].mxu0
      %v2503 = vadd.f32 0.0, %v2502
      %v2504 = vpop.f32.mrb[0].mxu0
      %v2505 = vpop.f32.mrb[0].mxu0
      %v2506 = vadd.f32 0.0, %v2505
      %v2507 = vpop.f32.mrb[0].mxu0
      %2508 = vmatprep.mubr.bf16.mxu0 0
      %2509 = vmatmul.mubr.bf16.gmra.mrb[0].mxu0 %v2354
      %v2510 = vpop.f32.mrb[0].mxu0
      %v2511 = vadd.f32 0.0, %v2510
      %v2512 = vpop.f32.mrb[0].mxu0
      %v2513 = vpop.f32.mrb[0].mxu0
      %v2514 = vadd.f32 0.0, %v2513
      %v2515 = vpop.f32.mrb[0].mxu0
      %2516 = vdwg.mxu0
      %v2549 = vunpack.c.l.b16 %v1814
      %v2550 = vunpack.c.l.b16 %v1815
      %v2551 = vunpack.c.l.b16 %v1816
      %v2552 = vunpack.c.l.b16 %v1817
      %v2553 = vunpack.c.l.b16 %v1818
      %v2554 = vunpack.c.l.b16 %v1819
      %v2555 = vunpack.c.l.b16 %v1820
      %v2556 = vunpack.c.l.b16 %v1821
      %v2557 = vunpack.c.l.b16 %v1822
      %v2558 = vunpack.c.l.b16 %v1823
      %v2559 = vunpack.c.l.b16 %v1824
      %v2560 = vunpack.c.l.b16 %v1825
      %v2561 = vunpack.c.l.b16 %v1826
      %v2562 = vunpack.c.l.b16 %v1827
      %v2563 = vunpack.c.l.b16 %v1828
      %v2564 = vunpack.c.l.b16 %v1829
      %v2565 = vunpack.c.l.b16 %v1830
      %v2566 = vunpack.c.l.b16 %v1831
      %v2567 = vunpack.c.l.b16 %v1832
      %v2568 = vunpack.c.l.b16 %v1833
      %v2569 = vunpack.c.l.b16 %v1834
      %v2570 = vunpack.c.l.b16 %v1835
      %v2571 = vunpack.c.l.b16 %v1836
      %v2572 = vunpack.c.l.b16 %v1837
      %v2573 = vunpack.c.l.b16 %v1838
      %v2574 = vunpack.c.l.b16 %v1839
      %v2575 = vunpack.c.l.b16 %v1840
      %v2576 = vunpack.c.l.b16 %v1841
      %v2577 = vunpack.c.l.b16 %v1842
      %v2578 = vunpack.c.l.b16 %v1843
      %v2579 = vunpack.c.l.b16 %v1844
      %v2580 = vunpack.c.l.b16 %v1845
      %v2581 = vpack.c.b16 %v2550, %v2549
      %v2582 = vpack.c.b16 %v2552, %v2551
      %v2583 = vpack.c.b16 %v2554, %v2553
      %v2584 = vpack.c.b16 %v2556, %v2555
      %v2585 = vpack.c.b16 %v2558, %v2557
      %v2586 = vpack.c.b16 %v2560, %v2559
      %v2587 = vpack.c.b16 %v2562, %v2561
      %v2588 = vpack.c.b16 %v2564, %v2563
      %v2589 = vpack.c.b16 %v2566, %v2565
      %v2590 = vpack.c.b16 %v2568, %v2567
      %v2591 = vpack.c.b16 %v2570, %v2569
      %v2592 = vpack.c.b16 %v2572, %v2571
      %v2593 = vpack.c.b16 %v2574, %v2573
      %v2594 = vpack.c.b16 %v2576, %v2575
      %v2595 = vpack.c.b16 %v2578, %v2577
      %v2596 = vpack.c.b16 %v2580, %v2579
      %v2599 = vunpack.c.l.b16 %v1846
      %v2600 = vunpack.c.l.b16 %v1847
      %v2601 = vpack.c.b16 %v2600, %v2599
      %v2604 = vsel %vm850, %v2581, 0
      %v2607 = vsel %vm850, %v2582, 0
      %v2610 = vsel %vm850, %v2583, 0
      %v2613 = vsel %vm850, %v2584, 0
      %v2616 = vsel %vm850, %v2585, 0
      %v2619 = vsel %vm850, %v2586, 0
      %v2622 = vsel %vm850, %v2587, 0
      %v2625 = vsel %vm850, %v2588, 0
      %v2628 = vsel %vm850, %v2589, 0
      %v2631 = vsel %vm850, %v2590, 0
      %v2634 = vsel %vm850, %v2591, 0
      %v2637 = vsel %vm850, %v2592, 0
      %v2640 = vsel %vm850, %v2593, 0
      %v2643 = vsel %vm850, %v2594, 0
      %v2646 = vsel %vm850, %v2595, 0
      %v2649 = vsel %vm850, %v2596, 0
      %2651 = vmatprep.subr.bf16.mxu0 0
      %2652 = vmatpush1.bf16.msra.mxu0 %v2601
      %2653 = vmatprep.subr.bf16.mxu0 0
      %2654 = vmatpush1.bf16.msra.mxu0 0
      %2655 = vmatprep.subr.bf16.mxu0 0
      %2656 = vmatpush1.bf16.msra.mxu0 0
      %2657 = vmatprep.subr.bf16.mxu0 0
      %2658 = vmatpush1.bf16.msra.mxu0 0
      %2659 = vmatprep.subr.bf16.mxu0 0
      %2660 = vmatpush1.bf16.msra.mxu0 0
      %2661 = vmatprep.subr.bf16.mxu0 0
      %2662 = vmatpush1.bf16.msra.mxu0 0
      %2663 = vmatprep.subr.bf16.mxu0 0
      %2664 = vmatpush1.bf16.msra.mxu0 0
      %2665 = vmatprep.subr.bf16.mxu0 0
      %2666 = vmatpush1.bf16.msra.mxu0 0
      %2667 = vmatprep.subr.bf16.mxu0 0
      %2668 = vmatpush1.bf16.msra.mxu0 0
      %2669 = vmatprep.subr.bf16.mxu0 0
      %2670 = vmatpush1.bf16.msra.mxu0 0
      %2671 = vmatprep.subr.bf16.mxu0 0
      %2672 = vmatpush1.bf16.msra.mxu0 0
      %2673 = vmatprep.subr.bf16.mxu0 0
      %2674 = vmatpush1.bf16.msra.mxu0 0
      %2675 = vmatprep.subr.bf16.mxu0 0
      %2676 = vmatpush1.bf16.msra.mxu0 0
      %2677 = vmatprep.subr.bf16.mxu0 0
      %2678 = vmatpush1.bf16.msra.mxu0 0
      %2679 = vmatprep.subr.bf16.mxu0 0
      %2680 = vmatpush1.bf16.msra.mxu0 0
      %2681 = vmatprep.subr.bf16.mxu0 0
      %2682 = vmatpush1.bf16.msra.mxu0 0
      %2683 = vmatprep.mubr.bf16.mxu0 0
      %2684 = vmatmul.mubr.bf16.gmra.mrb[0].mxu0 %v2604
      %v2685 = vpop.f32.mrb[0].mxu0
      %v2686 = vadd.f32 %v2391, %v2685
      %v2687 = vpop.f32.mrb[0].mxu0
      %v2688 = vpop.f32.mrb[0].mxu0
      %v2689 = vadd.f32 %v2394, %v2688
      %v2690 = vpop.f32.mrb[0].mxu0
      %2691 = vmatprep.mubr.bf16.mxu0 0
      %2692 = vmatmul.mubr.bf16.gmra.mrb[0].mxu0 %v2607
      %v2693 = vpop.f32.mrb[0].mxu0
      %v2694 = vadd.f32 %v2399, %v2693
      %v2695 = vpop.f32.mrb[0].mxu0
      %v2696 = vpop.f32.mrb[0].mxu0
      %v2697 = vadd.f32 %v2402, %v2696
      %v2698 = vpop.f32.mrb[0].mxu0
      %2699 = vmatprep.mubr.bf16.mxu0 0
      %2700 = vmatmul.mubr.bf16.gmra.mrb[0].mxu0 %v2610
      %v2701 = vpop.f32.mrb[0].mxu0
      %v2702 = vadd.f32 %v2407, %v2701
      %v2703 = vpop.f32.mrb[0].mxu0
      %v2704 = vpop.f32.mrb[0].mxu0
      %v2705 = vadd.f32 %v2410, %v2704
      %v2706 = vpop.f32.mrb[0].mxu0
      %2707 = vmatprep.mubr.bf16.mxu0 0
      %2708 = vmatmul.mubr.bf16.gmra.mrb[0].mxu0 %v2613
      %v2709 = vpop.f32.mrb[0].mxu0
      %v2710 = vadd.f32 %v2415, %v2709
      %v2711 = vpop.f32.mrb[0].mxu0
      %v2712 = vpop.f32.mrb[0].mxu0
      %v2713 = vadd.f32 %v2418, %v2712
      %v2714 = vpop.f32.mrb[0].mxu0
      %2715 = vmatprep.mubr.bf16.mxu0 0
      %2716 = vmatmul.mubr.bf16.gmra.mrb[0].mxu0 %v2616
      %v2717 = vpop.f32.mrb[0].mxu0
      %v2718 = vadd.f32 %v2423, %v2717
      %v2719 = vpop.f32.mrb[0].mxu0
      %v2720 = vpop.f32.mrb[0].mxu0
      %v2721 = vadd.f32 %v2426, %v2720
      %v2722 = vpop.f32.mrb[0].mxu0
      %2723 = vmatprep.mubr.bf16.mxu0 0
      %2724 = vmatmul.mubr.bf16.gmra.mrb[0].mxu0 %v2619
      %v2725 = vpop.f32.mrb[0].mxu0
      %v2726 = vadd.f32 %v2431, %v2725
      %v2727 = vpop.f32.mrb[0].mxu0
      %v2728 = vpop.f32.mrb[0].mxu0
      %v2729 = vadd.f32 %v2434, %v2728
      %v2730 = vpop.f32.mrb[0].mxu0
      %2731 = vmatprep.mubr.bf16.mxu0 0
      %2732 = vmatmul.mubr.bf16.gmra.mrb[0].mxu0 %v2622
      %v2733 = vpop.f32.mrb[0].mxu0
      %v2734 = vadd.f32 %v2439, %v2733
      %v2735 = vpop.f32.mrb[0].mxu0
      %v2736 = vpop.f32.mrb[0].mxu0
      %v2737 = vadd.f32 %v2442, %v2736
      %v2738 = vpop.f32.mrb[0].mxu0
      %2739 = vmatprep.mubr.bf16.mxu0 0
      %2740 = vmatmul.mubr.bf16.gmra.mrb[0].mxu0 %v2625
      %v2741 = vpop.f32.mrb[0].mxu0
      %v2742 = vadd.f32 %v2447, %v2741
      %v2743 = vpop.f32.mrb[0].mxu0
      %v2744 = vpop.f32.mrb[0].mxu0
      %v2745 = vadd.f32 %v2450, %v2744
      %v2746 = vpop.f32.mrb[0].mxu0
      %2747 = vmatprep.mubr.bf16.mxu0 0
      %2748 = vmatmul.mubr.bf16.gmra.mrb[0].mxu0 %v2628
      %v2749 = vpop.f32.mrb[0].mxu0
      %v2750 = vadd.f32 %v2455, %v2749
      %v2751 = vpop.f32.mrb[0].mxu0
      %v2752 = vpop.f32.mrb[0].mxu0
      %v2753 = vadd.f32 %v2458, %v2752
      %v2754 = vpop.f32.mrb[0].mxu0
      %2755 = vmatprep.mubr.bf16.mxu0 0
      %2756 = vmatmul.mubr.bf16.gmra.mrb[0].mxu0 %v2631
      %v2757 = vpop.f32.mrb[0].mxu0
      %v2758 = vadd.f32 %v2463, %v2757
      %v2759 = vpop.f32.mrb[0].mxu0
      %v2760 = vpop.f32.mrb[0].mxu0
      %v2761 = vadd.f32 %v2466, %v2760
      %v2762 = vpop.f32.mrb[0].mxu0
      %2763 = vmatprep.mubr.bf16.mxu0 0
      %2764 = vmatmul.mubr.bf16.gmra.mrb[0].mxu0 %v2634
      %v2765 = vpop.f32.mrb[0].mxu0
      %v2766 = vadd.f32 %v2471, %v2765
      %v2767 = vpop.f32.mrb[0].mxu0
      %v2768 = vpop.f32.mrb[0].mxu0
      %v2769 = vadd.f32 %v2474, %v2768
      %v2770 = vpop.f32.mrb[0].mxu0
      %2771 = vmatprep.mubr.bf16.mxu0 0
      %2772 = vmatmul.mubr.bf16.gmra.mrb[0].mxu0 %v2637
      %v2773 = vpop.f32.mrb[0].mxu0
      %v2774 = vadd.f32 %v2479, %v2773
      %v2775 = vpop.f32.mrb[0].mxu0
      %v2776 = vpop.f32.mrb[0].mxu0
      %v2777 = vadd.f32 %v2482, %v2776
      %v2778 = vpop.f32.mrb[0].mxu0
      %2779 = vmatprep.mubr.bf16.mxu0 0
      %2780 = vmatmul.mubr.bf16.gmra.mrb[0].mxu0 %v2640
      %v2781 = vpop.f32.mrb[0].mxu0
      %v2782 = vadd.f32 %v2487, %v2781
      %v2783 = vpop.f32.mrb[0].mxu0
      %v2784 = vpop.f32.mrb[0].mxu0
      %v2785 = vadd.f32 %v2490, %v2784
      %v2786 = vpop.f32.mrb[0].mxu0
      %2787 = vmatprep.mubr.bf16.mxu0 0
      %2788 = vmatmul.mubr.bf16.gmra.mrb[0].mxu0 %v2643
      %v2789 = vpop.f32.mrb[0].mxu0
      %v2790 = vadd.f32 %v2495, %v2789
      %v2791 = vpop.f32.mrb[0].mxu0
      %v2792 = vpop.f32.mrb[0].mxu0
      %v2793 = vadd.f32 %v2498, %v2792
      %v2794 = vpop.f32.mrb[0].mxu0
      %2795 = vmatprep.mubr.bf16.mxu0 0
      %2796 = vmatmul.mubr.bf16.gmra.mrb[0].mxu0 %v2646
      %v2797 = vpop.f32.mrb[0].mxu0
      %v2798 = vadd.f32 %v2503, %v2797
      %v2799 = vpop.f32.mrb[0].mxu0
      %v2800 = vpop.f32.mrb[0].mxu0
      %v2801 = vadd.f32 %v2506, %v2800
      %v2802 = vpop.f32.mrb[0].mxu0
      %2803 = vmatprep.mubr.bf16.mxu0 0
      %2804 = vmatmul.mubr.bf16.gmra.mrb[0].mxu0 %v2649
      %v2805 = vpop.f32.mrb[0].mxu0
      %v2806 = vadd.f32 %v2511, %v2805
      %v2807 = vpop.f32.mrb[0].mxu0
      %v2808 = vpop.f32.mrb[0].mxu0
      %v2809 = vadd.f32 %v2514, %v2808
      %v2810 = vpop.f32.mrb[0].mxu0
      %2811 = vdwg.mxu0
      %v2812 = vld [vmem:[#allocation2] sm:$0xe]
      %v2813 = vld [vmem:[#allocation2 + $0xc] sm:$0xe]
      %v2814 = vld [vmem:[#allocation2 + $0x18] sm:$0xe]
      %v2815 = vld [vmem:[#allocation2 + $0x24] sm:$0xe]
      %v2816 = vld [vmem:[#allocation2 + $0x30] sm:$0xe]
      %v2817 = vld [vmem:[#allocation2 + $0x3c] sm:$0xe]
      %v2818 = vld [vmem:[#allocation2 + $0x48] sm:$0xe]
      %v2819 = vld [vmem:[#allocation2 + $0x54] sm:$0xe]
      %v2820 = vld [vmem:[#allocation2 + $0x60] sm:$0xe]
      %v2821 = vld [vmem:[#allocation2 + $0x6c] sm:$0xe]
      %v2822 = vld [vmem:[#allocation2 + $0x78] sm:$0xe]
      %v2823 = vld [vmem:[#allocation2 + $0x84] sm:$0xe]
      %v2824 = vld [vmem:[#allocation2 + $0x90] sm:$0xe]
      %v2825 = vld [vmem:[#allocation2 + $0x9c] sm:$0xe]
      %v2826 = vld [vmem:[#allocation2 + $0xa8] sm:$0xe]
      %v2827 = vld [vmem:[#allocation2 + $0xb4] sm:$0xe]
      %vm2860 = vcmask 1042432
      %vm2861 = vcmask 1046532
      %vm2862 = vmor %vm2860, %vm2861
      %v2863 = vrot.slane %v2812, 5
      %v2864 = vrot.slane %v2863, 4
      %v2865 = vrot.slane %v1815, 5
      %v2866 = vsel %vm2862, %v2864, %v2865
      %v2867 = vrot.slane %v2865, 4
      %v2868 = vrot.slane %v1848, 5
      %v2869 = vsel %vm2862, %v2867, %v2868
      %v2870 = vrot.slane %v2813, 5
      %v2871 = vrot.slane %v2870, 4
      %v2872 = vrot.slane %v1817, 5
      %v2873 = vsel %vm2862, %v2871, %v2872
      %v2874 = vrot.slane %v2872, 4
      %v2875 = vrot.slane %v1849, 5
      %v2876 = vsel %vm2862, %v2874, %v2875
      %v2877 = vrot.slane %v2814, 5
      %v2878 = vrot.slane %v2877, 4
      %v2879 = vrot.slane %v1819, 5
      %v2880 = vsel %vm2862, %v2878, %v2879
      %v2881 = vrot.slane %v2879, 4
      %v2882 = vrot.slane %v1850, 5
      %v2883 = vsel %vm2862, %v2881, %v2882
      %v2884 = vrot.slane %v2815, 5
      %v2885 = vrot.slane %v2884, 4
      %v2886 = vrot.slane %v1821, 5
      %v2887 = vsel %vm2862, %v2885, %v2886
      %v2888 = vrot.slane %v2886, 4
      %v2889 = vrot.slane %v1851, 5
      %v2890 = vsel %vm2862, %v2888, %v2889
      %v2891 = vrot.slane %v2816, 5
      %v2892 = vrot.slane %v2891, 4
      %v2893 = vrot.slane %v1823, 5
      %v2894 = vsel %vm2862, %v2892, %v2893
      %v2895 = vrot.slane %v2893, 4
      %v2896 = vrot.slane %v1852, 5
      %v2897 = vsel %vm2862, %v2895, %v2896
      %v2898 = vrot.slane %v2817, 5
      %v2899 = vrot.slane %v2898, 4
      %v2900 = vrot.slane %v1825, 5
      %v2901 = vsel %vm2862, %v2899, %v2900
      %v2902 = vrot.slane %v2900, 4
      %v2903 = vrot.slane %v1853, 5
      %v2904 = vsel %vm2862, %v2902, %v2903
      %v2905 = vrot.slane %v2818, 5
      %v2906 = vrot.slane %v2905, 4
      %v2907 = vrot.slane %v1827, 5
      %v2908 = vsel %vm2862, %v2906, %v2907
      %v2909 = vrot.slane %v2907, 4
      %v2910 = vrot.slane %v1854, 5
      %v2911 = vsel %vm2862, %v2909, %v2910
      %v2912 = vrot.slane %v2819, 5
      %v2913 = vrot.slane %v2912, 4
      %v2914 = vrot.slane %v1829, 5
      %v2915 = vsel %vm2862, %v2913, %v2914
      %v2916 = vrot.slane %v2914, 4
      %v2917 = vrot.slane %v1855, 5
      %v2918 = vsel %vm2862, %v2916, %v2917
      %v2919 = vrot.slane %v2820, 5
      %v2920 = vrot.slane %v2919, 4
      %v2921 = vrot.slane %v1831, 5
      %v2922 = vsel %vm2862, %v2920, %v2921
      %v2923 = vrot.slane %v2921, 4
      %v2924 = vrot.slane %v1856, 5
      %v2925 = vsel %vm2862, %v2923, %v2924
      %v2926 = vrot.slane %v2821, 5
      %v2927 = vrot.slane %v2926, 4
      %v2928 = vrot.slane %v1833, 5
      %v2929 = vsel %vm2862, %v2927, %v2928
      %v2930 = vrot.slane %v2928, 4
      %v2931 = vrot.slane %v1857, 5
      %v2932 = vsel %vm2862, %v2930, %v2931
      %v2933 = vrot.slane %v2822, 5
      %v2934 = vrot.slane %v2933, 4
      %v2935 = vrot.slane %v1835, 5
      %v2936 = vsel %vm2862, %v2934, %v2935
      %v2937 = vrot.slane %v2935, 4
      %v2938 = vrot.slane %v1858, 5
      %v2939 = vsel %vm2862, %v2937, %v2938
      %v2940 = vrot.slane %v2823, 5
      %v2941 = vrot.slane %v2940, 4
      %v2942 = vrot.slane %v1837, 5
      %v2943 = vsel %vm2862, %v2941, %v2942
      %v2944 = vrot.slane %v2942, 4
      %v2945 = vrot.slane %v1859, 5
      %v2946 = vsel %vm2862, %v2944, %v2945
      %v2947 = vrot.slane %v2824, 5
      %v2948 = vrot.slane %v2947, 4
      %v2949 = vrot.slane %v1839, 5
      %v2950 = vsel %vm2862, %v2948, %v2949
      %v2951 = vrot.slane %v2949, 4
      %v2952 = vrot.slane %v1860, 5
      %v2953 = vsel %vm2862, %v2951, %v2952
      %v2954 = vrot.slane %v2825, 5
      %v2955 = vrot.slane %v2954, 4
      %v2956 = vrot.slane %v1841, 5
      %v2957 = vsel %vm2862, %v2955, %v2956
      %v2958 = vrot.slane %v2956, 4
      %v2959 = vrot.slane %v1861, 5
      %v2960 = vsel %vm2862, %v2958, %v2959
      %v2961 = vrot.slane %v2826, 5
      %v2962 = vrot.slane %v2961, 4
      %v2963 = vrot.slane %v1843, 5
      %v2964 = vsel %vm2862, %v2962, %v2963
      %v2965 = vrot.slane %v2963, 4
      %v2966 = vrot.slane %v1862, 5
      %v2967 = vsel %vm2862, %v2965, %v2966
      %v2968 = vrot.slane %v2827, 5
      %v2969 = vrot.slane %v2968, 4
      %v2970 = vrot.slane %v1845, 5
      %v2971 = vsel %vm2862, %v2969, %v2970
      %v2972 = vrot.slane %v2970, 4
      %v2973 = vrot.slane %v1863, 5
      %v2974 = vsel %vm2862, %v2972, %v2973
      %s2975 = scalar_lea.vmem %s5, 16
      %v2976 = vld [vmem:[%s2975] sm:$0xf]
      %v2977 = vld [vmem:[%s2975 + $0x4] sm:$0xf]
      %v2978 = vunpack.c.l.b16 %v2866
      %v2979 = vunpack.c.l.b16 %v2869
      %v2980 = vunpack.c.l.b16 %v2873
      %v2981 = vunpack.c.l.b16 %v2876
      %v2982 = vunpack.c.l.b16 %v2880
      %v2983 = vunpack.c.l.b16 %v2883
      %v2984 = vunpack.c.l.b16 %v2887
      %v2985 = vunpack.c.l.b16 %v2890
      %v2986 = vunpack.c.l.b16 %v2894
      %v2987 = vunpack.c.l.b16 %v2897
      %v2988 = vunpack.c.l.b16 %v2901
      %v2989 = vunpack.c.l.b16 %v2904
      %v2990 = vunpack.c.l.b16 %v2908
      %v2991 = vunpack.c.l.b16 %v2911
      %v2992 = vunpack.c.l.b16 %v2915
      %v2993 = vunpack.c.l.b16 %v2918
      %v2994 = vunpack.c.l.b16 %v2922
      %v2995 = vunpack.c.l.b16 %v2925
      %v2996 = vunpack.c.l.b16 %v2929
      %v2997 = vunpack.c.l.b16 %v2932
      %v2998 = vunpack.c.l.b16 %v2936
      %v2999 = vunpack.c.l.b16 %v2939
      %v3000 = vunpack.c.l.b16 %v2943
      %v3001 = vunpack.c.l.b16 %v2946
      %v3002 = vunpack.c.l.b16 %v2950
      %v3003 = vunpack.c.l.b16 %v2953
      %v3004 = vunpack.c.l.b16 %v2957
      %v3005 = vunpack.c.l.b16 %v2960
      %v3006 = vunpack.c.l.b16 %v2964
      %v3007 = vunpack.c.l.b16 %v2967
      %v3008 = vunpack.c.l.b16 %v2971
      %v3009 = vunpack.c.l.b16 %v2974
      %v3010 = vpack.c.b16 %v2979, %v2978
      %v3011 = vpack.c.b16 %v2981, %v2980
      %v3012 = vpack.c.b16 %v2983, %v2982
      %v3013 = vpack.c.b16 %v2985, %v2984
      %v3014 = vpack.c.b16 %v2987, %v2986
      %v3015 = vpack.c.b16 %v2989, %v2988
      %v3016 = vpack.c.b16 %v2991, %v2990
      %v3017 = vpack.c.b16 %v2993, %v2992
      %v3018 = vpack.c.b16 %v2995, %v2994
      %v3019 = vpack.c.b16 %v2997, %v2996
      %v3020 = vpack.c.b16 %v2999, %v2998
      %v3021 = vpack.c.b16 %v3001, %v3000
      %v3022 = vpack.c.b16 %v3003, %v3002
      %v3023 = vpack.c.b16 %v3005, %v3004
      %v3024 = vpack.c.b16 %v3007, %v3006
      %v3025 = vpack.c.b16 %v3009, %v3008
      %v3028 = vunpack.c.l.b16 %v2976
      %v3029 = vunpack.c.l.b16 %v2977
      %v3030 = vpack.c.b16 %v3029, %v3028
      %v3033 = vsel %vm850, %v3010, 0
      %v3036 = vsel %vm850, %v3011, 0
      %v3039 = vsel %vm850, %v3012, 0
      %v3042 = vsel %vm850, %v3013, 0
      %v3045 = vsel %vm850, %v3014, 0
      %v3048 = vsel %vm850, %v3015, 0
      %v3051 = vsel %vm850, %v3016, 0
      %v3054 = vsel %vm850, %v3017, 0
      %v3057 = vsel %vm850, %v3018, 0
      %v3060 = vsel %vm850, %v3019, 0
      %v3063 = vsel %vm850, %v3020, 0
      %v3066 = vsel %vm850, %v3021, 0
      %v3069 = vsel %vm850, %v3022, 0
      %v3072 = vsel %vm850, %v3023, 0
      %v3075 = vsel %vm850, %v3024, 0
      %v3078 = vsel %vm850, %v3025, 0
      %3080 = vmatprep.subr.bf16.mxu0 0
      %3081 = vmatpush1.bf16.msra.mxu0 %v3030
      %3082 = vmatprep.subr.bf16.mxu0 0
      %3083 = vmatpush1.bf16.msra.mxu0 0
      %3084 = vmatprep.subr.bf16.mxu0 0
      %3085 = vmatpush1.bf16.msra.mxu0 0
      %3086 = vmatprep.subr.bf16.mxu0 0
      %3087 = vmatpush1.bf16.msra.mxu0 0
      %3088 = vmatprep.subr.bf16.mxu0 0
      %3089 = vmatpush1.bf16.msra.mxu0 0
      %3090 = vmatprep.subr.bf16.mxu0 0
      %3091 = vmatpush1.bf16.msra.mxu0 0
      %3092 = vmatprep.subr.bf16.mxu0 0
      %3093 = vmatpush1.bf16.msra.mxu0 0
      %3094 = vmatprep.subr.bf16.mxu0 0
      %3095 = vmatpush1.bf16.msra.mxu0 0
      %3096 = vmatprep.subr.bf16.mxu0 0
      %3097 = vmatpush1.bf16.msra.mxu0 0
      %3098 = vmatprep.subr.bf16.mxu0 0
      %3099 = vmatpush1.bf16.msra.mxu0 0
      %3100 = vmatprep.subr.bf16.mxu0 0
      %3101 = vmatpush1.bf16.msra.mxu0 0
      %3102 = vmatprep.subr.bf16.mxu0 0
      %3103 = vmatpush1.bf16.msra.mxu0 0
      %3104 = vmatprep.subr.bf16.mxu0 0
      %3105 = vmatpush1.bf16.msra.mxu0 0
      %3106 = vmatprep.subr.bf16.mxu0 0
      %3107 = vmatpush1.bf16.msra.mxu0 0
      %3108 = vmatprep.subr.bf16.mxu0 0
      %3109 = vmatpush1.bf16.msra.mxu0 0
      %3110 = vmatprep.subr.bf16.mxu0 0
      %3111 = vmatpush1.bf16.msra.mxu0 0
      %3112 = vmatprep.mubr.bf16.mxu0 0
      %3113 = vmatmul.mubr.bf16.gmra.mrb[0].mxu0 %v3033
      %v3114 = vpop.f32.mrb[0].mxu0
      %v3115 = vadd.f32 0.0, %v3114
      %v3116 = vpop.f32.mrb[0].mxu0
      %v3117 = vpop.f32.mrb[0].mxu0
      %v3118 = vadd.f32 0.0, %v3117
      %v3119 = vpop.f32.mrb[0].mxu0
      %3120 = vmatprep.mubr.bf16.mxu0 0
      %3121 = vmatmul.mubr.bf16.gmra.mrb[0].mxu0 %v3036
      %v3122 = vpop.f32.mrb[0].mxu0
      %v3123 = vadd.f32 0.0, %v3122
      %v3124 = vpop.f32.mrb[0].mxu0
      %v3125 = vpop.f32.mrb[0].mxu0
      %v3126 = vadd.f32 0.0, %v3125
      %v3127 = vpop.f32.mrb[0].mxu0
      %3128 = vmatprep.mubr.bf16.mxu0 0
      %3129 = vmatmul.mubr.bf16.gmra.mrb[0].mxu0 %v3039
      %v3130 = vpop.f32.mrb[0].mxu0
      %v3131 = vadd.f32 0.0, %v3130
      %v3132 = vpop.f32.mrb[0].mxu0
      %v3133 = vpop.f32.mrb[0].mxu0
      %v3134 = vadd.f32 0.0, %v3133
      %v3135 = vpop.f32.mrb[0].mxu0
      %3136 = vmatprep.mubr.bf16.mxu0 0
      %3137 = vmatmul.mubr.bf16.gmra.mrb[0].mxu0 %v3042
      %v3138 = vpop.f32.mrb[0].mxu0
      %v3139 = vadd.f32 0.0, %v3138
      %v3140 = vpop.f32.mrb[0].mxu0
      %v3141 = vpop.f32.mrb[0].mxu0
      %v3142 = vadd.f32 0.0, %v3141
      %v3143 = vpop.f32.mrb[0].mxu0
      %3144 = vmatprep.mubr.bf16.mxu0 0
      %3145 = vmatmul.mubr.bf16.gmra.mrb[0].mxu0 %v3045
      %v3146 = vpop.f32.mrb[0].mxu0
      %v3147 = vadd.f32 0.0, %v3146
      %v3148 = vpop.f32.mrb[0].mxu0
      %v3149 = vpop.f32.mrb[0].mxu0
      %v3150 = vadd.f32 0.0, %v3149
      %v3151 = vpop.f32.mrb[0].mxu0
      %3152 = vmatprep.mubr.bf16.mxu0 0
      %3153 = vmatmul.mubr.bf16.gmra.mrb[0].mxu0 %v3048
      %v3154 = vpop.f32.mrb[0].mxu0
      %v3155 = vadd.f32 0.0, %v3154
      %v3156 = vpop.f32.mrb[0].mxu0
      %v3157 = vpop.f32.mrb[0].mxu0
      %v3158 = vadd.f32 0.0, %v3157
      %v3159 = vpop.f32.mrb[0].mxu0
      %3160 = vmatprep.mubr.bf16.mxu0 0
      %3161 = vmatmul.mubr.bf16.gmra.mrb[0].mxu0 %v3051
      %v3162 = vpop.f32.mrb[0].mxu0
      %v3163 = vadd.f32 0.0, %v3162
      %v3164 = vpop.f32.mrb[0].mxu0
      %v3165 = vpop.f32.mrb[0].mxu0
      %v3166 = vadd.f32 0.0, %v3165
      %v3167 = vpop.f32.mrb[0].mxu0
      %3168 = vmatprep.mubr.bf16.mxu0 0
      %3169 = vmatmul.mubr.bf16.gmra.mrb[0].mxu0 %v3054
      %v3170 = vpop.f32.mrb[0].mxu0
      %v3171 = vadd.f32 0.0, %v3170
      %v3172 = vpop.f32.mrb[0].mxu0
      %v3173 = vpop.f32.mrb[0].mxu0
      %v3174 = vadd.f32 0.0, %v3173
      %v3175 = vpop.f32.mrb[0].mxu0
      %3176 = vmatprep.mubr.bf16.mxu0 0
      %3177 = vmatmul.mubr.bf16.gmra.mrb[0].mxu0 %v3057
      %v3178 = vpop.f32.mrb[0].mxu0
      %v3179 = vadd.f32 0.0, %v3178
      %v3180 = vpop.f32.mrb[0].mxu0
      %v3181 = vpop.f32.mrb[0].mxu0
      %v3182 = vadd.f32 0.0, %v3181
      %v3183 = vpop.f32.mrb[0].mxu0
      %3184 = vmatprep.mubr.bf16.mxu0 0
      %3185 = vmatmul.mubr.bf16.gmra.mrb[0].mxu0 %v3060
      %v3186 = vpop.f32.mrb[0].mxu0
      %v3187 = vadd.f32 0.0, %v3186
      %v3188 = vpop.f32.mrb[0].mxu0
      %v3189 = vpop.f32.mrb[0].mxu0
      %v3190 = vadd.f32 0.0, %v3189
      %v3191 = vpop.f32.mrb[0].mxu0
      %3192 = vmatprep.mubr.bf16.mxu0 0
      %3193 = vmatmul.mubr.bf16.gmra.mrb[0].mxu0 %v3063
      %v3194 = vpop.f32.mrb[0].mxu0
      %v3195 = vadd.f32 0.0, %v3194
      %v3196 = vpop.f32.mrb[0].mxu0
      %v3197 = vpop.f32.mrb[0].mxu0
      %v3198 = vadd.f32 0.0, %v3197
      %v3199 = vpop.f32.mrb[0].mxu0
      %3200 = vmatprep.mubr.bf16.mxu0 0
      %3201 = vmatmul.mubr.bf16.gmra.mrb[0].mxu0 %v3066
      %v3202 = vpop.f32.mrb[0].mxu0
      %v3203 = vadd.f32 0.0, %v3202
      %v3204 = vpop.f32.mrb[0].mxu0
      %v3205 = vpop.f32.mrb[0].mxu0
      %v3206 = vadd.f32 0.0, %v3205
      %v3207 = vpop.f32.mrb[0].mxu0
      %3208 = vmatprep.mubr.bf16.mxu0 0
      %3209 = vmatmul.mubr.bf16.gmra.mrb[0].mxu0 %v3069
      %v3210 = vpop.f32.mrb[0].mxu0
      %v3211 = vadd.f32 0.0, %v3210
      %v3212 = vpop.f32.mrb[0].mxu0
      %v3213 = vpop.f32.mrb[0].mxu0
      %v3214 = vadd.f32 0.0, %v3213
      %v3215 = vpop.f32.mrb[0].mxu0
      %3216 = vmatprep.mubr.bf16.mxu0 0
      %3217 = vmatmul.mubr.bf16.gmra.mrb[0].mxu0 %v3072
      %v3218 = vpop.f32.mrb[0].mxu0
      %v3219 = vadd.f32 0.0, %v3218
      %v3220 = vpop.f32.mrb[0].mxu0
      %v3221 = vpop.f32.mrb[0].mxu0
      %v3222 = vadd.f32 0.0, %v3221
      %v3223 = vpop.f32.mrb[0].mxu0
      %3224 = vmatprep.mubr.bf16.mxu0 0
      %3225 = vmatmul.mubr.bf16.gmra.mrb[0].mxu0 %v3075
      %v3226 = vpop.f32.mrb[0].mxu0
      %v3227 = vadd.f32 0.0, %v3226
      %v3228 = vpop.f32.mrb[0].mxu0
      %v3229 = vpop.f32.mrb[0].mxu0
      %v3230 = vadd.f32 0.0, %v3229
      %v3231 = vpop.f32.mrb[0].mxu0
      %3232 = vmatprep.mubr.bf16.mxu0 0
      %3233 = vmatmul.mubr.bf16.gmra.mrb[0].mxu0 %v3078
      %v3234 = vpop.f32.mrb[0].mxu0
      %v3235 = vadd.f32 0.0, %v3234
      %v3236 = vpop.f32.mrb[0].mxu0
      %v3237 = vpop.f32.mrb[0].mxu0
      %v3238 = vadd.f32 0.0, %v3237
      %v3239 = vpop.f32.mrb[0].mxu0
      %3240 = vdwg.mxu0
      %v3241 = vadd.f32 %v2686, %v3115
      %v3242 = vadd.f32 %v2689, %v3118
      %v3243 = vadd.f32 %v2694, %v3123
      %v3244 = vadd.f32 %v2697, %v3126
      %v3245 = vadd.f32 %v2702, %v3131
      %v3246 = vadd.f32 %v2705, %v3134
      %v3247 = vadd.f32 %v2710, %v3139
      %v3248 = vadd.f32 %v2713, %v3142
      %v3249 = vadd.f32 %v2718, %v3147
      %v3250 = vadd.f32 %v2721, %v3150
      %v3251 = vadd.f32 %v2726, %v3155
      %v3252 = vadd.f32 %v2729, %v3158
      %v3253 = vadd.f32 %v2734, %v3163
      %v3254 = vadd.f32 %v2737, %v3166
      %v3255 = vadd.f32 %v2742, %v3171
      %v3256 = vadd.f32 %v2745, %v3174
      %v3257 = vadd.f32 %v2750, %v3179
      %v3258 = vadd.f32 %v2753, %v3182
      %v3259 = vadd.f32 %v2758, %v3187
      %v3260 = vadd.f32 %v2761, %v3190
      %v3261 = vadd.f32 %v2766, %v3195
      %v3262 = vadd.f32 %v2769, %v3198
      %v3263 = vadd.f32 %v2774, %v3203
      %v3264 = vadd.f32 %v2777, %v3206
      %v3265 = vadd.f32 %v2782, %v3211
      %v3266 = vadd.f32 %v2785, %v3214
      %v3267 = vadd.f32 %v2790, %v3219
      %v3268 = vadd.f32 %v2793, %v3222
      %v3269 = vadd.f32 %v2798, %v3227
      %v3270 = vadd.f32 %v2801, %v3230
      %v3271 = vadd.f32 %v2806, %v3235
      %v3272 = vadd.f32 %v2809, %v3238
      %v3273 = vld [vmem:[%s1699] sm:$0xf]
      %v3274 = vld [vmem:[%s1699 + $0x4] sm:$0xf]
      %v3275 = vld [vmem:[%s1699 + $0xc] sm:$0xf]
      %v3276 = vld [vmem:[%s1699 + $0x10] sm:$0xf]
      %v3277 = vld [vmem:[%s1699 + $0x18] sm:$0xf]
      %v3278 = vld [vmem:[%s1699 + $0x1c] sm:$0xf]
      %v3279 = vld [vmem:[%s1699 + $0x24] sm:$0xf]
      %v3280 = vld [vmem:[%s1699 + $0x28] sm:$0xf]
      %v3281 = vld [vmem:[%s1699 + $0x30] sm:$0xf]
      %v3282 = vld [vmem:[%s1699 + $0x34] sm:$0xf]
      %v3283 = vld [vmem:[%s1699 + $0x3c] sm:$0xf]
      %v3284 = vld [vmem:[%s1699 + $0x40] sm:$0xf]
      %v3285 = vld [vmem:[%s1699 + $0x48] sm:$0xf]
      %v3286 = vld [vmem:[%s1699 + $0x4c] sm:$0xf]
      %v3287 = vld [vmem:[%s1699 + $0x54] sm:$0xf]
      %v3288 = vld [vmem:[%s1699 + $0x58] sm:$0xf]
      %v3289 = vld [vmem:[%s1699 + $0x60] sm:$0xf]
      %v3290 = vld [vmem:[%s1699 + $0x64] sm:$0xf]
      %v3291 = vld [vmem:[%s1699 + $0x6c] sm:$0xf]
      %v3292 = vld [vmem:[%s1699 + $0x70] sm:$0xf]
      %v3293 = vld [vmem:[%s1699 + $0x78] sm:$0xf]
      %v3294 = vld [vmem:[%s1699 + $0x7c] sm:$0xf]
      %v3295 = vld [vmem:[%s1699 + $0x84] sm:$0xf]
      %v3296 = vld [vmem:[%s1699 + $0x88] sm:$0xf]
      %v3297 = vld [vmem:[%s1699 + $0x90] sm:$0xf]
      %v3298 = vld [vmem:[%s1699 + $0x94] sm:$0xf]
      %v3299 = vld [vmem:[%s1699 + $0x9c] sm:$0xf]
      %v3300 = vld [vmem:[%s1699 + $0xa0] sm:$0xf]
      %v3301 = vld [vmem:[%s1699 + $0xa8] sm:$0xf]
      %v3302 = vld [vmem:[%s1699 + $0xac] sm:$0xf]
      %v3303 = vld [vmem:[%s1699 + $0xb4] sm:$0xf]
      %v3304 = vld [vmem:[%s1699 + $0xb8] sm:$0xf]
      %s3305 = scalar_lea.vmem %s5, 24
      %v3306 = vld [vmem:[%s3305] sm:$0xf]
      %v3307 = vld [vmem:[%s3305 + $0x4] sm:$0xf]
      %v3340 = vunpack.c.l.b16 %v3273
      %v3341 = vunpack.c.l.b16 %v3274
      %v3342 = vunpack.c.l.b16 %v3275
      %v3343 = vunpack.c.l.b16 %v3276
      %v3344 = vunpack.c.l.b16 %v3277
      %v3345 = vunpack.c.l.b16 %v3278
      %v3346 = vunpack.c.l.b16 %v3279
      %v3347 = vunpack.c.l.b16 %v3280
      %v3348 = vunpack.c.l.b16 %v3281
      %v3349 = vunpack.c.l.b16 %v3282
      %v3350 = vunpack.c.l.b16 %v3283
      %v3351 = vunpack.c.l.b16 %v3284
      %v3352 = vunpack.c.l.b16 %v3285
      %v3353 = vunpack.c.l.b16 %v3286
      %v3354 = vunpack.c.l.b16 %v3287
      %v3355 = vunpack.c.l.b16 %v3288
      %v3356 = vunpack.c.l.b16 %v3289
      %v3357 = vunpack.c.l.b16 %v3290
      %v3358 = vunpack.c.l.b16 %v3291
      %v3359 = vunpack.c.l.b16 %v3292
      %v3360 = vunpack.c.l.b16 %v3293
      %v3361 = vunpack.c.l.b16 %v3294
      %v3362 = vunpack.c.l.b16 %v3295
      %v3363 = vunpack.c.l.b16 %v3296
      %v3364 = vunpack.c.l.b16 %v3297
      %v3365 = vunpack.c.l.b16 %v3298
      %v3366 = vunpack.c.l.b16 %v3299
      %v3367 = vunpack.c.l.b16 %v3300
      %v3368 = vunpack.c.l.b16 %v3301
      %v3369 = vunpack.c.l.b16 %v3302
      %v3370 = vunpack.c.l.b16 %v3303
      %v3371 = vunpack.c.l.b16 %v3304
      %v3372 = vpack.c.b16 %v3341, %v3340
      %v3373 = vpack.c.b16 %v3343, %v3342
      %v3374 = vpack.c.b16 %v3345, %v3344
      %v3375 = vpack.c.b16 %v3347, %v3346
      %v3376 = vpack.c.b16 %v3349, %v3348
      %v3377 = vpack.c.b16 %v3351, %v3350
      %v3378 = vpack.c.b16 %v3353, %v3352
      %v3379 = vpack.c.b16 %v3355, %v3354
      %v3380 = vpack.c.b16 %v3357, %v3356
      %v3381 = vpack.c.b16 %v3359, %v3358
      %v3382 = vpack.c.b16 %v3361, %v3360
      %v3383 = vpack.c.b16 %v3363, %v3362
      %v3384 = vpack.c.b16 %v3365, %v3364
      %v3385 = vpack.c.b16 %v3367, %v3366
      %v3386 = vpack.c.b16 %v3369, %v3368
      %v3387 = vpack.c.b16 %v3371, %v3370
      %v3390 = vunpack.c.l.b16 %v3306
      %v3391 = vunpack.c.l.b16 %v3307
      %v3392 = vpack.c.b16 %v3391, %v3390
      %v3395 = vsel %vm850, %v3372, 0
      %v3398 = vsel %vm850, %v3373, 0
      %v3401 = vsel %vm850, %v3374, 0
      %v3404 = vsel %vm850, %v3375, 0
      %v3407 = vsel %vm850, %v3376, 0
      %v3410 = vsel %vm850, %v3377, 0
      %v3413 = vsel %vm850, %v3378, 0
      %v3416 = vsel %vm850, %v3379, 0
      %v3419 = vsel %vm850, %v3380, 0
      %v3422 = vsel %vm850, %v3381, 0
      %v3425 = vsel %vm850, %v3382, 0
      %v3428 = vsel %vm850, %v3383, 0
      %v3431 = vsel %vm850, %v3384, 0
      %v3434 = vsel %vm850, %v3385, 0
      %v3437 = vsel %vm850, %v3386, 0
      %v3440 = vsel %vm850, %v3387, 0
      %3442 = vmatprep.subr.bf16.mxu0 0
      %3443 = vmatpush1.bf16.msra.mxu0 %v3392
      %3444 = vmatprep.subr.bf16.mxu0 0
      %3445 = vmatpush1.bf16.msra.mxu0 0
      %3446 = vmatprep.subr.bf16.mxu0 0
      %3447 = vmatpush1.bf16.msra.mxu0 0
      %3448 = vmatprep.subr.bf16.mxu0 0
      %3449 = vmatpush1.bf16.msra.mxu0 0
      %3450 = vmatprep.subr.bf16.mxu0 0
      %3451 = vmatpush1.bf16.msra.mxu0 0
      %3452 = vmatprep.subr.bf16.mxu0 0
      %3453 = vmatpush1.bf16.msra.mxu0 0
      %3454 = vmatprep.subr.bf16.mxu0 0
      %3455 = vmatpush1.bf16.msra.mxu0 0
      %3456 = vmatprep.subr.bf16.mxu0 0
      %3457 = vmatpush1.bf16.msra.mxu0 0
      %3458 = vmatprep.subr.bf16.mxu0 0
      %3459 = vmatpush1.bf16.msra.mxu0 0
      %3460 = vmatprep.subr.bf16.mxu0 0
      %3461 = vmatpush1.bf16.msra.mxu0 0
      %3462 = vmatprep.subr.bf16.mxu0 0
      %3463 = vmatpush1.bf16.msra.mxu0 0
      %3464 = vmatprep.subr.bf16.mxu0 0
      %3465 = vmatpush1.bf16.msra.mxu0 0
      %3466 = vmatprep.subr.bf16.mxu0 0
      %3467 = vmatpush1.bf16.msra.mxu0 0
      %3468 = vmatprep.subr.bf16.mxu0 0
      %3469 = vmatpush1.bf16.msra.mxu0 0
      %3470 = vmatprep.subr.bf16.mxu0 0
      %3471 = vmatpush1.bf16.msra.mxu0 0
      %3472 = vmatprep.subr.bf16.mxu0 0
      %3473 = vmatpush1.bf16.msra.mxu0 0
      %3474 = vmatprep.mubr.bf16.mxu0 0
      %3475 = vmatmul.mubr.bf16.gmra.mrb[0].mxu0 %v3395
      %v3476 = vpop.f32.mrb[0].mxu0
      %v3477 = vadd.f32 0.0, %v3476
      %v3478 = vpop.f32.mrb[0].mxu0
      %v3479 = vpop.f32.mrb[0].mxu0
      %v3480 = vadd.f32 0.0, %v3479
      %v3481 = vpop.f32.mrb[0].mxu0
      %3482 = vmatprep.mubr.bf16.mxu0 0
      %3483 = vmatmul.mubr.bf16.gmra.mrb[0].mxu0 %v3398
      %v3484 = vpop.f32.mrb[0].mxu0
      %v3485 = vadd.f32 0.0, %v3484
      %v3486 = vpop.f32.mrb[0].mxu0
      %v3487 = vpop.f32.mrb[0].mxu0
      %v3488 = vadd.f32 0.0, %v3487
      %v3489 = vpop.f32.mrb[0].mxu0
      %3490 = vmatprep.mubr.bf16.mxu0 0
      %3491 = vmatmul.mubr.bf16.gmra.mrb[0].mxu0 %v3401
      %v3492 = vpop.f32.mrb[0].mxu0
      %v3493 = vadd.f32 0.0, %v3492
      %v3494 = vpop.f32.mrb[0].mxu0
      %v3495 = vpop.f32.mrb[0].mxu0
      %v3496 = vadd.f32 0.0, %v3495
      %v3497 = vpop.f32.mrb[0].mxu0
      %3498 = vmatprep.mubr.bf16.mxu0 0
      %3499 = vmatmul.mubr.bf16.gmra.mrb[0].mxu0 %v3404
      %v3500 = vpop.f32.mrb[0].mxu0
      %v3501 = vadd.f32 0.0, %v3500
      %v3502 = vpop.f32.mrb[0].mxu0
      %v3503 = vpop.f32.mrb[0].mxu0
      %v3504 = vadd.f32 0.0, %v3503
      %v3505 = vpop.f32.mrb[0].mxu0
      %3506 = vmatprep.mubr.bf16.mxu0 0
      %3507 = vmatmul.mubr.bf16.gmra.mrb[0].mxu0 %v3407
      %v3508 = vpop.f32.mrb[0].mxu0
      %v3509 = vadd.f32 0.0, %v3508
      %v3510 = vpop.f32.mrb[0].mxu0
      %v3511 = vpop.f32.mrb[0].mxu0
      %v3512 = vadd.f32 0.0, %v3511
      %v3513 = vpop.f32.mrb[0].mxu0
      %3514 = vmatprep.mubr.bf16.mxu0 0
      %3515 = vmatmul.mubr.bf16.gmra.mrb[0].mxu0 %v3410
      %v3516 = vpop.f32.mrb[0].mxu0
      %v3517 = vadd.f32 0.0, %v3516
      %v3518 = vpop.f32.mrb[0].mxu0
      %v3519 = vpop.f32.mrb[0].mxu0
      %v3520 = vadd.f32 0.0, %v3519
      %v3521 = vpop.f32.mrb[0].mxu0
      %3522 = vmatprep.mubr.bf16.mxu0 0
      %3523 = vmatmul.mubr.bf16.gmra.mrb[0].mxu0 %v3413
      %v3524 = vpop.f32.mrb[0].mxu0
      %v3525 = vadd.f32 0.0, %v3524
      %v3526 = vpop.f32.mrb[0].mxu0
      %v3527 = vpop.f32.mrb[0].mxu0
      %v3528 = vadd.f32 0.0, %v3527
      %v3529 = vpop.f32.mrb[0].mxu0
      %3530 = vmatprep.mubr.bf16.mxu0 0
      %3531 = vmatmul.mubr.bf16.gmra.mrb[0].mxu0 %v3416
      %v3532 = vpop.f32.mrb[0].mxu0
      %v3533 = vadd.f32 0.0, %v3532
      %v3534 = vpop.f32.mrb[0].mxu0
      %v3535 = vpop.f32.mrb[0].mxu0
      %v3536 = vadd.f32 0.0, %v3535
      %v3537 = vpop.f32.mrb[0].mxu0
      %3538 = vmatprep.mubr.bf16.mxu0 0
      %3539 = vmatmul.mubr.bf16.gmra.mrb[0].mxu0 %v3419
      %v3540 = vpop.f32.mrb[0].mxu0
      %v3541 = vadd.f32 0.0, %v3540
      %v3542 = vpop.f32.mrb[0].mxu0
      %v3543 = vpop.f32.mrb[0].mxu0
      %v3544 = vadd.f32 0.0, %v3543
      %v3545 = vpop.f32.mrb[0].mxu0
      %3546 = vmatprep.mubr.bf16.mxu0 0
      %3547 = vmatmul.mubr.bf16.gmra.mrb[0].mxu0 %v3422
      %v3548 = vpop.f32.mrb[0].mxu0
      %v3549 = vadd.f32 0.0, %v3548
      %v3550 = vpop.f32.mrb[0].mxu0
      %v3551 = vpop.f32.mrb[0].mxu0
      %v3552 = vadd.f32 0.0, %v3551
      %v3553 = vpop.f32.mrb[0].mxu0
      %3554 = vmatprep.mubr.bf16.mxu0 0
      %3555 = vmatmul.mubr.bf16.gmra.mrb[0].mxu0 %v3425
      %v3556 = vpop.f32.mrb[0].mxu0
      %v3557 = vadd.f32 0.0, %v3556
      %v3558 = vpop.f32.mrb[0].mxu0
      %v3559 = vpop.f32.mrb[0].mxu0
      %v3560 = vadd.f32 0.0, %v3559
      %v3561 = vpop.f32.mrb[0].mxu0
      %3562 = vmatprep.mubr.bf16.mxu0 0
      %3563 = vmatmul.mubr.bf16.gmra.mrb[0].mxu0 %v3428
      %v3564 = vpop.f32.mrb[0].mxu0
      %v3565 = vadd.f32 0.0, %v3564
      %v3566 = vpop.f32.mrb[0].mxu0
      %v3567 = vpop.f32.mrb[0].mxu0
      %v3568 = vadd.f32 0.0, %v3567
      %v3569 = vpop.f32.mrb[0].mxu0
      %3570 = vmatprep.mubr.bf16.mxu0 0
      %3571 = vmatmul.mubr.bf16.gmra.mrb[0].mxu0 %v3431
      %v3572 = vpop.f32.mrb[0].mxu0
      %v3573 = vadd.f32 0.0, %v3572
      %v3574 = vpop.f32.mrb[0].mxu0
      %v3575 = vpop.f32.mrb[0].mxu0
      %v3576 = vadd.f32 0.0, %v3575
      %v3577 = vpop.f32.mrb[0].mxu0
      %3578 = vmatprep.mubr.bf16.mxu0 0
      %3579 = vmatmul.mubr.bf16.gmra.mrb[0].mxu0 %v3434
      %v3580 = vpop.f32.mrb[0].mxu0
      %v3581 = vadd.f32 0.0, %v3580
      %v3582 = vpop.f32.mrb[0].mxu0
      %v3583 = vpop.f32.mrb[0].mxu0
      %v3584 = vadd.f32 0.0, %v3583
      %v3585 = vpop.f32.mrb[0].mxu0
      %3586 = vmatprep.mubr.bf16.mxu0 0
      %3587 = vmatmul.mubr.bf16.gmra.mrb[0].mxu0 %v3437
      %v3588 = vpop.f32.mrb[0].mxu0
      %v3589 = vadd.f32 0.0, %v3588
      %v3590 = vpop.f32.mrb[0].mxu0
      %v3591 = vpop.f32.mrb[0].mxu0
      %v3592 = vadd.f32 0.0, %v3591
      %v3593 = vpop.f32.mrb[0].mxu0
      %3594 = vmatprep.mubr.bf16.mxu0 0
      %3595 = vmatmul.mubr.bf16.gmra.mrb[0].mxu0 %v3440
      %v3596 = vpop.f32.mrb[0].mxu0
      %v3597 = vadd.f32 0.0, %v3596
      %v3598 = vpop.f32.mrb[0].mxu0
      %v3599 = vpop.f32.mrb[0].mxu0
      %v3600 = vadd.f32 0.0, %v3599
      %v3601 = vpop.f32.mrb[0].mxu0
      %3602 = vdwg.mxu0
      %v3603 = vadd.f32 %v3241, %v3477
      %v3604 = vadd.f32 %v3242, %v3480
      %v3605 = vadd.f32 %v3243, %v3485
      %v3606 = vadd.f32 %v3244, %v3488
      %v3607 = vadd.f32 %v3245, %v3493
      %v3608 = vadd.f32 %v3246, %v3496
      %v3609 = vadd.f32 %v3247, %v3501
      %v3610 = vadd.f32 %v3248, %v3504
      %v3611 = vadd.f32 %v3249, %v3509
      %v3612 = vadd.f32 %v3250, %v3512
      %v3613 = vadd.f32 %v3251, %v3517
      %v3614 = vadd.f32 %v3252, %v3520
      %v3615 = vadd.f32 %v3253, %v3525
      %v3616 = vadd.f32 %v3254, %v3528
      %v3617 = vadd.f32 %v3255, %v3533
      %v3618 = vadd.f32 %v3256, %v3536
      %v3619 = vadd.f32 %v3257, %v3541
      %v3620 = vadd.f32 %v3258, %v3544
      %v3621 = vadd.f32 %v3259, %v3549
      %v3622 = vadd.f32 %v3260, %v3552
      %v3623 = vadd.f32 %v3261, %v3557
      %v3624 = vadd.f32 %v3262, %v3560
      %v3625 = vadd.f32 %v3263, %v3565
      %v3626 = vadd.f32 %v3264, %v3568
      %v3627 = vadd.f32 %v3265, %v3573
      %v3628 = vadd.f32 %v3266, %v3576
      %v3629 = vadd.f32 %v3267, %v3581
      %v3630 = vadd.f32 %v3268, %v3584
      %v3631 = vadd.f32 %v3269, %v3589
      %v3632 = vadd.f32 %v3270, %v3592
      %v3633 = vadd.f32 %v3271, %v3597
      %v3634 = vadd.f32 %v3272, %v3600
      %v3635 = vld [vmem:[%s1699] sm:$0xf]
      %v3636 = vld [vmem:[%s1699 + $0x4] sm:$0xf]
      %v3637 = vld [vmem:[%s1699 + $0x8] sm:$0x1]
      %v3638 = vld [vmem:[%s1699 + $0xc] sm:$0xf]
      %v3639 = vld [vmem:[%s1699 + $0x10] sm:$0xf]
      %v3640 = vld [vmem:[%s1699 + $0x14] sm:$0x1]
      %v3641 = vld [vmem:[%s1699 + $0x18] sm:$0xf]
      %v3642 = vld [vmem:[%s1699 + $0x1c] sm:$0xf]
      %v3643 = vld [vmem:[%s1699 + $0x20] sm:$0x1]
      %v3644 = vld [vmem:[%s1699 + $0x24] sm:$0xf]
      %v3645 = vld [vmem:[%s1699 + $0x28] sm:$0xf]
      %v3646 = vld [vmem:[%s1699 + $0x2c] sm:$0x1]
      %v3647 = vld [vmem:[%s1699 + $0x30] sm:$0xf]
      %v3648 = vld [vmem:[%s1699 + $0x34] sm:$0xf]
      %v3649 = vld [vmem:[%s1699 + $0x38] sm:$0x1]
      %v3650 = vld [vmem:[%s1699 + $0x3c] sm:$0xf]
      %v3651 = vld [vmem:[%s1699 + $0x40] sm:$0xf]
      %v3652 = vld [vmem:[%s1699 + $0x44] sm:$0x1]
      %v3653 = vld [vmem:[%s1699 + $0x48] sm:$0xf]
      %v3654 = vld [vmem:[%s1699 + $0x4c] sm:$0xf]
      %v3655 = vld [vmem:[%s1699 + $0x50] sm:$0x1]
      %v3656 = vld [vmem:[%s1699 + $0x54] sm:$0xf]
      %v3657 = vld [vmem:[%s1699 + $0x58] sm:$0xf]
      %v3658 = vld [vmem:[%s1699 + $0x5c] sm:$0x1]
      %v3659 = vld [vmem:[%s1699 + $0x60] sm:$0xf]
      %v3660 = vld [vmem:[%s1699 + $0x64] sm:$0xf]
      %v3661 = vld [vmem:[%s1699 + $0x68] sm:$0x1]
      %v3662 = vld [vmem:[%s1699 + $0x6c] sm:$0xf]
      %v3663 = vld [vmem:[%s1699 + $0x70] sm:$0xf]
      %v3664 = vld [vmem:[%s1699 + $0x74] sm:$0x1]
      %v3665 = vld [vmem:[%s1699 + $0x78] sm:$0xf]
      %v3666 = vld [vmem:[%s1699 + $0x7c] sm:$0xf]
      %v3667 = vld [vmem:[%s1699 + $0x80] sm:$0x1]
      %v3668 = vld [vmem:[%s1699 + $0x84] sm:$0xf]
      %v3669 = vld [vmem:[%s1699 + $0x88] sm:$0xf]
      %v3670 = vld [vmem:[%s1699 + $0x8c] sm:$0x1]
      %v3671 = vld [vmem:[%s1699 + $0x90] sm:$0xf]
      %v3672 = vld [vmem:[%s1699 + $0x94] sm:$0xf]
      %v3673 = vld [vmem:[%s1699 + $0x98] sm:$0x1]
      %v3674 = vld [vmem:[%s1699 + $0x9c] sm:$0xf]
      %v3675 = vld [vmem:[%s1699 + $0xa0] sm:$0xf]
      %v3676 = vld [vmem:[%s1699 + $0xa4] sm:$0x1]
      %v3677 = vld [vmem:[%s1699 + $0xa8] sm:$0xf]
      %v3678 = vld [vmem:[%s1699 + $0xac] sm:$0xf]
      %v3679 = vld [vmem:[%s1699 + $0xb0] sm:$0x1]
      %v3680 = vld [vmem:[%s1699 + $0xb4] sm:$0xf]
      %v3681 = vld [vmem:[%s1699 + $0xb8] sm:$0xf]
      %v3682 = vld [vmem:[%s1699 + $0xbc] sm:$0x1]
      %v3684 = vshrl.u32 %v3635, 16
      %v3686 = vrot.slane %v3684, 4
      %v3687 = vshll.u32 %v3635, 16
      %v3689 = vrot.slane %v3687, 5
      %v3690 = vor.u32 %v3686, %v3689
      %v3691 = vrot.slane %v3690, 4
      %v3693 = vshll.u32 %v3636, 16
      %v3695 = vrot.slane %v3693, 5
      %v3696 = vsel %vm1866, %v3691, %v3695
      %v3697 = vshrl.u32 %v3636, 16
      %v3699 = vrot.slane %v3697, 4
      %v3700 = vor.u32 %v3699, %v3695
      %v3701 = vrot.slane %v3700, 4
      %v3703 = vshll.u32 %v3637, 16
      %v3705 = vrot.slane %v3703, 5
      %v3706 = vsel %vm1866, %v3701, %v3705
      %v3708 = vshrl.u32 %v3638, 16
      %v3710 = vrot.slane %v3708, 4
      %v3711 = vshll.u32 %v3638, 16
      %v3713 = vrot.slane %v3711, 5
      %v3714 = vor.u32 %v3710, %v3713
      %v3715 = vrot.slane %v3714, 4
      %v3717 = vshll.u32 %v3639, 16
      %v3719 = vrot.slane %v3717, 5
      %v3720 = vsel %vm1866, %v3715, %v3719
      %v3721 = vshrl.u32 %v3639, 16
      %v3723 = vrot.slane %v3721, 4
      %v3724 = vor.u32 %v3723, %v3719
      %v3725 = vrot.slane %v3724, 4
      %v3727 = vshll.u32 %v3640, 16
      %v3729 = vrot.slane %v3727, 5
      %v3730 = vsel %vm1866, %v3725, %v3729
      %v3732 = vshrl.u32 %v3641, 16
      %v3734 = vrot.slane %v3732, 4
      %v3735 = vshll.u32 %v3641, 16
      %v3737 = vrot.slane %v3735, 5
      %v3738 = vor.u32 %v3734, %v3737
      %v3739 = vrot.slane %v3738, 4
      %v3741 = vshll.u32 %v3642, 16
      %v3743 = vrot.slane %v3741, 5
      %v3744 = vsel %vm1866, %v3739, %v3743
      %v3745 = vshrl.u32 %v3642, 16
      %v3747 = vrot.slane %v3745, 4
      %v3748 = vor.u32 %v3747, %v3743
      %v3749 = vrot.slane %v3748, 4
      %v3751 = vshll.u32 %v3643, 16
      %v3753 = vrot.slane %v3751, 5
      %v3754 = vsel %vm1866, %v3749, %v3753
      %v3756 = vshrl.u32 %v3644, 16
      %v3758 = vrot.slane %v3756, 4
      %v3759 = vshll.u32 %v3644, 16
      %v3761 = vrot.slane %v3759, 5
      %v3762 = vor.u32 %v3758, %v3761
      %v3763 = vrot.slane %v3762, 4
      %v3765 = vshll.u32 %v3645, 16
      %v3767 = vrot.slane %v3765, 5
      %v3768 = vsel %vm1866, %v3763, %v3767
      %v3769 = vshrl.u32 %v3645, 16
      %v3771 = vrot.slane %v3769, 4
      %v3772 = vor.u32 %v3771, %v3767
      %v3773 = vrot.slane %v3772, 4
      %v3775 = vshll.u32 %v3646, 16
      %v3777 = vrot.slane %v3775, 5
      %v3778 = vsel %vm1866, %v3773, %v3777
      %v3780 = vshrl.u32 %v3647, 16
      %v3782 = vrot.slane %v3780, 4
      %v3783 = vshll.u32 %v3647, 16
      %v3785 = vrot.slane %v3783, 5
      %v3786 = vor.u32 %v3782, %v3785
      %v3787 = vrot.slane %v3786, 4
      %v3789 = vshll.u32 %v3648, 16
      %v3791 = vrot.slane %v3789, 5
      %v3792 = vsel %vm1866, %v3787, %v3791
      %v3793 = vshrl.u32 %v3648, 16
      %v3795 = vrot.slane %v3793, 4
      %v3796 = vor.u32 %v3795, %v3791
      %v3797 = vrot.slane %v3796, 4
      %v3799 = vshll.u32 %v3649, 16
      %v3801 = vrot.slane %v3799, 5
      %v3802 = vsel %vm1866, %v3797, %v3801
      %v3804 = vshrl.u32 %v3650, 16
      %v3806 = vrot.slane %v3804, 4
      %v3807 = vshll.u32 %v3650, 16
      %v3809 = vrot.slane %v3807, 5
      %v3810 = vor.u32 %v3806, %v3809
      %v3811 = vrot.slane %v3810, 4
      %v3813 = vshll.u32 %v3651, 16
      %v3815 = vrot.slane %v3813, 5
      %v3816 = vsel %vm1866, %v3811, %v3815
      %v3817 = vshrl.u32 %v3651, 16
      %v3819 = vrot.slane %v3817, 4
      %v3820 = vor.u32 %v3819, %v3815
      %v3821 = vrot.slane %v3820, 4
      %v3823 = vshll.u32 %v3652, 16
      %v3825 = vrot.slane %v3823, 5
      %v3826 = vsel %vm1866, %v3821, %v3825
      %v3828 = vshrl.u32 %v3653, 16
      %v3830 = vrot.slane %v3828, 4
      %v3831 = vshll.u32 %v3653, 16
      %v3833 = vrot.slane %v3831, 5
      %v3834 = vor.u32 %v3830, %v3833
      %v3835 = vrot.slane %v3834, 4
      %v3837 = vshll.u32 %v3654, 16
      %v3839 = vrot.slane %v3837, 5
      %v3840 = vsel %vm1866, %v3835, %v3839
      %v3841 = vshrl.u32 %v3654, 16
      %v3843 = vrot.slane %v3841, 4
      %v3844 = vor.u32 %v3843, %v3839
      %v3845 = vrot.slane %v3844, 4
      %v3847 = vshll.u32 %v3655, 16
      %v3849 = vrot.slane %v3847, 5
      %v3850 = vsel %vm1866, %v3845, %v3849
      %v3852 = vshrl.u32 %v3656, 16
      %v3854 = vrot.slane %v3852, 4
      %v3855 = vshll.u32 %v3656, 16
      %v3857 = vrot.slane %v3855, 5
      %v3858 = vor.u32 %v3854, %v3857
      %v3859 = vrot.slane %v3858, 4
      %v3861 = vshll.u32 %v3657, 16
      %v3863 = vrot.slane %v3861, 5
      %v3864 = vsel %vm1866, %v3859, %v3863
      %v3865 = vshrl.u32 %v3657, 16
      %v3867 = vrot.slane %v3865, 4
      %v3868 = vor.u32 %v3867, %v3863
      %v3869 = vrot.slane %v3868, 4
      %v3871 = vshll.u32 %v3658, 16
      %v3873 = vrot.slane %v3871, 5
      %v3874 = vsel %vm1866, %v3869, %v3873
      %v3876 = vshrl.u32 %v3659, 16
      %v3878 = vrot.slane %v3876, 4
      %v3879 = vshll.u32 %v3659, 16
      %v3881 = vrot.slane %v3879, 5
      %v3882 = vor.u32 %v3878, %v3881
      %v3883 = vrot.slane %v3882, 4
      %v3885 = vshll.u32 %v3660, 16
      %v3887 = vrot.slane %v3885, 5
      %v3888 = vsel %vm1866, %v3883, %v3887
      %v3889 = vshrl.u32 %v3660, 16
      %v3891 = vrot.slane %v3889, 4
      %v3892 = vor.u32 %v3891, %v3887
      %v3893 = vrot.slane %v3892, 4
      %v3895 = vshll.u32 %v3661, 16
      %v3897 = vrot.slane %v3895, 5
      %v3898 = vsel %vm1866, %v3893, %v3897
      %v3900 = vshrl.u32 %v3662, 16
      %v3902 = vrot.slane %v3900, 4
      %v3903 = vshll.u32 %v3662, 16
      %v3905 = vrot.slane %v3903, 5
      %v3906 = vor.u32 %v3902, %v3905
      %v3907 = vrot.slane %v3906, 4
      %v3909 = vshll.u32 %v3663, 16
      %v3911 = vrot.slane %v3909, 5
      %v3912 = vsel %vm1866, %v3907, %v3911
      %v3913 = vshrl.u32 %v3663, 16
      %v3915 = vrot.slane %v3913, 4
      %v3916 = vor.u32 %v3915, %v3911
      %v3917 = vrot.slane %v3916, 4
      %v3919 = vshll.u32 %v3664, 16
      %v3921 = vrot.slane %v3919, 5
      %v3922 = vsel %vm1866, %v3917, %v3921
      %v3924 = vshrl.u32 %v3665, 16
      %v3926 = vrot.slane %v3924, 4
      %v3927 = vshll.u32 %v3665, 16
      %v3929 = vrot.slane %v3927, 5
      %v3930 = vor.u32 %v3926, %v3929
      %v3931 = vrot.slane %v3930, 4
      %v3933 = vshll.u32 %v3666, 16
      %v3935 = vrot.slane %v3933, 5
      %v3936 = vsel %vm1866, %v3931, %v3935
      %v3937 = vshrl.u32 %v3666, 16
      %v3939 = vrot.slane %v3937, 4
      %v3940 = vor.u32 %v3939, %v3935
      %v3941 = vrot.slane %v3940, 4
      %v3943 = vshll.u32 %v3667, 16
      %v3945 = vrot.slane %v3943, 5
      %v3946 = vsel %vm1866, %v3941, %v3945
      %v3948 = vshrl.u32 %v3668, 16
      %v3950 = vrot.slane %v3948, 4
      %v3951 = vshll.u32 %v3668, 16
      %v3953 = vrot.slane %v3951, 5
      %v3954 = vor.u32 %v3950, %v3953
      %v3955 = vrot.slane %v3954, 4
      %v3957 = vshll.u32 %v3669, 16
      %v3959 = vrot.slane %v3957, 5
      %v3960 = vsel %vm1866, %v3955, %v3959
      %v3961 = vshrl.u32 %v3669, 16
      %v3963 = vrot.slane %v3961, 4
      %v3964 = vor.u32 %v3963, %v3959
      %v3965 = vrot.slane %v3964, 4
      %v3967 = vshll.u32 %v3670, 16
      %v3969 = vrot.slane %v3967, 5
      %v3970 = vsel %vm1866, %v3965, %v3969
      %v3972 = vshrl.u32 %v3671, 16
      %v3974 = vrot.slane %v3972, 4
      %v3975 = vshll.u32 %v3671, 16
      %v3977 = vrot.slane %v3975, 5
      %v3978 = vor.u32 %v3974, %v3977
      %v3979 = vrot.slane %v3978, 4
      %v3981 = vshll.u32 %v3672, 16
      %v3983 = vrot.slane %v3981, 5
      %v3984 = vsel %vm1866, %v3979, %v3983
      %v3985 = vshrl.u32 %v3672, 16
      %v3987 = vrot.slane %v3985, 4
      %v3988 = vor.u32 %v3987, %v3983
      %v3989 = vrot.slane %v3988, 4
      %v3991 = vshll.u32 %v3673, 16
      %v3993 = vrot.slane %v3991, 5
      %v3994 = vsel %vm1866, %v3989, %v3993
      %v3996 = vshrl.u32 %v3674, 16
      %v3998 = vrot.slane %v3996, 4
      %v3999 = vshll.u32 %v3674, 16
      %v4001 = vrot.slane %v3999, 5
      %v4002 = vor.u32 %v3998, %v4001
      %v4003 = vrot.slane %v4002, 4
      %v4005 = vshll.u32 %v3675, 16
      %v4007 = vrot.slane %v4005, 5
      %v4008 = vsel %vm1866, %v4003, %v4007
      %v4009 = vshrl.u32 %v3675, 16
      %v4011 = vrot.slane %v4009, 4
      %v4012 = vor.u32 %v4011, %v4007
      %v4013 = vrot.slane %v4012, 4
      %v4015 = vshll.u32 %v3676, 16
      %v4017 = vrot.slane %v4015, 5
      %v4018 = vsel %vm1866, %v4013, %v4017
      %v4020 = vshrl.u32 %v3677, 16
      %v4022 = vrot.slane %v4020, 4
      %v4023 = vshll.u32 %v3677, 16
      %v4025 = vrot.slane %v4023, 5
      %v4026 = vor.u32 %v4022, %v4025
      %v4027 = vrot.slane %v4026, 4
      %v4029 = vshll.u32 %v3678, 16
      %v4031 = vrot.slane %v4029, 5
      %v4032 = vsel %vm1866, %v4027, %v4031
      %v4033 = vshrl.u32 %v3678, 16
      %v4035 = vrot.slane %v4033, 4
      %v4036 = vor.u32 %v4035, %v4031
      %v4037 = vrot.slane %v4036, 4
      %v4039 = vshll.u32 %v3679, 16
      %v4041 = vrot.slane %v4039, 5
      %v4042 = vsel %vm1866, %v4037, %v4041
      %v4044 = vshrl.u32 %v3680, 16
      %v4046 = vrot.slane %v4044, 4
      %v4047 = vshll.u32 %v3680, 16
      %v4049 = vrot.slane %v4047, 5
      %v4050 = vor.u32 %v4046, %v4049
      %v4051 = vrot.slane %v4050, 4
      %v4053 = vshll.u32 %v3681, 16
      %v4055 = vrot.slane %v4053, 5
      %v4056 = vsel %vm1866, %v4051, %v4055
      %v4057 = vshrl.u32 %v3681, 16
      %v4059 = vrot.slane %v4057, 4
      %v4060 = vor.u32 %v4059, %v4055
      %v4061 = vrot.slane %v4060, 4
      %v4063 = vshll.u32 %v3682, 16
      %v4065 = vrot.slane %v4063, 5
      %v4066 = vsel %vm1866, %v4061, %v4065
      %s4067 = scalar_lea.vmem %s5, 32
      %v4068 = vld [vmem:[%s4067] sm:$0xf]
      %v4069 = vld [vmem:[%s4067 + $0x4] sm:$0xf]
      %v4070 = vunpack.c.l.b16 %v3696
      %v4071 = vunpack.c.l.b16 %v3706
      %v4072 = vunpack.c.l.b16 %v3720
      %v4073 = vunpack.c.l.b16 %v3730
      %v4074 = vunpack.c.l.b16 %v3744
      %v4075 = vunpack.c.l.b16 %v3754
      %v4076 = vunpack.c.l.b16 %v3768
      %v4077 = vunpack.c.l.b16 %v3778
      %v4078 = vunpack.c.l.b16 %v3792
      %v4079 = vunpack.c.l.b16 %v3802
      %v4080 = vunpack.c.l.b16 %v3816
      %v4081 = vunpack.c.l.b16 %v3826
      %v4082 = vunpack.c.l.b16 %v3840
      %v4083 = vunpack.c.l.b16 %v3850
      %v4084 = vunpack.c.l.b16 %v3864
      %v4085 = vunpack.c.l.b16 %v3874
      %v4086 = vunpack.c.l.b16 %v3888
      %v4087 = vunpack.c.l.b16 %v3898
      %v4088 = vunpack.c.l.b16 %v3912
      %v4089 = vunpack.c.l.b16 %v3922
      %v4090 = vunpack.c.l.b16 %v3936
      %v4091 = vunpack.c.l.b16 %v3946
      %v4092 = vunpack.c.l.b16 %v3960
      %v4093 = vunpack.c.l.b16 %v3970
      %v4094 = vunpack.c.l.b16 %v3984
      %v4095 = vunpack.c.l.b16 %v3994
      %v4096 = vunpack.c.l.b16 %v4008
      %v4097 = vunpack.c.l.b16 %v4018
      %v4098 = vunpack.c.l.b16 %v4032
      %v4099 = vunpack.c.l.b16 %v4042
      %v4100 = vunpack.c.l.b16 %v4056
      %v4101 = vunpack.c.l.b16 %v4066
      %v4102 = vpack.c.b16 %v4071, %v4070
      %v4103 = vpack.c.b16 %v4073, %v4072
      %v4104 = vpack.c.b16 %v4075, %v4074
      %v4105 = vpack.c.b16 %v4077, %v4076
      %v4106 = vpack.c.b16 %v4079, %v4078
      %v4107 = vpack.c.b16 %v4081, %v4080
      %v4108 = vpack.c.b16 %v4083, %v4082
      %v4109 = vpack.c.b16 %v4085, %v4084
      %v4110 = vpack.c.b16 %v4087, %v4086
      %v4111 = vpack.c.b16 %v4089, %v4088
      %v4112 = vpack.c.b16 %v4091, %v4090
      %v4113 = vpack.c.b16 %v4093, %v4092
      %v4114 = vpack.c.b16 %v4095, %v4094
      %v4115 = vpack.c.b16 %v4097, %v4096
      %v4116 = vpack.c.b16 %v4099, %v4098
      %v4117 = vpack.c.b16 %v4101, %v4100
      %v4120 = vunpack.c.l.b16 %v4068
      %v4121 = vunpack.c.l.b16 %v4069
      %v4122 = vpack.c.b16 %v4121, %v4120
      %v4125 = vsel %vm850, %v4102, 0
      %v4128 = vsel %vm850, %v4103, 0
      %v4131 = vsel %vm850, %v4104, 0
      %v4134 = vsel %vm850, %v4105, 0
      %v4137 = vsel %vm850, %v4106, 0
      %v4140 = vsel %vm850, %v4107, 0
      %v4143 = vsel %vm850, %v4108, 0
      %v4146 = vsel %vm850, %v4109, 0
      %v4149 = vsel %vm850, %v4110, 0
      %v4152 = vsel %vm850, %v4111, 0
      %v4155 = vsel %vm850, %v4112, 0
      %v4158 = vsel %vm850, %v4113, 0
      %v4161 = vsel %vm850, %v4114, 0
      %v4164 = vsel %vm850, %v4115, 0
      %v4167 = vsel %vm850, %v4116, 0
      %v4170 = vsel %vm850, %v4117, 0
      %4172 = vmatprep.subr.bf16.mxu0 0
      %4173 = vmatpush1.bf16.msra.mxu0 %v4122
      %4174 = vmatprep.subr.bf16.mxu0 0
      %4175 = vmatpush1.bf16.msra.mxu0 0
      %4176 = vmatprep.subr.bf16.mxu0 0
      %4177 = vmatpush1.bf16.msra.mxu0 0
      %4178 = vmatprep.subr.bf16.mxu0 0
      %4179 = vmatpush1.bf16.msra.mxu0 0
      %4180 = vmatprep.subr.bf16.mxu0 0
      %4181 = vmatpush1.bf16.msra.mxu0 0
      %4182 = vmatprep.subr.bf16.mxu0 0
      %4183 = vmatpush1.bf16.msra.mxu0 0
      %4184 = vmatprep.subr.bf16.mxu0 0
      %4185 = vmatpush1.bf16.msra.mxu0 0
      %4186 = vmatprep.subr.bf16.mxu0 0
      %4187 = vmatpush1.bf16.msra.mxu0 0
      %4188 = vmatprep.subr.bf16.mxu0 0
      %4189 = vmatpush1.bf16.msra.mxu0 0
      %4190 = vmatprep.subr.bf16.mxu0 0
      %4191 = vmatpush1.bf16.msra.mxu0 0
      %4192 = vmatprep.subr.bf16.mxu0 0
      %4193 = vmatpush1.bf16.msra.mxu0 0
      %4194 = vmatprep.subr.bf16.mxu0 0
      %4195 = vmatpush1.bf16.msra.mxu0 0
      %4196 = vmatprep.subr.bf16.mxu0 0
      %4197 = vmatpush1.bf16.msra.mxu0 0
      %4198 = vmatprep.subr.bf16.mxu0 0
      %4199 = vmatpush1.bf16.msra.mxu0 0
      %4200 = vmatprep.subr.bf16.mxu0 0
      %4201 = vmatpush1.bf16.msra.mxu0 0
      %4202 = vmatprep.subr.bf16.mxu0 0
      %4203 = vmatpush1.bf16.msra.mxu0 0
      %4204 = vmatprep.mubr.bf16.mxu0 0
      %4205 = vmatmul.mubr.bf16.gmra.mrb[0].mxu0 %v4125
      %v4206 = vpop.f32.mrb[0].mxu0
      %v4207 = vadd.f32 0.0, %v4206
      %v4208 = vpop.f32.mrb[0].mxu0
      %v4209 = vpop.f32.mrb[0].mxu0
      %v4210 = vadd.f32 0.0, %v4209
      %v4211 = vpop.f32.mrb[0].mxu0
      %4212 = vmatprep.mubr.bf16.mxu0 0
      %4213 = vmatmul.mubr.bf16.gmra.mrb[0].mxu0 %v4128
      %v4214 = vpop.f32.mrb[0].mxu0
      %v4215 = vadd.f32 0.0, %v4214
      %v4216 = vpop.f32.mrb[0].mxu0
      %v4217 = vpop.f32.mrb[0].mxu0
      %v4218 = vadd.f32 0.0, %v4217
      %v4219 = vpop.f32.mrb[0].mxu0
      %4220 = vmatprep.mubr.bf16.mxu0 0
      %4221 = vmatmul.mubr.bf16.gmra.mrb[0].mxu0 %v4131
      %v4222 = vpop.f32.mrb[0].mxu0
      %v4223 = vadd.f32 0.0, %v4222
      %v4224 = vpop.f32.mrb[0].mxu0
      %v4225 = vpop.f32.mrb[0].mxu0
      %v4226 = vadd.f32 0.0, %v4225
      %v4227 = vpop.f32.mrb[0].mxu0
      %4228 = vmatprep.mubr.bf16.mxu0 0
      %4229 = vmatmul.mubr.bf16.gmra.mrb[0].mxu0 %v4134
      %v4230 = vpop.f32.mrb[0].mxu0
      %v4231 = vadd.f32 0.0, %v4230
      %v4232 = vpop.f32.mrb[0].mxu0
      %v4233 = vpop.f32.mrb[0].mxu0
      %v4234 = vadd.f32 0.0, %v4233
      %v4235 = vpop.f32.mrb[0].mxu0
      %4236 = vmatprep.mubr.bf16.mxu0 0
      %4237 = vmatmul.mubr.bf16.gmra.mrb[0].mxu0 %v4137
      %v4238 = vpop.f32.mrb[0].mxu0
      %v4239 = vadd.f32 0.0, %v4238
      %v4240 = vpop.f32.mrb[0].mxu0
      %v4241 = vpop.f32.mrb[0].mxu0
      %v4242 = vadd.f32 0.0, %v4241
      %v4243 = vpop.f32.mrb[0].mxu0
      %4244 = vmatprep.mubr.bf16.mxu0 0
      %4245 = vmatmul.mubr.bf16.gmra.mrb[0].mxu0 %v4140
      %v4246 = vpop.f32.mrb[0].mxu0
      %v4247 = vadd.f32 0.0, %v4246
      %v4248 = vpop.f32.mrb[0].mxu0
      %v4249 = vpop.f32.mrb[0].mxu0
      %v4250 = vadd.f32 0.0, %v4249
      %v4251 = vpop.f32.mrb[0].mxu0
      %4252 = vmatprep.mubr.bf16.mxu0 0
      %4253 = vmatmul.mubr.bf16.gmra.mrb[0].mxu0 %v4143
      %v4254 = vpop.f32.mrb[0].mxu0
      %v4255 = vadd.f32 0.0, %v4254
      %v4256 = vpop.f32.mrb[0].mxu0
      %v4257 = vpop.f32.mrb[0].mxu0
      %v4258 = vadd.f32 0.0, %v4257
      %v4259 = vpop.f32.mrb[0].mxu0
      %4260 = vmatprep.mubr.bf16.mxu0 0
      %4261 = vmatmul.mubr.bf16.gmra.mrb[0].mxu0 %v4146
      %v4262 = vpop.f32.mrb[0].mxu0
      %v4263 = vadd.f32 0.0, %v4262
      %v4264 = vpop.f32.mrb[0].mxu0
      %v4265 = vpop.f32.mrb[0].mxu0
      %v4266 = vadd.f32 0.0, %v4265
      %v4267 = vpop.f32.mrb[0].mxu0
      %4268 = vmatprep.mubr.bf16.mxu0 0
      %4269 = vmatmul.mubr.bf16.gmra.mrb[0].mxu0 %v4149
      %v4270 = vpop.f32.mrb[0].mxu0
      %v4271 = vadd.f32 0.0, %v4270
      %v4272 = vpop.f32.mrb[0].mxu0
      %v4273 = vpop.f32.mrb[0].mxu0
      %v4274 = vadd.f32 0.0, %v4273
      %v4275 = vpop.f32.mrb[0].mxu0
      %4276 = vmatprep.mubr.bf16.mxu0 0
      %4277 = vmatmul.mubr.bf16.gmra.mrb[0].mxu0 %v4152
      %v4278 = vpop.f32.mrb[0].mxu0
      %v4279 = vadd.f32 0.0, %v4278
      %v4280 = vpop.f32.mrb[0].mxu0
      %v4281 = vpop.f32.mrb[0].mxu0
      %v4282 = vadd.f32 0.0, %v4281
      %v4283 = vpop.f32.mrb[0].mxu0
      %4284 = vmatprep.mubr.bf16.mxu0 0
      %4285 = vmatmul.mubr.bf16.gmra.mrb[0].mxu0 %v4155
      %v4286 = vpop.f32.mrb[0].mxu0
      %v4287 = vadd.f32 0.0, %v4286
      %v4288 = vpop.f32.mrb[0].mxu0
      %v4289 = vpop.f32.mrb[0].mxu0
      %v4290 = vadd.f32 0.0, %v4289
      %v4291 = vpop.f32.mrb[0].mxu0
      %4292 = vmatprep.mubr.bf16.mxu0 0
      %4293 = vmatmul.mubr.bf16.gmra.mrb[0].mxu0 %v4158
      %v4294 = vpop.f32.mrb[0].mxu0
      %v4295 = vadd.f32 0.0, %v4294
      %v4296 = vpop.f32.mrb[0].mxu0
      %v4297 = vpop.f32.mrb[0].mxu0
      %v4298 = vadd.f32 0.0, %v4297
      %v4299 = vpop.f32.mrb[0].mxu0
      %4300 = vmatprep.mubr.bf16.mxu0 0
      %4301 = vmatmul.mubr.bf16.gmra.mrb[0].mxu0 %v4161
      %v4302 = vpop.f32.mrb[0].mxu0
      %v4303 = vadd.f32 0.0, %v4302
      %v4304 = vpop.f32.mrb[0].mxu0
      %v4305 = vpop.f32.mrb[0].mxu0
      %v4306 = vadd.f32 0.0, %v4305
      %v4307 = vpop.f32.mrb[0].mxu0
      %4308 = vmatprep.mubr.bf16.mxu0 0
      %4309 = vmatmul.mubr.bf16.gmra.mrb[0].mxu0 %v4164
      %v4310 = vpop.f32.mrb[0].mxu0
      %v4311 = vadd.f32 0.0, %v4310
      %v4312 = vpop.f32.mrb[0].mxu0
      %v4313 = vpop.f32.mrb[0].mxu0
      %v4314 = vadd.f32 0.0, %v4313
      %v4315 = vpop.f32.mrb[0].mxu0
      %4316 = vmatprep.mubr.bf16.mxu0 0
      %4317 = vmatmul.mubr.bf16.gmra.mrb[0].mxu0 %v4167
      %v4318 = vpop.f32.mrb[0].mxu0
      %v4319 = vadd.f32 0.0, %v4318
      %v4320 = vpop.f32.mrb[0].mxu0
      %v4321 = vpop.f32.mrb[0].mxu0
      %v4322 = vadd.f32 0.0, %v4321
      %v4323 = vpop.f32.mrb[0].mxu0
      %4324 = vmatprep.mubr.bf16.mxu0 0
      %4325 = vmatmul.mubr.bf16.gmra.mrb[0].mxu0 %v4170
      %v4326 = vpop.f32.mrb[0].mxu0
      %v4327 = vadd.f32 0.0, %v4326
      %v4328 = vpop.f32.mrb[0].mxu0
      %v4329 = vpop.f32.mrb[0].mxu0
      %v4330 = vadd.f32 0.0, %v4329
      %v4331 = vpop.f32.mrb[0].mxu0
      %4332 = vdwg.mxu0
      %v4333 = vadd.f32 %v3603, %v4207
      %v4334 = vadd.f32 %v3604, %v4210
      %v4335 = vadd.f32 %v3605, %v4215
      %v4336 = vadd.f32 %v3606, %v4218
      %v4337 = vadd.f32 %v3607, %v4223
      %v4338 = vadd.f32 %v3608, %v4226
      %v4339 = vadd.f32 %v3609, %v4231
      %v4340 = vadd.f32 %v3610, %v4234
      %v4341 = vadd.f32 %v3611, %v4239
      %v4342 = vadd.f32 %v3612, %v4242
      %v4343 = vadd.f32 %v3613, %v4247
      %v4344 = vadd.f32 %v3614, %v4250
      %v4345 = vadd.f32 %v3615, %v4255
      %v4346 = vadd.f32 %v3616, %v4258
      %v4347 = vadd.f32 %v3617, %v4263
      %v4348 = vadd.f32 %v3618, %v4266
      %v4349 = vadd.f32 %v3619, %v4271
      %v4350 = vadd.f32 %v3620, %v4274
      %v4351 = vadd.f32 %v3621, %v4279
      %v4352 = vadd.f32 %v3622, %v4282
      %v4353 = vadd.f32 %v3623, %v4287
      %v4354 = vadd.f32 %v3624, %v4290
      %v4355 = vadd.f32 %v3625, %v4295
      %v4356 = vadd.f32 %v3626, %v4298
      %v4357 = vadd.f32 %v3627, %v4303
      %v4358 = vadd.f32 %v3628, %v4306
      %v4359 = vadd.f32 %v3629, %v4311
      %v4360 = vadd.f32 %v3630, %v4314
      %v4361 = vadd.f32 %v3631, %v4319
      %v4362 = vadd.f32 %v3632, %v4322
      %v4363 = vadd.f32 %v3633, %v4327
      %v4364 = vadd.f32 %v3634, %v4330
      %v4365 = vld [vmem:[%s1699] sm:$0xe]
      %v4366 = vld [vmem:[%s1699 + $0xc] sm:$0xe]
      %v4367 = vld [vmem:[%s1699 + $0x18] sm:$0xe]
      %v4368 = vld [vmem:[%s1699 + $0x24] sm:$0xe]
      %v4369 = vld [vmem:[%s1699 + $0x30] sm:$0xe]
      %v4370 = vld [vmem:[%s1699 + $0x3c] sm:$0xe]
      %v4371 = vld [vmem:[%s1699 + $0x48] sm:$0xe]
      %v4372 = vld [vmem:[%s1699 + $0x54] sm:$0xe]
      %v4373 = vld [vmem:[%s1699 + $0x60] sm:$0xe]
      %v4374 = vld [vmem:[%s1699 + $0x6c] sm:$0xe]
      %v4375 = vld [vmem:[%s1699 + $0x78] sm:$0xe]
      %v4376 = vld [vmem:[%s1699 + $0x84] sm:$0xe]
      %v4377 = vld [vmem:[%s1699 + $0x90] sm:$0xe]
      %v4378 = vld [vmem:[%s1699 + $0x9c] sm:$0xe]
      %v4379 = vld [vmem:[%s1699 + $0xa8] sm:$0xe]
      %v4380 = vld [vmem:[%s1699 + $0xb4] sm:$0xe]
      %v4429 = vrot.slane %v4365, 5
      %v4430 = vrot.slane %v4429, 4
      %v4431 = vrot.slane %v3636, 5
      %v4432 = vsel %vm2862, %v4430, %v4431
      %v4433 = vrot.slane %v4431, 4
      %v4434 = vrot.slane %v3637, 5
      %v4435 = vsel %vm2862, %v4433, %v4434
      %v4436 = vrot.slane %v4366, 5
      %v4437 = vrot.slane %v4436, 4
      %v4438 = vrot.slane %v3639, 5
      %v4439 = vsel %vm2862, %v4437, %v4438
      %v4440 = vrot.slane %v4438, 4
      %v4441 = vrot.slane %v3640, 5
      %v4442 = vsel %vm2862, %v4440, %v4441
      %v4443 = vrot.slane %v4367, 5
      %v4444 = vrot.slane %v4443, 4
      %v4445 = vrot.slane %v3642, 5
      %v4446 = vsel %vm2862, %v4444, %v4445
      %v4447 = vrot.slane %v4445, 4
      %v4448 = vrot.slane %v3643, 5
      %v4449 = vsel %vm2862, %v4447, %v4448
      %v4450 = vrot.slane %v4368, 5
      %v4451 = vrot.slane %v4450, 4
      %v4452 = vrot.slane %v3645, 5
      %v4453 = vsel %vm2862, %v4451, %v4452
      %v4454 = vrot.slane %v4452, 4
      %v4455 = vrot.slane %v3646, 5
      %v4456 = vsel %vm2862, %v4454, %v4455
      %v4457 = vrot.slane %v4369, 5
      %v4458 = vrot.slane %v4457, 4
      %v4459 = vrot.slane %v3648, 5
      %v4460 = vsel %vm2862, %v4458, %v4459
      %v4461 = vrot.slane %v4459, 4
      %v4462 = vrot.slane %v3649, 5
      %v4463 = vsel %vm2862, %v4461, %v4462
      %v4464 = vrot.slane %v4370, 5
      %v4465 = vrot.slane %v4464, 4
      %v4466 = vrot.slane %v3651, 5
      %v4467 = vsel %vm2862, %v4465, %v4466
      %v4468 = vrot.slane %v4466, 4
      %v4469 = vrot.slane %v3652, 5
      %v4470 = vsel %vm2862, %v4468, %v4469
      %v4471 = vrot.slane %v4371, 5
      %v4472 = vrot.slane %v4471, 4
      %v4473 = vrot.slane %v3654, 5
      %v4474 = vsel %vm2862, %v4472, %v4473
      %v4475 = vrot.slane %v4473, 4
      %v4476 = vrot.slane %v3655, 5
      %v4477 = vsel %vm2862, %v4475, %v4476
      %v4478 = vrot.slane %v4372, 5
      %v4479 = vrot.slane %v4478, 4
      %v4480 = vrot.slane %v3657, 5
      %v4481 = vsel %vm2862, %v4479, %v4480
      %v4482 = vrot.slane %v4480, 4
      %v4483 = vrot.slane %v3658, 5
      %v4484 = vsel %vm2862, %v4482, %v4483
      %v4485 = vrot.slane %v4373, 5
      %v4486 = vrot.slane %v4485, 4
      %v4487 = vrot.slane %v3660, 5
      %v4488 = vsel %vm2862, %v4486, %v4487
      %v4489 = vrot.slane %v4487, 4
      %v4490 = vrot.slane %v3661, 5
      %v4491 = vsel %vm2862, %v4489, %v4490
      %v4492 = vrot.slane %v4374, 5
      %v4493 = vrot.slane %v4492, 4
      %v4494 = vrot.slane %v3663, 5
      %v4495 = vsel %vm2862, %v4493, %v4494
      %v4496 = vrot.slane %v4494, 4
      %v4497 = vrot.slane %v3664, 5
      %v4498 = vsel %vm2862, %v4496, %v4497
      %v4499 = vrot.slane %v4375, 5
      %v4500 = vrot.slane %v4499, 4
      %v4501 = vrot.slane %v3666, 5
      %v4502 = vsel %vm2862, %v4500, %v4501
      %v4503 = vrot.slane %v4501, 4
      %v4504 = vrot.slane %v3667, 5
      %v4505 = vsel %vm2862, %v4503, %v4504
      %v4506 = vrot.slane %v4376, 5
      %v4507 = vrot.slane %v4506, 4
      %v4508 = vrot.slane %v3669, 5
      %v4509 = vsel %vm2862, %v4507, %v4508
      %v4510 = vrot.slane %v4508, 4
      %v4511 = vrot.slane %v3670, 5
      %v4512 = vsel %vm2862, %v4510, %v4511
      %v4513 = vrot.slane %v4377, 5
      %v4514 = vrot.slane %v4513, 4
      %v4515 = vrot.slane %v3672, 5
      %v4516 = vsel %vm2862, %v4514, %v4515
      %v4517 = vrot.slane %v4515, 4
      %v4518 = vrot.slane %v3673, 5
      %v4519 = vsel %vm2862, %v4517, %v4518
      %v4520 = vrot.slane %v4378, 5
      %v4521 = vrot.slane %v4520, 4
      %v4522 = vrot.slane %v3675, 5
      %v4523 = vsel %vm2862, %v4521, %v4522
      %v4524 = vrot.slane %v4522, 4
      %v4525 = vrot.slane %v3676, 5
      %v4526 = vsel %vm2862, %v4524, %v4525
      %v4527 = vrot.slane %v4379, 5
      %v4528 = vrot.slane %v4527, 4
      %v4529 = vrot.slane %v3678, 5
      %v4530 = vsel %vm2862, %v4528, %v4529
      %v4531 = vrot.slane %v4529, 4
      %v4532 = vrot.slane %v3679, 5
      %v4533 = vsel %vm2862, %v4531, %v4532
      %v4534 = vrot.slane %v4380, 5
      %v4535 = vrot.slane %v4534, 4
      %v4536 = vrot.slane %v3681, 5
      %v4537 = vsel %vm2862, %v4535, %v4536
      %v4538 = vrot.slane %v4536, 4
      %v4539 = vrot.slane %v3682, 5
      %v4540 = vsel %vm2862, %v4538, %v4539
      %s4541 = scalar_lea.vmem %s5, 40
      %v4542 = vld [vmem:[%s4541] sm:$0xf]
      %v4543 = vld [vmem:[%s4541 + $0x4] sm:$0xf]
      %v4544 = vunpack.c.l.b16 %v4432
      %v4545 = vunpack.c.l.b16 %v4435
      %v4546 = vunpack.c.l.b16 %v4439
      %v4547 = vunpack.c.l.b16 %v4442
      %v4548 = vunpack.c.l.b16 %v4446
      %v4549 = vunpack.c.l.b16 %v4449
      %v4550 = vunpack.c.l.b16 %v4453
      %v4551 = vunpack.c.l.b16 %v4456
      %v4552 = vunpack.c.l.b16 %v4460
      %v4553 = vunpack.c.l.b16 %v4463
      %v4554 = vunpack.c.l.b16 %v4467
      %v4555 = vunpack.c.l.b16 %v4470
      %v4556 = vunpack.c.l.b16 %v4474
      %v4557 = vunpack.c.l.b16 %v4477
      %v4558 = vunpack.c.l.b16 %v4481
      %v4559 = vunpack.c.l.b16 %v4484
      %v4560 = vunpack.c.l.b16 %v4488
      %v4561 = vunpack.c.l.b16 %v4491
      %v4562 = vunpack.c.l.b16 %v4495
      %v4563 = vunpack.c.l.b16 %v4498
      %v4564 = vunpack.c.l.b16 %v4502
      %v4565 = vunpack.c.l.b16 %v4505
      %v4566 = vunpack.c.l.b16 %v4509
      %v4567 = vunpack.c.l.b16 %v4512
      %v4568 = vunpack.c.l.b16 %v4516
      %v4569 = vunpack.c.l.b16 %v4519
      %v4570 = vunpack.c.l.b16 %v4523
      %v4571 = vunpack.c.l.b16 %v4526
      %v4572 = vunpack.c.l.b16 %v4530
      %v4573 = vunpack.c.l.b16 %v4533
      %v4574 = vunpack.c.l.b16 %v4537
      %v4575 = vunpack.c.l.b16 %v4540
      %v4576 = vpack.c.b16 %v4545, %v4544
      %v4577 = vpack.c.b16 %v4547, %v4546
      %v4578 = vpack.c.b16 %v4549, %v4548
      %v4579 = vpack.c.b16 %v4551, %v4550
      %v4580 = vpack.c.b16 %v4553, %v4552
      %v4581 = vpack.c.b16 %v4555, %v4554
      %v4582 = vpack.c.b16 %v4557, %v4556
      %v4583 = vpack.c.b16 %v4559, %v4558
      %v4584 = vpack.c.b16 %v4561, %v4560
      %v4585 = vpack.c.b16 %v4563, %v4562
      %v4586 = vpack.c.b16 %v4565, %v4564
      %v4587 = vpack.c.b16 %v4567, %v4566
      %v4588 = vpack.c.b16 %v4569, %v4568
      %v4589 = vpack.c.b16 %v4571, %v4570
      %v4590 = vpack.c.b16 %v4573, %v4572
      %v4591 = vpack.c.b16 %v4575, %v4574
      %v4594 = vunpack.c.l.b16 %v4542
      %v4595 = vunpack.c.l.b16 %v4543
      %v4596 = vpack.c.b16 %v4595, %v4594
      %v4599 = vsel %vm850, %v4576, 0
      %v4602 = vsel %vm850, %v4577, 0
      %v4605 = vsel %vm850, %v4578, 0
      %v4608 = vsel %vm850, %v4579, 0
      %v4611 = vsel %vm850, %v4580, 0
      %v4614 = vsel %vm850, %v4581, 0
      %v4617 = vsel %vm850, %v4582, 0
      %v4620 = vsel %vm850, %v4583, 0
      %v4623 = vsel %vm850, %v4584, 0
      %v4626 = vsel %vm850, %v4585, 0
      %v4629 = vsel %vm850, %v4586, 0
      %v4632 = vsel %vm850, %v4587, 0
      %v4635 = vsel %vm850, %v4588, 0
      %v4638 = vsel %vm850, %v4589, 0
      %v4641 = vsel %vm850, %v4590, 0
      %v4644 = vsel %vm850, %v4591, 0
      %4646 = vmatprep.subr.bf16.mxu0 0
      %4647 = vmatpush1.bf16.msra.mxu0 %v4596
      %4648 = vmatprep.subr.bf16.mxu0 0
      %4649 = vmatpush1.bf16.msra.mxu0 0
      %4650 = vmatprep.subr.bf16.mxu0 0
      %4651 = vmatpush1.bf16.msra.mxu0 0
      %4652 = vmatprep.subr.bf16.mxu0 0
      %4653 = vmatpush1.bf16.msra.mxu0 0
      %4654 = vmatprep.subr.bf16.mxu0 0
      %4655 = vmatpush1.bf16.msra.mxu0 0
      %4656 = vmatprep.subr.bf16.mxu0 0
      %4657 = vmatpush1.bf16.msra.mxu0 0
      %4658 = vmatprep.subr.bf16.mxu0 0
      %4659 = vmatpush1.bf16.msra.mxu0 0
      %4660 = vmatprep.subr.bf16.mxu0 0
      %4661 = vmatpush1.bf16.msra.mxu0 0
      %4662 = vmatprep.subr.bf16.mxu0 0
      %4663 = vmatpush1.bf16.msra.mxu0 0
      %4664 = vmatprep.subr.bf16.mxu0 0
      %4665 = vmatpush1.bf16.msra.mxu0 0
      %4666 = vmatprep.subr.bf16.mxu0 0
      %4667 = vmatpush1.bf16.msra.mxu0 0
      %4668 = vmatprep.subr.bf16.mxu0 0
      %4669 = vmatpush1.bf16.msra.mxu0 0
      %4670 = vmatprep.subr.bf16.mxu0 0
      %4671 = vmatpush1.bf16.msra.mxu0 0
      %4672 = vmatprep.subr.bf16.mxu0 0
      %4673 = vmatpush1.bf16.msra.mxu0 0
      %4674 = vmatprep.subr.bf16.mxu0 0
      %4675 = vmatpush1.bf16.msra.mxu0 0
      %4676 = vmatprep.subr.bf16.mxu0 0
      %4677 = vmatpush1.bf16.msra.mxu0 0
      %4678 = vmatprep.mubr.bf16.mxu0 0
      %4679 = vmatmul.mubr.bf16.gmra.mrb[0].mxu0 %v4599
      %v4680 = vpop.f32.mrb[0].mxu0
      %v4681 = vadd.f32 0.0, %v4680
      %v4682 = vpop.f32.mrb[0].mxu0
      %v4683 = vpop.f32.mrb[0].mxu0
      %v4684 = vadd.f32 0.0, %v4683
      %v4685 = vpop.f32.mrb[0].mxu0
      %4686 = vmatprep.mubr.bf16.mxu0 0
      %4687 = vmatmul.mubr.bf16.gmra.mrb[0].mxu0 %v4602
      %v4688 = vpop.f32.mrb[0].mxu0
      %v4689 = vadd.f32 0.0, %v4688
      %v4690 = vpop.f32.mrb[0].mxu0
      %v4691 = vpop.f32.mrb[0].mxu0
      %v4692 = vadd.f32 0.0, %v4691
      %v4693 = vpop.f32.mrb[0].mxu0
      %4694 = vmatprep.mubr.bf16.mxu0 0
      %4695 = vmatmul.mubr.bf16.gmra.mrb[0].mxu0 %v4605
      %v4696 = vpop.f32.mrb[0].mxu0
      %v4697 = vadd.f32 0.0, %v4696
      %v4698 = vpop.f32.mrb[0].mxu0
      %v4699 = vpop.f32.mrb[0].mxu0
      %v4700 = vadd.f32 0.0, %v4699
      %v4701 = vpop.f32.mrb[0].mxu0
      %4702 = vmatprep.mubr.bf16.mxu0 0
      %4703 = vmatmul.mubr.bf16.gmra.mrb[0].mxu0 %v4608
      %v4704 = vpop.f32.mrb[0].mxu0
      %v4705 = vadd.f32 0.0, %v4704
      %v4706 = vpop.f32.mrb[0].mxu0
      %v4707 = vpop.f32.mrb[0].mxu0
      %v4708 = vadd.f32 0.0, %v4707
      %v4709 = vpop.f32.mrb[0].mxu0
      %4710 = vmatprep.mubr.bf16.mxu0 0
      %4711 = vmatmul.mubr.bf16.gmra.mrb[0].mxu0 %v4611
      %v4712 = vpop.f32.mrb[0].mxu0
      %v4713 = vadd.f32 0.0, %v4712
      %v4714 = vpop.f32.mrb[0].mxu0
      %v4715 = vpop.f32.mrb[0].mxu0
      %v4716 = vadd.f32 0.0, %v4715
      %v4717 = vpop.f32.mrb[0].mxu0
      %4718 = vmatprep.mubr.bf16.mxu0 0
      %4719 = vmatmul.mubr.bf16.gmra.mrb[0].mxu0 %v4614
      %v4720 = vpop.f32.mrb[0].mxu0
      %v4721 = vadd.f32 0.0, %v4720
      %v4722 = vpop.f32.mrb[0].mxu0
      %v4723 = vpop.f32.mrb[0].mxu0
      %v4724 = vadd.f32 0.0, %v4723
      %v4725 = vpop.f32.mrb[0].mxu0
      %4726 = vmatprep.mubr.bf16.mxu0 0
      %4727 = vmatmul.mubr.bf16.gmra.mrb[0].mxu0 %v4617
      %v4728 = vpop.f32.mrb[0].mxu0
      %v4729 = vadd.f32 0.0, %v4728
      %v4730 = vpop.f32.mrb[0].mxu0
      %v4731 = vpop.f32.mrb[0].mxu0
      %v4732 = vadd.f32 0.0, %v4731
      %v4733 = vpop.f32.mrb[0].mxu0
      %4734 = vmatprep.mubr.bf16.mxu0 0
      %4735 = vmatmul.mubr.bf16.gmra.mrb[0].mxu0 %v4620
      %v4736 = vpop.f32.mrb[0].mxu0
      %v4737 = vadd.f32 0.0, %v4736
      %v4738 = vpop.f32.mrb[0].mxu0
      %v4739 = vpop.f32.mrb[0].mxu0
      %v4740 = vadd.f32 0.0, %v4739
      %v4741 = vpop.f32.mrb[0].mxu0
      %4742 = vmatprep.mubr.bf16.mxu0 0
      %4743 = vmatmul.mubr.bf16.gmra.mrb[0].mxu0 %v4623
      %v4744 = vpop.f32.mrb[0].mxu0
      %v4745 = vadd.f32 0.0, %v4744
      %v4746 = vpop.f32.mrb[0].mxu0
      %v4747 = vpop.f32.mrb[0].mxu0
      %v4748 = vadd.f32 0.0, %v4747
      %v4749 = vpop.f32.mrb[0].mxu0
      %4750 = vmatprep.mubr.bf16.mxu0 0
      %4751 = vmatmul.mubr.bf16.gmra.mrb[0].mxu0 %v4626
      %v4752 = vpop.f32.mrb[0].mxu0
      %v4753 = vadd.f32 0.0, %v4752
      %v4754 = vpop.f32.mrb[0].mxu0
      %v4755 = vpop.f32.mrb[0].mxu0
      %v4756 = vadd.f32 0.0, %v4755
      %v4757 = vpop.f32.mrb[0].mxu0
      %4758 = vmatprep.mubr.bf16.mxu0 0
      %4759 = vmatmul.mubr.bf16.gmra.mrb[0].mxu0 %v4629
      %v4760 = vpop.f32.mrb[0].mxu0
      %v4761 = vadd.f32 0.0, %v4760
      %v4762 = vpop.f32.mrb[0].mxu0
      %v4763 = vpop.f32.mrb[0].mxu0
      %v4764 = vadd.f32 0.0, %v4763
      %v4765 = vpop.f32.mrb[0].mxu0
      %4766 = vmatprep.mubr.bf16.mxu0 0
      %4767 = vmatmul.mubr.bf16.gmra.mrb[0].mxu0 %v4632
      %v4768 = vpop.f32.mrb[0].mxu0
      %v4769 = vadd.f32 0.0, %v4768
      %v4770 = vpop.f32.mrb[0].mxu0
      %v4771 = vpop.f32.mrb[0].mxu0
      %v4772 = vadd.f32 0.0, %v4771
      %v4773 = vpop.f32.mrb[0].mxu0
      %4774 = vmatprep.mubr.bf16.mxu0 0
      %4775 = vmatmul.mubr.bf16.gmra.mrb[0].mxu0 %v4635
      %v4776 = vpop.f32.mrb[0].mxu0
      %v4777 = vadd.f32 0.0, %v4776
      %v4778 = vpop.f32.mrb[0].mxu0
      %v4779 = vpop.f32.mrb[0].mxu0
      %v4780 = vadd.f32 0.0, %v4779
      %v4781 = vpop.f32.mrb[0].mxu0
      %4782 = vmatprep.mubr.bf16.mxu0 0
      %4783 = vmatmul.mubr.bf16.gmra.mrb[0].mxu0 %v4638
      %v4784 = vpop.f32.mrb[0].mxu0
      %v4785 = vadd.f32 0.0, %v4784
      %v4786 = vpop.f32.mrb[0].mxu0
      %v4787 = vpop.f32.mrb[0].mxu0
      %v4788 = vadd.f32 0.0, %v4787
      %v4789 = vpop.f32.mrb[0].mxu0
      %4790 = vmatprep.mubr.bf16.mxu0 0
      %4791 = vmatmul.mubr.bf16.gmra.mrb[0].mxu0 %v4641
      %v4792 = vpop.f32.mrb[0].mxu0
      %v4793 = vadd.f32 0.0, %v4792
      %v4794 = vpop.f32.mrb[0].mxu0
      %v4795 = vpop.f32.mrb[0].mxu0
      %v4796 = vadd.f32 0.0, %v4795
      %v4797 = vpop.f32.mrb[0].mxu0
      %4798 = vmatprep.mubr.bf16.mxu0 0
      %4799 = vmatmul.mubr.bf16.gmra.mrb[0].mxu0 %v4644
      %v4800 = vpop.f32.mrb[0].mxu0
      %v4801 = vadd.f32 0.0, %v4800
      %v4802 = vpop.f32.mrb[0].mxu0
      %v4803 = vpop.f32.mrb[0].mxu0
      %v4804 = vadd.f32 0.0, %v4803
      %v4805 = vpop.f32.mrb[0].mxu0
      %4806 = vdwg.mxu0
      %v4807 = vadd.f32 %v4333, %v4681
      %v4808 = vadd.f32 %v4334, %v4684
      %v4809 = vadd.f32 %v4335, %v4689
      %v4810 = vadd.f32 %v4336, %v4692
      %v4811 = vadd.f32 %v4337, %v4697
      %v4812 = vadd.f32 %v4338, %v4700
      %v4813 = vadd.f32 %v4339, %v4705
      %v4814 = vadd.f32 %v4340, %v4708
      %v4815 = vadd.f32 %v4341, %v4713
      %v4816 = vadd.f32 %v4342, %v4716
      %v4817 = vadd.f32 %v4343, %v4721
      %v4818 = vadd.f32 %v4344, %v4724
      %v4819 = vadd.f32 %v4345, %v4729
      %v4820 = vadd.f32 %v4346, %v4732
      %v4821 = vadd.f32 %v4347, %v4737
      %v4822 = vadd.f32 %v4348, %v4740
      %v4823 = vadd.f32 %v4349, %v4745
      %v4824 = vadd.f32 %v4350, %v4748
      %v4825 = vadd.f32 %v4351, %v4753
      %v4826 = vadd.f32 %v4352, %v4756
      %v4827 = vadd.f32 %v4353, %v4761
      %v4828 = vadd.f32 %v4354, %v4764
      %v4829 = vadd.f32 %v4355, %v4769
      %v4830 = vadd.f32 %v4356, %v4772
      %v4831 = vadd.f32 %v4357, %v4777
      %v4832 = vadd.f32 %v4358, %v4780
      %v4833 = vadd.f32 %v4359, %v4785
      %v4834 = vadd.f32 %v4360, %v4788
      %v4835 = vadd.f32 %v4361, %v4793
      %v4836 = vadd.f32 %v4362, %v4796
      %v4837 = vadd.f32 %v4363, %v4801
      %v4838 = vadd.f32 %v4364, %v4804
      %s4839 = scalar_lea.vmem [#allocation2], 24
      %v4840 = vld [vmem:[%s4839] sm:$0xf]
      %v4841 = vld [vmem:[%s4839 + $0x4] sm:$0xf]
      %v4842 = vld [vmem:[%s4839 + $0xc] sm:$0xf]
      %v4843 = vld [vmem:[%s4839 + $0x10] sm:$0xf]
      %v4844 = vld [vmem:[%s4839 + $0x18] sm:$0xf]
      %v4845 = vld [vmem:[%s4839 + $0x1c] sm:$0xf]
      %v4846 = vld [vmem:[%s4839 + $0x24] sm:$0xf]
      %v4847 = vld [vmem:[%s4839 + $0x28] sm:$0xf]
      %v4848 = vld [vmem:[%s4839 + $0x30] sm:$0xf]
      %v4849 = vld [vmem:[%s4839 + $0x34] sm:$0xf]
      %v4850 = vld [vmem:[%s4839 + $0x3c] sm:$0xf]
      %v4851 = vld [vmem:[%s4839 + $0x40] sm:$0xf]
      %v4852 = vld [vmem:[%s4839 + $0x48] sm:$0xf]
      %v4853 = vld [vmem:[%s4839 + $0x4c] sm:$0xf]
      %v4854 = vld [vmem:[%s4839 + $0x54] sm:$0xf]
      %v4855 = vld [vmem:[%s4839 + $0x58] sm:$0xf]
      %v4856 = vld [vmem:[%s4839 + $0x60] sm:$0xf]
      %v4857 = vld [vmem:[%s4839 + $0x64] sm:$0xf]
      %v4858 = vld [vmem:[%s4839 + $0x6c] sm:$0xf]
      %v4859 = vld [vmem:[%s4839 + $0x70] sm:$0xf]
      %v4860 = vld [vmem:[%s4839 + $0x78] sm:$0xf]
      %v4861 = vld [vmem:[%s4839 + $0x7c] sm:$0xf]
      %v4862 = vld [vmem:[%s4839 + $0x84] sm:$0xf]
      %v4863 = vld [vmem:[%s4839 + $0x88] sm:$0xf]
      %v4864 = vld [vmem:[%s4839 + $0x90] sm:$0xf]
      %v4865 = vld [vmem:[%s4839 + $0x94] sm:$0xf]
      %v4866 = vld [vmem:[%s4839 + $0x9c] sm:$0xf]
      %v4867 = vld [vmem:[%s4839 + $0xa0] sm:$0xf]
      %v4868 = vld [vmem:[%s4839 + $0xa8] sm:$0xf]
      %v4869 = vld [vmem:[%s4839 + $0xac] sm:$0xf]
      %v4870 = vld [vmem:[%s4839 + $0xb4] sm:$0xf]
      %v4871 = vld [vmem:[%s4839 + $0xb8] sm:$0xf]
      %s4872 = scalar_lea.vmem %s5, 48
      %v4873 = vld [vmem:[%s4872] sm:$0xf]
      %v4874 = vld [vmem:[%s4872 + $0x4] sm:$0xf]
      %v4907 = vunpack.c.l.b16 %v4840
      %v4908 = vunpack.c.l.b16 %v4841
      %v4909 = vunpack.c.l.b16 %v4842
      %v4910 = vunpack.c.l.b16 %v4843
      %v4911 = vunpack.c.l.b16 %v4844
      %v4912 = vunpack.c.l.b16 %v4845
      %v4913 = vunpack.c.l.b16 %v4846
      %v4914 = vunpack.c.l.b16 %v4847
      %v4915 = vunpack.c.l.b16 %v4848
      %v4916 = vunpack.c.l.b16 %v4849
      %v4917 = vunpack.c.l.b16 %v4850
      %v4918 = vunpack.c.l.b16 %v4851
      %v4919 = vunpack.c.l.b16 %v4852
      %v4920 = vunpack.c.l.b16 %v4853
      %v4921 = vunpack.c.l.b16 %v4854
      %v4922 = vunpack.c.l.b16 %v4855
      %v4923 = vunpack.c.l.b16 %v4856
      %v4924 = vunpack.c.l.b16 %v4857
      %v4925 = vunpack.c.l.b16 %v4858
      %v4926 = vunpack.c.l.b16 %v4859
      %v4927 = vunpack.c.l.b16 %v4860
      %v4928 = vunpack.c.l.b16 %v4861
      %v4929 = vunpack.c.l.b16 %v4862
      %v4930 = vunpack.c.l.b16 %v4863
      %v4931 = vunpack.c.l.b16 %v4864
      %v4932 = vunpack.c.l.b16 %v4865
      %v4933 = vunpack.c.l.b16 %v4866
      %v4934 = vunpack.c.l.b16 %v4867
      %v4935 = vunpack.c.l.b16 %v4868
      %v4936 = vunpack.c.l.b16 %v4869
      %v4937 = vunpack.c.l.b16 %v4870
      %v4938 = vunpack.c.l.b16 %v4871
      %v4939 = vpack.c.b16 %v4908, %v4907
      %v4940 = vpack.c.b16 %v4910, %v4909
      %v4941 = vpack.c.b16 %v4912, %v4911
      %v4942 = vpack.c.b16 %v4914, %v4913
      %v4943 = vpack.c.b16 %v4916, %v4915
      %v4944 = vpack.c.b16 %v4918, %v4917
      %v4945 = vpack.c.b16 %v4920, %v4919
      %v4946 = vpack.c.b16 %v4922, %v4921
      %v4947 = vpack.c.b16 %v4924, %v4923
      %v4948 = vpack.c.b16 %v4926, %v4925
      %v4949 = vpack.c.b16 %v4928, %v4927
      %v4950 = vpack.c.b16 %v4930, %v4929
      %v4951 = vpack.c.b16 %v4932, %v4931
      %v4952 = vpack.c.b16 %v4934, %v4933
      %v4953 = vpack.c.b16 %v4936, %v4935
      %v4954 = vpack.c.b16 %v4938, %v4937
      %v4957 = vunpack.c.l.b16 %v4873
      %v4958 = vunpack.c.l.b16 %v4874
      %v4959 = vpack.c.b16 %v4958, %v4957
      %v4962 = vsel %vm850, %v4939, 0
      %v4965 = vsel %vm850, %v4940, 0
      %v4968 = vsel %vm850, %v4941, 0
      %v4971 = vsel %vm850, %v4942, 0
      %v4974 = vsel %vm850, %v4943, 0
      %v4977 = vsel %vm850, %v4944, 0
      %v4980 = vsel %vm850, %v4945, 0
      %v4983 = vsel %vm850, %v4946, 0
      %v4986 = vsel %vm850, %v4947, 0
      %v4989 = vsel %vm850, %v4948, 0
      %v4992 = vsel %vm850, %v4949, 0
      %v4995 = vsel %vm850, %v4950, 0
      %v4998 = vsel %vm850, %v4951, 0
      %v5001 = vsel %vm850, %v4952, 0
      %v5004 = vsel %vm850, %v4953, 0
      %v5007 = vsel %vm850, %v4954, 0
      %5009 = vmatprep.subr.bf16.mxu0 0
      %5010 = vmatpush1.bf16.msra.mxu0 %v4959
      %5011 = vmatprep.subr.bf16.mxu0 0
      %5012 = vmatpush1.bf16.msra.mxu0 0
      %5013 = vmatprep.subr.bf16.mxu0 0
      %5014 = vmatpush1.bf16.msra.mxu0 0
      %5015 = vmatprep.subr.bf16.mxu0 0
      %5016 = vmatpush1.bf16.msra.mxu0 0
      %5017 = vmatprep.subr.bf16.mxu0 0
      %5018 = vmatpush1.bf16.msra.mxu0 0
      %5019 = vmatprep.subr.bf16.mxu0 0
      %5020 = vmatpush1.bf16.msra.mxu0 0
      %5021 = vmatprep.subr.bf16.mxu0 0
      %5022 = vmatpush1.bf16.msra.mxu0 0
      %5023 = vmatprep.subr.bf16.mxu0 0
      %5024 = vmatpush1.bf16.msra.mxu0 0
      %5025 = vmatprep.subr.bf16.mxu0 0
      %5026 = vmatpush1.bf16.msra.mxu0 0
      %5027 = vmatprep.subr.bf16.mxu0 0
      %5028 = vmatpush1.bf16.msra.mxu0 0
      %5029 = vmatprep.subr.bf16.mxu0 0
      %5030 = vmatpush1.bf16.msra.mxu0 0
      %5031 = vmatprep.subr.bf16.mxu0 0
      %5032 = vmatpush1.bf16.msra.mxu0 0
      %5033 = vmatprep.subr.bf16.mxu0 0
      %5034 = vmatpush1.bf16.msra.mxu0 0
      %5035 = vmatprep.subr.bf16.mxu0 0
      %5036 = vmatpush1.bf16.msra.mxu0 0
      %5037 = vmatprep.subr.bf16.mxu0 0
      %5038 = vmatpush1.bf16.msra.mxu0 0
      %5039 = vmatprep.subr.bf16.mxu0 0
      %5040 = vmatpush1.bf16.msra.mxu0 0
      %5041 = vmatprep.mubr.bf16.mxu0 0
      %5042 = vmatmul.mubr.bf16.gmra.mrb[0].mxu0 %v4962
      %v5043 = vpop.f32.mrb[0].mxu0
      %v5044 = vadd.f32 0.0, %v5043
      %v5045 = vpop.f32.mrb[0].mxu0
      %v5046 = vpop.f32.mrb[0].mxu0
      %v5047 = vadd.f32 0.0, %v5046
      %v5048 = vpop.f32.mrb[0].mxu0
      %5049 = vmatprep.mubr.bf16.mxu0 0
      %5050 = vmatmul.mubr.bf16.gmra.mrb[0].mxu0 %v4965
      %v5051 = vpop.f32.mrb[0].mxu0
      %v5052 = vadd.f32 0.0, %v5051
      %v5053 = vpop.f32.mrb[0].mxu0
      %v5054 = vpop.f32.mrb[0].mxu0
      %v5055 = vadd.f32 0.0, %v5054
      %v5056 = vpop.f32.mrb[0].mxu0
      %5057 = vmatprep.mubr.bf16.mxu0 0
      %5058 = vmatmul.mubr.bf16.gmra.mrb[0].mxu0 %v4968
      %v5059 = vpop.f32.mrb[0].mxu0
      %v5060 = vadd.f32 0.0, %v5059
      %v5061 = vpop.f32.mrb[0].mxu0
      %v5062 = vpop.f32.mrb[0].mxu0
      %v5063 = vadd.f32 0.0, %v5062
      %v5064 = vpop.f32.mrb[0].mxu0
      %5065 = vmatprep.mubr.bf16.mxu0 0
      %5066 = vmatmul.mubr.bf16.gmra.mrb[0].mxu0 %v4971
      %v5067 = vpop.f32.mrb[0].mxu0
      %v5068 = vadd.f32 0.0, %v5067
      %v5069 = vpop.f32.mrb[0].mxu0
      %v5070 = vpop.f32.mrb[0].mxu0
      %v5071 = vadd.f32 0.0, %v5070
      %v5072 = vpop.f32.mrb[0].mxu0
      %5073 = vmatprep.mubr.bf16.mxu0 0
      %5074 = vmatmul.mubr.bf16.gmra.mrb[0].mxu0 %v4974
      %v5075 = vpop.f32.mrb[0].mxu0
      %v5076 = vadd.f32 0.0, %v5075
      %v5077 = vpop.f32.mrb[0].mxu0
      %v5078 = vpop.f32.mrb[0].mxu0
      %v5079 = vadd.f32 0.0, %v5078
      %v5080 = vpop.f32.mrb[0].mxu0
      %5081 = vmatprep.mubr.bf16.mxu0 0
      %5082 = vmatmul.mubr.bf16.gmra.mrb[0].mxu0 %v4977
      %v5083 = vpop.f32.mrb[0].mxu0
      %v5084 = vadd.f32 0.0, %v5083
      %v5085 = vpop.f32.mrb[0].mxu0
      %v5086 = vpop.f32.mrb[0].mxu0
      %v5087 = vadd.f32 0.0, %v5086
      %v5088 = vpop.f32.mrb[0].mxu0
      %5089 = vmatprep.mubr.bf16.mxu0 0
      %5090 = vmatmul.mubr.bf16.gmra.mrb[0].mxu0 %v4980
      %v5091 = vpop.f32.mrb[0].mxu0
      %v5092 = vadd.f32 0.0, %v5091
      %v5093 = vpop.f32.mrb[0].mxu0
      %v5094 = vpop.f32.mrb[0].mxu0
      %v5095 = vadd.f32 0.0, %v5094
      %v5096 = vpop.f32.mrb[0].mxu0
      %5097 = vmatprep.mubr.bf16.mxu0 0
      %5098 = vmatmul.mubr.bf16.gmra.mrb[0].mxu0 %v4983
      %v5099 = vpop.f32.mrb[0].mxu0
      %v5100 = vadd.f32 0.0, %v5099
      %v5101 = vpop.f32.mrb[0].mxu0
      %v5102 = vpop.f32.mrb[0].mxu0
      %v5103 = vadd.f32 0.0, %v5102
      %v5104 = vpop.f32.mrb[0].mxu0
      %5105 = vmatprep.mubr.bf16.mxu0 0
      %5106 = vmatmul.mubr.bf16.gmra.mrb[0].mxu0 %v4986
      %v5107 = vpop.f32.mrb[0].mxu0
      %v5108 = vadd.f32 0.0, %v5107
      %v5109 = vpop.f32.mrb[0].mxu0
      %v5110 = vpop.f32.mrb[0].mxu0
      %v5111 = vadd.f32 0.0, %v5110
      %v5112 = vpop.f32.mrb[0].mxu0
      %5113 = vmatprep.mubr.bf16.mxu0 0
      %5114 = vmatmul.mubr.bf16.gmra.mrb[0].mxu0 %v4989
      %v5115 = vpop.f32.mrb[0].mxu0
      %v5116 = vadd.f32 0.0, %v5115
      %v5117 = vpop.f32.mrb[0].mxu0
      %v5118 = vpop.f32.mrb[0].mxu0
      %v5119 = vadd.f32 0.0, %v5118
      %v5120 = vpop.f32.mrb[0].mxu0
      %5121 = vmatprep.mubr.bf16.mxu0 0
      %5122 = vmatmul.mubr.bf16.gmra.mrb[0].mxu0 %v4992
      %v5123 = vpop.f32.mrb[0].mxu0
      %v5124 = vadd.f32 0.0, %v5123
      %v5125 = vpop.f32.mrb[0].mxu0
      %v5126 = vpop.f32.mrb[0].mxu0
      %v5127 = vadd.f32 0.0, %v5126
      %v5128 = vpop.f32.mrb[0].mxu0
      %5129 = vmatprep.mubr.bf16.mxu0 0
      %5130 = vmatmul.mubr.bf16.gmra.mrb[0].mxu0 %v4995
      %v5131 = vpop.f32.mrb[0].mxu0
      %v5132 = vadd.f32 0.0, %v5131
      %v5133 = vpop.f32.mrb[0].mxu0
      %v5134 = vpop.f32.mrb[0].mxu0
      %v5135 = vadd.f32 0.0, %v5134
      %v5136 = vpop.f32.mrb[0].mxu0
      %5137 = vmatprep.mubr.bf16.mxu0 0
      %5138 = vmatmul.mubr.bf16.gmra.mrb[0].mxu0 %v4998
      %v5139 = vpop.f32.mrb[0].mxu0
      %v5140 = vadd.f32 0.0, %v5139
      %v5141 = vpop.f32.mrb[0].mxu0
      %v5142 = vpop.f32.mrb[0].mxu0
      %v5143 = vadd.f32 0.0, %v5142
      %v5144 = vpop.f32.mrb[0].mxu0
      %5145 = vmatprep.mubr.bf16.mxu0 0
      %5146 = vmatmul.mubr.bf16.gmra.mrb[0].mxu0 %v5001
      %v5147 = vpop.f32.mrb[0].mxu0
      %v5148 = vadd.f32 0.0, %v5147
      %v5149 = vpop.f32.mrb[0].mxu0
      %v5150 = vpop.f32.mrb[0].mxu0
      %v5151 = vadd.f32 0.0, %v5150
      %v5152 = vpop.f32.mrb[0].mxu0
      %5153 = vmatprep.mubr.bf16.mxu0 0
      %5154 = vmatmul.mubr.bf16.gmra.mrb[0].mxu0 %v5004
      %v5155 = vpop.f32.mrb[0].mxu0
      %v5156 = vadd.f32 0.0, %v5155
      %v5157 = vpop.f32.mrb[0].mxu0
      %v5158 = vpop.f32.mrb[0].mxu0
      %v5159 = vadd.f32 0.0, %v5158
      %v5160 = vpop.f32.mrb[0].mxu0
      %5161 = vmatprep.mubr.bf16.mxu0 0
      %5162 = vmatmul.mubr.bf16.gmra.mrb[0].mxu0 %v5007
      %v5163 = vpop.f32.mrb[0].mxu0
      %v5164 = vadd.f32 0.0, %v5163
      %v5165 = vpop.f32.mrb[0].mxu0
      %v5166 = vpop.f32.mrb[0].mxu0
      %v5167 = vadd.f32 0.0, %v5166
      %v5168 = vpop.f32.mrb[0].mxu0
      %5169 = vdwg.mxu0
      %v5170 = vadd.f32 %v4807, %v5044
      %v5171 = vadd.f32 %v4808, %v5047
      %v5172 = vadd.f32 %v4809, %v5052
      %v5173 = vadd.f32 %v4810, %v5055
      %v5174 = vadd.f32 %v4811, %v5060
      %v5175 = vadd.f32 %v4812, %v5063
      %v5176 = vadd.f32 %v4813, %v5068
      %v5177 = vadd.f32 %v4814, %v5071
      %v5178 = vadd.f32 %v4815, %v5076
      %v5179 = vadd.f32 %v4816, %v5079
      %v5180 = vadd.f32 %v4817, %v5084
      %v5181 = vadd.f32 %v4818, %v5087
      %v5182 = vadd.f32 %v4819, %v5092
      %v5183 = vadd.f32 %v4820, %v5095
      %v5184 = vadd.f32 %v4821, %v5100
      %v5185 = vadd.f32 %v4822, %v5103
      %v5186 = vadd.f32 %v4823, %v5108
      %v5187 = vadd.f32 %v4824, %v5111
      %v5188 = vadd.f32 %v4825, %v5116
      %v5189 = vadd.f32 %v4826, %v5119
      %v5190 = vadd.f32 %v4827, %v5124
      %v5191 = vadd.f32 %v4828, %v5127
      %v5192 = vadd.f32 %v4829, %v5132
      %v5193 = vadd.f32 %v4830, %v5135
      %v5194 = vadd.f32 %v4831, %v5140
      %v5195 = vadd.f32 %v4832, %v5143
      %v5196 = vadd.f32 %v4833, %v5148
      %v5197 = vadd.f32 %v4834, %v5151
      %v5198 = vadd.f32 %v4835, %v5156
      %v5199 = vadd.f32 %v4836, %v5159
      %v5200 = vadd.f32 %v4837, %v5164
      %v5201 = vadd.f32 %v4838, %v5167
      %v5202 = vld [vmem:[%s4839] sm:$0xf]
      %v5203 = vld [vmem:[%s4839 + $0x4] sm:$0xf]
      %v5204 = vld [vmem:[%s4839 + $0x8] sm:$0x1]
      %v5205 = vld [vmem:[%s4839 + $0xc] sm:$0xf]
      %v5206 = vld [vmem:[%s4839 + $0x10] sm:$0xf]
      %v5207 = vld [vmem:[%s4839 + $0x14] sm:$0x1]
      %v5208 = vld [vmem:[%s4839 + $0x18] sm:$0xf]
      %v5209 = vld [vmem:[%s4839 + $0x1c] sm:$0xf]
      %v5210 = vld [vmem:[%s4839 + $0x20] sm:$0x1]
      %v5211 = vld [vmem:[%s4839 + $0x24] sm:$0xf]
      %v5212 = vld [vmem:[%s4839 + $0x28] sm:$0xf]
      %v5213 = vld [vmem:[%s4839 + $0x2c] sm:$0x1]
      %v5214 = vld [vmem:[%s4839 + $0x30] sm:$0xf]
      %v5215 = vld [vmem:[%s4839 + $0x34] sm:$0xf]
      %v5216 = vld [vmem:[%s4839 + $0x38] sm:$0x1]
      %v5217 = vld [vmem:[%s4839 + $0x3c] sm:$0xf]
      %v5218 = vld [vmem:[%s4839 + $0x40] sm:$0xf]
      %v5219 = vld [vmem:[%s4839 + $0x44] sm:$0x1]
      %v5220 = vld [vmem:[%s4839 + $0x48] sm:$0xf]
      %v5221 = vld [vmem:[%s4839 + $0x4c] sm:$0xf]
      %v5222 = vld [vmem:[%s4839 + $0x50] sm:$0x1]
      %v5223 = vld [vmem:[%s4839 + $0x54] sm:$0xf]
      %v5224 = vld [vmem:[%s4839 + $0x58] sm:$0xf]
      %v5225 = vld [vmem:[%s4839 + $0x5c] sm:$0x1]
      %v5226 = vld [vmem:[%s4839 + $0x60] sm:$0xf]
      %v5227 = vld [vmem:[%s4839 + $0x64] sm:$0xf]
      %v5228 = vld [vmem:[%s4839 + $0x68] sm:$0x1]
      %v5229 = vld [vmem:[%s4839 + $0x6c] sm:$0xf]
      %v5230 = vld [vmem:[%s4839 + $0x70] sm:$0xf]
      %v5231 = vld [vmem:[%s4839 + $0x74] sm:$0x1]
      %v5232 = vld [vmem:[%s4839 + $0x78] sm:$0xf]
      %v5233 = vld [vmem:[%s4839 + $0x7c] sm:$0xf]
      %v5234 = vld [vmem:[%s4839 + $0x80] sm:$0x1]
      %v5235 = vld [vmem:[%s4839 + $0x84] sm:$0xf]
      %v5236 = vld [vmem:[%s4839 + $0x88] sm:$0xf]
      %v5237 = vld [vmem:[%s4839 + $0x8c] sm:$0x1]
      %v5238 = vld [vmem:[%s4839 + $0x90] sm:$0xf]
      %v5239 = vld [vmem:[%s4839 + $0x94] sm:$0xf]
      %v5240 = vld [vmem:[%s4839 + $0x98] sm:$0x1]
      %v5241 = vld [vmem:[%s4839 + $0x9c] sm:$0xf]
      %v5242 = vld [vmem:[%s4839 + $0xa0] sm:$0xf]
      %v5243 = vld [vmem:[%s4839 + $0xa4] sm:$0x1]
      %v5244 = vld [vmem:[%s4839 + $0xa8] sm:$0xf]
      %v5245 = vld [vmem:[%s4839 + $0xac] sm:$0xf]
      %v5246 = vld [vmem:[%s4839 + $0xb0] sm:$0x1]
      %v5247 = vld [vmem:[%s4839 + $0xb4] sm:$0xf]
      %v5248 = vld [vmem:[%s4839 + $0xb8] sm:$0xf]
      %v5249 = vld [vmem:[%s4839 + $0xbc] sm:$0x1]
      %v5251 = vshrl.u32 %v5202, 16
      %v5253 = vrot.slane %v5251, 4
      %v5254 = vshll.u32 %v5202, 16
      %v5256 = vrot.slane %v5254, 5
      %v5257 = vor.u32 %v5253, %v5256
      %v5258 = vrot.slane %v5257, 4
      %v5260 = vshll.u32 %v5203, 16
      %v5262 = vrot.slane %v5260, 5
      %v5263 = vsel %vm1866, %v5258, %v5262
      %v5264 = vshrl.u32 %v5203, 16
      %v5266 = vrot.slane %v5264, 4
      %v5267 = vor.u32 %v5266, %v5262
      %v5268 = vrot.slane %v5267, 4
      %v5270 = vshll.u32 %v5204, 16
      %v5272 = vrot.slane %v5270, 5
      %v5273 = vsel %vm1866, %v5268, %v5272
      %v5275 = vshrl.u32 %v5205, 16
      %v5277 = vrot.slane %v5275, 4
      %v5278 = vshll.u32 %v5205, 16
      %v5280 = vrot.slane %v5278, 5
      %v5281 = vor.u32 %v5277, %v5280
      %v5282 = vrot.slane %v5281, 4
      %v5284 = vshll.u32 %v5206, 16
      %v5286 = vrot.slane %v5284, 5
      %v5287 = vsel %vm1866, %v5282, %v5286
      %v5288 = vshrl.u32 %v5206, 16
      %v5290 = vrot.slane %v5288, 4
      %v5291 = vor.u32 %v5290, %v5286
      %v5292 = vrot.slane %v5291, 4
      %v5294 = vshll.u32 %v5207, 16
      %v5296 = vrot.slane %v5294, 5
      %v5297 = vsel %vm1866, %v5292, %v5296
      %v5299 = vshrl.u32 %v5208, 16
      %v5301 = vrot.slane %v5299, 4
      %v5302 = vshll.u32 %v5208, 16
      %v5304 = vrot.slane %v5302, 5
      %v5305 = vor.u32 %v5301, %v5304
      %v5306 = vrot.slane %v5305, 4
      %v5308 = vshll.u32 %v5209, 16
      %v5310 = vrot.slane %v5308, 5
      %v5311 = vsel %vm1866, %v5306, %v5310
      %v5312 = vshrl.u32 %v5209, 16
      %v5314 = vrot.slane %v5312, 4
      %v5315 = vor.u32 %v5314, %v5310
      %v5316 = vrot.slane %v5315, 4
      %v5318 = vshll.u32 %v5210, 16
      %v5320 = vrot.slane %v5318, 5
      %v5321 = vsel %vm1866, %v5316, %v5320
      %v5323 = vshrl.u32 %v5211, 16
      %v5325 = vrot.slane %v5323, 4
      %v5326 = vshll.u32 %v5211, 16
      %v5328 = vrot.slane %v5326, 5
      %v5329 = vor.u32 %v5325, %v5328
      %v5330 = vrot.slane %v5329, 4
      %v5332 = vshll.u32 %v5212, 16
      %v5334 = vrot.slane %v5332, 5
      %v5335 = vsel %vm1866, %v5330, %v5334
      %v5336 = vshrl.u32 %v5212, 16
      %v5338 = vrot.slane %v5336, 4
      %v5339 = vor.u32 %v5338, %v5334
      %v5340 = vrot.slane %v5339, 4
      %v5342 = vshll.u32 %v5213, 16
      %v5344 = vrot.slane %v5342, 5
      %v5345 = vsel %vm1866, %v5340, %v5344
      %v5347 = vshrl.u32 %v5214, 16
      %v5349 = vrot.slane %v5347, 4
      %v5350 = vshll.u32 %v5214, 16
      %v5352 = vrot.slane %v5350, 5
      %v5353 = vor.u32 %v5349, %v5352
      %v5354 = vrot.slane %v5353, 4
      %v5356 = vshll.u32 %v5215, 16
      %v5358 = vrot.slane %v5356, 5
      %v5359 = vsel %vm1866, %v5354, %v5358
      %v5360 = vshrl.u32 %v5215, 16
      %v5362 = vrot.slane %v5360, 4
      %v5363 = vor.u32 %v5362, %v5358
      %v5364 = vrot.slane %v5363, 4
      %v5366 = vshll.u32 %v5216, 16
      %v5368 = vrot.slane %v5366, 5
      %v5369 = vsel %vm1866, %v5364, %v5368
      %v5371 = vshrl.u32 %v5217, 16
      %v5373 = vrot.slane %v5371, 4
      %v5374 = vshll.u32 %v5217, 16
      %v5376 = vrot.slane %v5374, 5
      %v5377 = vor.u32 %v5373, %v5376
      %v5378 = vrot.slane %v5377, 4
      %v5380 = vshll.u32 %v5218, 16
      %v5382 = vrot.slane %v5380, 5
      %v5383 = vsel %vm1866, %v5378, %v5382
      %v5384 = vshrl.u32 %v5218, 16
      %v5386 = vrot.slane %v5384, 4
      %v5387 = vor.u32 %v5386, %v5382
      %v5388 = vrot.slane %v5387, 4
      %v5390 = vshll.u32 %v5219, 16
      %v5392 = vrot.slane %v5390, 5
      %v5393 = vsel %vm1866, %v5388, %v5392
      %v5395 = vshrl.u32 %v5220, 16
      %v5397 = vrot.slane %v5395, 4
      %v5398 = vshll.u32 %v5220, 16
      %v5400 = vrot.slane %v5398, 5
      %v5401 = vor.u32 %v5397, %v5400
      %v5402 = vrot.slane %v5401, 4
      %v5404 = vshll.u32 %v5221, 16
      %v5406 = vrot.slane %v5404, 5
      %v5407 = vsel %vm1866, %v5402, %v5406
      %v5408 = vshrl.u32 %v5221, 16
      %v5410 = vrot.slane %v5408, 4
      %v5411 = vor.u32 %v5410, %v5406
      %v5412 = vrot.slane %v5411, 4
      %v5414 = vshll.u32 %v5222, 16
      %v5416 = vrot.slane %v5414, 5
      %v5417 = vsel %vm1866, %v5412, %v5416
      %v5419 = vshrl.u32 %v5223, 16
      %v5421 = vrot.slane %v5419, 4
      %v5422 = vshll.u32 %v5223, 16
      %v5424 = vrot.slane %v5422, 5
      %v5425 = vor.u32 %v5421, %v5424
      %v5426 = vrot.slane %v5425, 4
      %v5428 = vshll.u32 %v5224, 16
      %v5430 = vrot.slane %v5428, 5
      %v5431 = vsel %vm1866, %v5426, %v5430
      %v5432 = vshrl.u32 %v5224, 16
      %v5434 = vrot.slane %v5432, 4
      %v5435 = vor.u32 %v5434, %v5430
      %v5436 = vrot.slane %v5435, 4
      %v5438 = vshll.u32 %v5225, 16
      %v5440 = vrot.slane %v5438, 5
      %v5441 = vsel %vm1866, %v5436, %v5440
      %v5443 = vshrl.u32 %v5226, 16
      %v5445 = vrot.slane %v5443, 4
      %v5446 = vshll.u32 %v5226, 16
      %v5448 = vrot.slane %v5446, 5
      %v5449 = vor.u32 %v5445, %v5448
      %v5450 = vrot.slane %v5449, 4
      %v5452 = vshll.u32 %v5227, 16
      %v5454 = vrot.slane %v5452, 5
      %v5455 = vsel %vm1866, %v5450, %v5454
      %v5456 = vshrl.u32 %v5227, 16
      %v5458 = vrot.slane %v5456, 4
      %v5459 = vor.u32 %v5458, %v5454
      %v5460 = vrot.slane %v5459, 4
      %v5462 = vshll.u32 %v5228, 16
      %v5464 = vrot.slane %v5462, 5
      %v5465 = vsel %vm1866, %v5460, %v5464
      %v5467 = vshrl.u32 %v5229, 16
      %v5469 = vrot.slane %v5467, 4
      %v5470 = vshll.u32 %v5229, 16
      %v5472 = vrot.slane %v5470, 5
      %v5473 = vor.u32 %v5469, %v5472
      %v5474 = vrot.slane %v5473, 4
      %v5476 = vshll.u32 %v5230, 16
      %v5478 = vrot.slane %v5476, 5
      %v5479 = vsel %vm1866, %v5474, %v5478
      %v5480 = vshrl.u32 %v5230, 16
      %v5482 = vrot.slane %v5480, 4
      %v5483 = vor.u32 %v5482, %v5478
      %v5484 = vrot.slane %v5483, 4
      %v5486 = vshll.u32 %v5231, 16
      %v5488 = vrot.slane %v5486, 5
      %v5489 = vsel %vm1866, %v5484, %v5488
      %v5491 = vshrl.u32 %v5232, 16
      %v5493 = vrot.slane %v5491, 4
      %v5494 = vshll.u32 %v5232, 16
      %v5496 = vrot.slane %v5494, 5
      %v5497 = vor.u32 %v5493, %v5496
      %v5498 = vrot.slane %v5497, 4
      %v5500 = vshll.u32 %v5233, 16
      %v5502 = vrot.slane %v5500, 5
      %v5503 = vsel %vm1866, %v5498, %v5502
      %v5504 = vshrl.u32 %v5233, 16
      %v5506 = vrot.slane %v5504, 4
      %v5507 = vor.u32 %v5506, %v5502
      %v5508 = vrot.slane %v5507, 4
      %v5510 = vshll.u32 %v5234, 16
      %v5512 = vrot.slane %v5510, 5
      %v5513 = vsel %vm1866, %v5508, %v5512
      %v5515 = vshrl.u32 %v5235, 16
      %v5517 = vrot.slane %v5515, 4
      %v5518 = vshll.u32 %v5235, 16
      %v5520 = vrot.slane %v5518, 5
      %v5521 = vor.u32 %v5517, %v5520
      %v5522 = vrot.slane %v5521, 4
      %v5524 = vshll.u32 %v5236, 16
      %v5526 = vrot.slane %v5524, 5
      %v5527 = vsel %vm1866, %v5522, %v5526
      %v5528 = vshrl.u32 %v5236, 16
      %v5530 = vrot.slane %v5528, 4
      %v5531 = vor.u32 %v5530, %v5526
      %v5532 = vrot.slane %v5531, 4
      %v5534 = vshll.u32 %v5237, 16
      %v5536 = vrot.slane %v5534, 5
      %v5537 = vsel %vm1866, %v5532, %v5536
      %v5539 = vshrl.u32 %v5238, 16
      %v5541 = vrot.slane %v5539, 4
      %v5542 = vshll.u32 %v5238, 16
      %v5544 = vrot.slane %v5542, 5
      %v5545 = vor.u32 %v5541, %v5544
      %v5546 = vrot.slane %v5545, 4
      %v5548 = vshll.u32 %v5239, 16
      %v5550 = vrot.slane %v5548, 5
      %v5551 = vsel %vm1866, %v5546, %v5550
      %v5552 = vshrl.u32 %v5239, 16
      %v5554 = vrot.slane %v5552, 4
      %v5555 = vor.u32 %v5554, %v5550
      %v5556 = vrot.slane %v5555, 4
      %v5558 = vshll.u32 %v5240, 16
      %v5560 = vrot.slane %v5558, 5
      %v5561 = vsel %vm1866, %v5556, %v5560
      %v5563 = vshrl.u32 %v5241, 16
      %v5565 = vrot.slane %v5563, 4
      %v5566 = vshll.u32 %v5241, 16
      %v5568 = vrot.slane %v5566, 5
      %v5569 = vor.u32 %v5565, %v5568
      %v5570 = vrot.slane %v5569, 4
      %v5572 = vshll.u32 %v5242, 16
      %v5574 = vrot.slane %v5572, 5
      %v5575 = vsel %vm1866, %v5570, %v5574
      %v5576 = vshrl.u32 %v5242, 16
      %v5578 = vrot.slane %v5576, 4
      %v5579 = vor.u32 %v5578, %v5574
      %v5580 = vrot.slane %v5579, 4
      %v5582 = vshll.u32 %v5243, 16
      %v5584 = vrot.slane %v5582, 5
      %v5585 = vsel %vm1866, %v5580, %v5584
      %v5587 = vshrl.u32 %v5244, 16
      %v5589 = vrot.slane %v5587, 4
      %v5590 = vshll.u32 %v5244, 16
      %v5592 = vrot.slane %v5590, 5
      %v5593 = vor.u32 %v5589, %v5592
      %v5594 = vrot.slane %v5593, 4
      %v5596 = vshll.u32 %v5245, 16
      %v5598 = vrot.slane %v5596, 5
      %v5599 = vsel %vm1866, %v5594, %v5598
      %v5600 = vshrl.u32 %v5245, 16
      %v5602 = vrot.slane %v5600, 4
      %v5603 = vor.u32 %v5602, %v5598
      %v5604 = vrot.slane %v5603, 4
      %v5606 = vshll.u32 %v5246, 16
      %v5608 = vrot.slane %v5606, 5
      %v5609 = vsel %vm1866, %v5604, %v5608
      %v5611 = vshrl.u32 %v5247, 16
      %v5613 = vrot.slane %v5611, 4
      %v5614 = vshll.u32 %v5247, 16
      %v5616 = vrot.slane %v5614, 5
      %v5617 = vor.u32 %v5613, %v5616
      %v5618 = vrot.slane %v5617, 4
      %v5620 = vshll.u32 %v5248, 16
      %v5622 = vrot.slane %v5620, 5
      %v5623 = vsel %vm1866, %v5618, %v5622
      %v5624 = vshrl.u32 %v5248, 16
      %v5626 = vrot.slane %v5624, 4
      %v5627 = vor.u32 %v5626, %v5622
      %v5628 = vrot.slane %v5627, 4
      %v5630 = vshll.u32 %v5249, 16
      %v5632 = vrot.slane %v5630, 5
      %v5633 = vsel %vm1866, %v5628, %v5632
      %s5634 = scalar_lea.vmem %s5, 56
      %v5635 = vld [vmem:[%s5634] sm:$0xf]
      %v5636 = vld [vmem:[%s5634 + $0x4] sm:$0xf]
      %v5637 = vunpack.c.l.b16 %v5263
      %v5638 = vunpack.c.l.b16 %v5273
      %v5639 = vunpack.c.l.b16 %v5287
      %v5640 = vunpack.c.l.b16 %v5297
      %v5641 = vunpack.c.l.b16 %v5311
      %v5642 = vunpack.c.l.b16 %v5321
      %v5643 = vunpack.c.l.b16 %v5335
      %v5644 = vunpack.c.l.b16 %v5345
      %v5645 = vunpack.c.l.b16 %v5359
      %v5646 = vunpack.c.l.b16 %v5369
      %v5647 = vunpack.c.l.b16 %v5383
      %v5648 = vunpack.c.l.b16 %v5393
      %v5649 = vunpack.c.l.b16 %v5407
      %v5650 = vunpack.c.l.b16 %v5417
      %v5651 = vunpack.c.l.b16 %v5431
      %v5652 = vunpack.c.l.b16 %v5441
      %v5653 = vunpack.c.l.b16 %v5455
      %v5654 = vunpack.c.l.b16 %v5465
      %v5655 = vunpack.c.l.b16 %v5479
      %v5656 = vunpack.c.l.b16 %v5489
      %v5657 = vunpack.c.l.b16 %v5503
      %v5658 = vunpack.c.l.b16 %v5513
      %v5659 = vunpack.c.l.b16 %v5527
      %v5660 = vunpack.c.l.b16 %v5537
      %v5661 = vunpack.c.l.b16 %v5551
      %v5662 = vunpack.c.l.b16 %v5561
      %v5663 = vunpack.c.l.b16 %v5575
      %v5664 = vunpack.c.l.b16 %v5585
      %v5665 = vunpack.c.l.b16 %v5599
      %v5666 = vunpack.c.l.b16 %v5609
      %v5667 = vunpack.c.l.b16 %v5623
      %v5668 = vunpack.c.l.b16 %v5633
      %v5669 = vpack.c.b16 %v5638, %v5637
      %v5670 = vpack.c.b16 %v5640, %v5639
      %v5671 = vpack.c.b16 %v5642, %v5641
      %v5672 = vpack.c.b16 %v5644, %v5643
      %v5673 = vpack.c.b16 %v5646, %v5645
      %v5674 = vpack.c.b16 %v5648, %v5647
      %v5675 = vpack.c.b16 %v5650, %v5649
      %v5676 = vpack.c.b16 %v5652, %v5651
      %v5677 = vpack.c.b16 %v5654, %v5653
      %v5678 = vpack.c.b16 %v5656, %v5655
      %v5679 = vpack.c.b16 %v5658, %v5657
      %v5680 = vpack.c.b16 %v5660, %v5659
      %v5681 = vpack.c.b16 %v5662, %v5661
      %v5682 = vpack.c.b16 %v5664, %v5663
      %v5683 = vpack.c.b16 %v5666, %v5665
      %v5684 = vpack.c.b16 %v5668, %v5667
      %v5687 = vunpack.c.l.b16 %v5635
      %v5688 = vunpack.c.l.b16 %v5636
      %v5689 = vpack.c.b16 %v5688, %v5687
      %v5692 = vsel %vm850, %v5669, 0
      %v5695 = vsel %vm850, %v5670, 0
      %v5698 = vsel %vm850, %v5671, 0
      %v5701 = vsel %vm850, %v5672, 0
      %v5704 = vsel %vm850, %v5673, 0
      %v5707 = vsel %vm850, %v5674, 0
      %v5710 = vsel %vm850, %v5675, 0
      %v5713 = vsel %vm850, %v5676, 0
      %v5716 = vsel %vm850, %v5677, 0
      %v5719 = vsel %vm850, %v5678, 0
      %v5722 = vsel %vm850, %v5679, 0
      %v5725 = vsel %vm850, %v5680, 0
      %v5728 = vsel %vm850, %v5681, 0
      %v5731 = vsel %vm850, %v5682, 0
      %v5734 = vsel %vm850, %v5683, 0
      %v5737 = vsel %vm850, %v5684, 0
      %5739 = vmatprep.subr.bf16.mxu0 0
      %5740 = vmatpush1.bf16.msra.mxu0 %v5689
      %5741 = vmatprep.subr.bf16.mxu0 0
      %5742 = vmatpush1.bf16.msra.mxu0 0
      %5743 = vmatprep.subr.bf16.mxu0 0
      %5744 = vmatpush1.bf16.msra.mxu0 0
      %5745 = vmatprep.subr.bf16.mxu0 0
      %5746 = vmatpush1.bf16.msra.mxu0 0
      %5747 = vmatprep.subr.bf16.mxu0 0
      %5748 = vmatpush1.bf16.msra.mxu0 0
      %5749 = vmatprep.subr.bf16.mxu0 0
      %5750 = vmatpush1.bf16.msra.mxu0 0
      %5751 = vmatprep.subr.bf16.mxu0 0
      %5752 = vmatpush1.bf16.msra.mxu0 0
      %5753 = vmatprep.subr.bf16.mxu0 0
      %5754 = vmatpush1.bf16.msra.mxu0 0
      %5755 = vmatprep.subr.bf16.mxu0 0
      %5756 = vmatpush1.bf16.msra.mxu0 0
      %5757 = vmatprep.subr.bf16.mxu0 0
      %5758 = vmatpush1.bf16.msra.mxu0 0
      %5759 = vmatprep.subr.bf16.mxu0 0
      %5760 = vmatpush1.bf16.msra.mxu0 0
      %5761 = vmatprep.subr.bf16.mxu0 0
      %5762 = vmatpush1.bf16.msra.mxu0 0
      %5763 = vmatprep.subr.bf16.mxu0 0
      %5764 = vmatpush1.bf16.msra.mxu0 0
      %5765 = vmatprep.subr.bf16.mxu0 0
      %5766 = vmatpush1.bf16.msra.mxu0 0
      %5767 = vmatprep.subr.bf16.mxu0 0
      %5768 = vmatpush1.bf16.msra.mxu0 0
      %5769 = vmatprep.subr.bf16.mxu0 0
      %5770 = vmatpush1.bf16.msra.mxu0 0
      %5771 = vmatprep.mubr.bf16.mxu0 0
      %5772 = vmatmul.mubr.bf16.gmra.mrb[0].mxu0 %v5692
      %v5773 = vpop.f32.mrb[0].mxu0
      %v5774 = vadd.f32 0.0, %v5773
      %v5775 = vpop.f32.mrb[0].mxu0
      %v5776 = vpop.f32.mrb[0].mxu0
      %v5777 = vadd.f32 0.0, %v5776
      %v5778 = vpop.f32.mrb[0].mxu0
      %5779 = vmatprep.mubr.bf16.mxu0 0
      %5780 = vmatmul.mubr.bf16.gmra.mrb[0].mxu0 %v5695
      %v5781 = vpop.f32.mrb[0].mxu0
      %v5782 = vadd.f32 0.0, %v5781
      %v5783 = vpop.f32.mrb[0].mxu0
      %v5784 = vpop.f32.mrb[0].mxu0
      %v5785 = vadd.f32 0.0, %v5784
      %v5786 = vpop.f32.mrb[0].mxu0
      %5787 = vmatprep.mubr.bf16.mxu0 0
      %5788 = vmatmul.mubr.bf16.gmra.mrb[0].mxu0 %v5698
      %v5789 = vpop.f32.mrb[0].mxu0
      %v5790 = vadd.f32 0.0, %v5789
      %v5791 = vpop.f32.mrb[0].mxu0
      %v5792 = vpop.f32.mrb[0].mxu0
      %v5793 = vadd.f32 0.0, %v5792
      %v5794 = vpop.f32.mrb[0].mxu0
      %5795 = vmatprep.mubr.bf16.mxu0 0
      %5796 = vmatmul.mubr.bf16.gmra.mrb[0].mxu0 %v5701
      %v5797 = vpop.f32.mrb[0].mxu0
      %v5798 = vadd.f32 0.0, %v5797
      %v5799 = vpop.f32.mrb[0].mxu0
      %v5800 = vpop.f32.mrb[0].mxu0
      %v5801 = vadd.f32 0.0, %v5800
      %v5802 = vpop.f32.mrb[0].mxu0
      %5803 = vmatprep.mubr.bf16.mxu0 0
      %5804 = vmatmul.mubr.bf16.gmra.mrb[0].mxu0 %v5704
      %v5805 = vpop.f32.mrb[0].mxu0
      %v5806 = vadd.f32 0.0, %v5805
      %v5807 = vpop.f32.mrb[0].mxu0
      %v5808 = vpop.f32.mrb[0].mxu0
      %v5809 = vadd.f32 0.0, %v5808
      %v5810 = vpop.f32.mrb[0].mxu0
      %5811 = vmatprep.mubr.bf16.mxu0 0
      %5812 = vmatmul.mubr.bf16.gmra.mrb[0].mxu0 %v5707
      %v5813 = vpop.f32.mrb[0].mxu0
      %v5814 = vadd.f32 0.0, %v5813
      %v5815 = vpop.f32.mrb[0].mxu0
      %v5816 = vpop.f32.mrb[0].mxu0
      %v5817 = vadd.f32 0.0, %v5816
      %v5818 = vpop.f32.mrb[0].mxu0
      %5819 = vmatprep.mubr.bf16.mxu0 0
      %5820 = vmatmul.mubr.bf16.gmra.mrb[0].mxu0 %v5710
      %v5821 = vpop.f32.mrb[0].mxu0
      %v5822 = vadd.f32 0.0, %v5821
      %v5823 = vpop.f32.mrb[0].mxu0
      %v5824 = vpop.f32.mrb[0].mxu0
      %v5825 = vadd.f32 0.0, %v5824
      %v5826 = vpop.f32.mrb[0].mxu0
      %5827 = vmatprep.mubr.bf16.mxu0 0
      %5828 = vmatmul.mubr.bf16.gmra.mrb[0].mxu0 %v5713
      %v5829 = vpop.f32.mrb[0].mxu0
      %v5830 = vadd.f32 0.0, %v5829
      %v5831 = vpop.f32.mrb[0].mxu0
      %v5832 = vpop.f32.mrb[0].mxu0
      %v5833 = vadd.f32 0.0, %v5832
      %v5834 = vpop.f32.mrb[0].mxu0
      %5835 = vmatprep.mubr.bf16.mxu0 0
      %5836 = vmatmul.mubr.bf16.gmra.mrb[0].mxu0 %v5716
      %v5837 = vpop.f32.mrb[0].mxu0
      %v5838 = vadd.f32 0.0, %v5837
      %v5839 = vpop.f32.mrb[0].mxu0
      %v5840 = vpop.f32.mrb[0].mxu0
      %v5841 = vadd.f32 0.0, %v5840
      %v5842 = vpop.f32.mrb[0].mxu0
      %5843 = vmatprep.mubr.bf16.mxu0 0
      %5844 = vmatmul.mubr.bf16.gmra.mrb[0].mxu0 %v5719
      %v5845 = vpop.f32.mrb[0].mxu0
      %v5846 = vadd.f32 0.0, %v5845
      %v5847 = vpop.f32.mrb[0].mxu0
      %v5848 = vpop.f32.mrb[0].mxu0
      %v5849 = vadd.f32 0.0, %v5848
      %v5850 = vpop.f32.mrb[0].mxu0
      %5851 = vmatprep.mubr.bf16.mxu0 0
      %5852 = vmatmul.mubr.bf16.gmra.mrb[0].mxu0 %v5722
      %v5853 = vpop.f32.mrb[0].mxu0
      %v5854 = vadd.f32 0.0, %v5853
      %v5855 = vpop.f32.mrb[0].mxu0
      %v5856 = vpop.f32.mrb[0].mxu0
      %v5857 = vadd.f32 0.0, %v5856
      %v5858 = vpop.f32.mrb[0].mxu0
      %5859 = vmatprep.mubr.bf16.mxu0 0
      %5860 = vmatmul.mubr.bf16.gmra.mrb[0].mxu0 %v5725
      %v5861 = vpop.f32.mrb[0].mxu0
      %v5862 = vadd.f32 0.0, %v5861
      %v5863 = vpop.f32.mrb[0].mxu0
      %v5864 = vpop.f32.mrb[0].mxu0
      %v5865 = vadd.f32 0.0, %v5864
      %v5866 = vpop.f32.mrb[0].mxu0
      %5867 = vmatprep.mubr.bf16.mxu0 0
      %5868 = vmatmul.mubr.bf16.gmra.mrb[0].mxu0 %v5728
      %v5869 = vpop.f32.mrb[0].mxu0
      %v5870 = vadd.f32 0.0, %v5869
      %v5871 = vpop.f32.mrb[0].mxu0
      %v5872 = vpop.f32.mrb[0].mxu0
      %v5873 = vadd.f32 0.0, %v5872
      %v5874 = vpop.f32.mrb[0].mxu0
      %5875 = vmatprep.mubr.bf16.mxu0 0
      %5876 = vmatmul.mubr.bf16.gmra.mrb[0].mxu0 %v5731
      %v5877 = vpop.f32.mrb[0].mxu0
      %v5878 = vadd.f32 0.0, %v5877
      %v5879 = vpop.f32.mrb[0].mxu0
      %v5880 = vpop.f32.mrb[0].mxu0
      %v5881 = vadd.f32 0.0, %v5880
      %v5882 = vpop.f32.mrb[0].mxu0
      %5883 = vmatprep.mubr.bf16.mxu0 0
      %5884 = vmatmul.mubr.bf16.gmra.mrb[0].mxu0 %v5734
      %v5885 = vpop.f32.mrb[0].mxu0
      %v5886 = vadd.f32 0.0, %v5885
      %v5887 = vpop.f32.mrb[0].mxu0
      %v5888 = vpop.f32.mrb[0].mxu0
      %v5889 = vadd.f32 0.0, %v5888
      %v5890 = vpop.f32.mrb[0].mxu0
      %5891 = vmatprep.mubr.bf16.mxu0 0
      %5892 = vmatmul.mubr.bf16.gmra.mrb[0].mxu0 %v5737
      %v5893 = vpop.f32.mrb[0].mxu0
      %v5894 = vadd.f32 0.0, %v5893
      %v5895 = vpop.f32.mrb[0].mxu0
      %v5896 = vpop.f32.mrb[0].mxu0
      %v5897 = vadd.f32 0.0, %v5896
      %v5898 = vpop.f32.mrb[0].mxu0
      %5899 = vdwg.mxu0
      %v5900 = vadd.f32 %v5170, %v5774
      %v5901 = vadd.f32 %v5171, %v5777
      %v5902 = vadd.f32 %v5172, %v5782
      %v5903 = vadd.f32 %v5173, %v5785
      %v5904 = vadd.f32 %v5174, %v5790
      %v5905 = vadd.f32 %v5175, %v5793
      %v5906 = vadd.f32 %v5176, %v5798
      %v5907 = vadd.f32 %v5177, %v5801
      %v5908 = vadd.f32 %v5178, %v5806
      %v5909 = vadd.f32 %v5179, %v5809
      %v5910 = vadd.f32 %v5180, %v5814
      %v5911 = vadd.f32 %v5181, %v5817
      %v5912 = vadd.f32 %v5182, %v5822
      %v5913 = vadd.f32 %v5183, %v5825
      %v5914 = vadd.f32 %v5184, %v5830
      %v5915 = vadd.f32 %v5185, %v5833
      %v5916 = vadd.f32 %v5186, %v5838
      %v5917 = vadd.f32 %v5187, %v5841
      %v5918 = vadd.f32 %v5188, %v5846
      %v5919 = vadd.f32 %v5189, %v5849
      %v5920 = vadd.f32 %v5190, %v5854
      %v5921 = vadd.f32 %v5191, %v5857
      %v5922 = vadd.f32 %v5192, %v5862
      %v5923 = vadd.f32 %v5193, %v5865
      %v5924 = vadd.f32 %v5194, %v5870
      %v5925 = vadd.f32 %v5195, %v5873
      %v5926 = vadd.f32 %v5196, %v5878
      %v5927 = vadd.f32 %v5197, %v5881
      %v5928 = vadd.f32 %v5198, %v5886
      %v5929 = vadd.f32 %v5199, %v5889
      %v5930 = vadd.f32 %v5200, %v5894
      %v5931 = vadd.f32 %v5201, %v5897
      %v5932 = vld [vmem:[%s4839] sm:$0xe]
      %v5933 = vld [vmem:[%s4839 + $0xc] sm:$0xe]
      %v5934 = vld [vmem:[%s4839 + $0x18] sm:$0xe]
      %v5935 = vld [vmem:[%s4839 + $0x24] sm:$0xe]
      %v5936 = vld [vmem:[%s4839 + $0x30] sm:$0xe]
      %v5937 = vld [vmem:[%s4839 + $0x3c] sm:$0xe]
      %v5938 = vld [vmem:[%s4839 + $0x48] sm:$0xe]
      %v5939 = vld [vmem:[%s4839 + $0x54] sm:$0xe]
      %v5940 = vld [vmem:[%s4839 + $0x60] sm:$0xe]
      %v5941 = vld [vmem:[%s4839 + $0x6c] sm:$0xe]
      %v5942 = vld [vmem:[%s4839 + $0x78] sm:$0xe]
      %v5943 = vld [vmem:[%s4839 + $0x84] sm:$0xe]
      %v5944 = vld [vmem:[%s4839 + $0x90] sm:$0xe]
      %v5945 = vld [vmem:[%s4839 + $0x9c] sm:$0xe]
      %v5946 = vld [vmem:[%s4839 + $0xa8] sm:$0xe]
      %v5947 = vld [vmem:[%s4839 + $0xb4] sm:$0xe]
      %v5996 = vrot.slane %v5932, 5
      %v5997 = vrot.slane %v5996, 4
      %v5998 = vrot.slane %v5203, 5
      %v5999 = vsel %vm2862, %v5997, %v5998
      %v6000 = vrot.slane %v5998, 4
      %v6001 = vrot.slane %v5204, 5
      %v6002 = vsel %vm2862, %v6000, %v6001
      %v6003 = vrot.slane %v5933, 5
      %v6004 = vrot.slane %v6003, 4
      %v6005 = vrot.slane %v5206, 5
      %v6006 = vsel %vm2862, %v6004, %v6005
      %v6007 = vrot.slane %v6005, 4
      %v6008 = vrot.slane %v5207, 5
      %v6009 = vsel %vm2862, %v6007, %v6008
      %v6010 = vrot.slane %v5934, 5
      %v6011 = vrot.slane %v6010, 4
      %v6012 = vrot.slane %v5209, 5
      %v6013 = vsel %vm2862, %v6011, %v6012
      %v6014 = vrot.slane %v6012, 4
      %v6015 = vrot.slane %v5210, 5
      %v6016 = vsel %vm2862, %v6014, %v6015
      %v6017 = vrot.slane %v5935, 5
      %v6018 = vrot.slane %v6017, 4
      %v6019 = vrot.slane %v5212, 5
      %v6020 = vsel %vm2862, %v6018, %v6019
      %v6021 = vrot.slane %v6019, 4
      %v6022 = vrot.slane %v5213, 5
      %v6023 = vsel %vm2862, %v6021, %v6022
      %v6024 = vrot.slane %v5936, 5
      %v6025 = vrot.slane %v6024, 4
      %v6026 = vrot.slane %v5215, 5
      %v6027 = vsel %vm2862, %v6025, %v6026
      %v6028 = vrot.slane %v6026, 4
      %v6029 = vrot.slane %v5216, 5
      %v6030 = vsel %vm2862, %v6028, %v6029
      %v6031 = vrot.slane %v5937, 5
      %v6032 = vrot.slane %v6031, 4
      %v6033 = vrot.slane %v5218, 5
      %v6034 = vsel %vm2862, %v6032, %v6033
      %v6035 = vrot.slane %v6033, 4
      %v6036 = vrot.slane %v5219, 5
      %v6037 = vsel %vm2862, %v6035, %v6036
      %v6038 = vrot.slane %v5938, 5
      %v6039 = vrot.slane %v6038, 4
      %v6040 = vrot.slane %v5221, 5
      %v6041 = vsel %vm2862, %v6039, %v6040
      %v6042 = vrot.slane %v6040, 4
      %v6043 = vrot.slane %v5222, 5
      %v6044 = vsel %vm2862, %v6042, %v6043
      %v6045 = vrot.slane %v5939, 5
      %v6046 = vrot.slane %v6045, 4
      %v6047 = vrot.slane %v5224, 5
      %v6048 = vsel %vm2862, %v6046, %v6047
      %v6049 = vrot.slane %v6047, 4
      %v6050 = vrot.slane %v5225, 5
      %v6051 = vsel %vm2862, %v6049, %v6050
      %v6052 = vrot.slane %v5940, 5
      %v6053 = vrot.slane %v6052, 4
      %v6054 = vrot.slane %v5227, 5
      %v6055 = vsel %vm2862, %v6053, %v6054
      %v6056 = vrot.slane %v6054, 4
      %v6057 = vrot.slane %v5228, 5
      %v6058 = vsel %vm2862, %v6056, %v6057
      %v6059 = vrot.slane %v5941, 5
      %v6060 = vrot.slane %v6059, 4
      %v6061 = vrot.slane %v5230, 5
      %v6062 = vsel %vm2862, %v6060, %v6061
      %v6063 = vrot.slane %v6061, 4
      %v6064 = vrot.slane %v5231, 5
      %v6065 = vsel %vm2862, %v6063, %v6064
      %v6066 = vrot.slane %v5942, 5
      %v6067 = vrot.slane %v6066, 4
      %v6068 = vrot.slane %v5233, 5
      %v6069 = vsel %vm2862, %v6067, %v6068
      %v6070 = vrot.slane %v6068, 4
      %v6071 = vrot.slane %v5234, 5
      %v6072 = vsel %vm2862, %v6070, %v6071
      %v6073 = vrot.slane %v5943, 5
      %v6074 = vrot.slane %v6073, 4
      %v6075 = vrot.slane %v5236, 5
      %v6076 = vsel %vm2862, %v6074, %v6075
      %v6077 = vrot.slane %v6075, 4
      %v6078 = vrot.slane %v5237, 5
      %v6079 = vsel %vm2862, %v6077, %v6078
      %v6080 = vrot.slane %v5944, 5
      %v6081 = vrot.slane %v6080, 4
      %v6082 = vrot.slane %v5239, 5
      %v6083 = vsel %vm2862, %v6081, %v6082
      %v6084 = vrot.slane %v6082, 4
      %v6085 = vrot.slane %v5240, 5
      %v6086 = vsel %vm2862, %v6084, %v6085
      %v6087 = vrot.slane %v5945, 5
      %v6088 = vrot.slane %v6087, 4
      %v6089 = vrot.slane %v5242, 5
      %v6090 = vsel %vm2862, %v6088, %v6089
      %v6091 = vrot.slane %v6089, 4
      %v6092 = vrot.slane %v5243, 5
      %v6093 = vsel %vm2862, %v6091, %v6092
      %v6094 = vrot.slane %v5946, 5
      %v6095 = vrot.slane %v6094, 4
      %v6096 = vrot.slane %v5245, 5
      %v6097 = vsel %vm2862, %v6095, %v6096
      %v6098 = vrot.slane %v6096, 4
      %v6099 = vrot.slane %v5246, 5
      %v6100 = vsel %vm2862, %v6098, %v6099
      %v6101 = vrot.slane %v5947, 5
      %v6102 = vrot.slane %v6101, 4
      %v6103 = vrot.slane %v5248, 5
      %v6104 = vsel %vm2862, %v6102, %v6103
      %v6105 = vrot.slane %v6103, 4
      %v6106 = vrot.slane %v5249, 5
      %v6107 = vsel %vm2862, %v6105, %v6106
      %s6108 = scalar_lea.vmem %s5, 64
      %v6109 = vld [vmem:[%s6108] sm:$0xf]
      %v6110 = vld [vmem:[%s6108 + $0x4] sm:$0xf]
      %v6111 = vunpack.c.l.b16 %v5999
      %v6112 = vunpack.c.l.b16 %v6002
      %v6113 = vunpack.c.l.b16 %v6006
      %v6114 = vunpack.c.l.b16 %v6009
      %v6115 = vunpack.c.l.b16 %v6013
      %v6116 = vunpack.c.l.b16 %v6016
      %v6117 = vunpack.c.l.b16 %v6020
      %v6118 = vunpack.c.l.b16 %v6023
      %v6119 = vunpack.c.l.b16 %v6027
      %v6120 = vunpack.c.l.b16 %v6030
      %v6121 = vunpack.c.l.b16 %v6034
      %v6122 = vunpack.c.l.b16 %v6037
      %v6123 = vunpack.c.l.b16 %v6041
      %v6124 = vunpack.c.l.b16 %v6044
      %v6125 = vunpack.c.l.b16 %v6048
      %v6126 = vunpack.c.l.b16 %v6051
      %v6127 = vunpack.c.l.b16 %v6055
      %v6128 = vunpack.c.l.b16 %v6058
      %v6129 = vunpack.c.l.b16 %v6062
      %v6130 = vunpack.c.l.b16 %v6065
      %v6131 = vunpack.c.l.b16 %v6069
      %v6132 = vunpack.c.l.b16 %v6072
      %v6133 = vunpack.c.l.b16 %v6076
      %v6134 = vunpack.c.l.b16 %v6079
      %v6135 = vunpack.c.l.b16 %v6083
      %v6136 = vunpack.c.l.b16 %v6086
      %v6137 = vunpack.c.l.b16 %v6090
      %v6138 = vunpack.c.l.b16 %v6093
      %v6139 = vunpack.c.l.b16 %v6097
      %v6140 = vunpack.c.l.b16 %v6100
      %v6141 = vunpack.c.l.b16 %v6104
      %v6142 = vunpack.c.l.b16 %v6107
      %v6143 = vpack.c.b16 %v6112, %v6111
      %v6144 = vpack.c.b16 %v6114, %v6113
      %v6145 = vpack.c.b16 %v6116, %v6115
      %v6146 = vpack.c.b16 %v6118, %v6117
      %v6147 = vpack.c.b16 %v6120, %v6119
      %v6148 = vpack.c.b16 %v6122, %v6121
      %v6149 = vpack.c.b16 %v6124, %v6123
      %v6150 = vpack.c.b16 %v6126, %v6125
      %v6151 = vpack.c.b16 %v6128, %v6127
      %v6152 = vpack.c.b16 %v6130, %v6129
      %v6153 = vpack.c.b16 %v6132, %v6131
      %v6154 = vpack.c.b16 %v6134, %v6133
      %v6155 = vpack.c.b16 %v6136, %v6135
      %v6156 = vpack.c.b16 %v6138, %v6137
      %v6157 = vpack.c.b16 %v6140, %v6139
      %v6158 = vpack.c.b16 %v6142, %v6141
      %v6161 = vunpack.c.l.b16 %v6109
      %v6162 = vunpack.c.l.b16 %v6110
      %v6163 = vpack.c.b16 %v6162, %v6161
      %v6166 = vsel %vm850, %v6143, 0
      %v6169 = vsel %vm850, %v6144, 0
      %v6172 = vsel %vm850, %v6145, 0
      %v6175 = vsel %vm850, %v6146, 0
      %v6178 = vsel %vm850, %v6147, 0
      %v6181 = vsel %vm850, %v6148, 0
      %v6184 = vsel %vm850, %v6149, 0
      %v6187 = vsel %vm850, %v6150, 0
      %v6190 = vsel %vm850, %v6151, 0
      %v6193 = vsel %vm850, %v6152, 0
      %v6196 = vsel %vm850, %v6153, 0
      %v6199 = vsel %vm850, %v6154, 0
      %v6202 = vsel %vm850, %v6155, 0
      %v6205 = vsel %vm850, %v6156, 0
      %v6208 = vsel %vm850, %v6157, 0
      %v6211 = vsel %vm850, %v6158, 0
      %6213 = vmatprep.subr.bf16.mxu0 0
      %6214 = vmatpush1.bf16.msra.mxu0 %v6163
      %6215 = vmatprep.subr.bf16.mxu0 0
      %6216 = vmatpush1.bf16.msra.mxu0 0
      %6217 = vmatprep.subr.bf16.mxu0 0
      %6218 = vmatpush1.bf16.msra.mxu0 0
      %6219 = vmatprep.subr.bf16.mxu0 0
      %6220 = vmatpush1.bf16.msra.mxu0 0
      %6221 = vmatprep.subr.bf16.mxu0 0
      %6222 = vmatpush1.bf16.msra.mxu0 0
      %6223 = vmatprep.subr.bf16.mxu0 0
      %6224 = vmatpush1.bf16.msra.mxu0 0
      %6225 = vmatprep.subr.bf16.mxu0 0
      %6226 = vmatpush1.bf16.msra.mxu0 0
      %6227 = vmatprep.subr.bf16.mxu0 0
      %6228 = vmatpush1.bf16.msra.mxu0 0
      %6229 = vmatprep.subr.bf16.mxu0 0
      %6230 = vmatpush1.bf16.msra.mxu0 0
      %6231 = vmatprep.subr.bf16.mxu0 0
      %6232 = vmatpush1.bf16.msra.mxu0 0
      %6233 = vmatprep.subr.bf16.mxu0 0
      %6234 = vmatpush1.bf16.msra.mxu0 0
      %6235 = vmatprep.subr.bf16.mxu0 0
      %6236 = vmatpush1.bf16.msra.mxu0 0
      %6237 = vmatprep.subr.bf16.mxu0 0
      %6238 = vmatpush1.bf16.msra.mxu0 0
      %6239 = vmatprep.subr.bf16.mxu0 0
      %6240 = vmatpush1.bf16.msra.mxu0 0
      %6241 = vmatprep.subr.bf16.mxu0 0
      %6242 = vmatpush1.bf16.msra.mxu0 0
      %6243 = vmatprep.subr.bf16.mxu0 0
      %6244 = vmatpush1.bf16.msra.mxu0 0
      %6245 = vmatprep.mubr.bf16.mxu0 0
      %6246 = vmatmul.mubr.bf16.gmra.mrb[0].mxu0 %v6166
      %v6247 = vpop.f32.mrb[0].mxu0
      %v6248 = vadd.f32 0.0, %v6247
      %v6249 = vpop.f32.mrb[0].mxu0
      %v6250 = vpop.f32.mrb[0].mxu0
      %v6251 = vadd.f32 0.0, %v6250
      %v6252 = vpop.f32.mrb[0].mxu0
      %6253 = vmatprep.mubr.bf16.mxu0 0
      %6254 = vmatmul.mubr.bf16.gmra.mrb[0].mxu0 %v6169
      %v6255 = vpop.f32.mrb[0].mxu0
      %v6256 = vadd.f32 0.0, %v6255
      %v6257 = vpop.f32.mrb[0].mxu0
      %v6258 = vpop.f32.mrb[0].mxu0
      %v6259 = vadd.f32 0.0, %v6258
      %v6260 = vpop.f32.mrb[0].mxu0
      %6261 = vmatprep.mubr.bf16.mxu0 0
      %6262 = vmatmul.mubr.bf16.gmra.mrb[0].mxu0 %v6172
      %v6263 = vpop.f32.mrb[0].mxu0
      %v6264 = vadd.f32 0.0, %v6263
      %v6265 = vpop.f32.mrb[0].mxu0
      %v6266 = vpop.f32.mrb[0].mxu0
      %v6267 = vadd.f32 0.0, %v6266
      %v6268 = vpop.f32.mrb[0].mxu0
      %6269 = vmatprep.mubr.bf16.mxu0 0
      %6270 = vmatmul.mubr.bf16.gmra.mrb[0].mxu0 %v6175
      %v6271 = vpop.f32.mrb[0].mxu0
      %v6272 = vadd.f32 0.0, %v6271
      %v6273 = vpop.f32.mrb[0].mxu0
      %v6274 = vpop.f32.mrb[0].mxu0
      %v6275 = vadd.f32 0.0, %v6274
      %v6276 = vpop.f32.mrb[0].mxu0
      %6277 = vmatprep.mubr.bf16.mxu0 0
      %6278 = vmatmul.mubr.bf16.gmra.mrb[0].mxu0 %v6178
      %v6279 = vpop.f32.mrb[0].mxu0
      %v6280 = vadd.f32 0.0, %v6279
      %v6281 = vpop.f32.mrb[0].mxu0
      %v6282 = vpop.f32.mrb[0].mxu0
      %v6283 = vadd.f32 0.0, %v6282
      %v6284 = vpop.f32.mrb[0].mxu0
      %6285 = vmatprep.mubr.bf16.mxu0 0
      %6286 = vmatmul.mubr.bf16.gmra.mrb[0].mxu0 %v6181
      %v6287 = vpop.f32.mrb[0].mxu0
      %v6288 = vadd.f32 0.0, %v6287
      %v6289 = vpop.f32.mrb[0].mxu0
      %v6290 = vpop.f32.mrb[0].mxu0
      %v6291 = vadd.f32 0.0, %v6290
      %v6292 = vpop.f32.mrb[0].mxu0
      %6293 = vmatprep.mubr.bf16.mxu0 0
      %6294 = vmatmul.mubr.bf16.gmra.mrb[0].mxu0 %v6184
      %v6295 = vpop.f32.mrb[0].mxu0
      %v6296 = vadd.f32 0.0, %v6295
      %v6297 = vpop.f32.mrb[0].mxu0
      %v6298 = vpop.f32.mrb[0].mxu0
      %v6299 = vadd.f32 0.0, %v6298
      %v6300 = vpop.f32.mrb[0].mxu0
      %6301 = vmatprep.mubr.bf16.mxu0 0
      %6302 = vmatmul.mubr.bf16.gmra.mrb[0].mxu0 %v6187
      %v6303 = vpop.f32.mrb[0].mxu0
      %v6304 = vadd.f32 0.0, %v6303
      %v6305 = vpop.f32.mrb[0].mxu0
      %v6306 = vpop.f32.mrb[0].mxu0
      %v6307 = vadd.f32 0.0, %v6306
      %v6308 = vpop.f32.mrb[0].mxu0
      %6309 = vmatprep.mubr.bf16.mxu0 0
      %6310 = vmatmul.mubr.bf16.gmra.mrb[0].mxu0 %v6190
      %v6311 = vpop.f32.mrb[0].mxu0
      %v6312 = vadd.f32 0.0, %v6311
      %v6313 = vpop.f32.mrb[0].mxu0
      %v6314 = vpop.f32.mrb[0].mxu0
      %v6315 = vadd.f32 0.0, %v6314
      %v6316 = vpop.f32.mrb[0].mxu0
      %6317 = vmatprep.mubr.bf16.mxu0 0
      %6318 = vmatmul.mubr.bf16.gmra.mrb[0].mxu0 %v6193
      %v6319 = vpop.f32.mrb[0].mxu0
      %v6320 = vadd.f32 0.0, %v6319
      %v6321 = vpop.f32.mrb[0].mxu0
      %v6322 = vpop.f32.mrb[0].mxu0
      %v6323 = vadd.f32 0.0, %v6322
      %v6324 = vpop.f32.mrb[0].mxu0
      %6325 = vmatprep.mubr.bf16.mxu0 0
      %6326 = vmatmul.mubr.bf16.gmra.mrb[0].mxu0 %v6196
      %v6327 = vpop.f32.mrb[0].mxu0
      %v6328 = vadd.f32 0.0, %v6327
      %v6329 = vpop.f32.mrb[0].mxu0
      %v6330 = vpop.f32.mrb[0].mxu0
      %v6331 = vadd.f32 0.0, %v6330
      %v6332 = vpop.f32.mrb[0].mxu0
      %6333 = vmatprep.mubr.bf16.mxu0 0
      %6334 = vmatmul.mubr.bf16.gmra.mrb[0].mxu0 %v6199
      %v6335 = vpop.f32.mrb[0].mxu0
      %v6336 = vadd.f32 0.0, %v6335
      %v6337 = vpop.f32.mrb[0].mxu0
      %v6338 = vpop.f32.mrb[0].mxu0
      %v6339 = vadd.f32 0.0, %v6338
      %v6340 = vpop.f32.mrb[0].mxu0
      %6341 = vmatprep.mubr.bf16.mxu0 0
      %6342 = vmatmul.mubr.bf16.gmra.mrb[0].mxu0 %v6202
      %v6343 = vpop.f32.mrb[0].mxu0
      %v6344 = vadd.f32 0.0, %v6343
      %v6345 = vpop.f32.mrb[0].mxu0
      %v6346 = vpop.f32.mrb[0].mxu0
      %v6347 = vadd.f32 0.0, %v6346
      %v6348 = vpop.f32.mrb[0].mxu0
      %6349 = vmatprep.mubr.bf16.mxu0 0
      %6350 = vmatmul.mubr.bf16.gmra.mrb[0].mxu0 %v6205
      %v6351 = vpop.f32.mrb[0].mxu0
      %v6352 = vadd.f32 0.0, %v6351
      %v6353 = vpop.f32.mrb[0].mxu0
      %v6354 = vpop.f32.mrb[0].mxu0
      %v6355 = vadd.f32 0.0, %v6354
      %v6356 = vpop.f32.mrb[0].mxu0
      %6357 = vmatprep.mubr.bf16.mxu0 0
      %6358 = vmatmul.mubr.bf16.gmra.mrb[0].mxu0 %v6208
      %v6359 = vpop.f32.mrb[0].mxu0
      %v6360 = vadd.f32 0.0, %v6359
      %v6361 = vpop.f32.mrb[0].mxu0
      %v6362 = vpop.f32.mrb[0].mxu0
      %v6363 = vadd.f32 0.0, %v6362
      %v6364 = vpop.f32.mrb[0].mxu0
      %6365 = vmatprep.mubr.bf16.mxu0 0
      %6366 = vmatmul.mubr.bf16.gmra.mrb[0].mxu0 %v6211
      %v6367 = vpop.f32.mrb[0].mxu0
      %v6368 = vadd.f32 0.0, %v6367
      %v6369 = vpop.f32.mrb[0].mxu0
      %v6370 = vpop.f32.mrb[0].mxu0
      %v6371 = vadd.f32 0.0, %v6370
      %v6372 = vpop.f32.mrb[0].mxu0
      %6373 = vdwg.mxu0
      %v6374 = vadd.f32 %v5900, %v6248
      %v6375 = vadd.f32 %v5901, %v6251
      %v6376 = vadd.f32 %v5902, %v6256
      %v6377 = vadd.f32 %v5903, %v6259
      %v6378 = vadd.f32 %v5904, %v6264
      %v6379 = vadd.f32 %v5905, %v6267
      %v6380 = vadd.f32 %v5906, %v6272
      %v6381 = vadd.f32 %v5907, %v6275
      %v6382 = vadd.f32 %v5908, %v6280
      %v6383 = vadd.f32 %v5909, %v6283
      %v6384 = vadd.f32 %v5910, %v6288
      %v6385 = vadd.f32 %v5911, %v6291
      %v6386 = vadd.f32 %v5912, %v6296
      %v6387 = vadd.f32 %v5913, %v6299
      %v6388 = vadd.f32 %v5914, %v6304
      %v6389 = vadd.f32 %v5915, %v6307
      %v6390 = vadd.f32 %v5916, %v6312
      %v6391 = vadd.f32 %v5917, %v6315
      %v6392 = vadd.f32 %v5918, %v6320
      %v6393 = vadd.f32 %v5919, %v6323
      %v6394 = vadd.f32 %v5920, %v6328
      %v6395 = vadd.f32 %v5921, %v6331
      %v6396 = vadd.f32 %v5922, %v6336
      %v6397 = vadd.f32 %v5923, %v6339
      %v6398 = vadd.f32 %v5924, %v6344
      %v6399 = vadd.f32 %v5925, %v6347
      %v6400 = vadd.f32 %v5926, %v6352
      %v6401 = vadd.f32 %v5927, %v6355
      %v6402 = vadd.f32 %v5928, %v6360
      %v6403 = vadd.f32 %v5929, %v6363
      %v6404 = vadd.f32 %v5930, %v6368
      %v6405 = vadd.f32 %v5931, %v6371
      %v6406 = vmax.f32 %v6374, 0.0
      %v6407 = vmax.f32 %v6375, 0.0
      %v6408 = vmax.f32 %v6376, 0.0
      %v6409 = vmax.f32 %v6377, 0.0
      %v6410 = vmax.f32 %v6378, 0.0
      %v6411 = vmax.f32 %v6379, 0.0
      %v6412 = vmax.f32 %v6380, 0.0
      %v6413 = vmax.f32 %v6381, 0.0
      %v6414 = vmax.f32 %v6382, 0.0
      %v6415 = vmax.f32 %v6383, 0.0
      %v6416 = vmax.f32 %v6384, 0.0
      %v6417 = vmax.f32 %v6385, 0.0
      %v6418 = vmax.f32 %v6386, 0.0
      %v6419 = vmax.f32 %v6387, 0.0
      %v6420 = vmax.f32 %v6388, 0.0
      %v6421 = vmax.f32 %v6389, 0.0
      %v6422 = vmax.f32 %v6390, 0.0
      %v6423 = vmax.f32 %v6391, 0.0
      %v6424 = vmax.f32 %v6392, 0.0
      %v6425 = vmax.f32 %v6393, 0.0
      %v6426 = vmax.f32 %v6394, 0.0
      %v6427 = vmax.f32 %v6395, 0.0
      %v6428 = vmax.f32 %v6396, 0.0
      %v6429 = vmax.f32 %v6397, 0.0
      %v6430 = vmax.f32 %v6398, 0.0
      %v6431 = vmax.f32 %v6399, 0.0
      %v6432 = vmax.f32 %v6400, 0.0
      %v6433 = vmax.f32 %v6401, 0.0
      %v6434 = vmax.f32 %v6402, 0.0
      %v6435 = vmax.f32 %v6403, 0.0
      %v6436 = vmax.f32 %v6404, 0.0
      %v6437 = vmax.f32 %v6405, 0.0
      %v6438 = vld [vmem:[%s6] sm:$0xff]
      %v6439 = vsel %vm815, %v6406, 0.0
      %v6440 = vsel %vm815, %v6407, 0.0
      %v6441 = vadd.f32 %v6439, %v6440
      %v6442 = vsel %vm815, %v6408, 0.0
      %v6443 = vadd.f32 %v6441, %v6442
      %v6444 = vsel %vm815, %v6409, 0.0
      %v6445 = vadd.f32 %v6443, %v6444
      %v6446 = vsel %vm815, %v6410, 0.0
      %v6447 = vadd.f32 %v6445, %v6446
      %v6448 = vsel %vm815, %v6411, 0.0
      %v6449 = vadd.f32 %v6447, %v6448
      %v6450 = vsel %vm815, %v6412, 0.0
      %v6451 = vadd.f32 %v6449, %v6450
      %v6452 = vsel %vm815, %v6413, 0.0
      %v6453 = vadd.f32 %v6451, %v6452
      %v6454 = vsel %vm815, %v6414, 0.0
      %v6455 = vadd.f32 %v6453, %v6454
      %v6456 = vsel %vm815, %v6415, 0.0
      %v6457 = vadd.f32 %v6455, %v6456
      %v6458 = vsel %vm815, %v6416, 0.0
      %v6459 = vadd.f32 %v6457, %v6458
      %v6460 = vsel %vm815, %v6417, 0.0
      %v6461 = vadd.f32 %v6459, %v6460
      %v6462 = vsel %vm815, %v6418, 0.0
      %v6463 = vadd.f32 %v6461, %v6462
      %v6464 = vsel %vm815, %v6419, 0.0
      %v6465 = vadd.f32 %v6463, %v6464
      %v6466 = vsel %vm815, %v6420, 0.0
      %v6467 = vadd.f32 %v6465, %v6466
      %v6468 = vsel %vm815, %v6421, 0.0
      %v6469 = vadd.f32 %v6467, %v6468
      %v6470 = vsel %vm815, %v6422, 0.0
      %v6471 = vadd.f32 %v6469, %v6470
      %v6472 = vsel %vm815, %v6423, 0.0
      %v6473 = vadd.f32 %v6471, %v6472
      %v6474 = vsel %vm815, %v6424, 0.0
      %v6475 = vadd.f32 %v6473, %v6474
      %v6476 = vsel %vm815, %v6425, 0.0
      %v6477 = vadd.f32 %v6475, %v6476
      %v6478 = vsel %vm815, %v6426, 0.0
      %v6479 = vadd.f32 %v6477, %v6478
      %v6480 = vsel %vm815, %v6427, 0.0
      %v6481 = vadd.f32 %v6479, %v6480
      %v6482 = vsel %vm815, %v6428, 0.0
      %v6483 = vadd.f32 %v6481, %v6482
      %v6484 = vsel %vm815, %v6429, 0.0
      %v6485 = vadd.f32 %v6483, %v6484
      %v6486 = vsel %vm815, %v6430, 0.0
      %v6487 = vadd.f32 %v6485, %v6486
      %v6488 = vsel %vm815, %v6431, 0.0
      %v6489 = vadd.f32 %v6487, %v6488
      %v6490 = vsel %vm815, %v6432, 0.0
      %v6491 = vadd.f32 %v6489, %v6490
      %v6492 = vsel %vm815, %v6433, 0.0
      %v6493 = vadd.f32 %v6491, %v6492
      %v6494 = vsel %vm815, %v6434, 0.0
      %v6495 = vadd.f32 %v6493, %v6494
      %v6496 = vsel %vm815, %v6435, 0.0
      %v6497 = vadd.f32 %v6495, %v6496
      %v6498 = vsel %vm815, %v6436, 0.0
      %v6499 = vadd.f32 %v6497, %v6498
      %v6500 = vsel %vm815, %v6437, 0.0
      %v6501 = vadd.f32 %v6499, %v6500
      %v6502 = vrot.slane %v6501, 4
      %v6503 = vadd.f32 %v6501, %v6502
      %v6504 = vrot.slane %v6503, 2
      %v6505 = vadd.f32 %v6503, %v6504
      %v6506 = vrot.slane %v6505, 1
      %v6507 = vadd.f32 %v6505, %v6506
      %v6509 = vsel %vm815, %v6507, 0
      %6511 = vmatprep.subr.mxu0 0.0
      %6512 = vmatpush1.msra.mxu0 %v6438
      %6513 = vmatprep.subr.mxu0 0.0
      %6514 = vmatpush1.msra.mxu0 0.0
      %6515 = vmatprep.subr.mxu0 0.0
      %6516 = vmatpush1.msra.mxu0 0.0
      %6517 = vmatprep.subr.mxu0 0.0
      %6518 = vmatpush1.msra.mxu0 0.0
      %6519 = vmatprep.subr.mxu0 0.0
      %6520 = vmatpush1.msra.mxu0 0.0
      %6521 = vmatprep.subr.mxu0 0.0
      %6522 = vmatpush1.msra.mxu0 0.0
      %6523 = vmatprep.subr.mxu0 0.0
      %6524 = vmatpush1.msra.mxu0 0.0
      %6525 = vmatprep.subr.mxu0 0.0
      %6526 = vmatpush1.msra.mxu0 0.0
      %6527 = vmatprep.subr.mxu0 0.0
      %6528 = vmatpush1.msra.mxu0 0.0
      %6529 = vmatprep.subr.mxu0 0.0
      %6530 = vmatpush1.msra.mxu0 0.0
      %6531 = vmatprep.subr.mxu0 0.0
      %6532 = vmatpush1.msra.mxu0 0.0
      %6533 = vmatprep.subr.mxu0 0.0
      %6534 = vmatpush1.msra.mxu0 0.0
      %6535 = vmatprep.subr.mxu0 0.0
      %6536 = vmatpush1.msra.mxu0 0.0
      %6537 = vmatprep.subr.mxu0 0.0
      %6538 = vmatpush1.msra.mxu0 0.0
      %6539 = vmatprep.subr.mxu0 0.0
      %6540 = vmatpush1.msra.mxu0 0.0
      %6541 = vmatprep.subr.mxu0 0.0
      %6542 = vmatpush1.msra.mxu0 0.0
      %6543 = vmatprep.subr.mxu0 0.0
      %6544 = vmatpush1.msra.mxu0 0.0
      %6545 = vmatprep.subr.mxu0 0.0
      %6546 = vmatpush1.msra.mxu0 0.0
      %6547 = vmatprep.subr.mxu0 0.0
      %6548 = vmatpush1.msra.mxu0 0.0
      %6549 = vmatprep.subr.mxu0 0.0
      %6550 = vmatpush1.msra.mxu0 0.0
      %6551 = vmatprep.subr.mxu0 0.0
      %6552 = vmatpush1.msra.mxu0 0.0
      %6553 = vmatprep.subr.mxu0 0.0
      %6554 = vmatpush1.msra.mxu0 0.0
      %6555 = vmatprep.subr.mxu0 0.0
      %6556 = vmatpush1.msra.mxu0 0.0
      %6557 = vmatprep.subr.mxu0 0.0
      %6558 = vmatpush1.msra.mxu0 0.0
      %6559 = vmatprep.subr.mxu0 0.0
      %6560 = vmatpush1.msra.mxu0 0.0
      %6561 = vmatprep.subr.mxu0 0.0
      %6562 = vmatpush1.msra.mxu0 0.0
      %6563 = vmatprep.subr.mxu0 0.0
      %6564 = vmatpush1.msra.mxu0 0.0
      %6565 = vmatprep.subr.mxu0 0.0
      %6566 = vmatpush1.msra.mxu0 0.0
      %6567 = vmatprep.subr.mxu0 0.0
      %6568 = vmatpush1.msra.mxu0 0.0
      %6569 = vmatprep.subr.mxu0 0.0
      %6570 = vmatpush1.msra.mxu0 0.0
      %6571 = vmatprep.subr.mxu0 0.0
      %6572 = vmatpush1.msra.mxu0 0.0
      %6573 = vmatprep.subr.mxu0 0.0
      %6574 = vmatpush1.msra.mxu0 0.0
      %6575 = vmatprep.mubr.f32.mxu0 0.0
      %6576 = vmatmul.mubr.f32.gmra.mrb[0].mxu0 %v6509
      %v6577 = vpop.f32.mrb[0].mxu0
      %v6578 = vadd.f32 0.0, %v6577
      %v6579 = vpop.f32.mrb[0].mxu0
      %6580 = vdwg.mxu0
      %v6581 = vlaneseq
      %v6582 = vshrl.u32 %v6581, 7
      %v6583 = vsub.s32 0, %v6582
      %v6584 = vrot.slane %v6578, %v6583
      %v6585 = vsub.f32 %v6406, %v6584
      %v6586 = vsub.f32 %v6407, %v6584
      %v6587 = vsub.f32 %v6408, %v6584
      %v6588 = vsub.f32 %v6409, %v6584
      %v6589 = vsub.f32 %v6410, %v6584
      %v6590 = vsub.f32 %v6411, %v6584
      %v6591 = vsub.f32 %v6412, %v6584
      %v6592 = vsub.f32 %v6413, %v6584
      %v6593 = vsub.f32 %v6414, %v6584
      %v6594 = vsub.f32 %v6415, %v6584
      %v6595 = vsub.f32 %v6416, %v6584
      %v6596 = vsub.f32 %v6417, %v6584
      %v6597 = vsub.f32 %v6418, %v6584
      %v6598 = vsub.f32 %v6419, %v6584
      %v6599 = vsub.f32 %v6420, %v6584
      %v6600 = vsub.f32 %v6421, %v6584
      %v6601 = vsub.f32 %v6422, %v6584
      %v6602 = vsub.f32 %v6423, %v6584
      %v6603 = vsub.f32 %v6424, %v6584
      %v6604 = vsub.f32 %v6425, %v6584
      %v6605 = vsub.f32 %v6426, %v6584
      %v6606 = vsub.f32 %v6427, %v6584
      %v6607 = vsub.f32 %v6428, %v6584
      %v6608 = vsub.f32 %v6429, %v6584
      %v6609 = vsub.f32 %v6430, %v6584
      %v6610 = vsub.f32 %v6431, %v6584
      %v6611 = vsub.f32 %v6432, %v6584
      %v6612 = vsub.f32 %v6433, %v6584
      %v6613 = vsub.f32 %v6434, %v6584
      %v6614 = vsub.f32 %v6435, %v6584
      %v6615 = vsub.f32 %v6436, %v6584
      %v6616 = vsub.f32 %v6437, %v6584
      %v6617 = vmul.f32 %v6585, %v6585
      %v6618 = vmul.f32 %v6586, %v6586
      %v6619 = vmul.f32 %v6587, %v6587
      %v6620 = vmul.f32 %v6588, %v6588
      %v6621 = vmul.f32 %v6589, %v6589
      %v6622 = vmul.f32 %v6590, %v6590
      %v6623 = vmul.f32 %v6591, %v6591
      %v6624 = vmul.f32 %v6592, %v6592
      %v6625 = vmul.f32 %v6593, %v6593
      %v6626 = vmul.f32 %v6594, %v6594
      %v6627 = vmul.f32 %v6595, %v6595
      %v6628 = vmul.f32 %v6596, %v6596
      %v6629 = vmul.f32 %v6597, %v6597
      %v6630 = vmul.f32 %v6598, %v6598
      %v6631 = vmul.f32 %v6599, %v6599
      %v6632 = vmul.f32 %v6600, %v6600
      %v6633 = vmul.f32 %v6601, %v6601
      %v6634 = vmul.f32 %v6602, %v6602
      %v6635 = vmul.f32 %v6603, %v6603
      %v6636 = vmul.f32 %v6604, %v6604
      %v6637 = vmul.f32 %v6605, %v6605
      %v6638 = vmul.f32 %v6606, %v6606
      %v6639 = vmul.f32 %v6607, %v6607
      %v6640 = vmul.f32 %v6608, %v6608
      %v6641 = vmul.f32 %v6609, %v6609
      %v6642 = vmul.f32 %v6610, %v6610
      %v6643 = vmul.f32 %v6611, %v6611
      %v6644 = vmul.f32 %v6612, %v6612
      %v6645 = vmul.f32 %v6613, %v6613
      %v6646 = vmul.f32 %v6614, %v6614
      %v6647 = vmul.f32 %v6615, %v6615
      %v6648 = vmul.f32 %v6616, %v6616
      %v6649 = vsel %vm815, %v6617, 0.0
      %v6650 = vsel %vm815, %v6618, 0.0
      %v6651 = vadd.f32 %v6649, %v6650
      %v6652 = vsel %vm815, %v6619, 0.0
      %v6653 = vadd.f32 %v6651, %v6652
      %v6654 = vsel %vm815, %v6620, 0.0
      %v6655 = vadd.f32 %v6653, %v6654
      %v6656 = vsel %vm815, %v6621, 0.0
      %v6657 = vadd.f32 %v6655, %v6656
      %v6658 = vsel %vm815, %v6622, 0.0
      %v6659 = vadd.f32 %v6657, %v6658
      %v6660 = vsel %vm815, %v6623, 0.0
      %v6661 = vadd.f32 %v6659, %v6660
      %v6662 = vsel %vm815, %v6624, 0.0
      %v6663 = vadd.f32 %v6661, %v6662
      %v6664 = vsel %vm815, %v6625, 0.0
      %v6665 = vadd.f32 %v6663, %v6664
      %v6666 = vsel %vm815, %v6626, 0.0
      %v6667 = vadd.f32 %v6665, %v6666
      %v6668 = vsel %vm815, %v6627, 0.0
      %v6669 = vadd.f32 %v6667, %v6668
      %v6670 = vsel %vm815, %v6628, 0.0
      %v6671 = vadd.f32 %v6669, %v6670
      %v6672 = vsel %vm815, %v6629, 0.0
      %v6673 = vadd.f32 %v6671, %v6672
      %v6674 = vsel %vm815, %v6630, 0.0
      %v6675 = vadd.f32 %v6673, %v6674
      %v6676 = vsel %vm815, %v6631, 0.0
      %v6677 = vadd.f32 %v6675, %v6676
      %v6678 = vsel %vm815, %v6632, 0.0
      %v6679 = vadd.f32 %v6677, %v6678
      %v6680 = vsel %vm815, %v6633, 0.0
      %v6681 = vadd.f32 %v6679, %v6680
      %v6682 = vsel %vm815, %v6634, 0.0
      %v6683 = vadd.f32 %v6681, %v6682
      %v6684 = vsel %vm815, %v6635, 0.0
      %v6685 = vadd.f32 %v6683, %v6684
      %v6686 = vsel %vm815, %v6636, 0.0
      %v6687 = vadd.f32 %v6685, %v6686
      %v6688 = vsel %vm815, %v6637, 0.0
      %v6689 = vadd.f32 %v6687, %v6688
      %v6690 = vsel %vm815, %v6638, 0.0
      %v6691 = vadd.f32 %v6689, %v6690
      %v6692 = vsel %vm815, %v6639, 0.0
      %v6693 = vadd.f32 %v6691, %v6692
      %v6694 = vsel %vm815, %v6640, 0.0
      %v6695 = vadd.f32 %v6693, %v6694
      %v6696 = vsel %vm815, %v6641, 0.0
      %v6697 = vadd.f32 %v6695, %v6696
      %v6698 = vsel %vm815, %v6642, 0.0
      %v6699 = vadd.f32 %v6697, %v6698
      %v6700 = vsel %vm815, %v6643, 0.0
      %v6701 = vadd.f32 %v6699, %v6700
      %v6702 = vsel %vm815, %v6644, 0.0
      %v6703 = vadd.f32 %v6701, %v6702
      %v6704 = vsel %vm815, %v6645, 0.0
      %v6705 = vadd.f32 %v6703, %v6704
      %v6706 = vsel %vm815, %v6646, 0.0
      %v6707 = vadd.f32 %v6705, %v6706
      %v6708 = vsel %vm815, %v6647, 0.0
      %v6709 = vadd.f32 %v6707, %v6708
      %v6710 = vsel %vm815, %v6648, 0.0
      %v6711 = vadd.f32 %v6709, %v6710
      %v6712 = vrot.slane %v6711, 4
      %v6713 = vadd.f32 %v6711, %v6712
      %v6714 = vrot.slane %v6713, 2
      %v6715 = vadd.f32 %v6713, %v6714
      %v6716 = vrot.slane %v6715, 1
      %v6717 = vadd.f32 %v6715, %v6716
      %v6719 = vsel %vm815, %v6717, 0
      %6721 = vmatprep.subr.mxu0 0.0
      %6722 = vmatpush1.msra.mxu0 %v6438
      %6723 = vmatprep.subr.mxu0 0.0
      %6724 = vmatpush1.msra.mxu0 0.0
      %6725 = vmatprep.subr.mxu0 0.0
      %6726 = vmatpush1.msra.mxu0 0.0
      %6727 = vmatprep.subr.mxu0 0.0
      %6728 = vmatpush1.msra.mxu0 0.0
      %6729 = vmatprep.subr.mxu0 0.0
      %6730 = vmatpush1.msra.mxu0 0.0
      %6731 = vmatprep.subr.mxu0 0.0
      %6732 = vmatpush1.msra.mxu0 0.0
      %6733 = vmatprep.subr.mxu0 0.0
      %6734 = vmatpush1.msra.mxu0 0.0
      %6735 = vmatprep.subr.mxu0 0.0
      %6736 = vmatpush1.msra.mxu0 0.0
      %6737 = vmatprep.subr.mxu0 0.0
      %6738 = vmatpush1.msra.mxu0 0.0
      %6739 = vmatprep.subr.mxu0 0.0
      %6740 = vmatpush1.msra.mxu0 0.0
      %6741 = vmatprep.subr.mxu0 0.0
      %6742 = vmatpush1.msra.mxu0 0.0
      %6743 = vmatprep.subr.mxu0 0.0
      %6744 = vmatpush1.msra.mxu0 0.0
      %6745 = vmatprep.subr.mxu0 0.0
      %6746 = vmatpush1.msra.mxu0 0.0
      %6747 = vmatprep.subr.mxu0 0.0
      %6748 = vmatpush1.msra.mxu0 0.0
      %6749 = vmatprep.subr.mxu0 0.0
      %6750 = vmatpush1.msra.mxu0 0.0
      %6751 = vmatprep.subr.mxu0 0.0
      %6752 = vmatpush1.msra.mxu0 0.0
      %6753 = vmatprep.subr.mxu0 0.0
      %6754 = vmatpush1.msra.mxu0 0.0
      %6755 = vmatprep.subr.mxu0 0.0
      %6756 = vmatpush1.msra.mxu0 0.0
      %6757 = vmatprep.subr.mxu0 0.0
      %6758 = vmatpush1.msra.mxu0 0.0
      %6759 = vmatprep.subr.mxu0 0.0
      %6760 = vmatpush1.msra.mxu0 0.0
      %6761 = vmatprep.subr.mxu0 0.0
      %6762 = vmatpush1.msra.mxu0 0.0
      %6763 = vmatprep.subr.mxu0 0.0
      %6764 = vmatpush1.msra.mxu0 0.0
      %6765 = vmatprep.subr.mxu0 0.0
      %6766 = vmatpush1.msra.mxu0 0.0
      %6767 = vmatprep.subr.mxu0 0.0
      %6768 = vmatpush1.msra.mxu0 0.0
      %6769 = vmatprep.subr.mxu0 0.0
      %6770 = vmatpush1.msra.mxu0 0.0
      %6771 = vmatprep.subr.mxu0 0.0
      %6772 = vmatpush1.msra.mxu0 0.0
      %6773 = vmatprep.subr.mxu0 0.0
      %6774 = vmatpush1.msra.mxu0 0.0
      %6775 = vmatprep.subr.mxu0 0.0
      %6776 = vmatpush1.msra.mxu0 0.0
      %6777 = vmatprep.subr.mxu0 0.0
      %6778 = vmatpush1.msra.mxu0 0.0
      %6779 = vmatprep.subr.mxu0 0.0
      %6780 = vmatpush1.msra.mxu0 0.0
      %6781 = vmatprep.subr.mxu0 0.0
      %6782 = vmatpush1.msra.mxu0 0.0
      %6783 = vmatprep.subr.mxu0 0.0
      %6784 = vmatpush1.msra.mxu0 0.0
      %6785 = vmatprep.mubr.f32.mxu0 0.0
      %6786 = vmatmul.mubr.f32.gmra.mrb[0].mxu0 %v6719
      %v6787 = vpop.f32.mrb[0].mxu0
      %v6788 = vadd.f32 1e-05, %v6787
      %v6789 = vpop.f32.mrb[0].mxu0
      %6790 = vdwg.mxu0
      %v6791 = vrsqrt.pop %v6788
      %v6792 = vld [vmem:[%s7] sm:$0x1]
      %v6793 = vmul.f32 %v6791, %v6792
      %v6794 = vlaneseq
      %v6795 = vshrl.u32 %v6794, 7
      %v6796 = vsub.s32 0, %v6795
      %v6797 = vrot.slane %v6793, %v6796
      %v6798 = vmul.f32 %v6585, %v6797
      %v6799 = vmul.f32 %v6586, %v6797
      %v6800 = vmul.f32 %v6587, %v6797
      %v6801 = vmul.f32 %v6588, %v6797
      %v6802 = vmul.f32 %v6589, %v6797
      %v6803 = vmul.f32 %v6590, %v6797
      %v6804 = vmul.f32 %v6591, %v6797
      %v6805 = vmul.f32 %v6592, %v6797
      %v6806 = vmul.f32 %v6593, %v6797
      %v6807 = vmul.f32 %v6594, %v6797
      %v6808 = vmul.f32 %v6595, %v6797
      %v6809 = vmul.f32 %v6596, %v6797
      %v6810 = vmul.f32 %v6597, %v6797
      %v6811 = vmul.f32 %v6598, %v6797
      %v6812 = vmul.f32 %v6599, %v6797
      %v6813 = vmul.f32 %v6600, %v6797
      %v6814 = vmul.f32 %v6601, %v6797
      %v6815 = vmul.f32 %v6602, %v6797
      %v6816 = vmul.f32 %v6603, %v6797
      %v6817 = vmul.f32 %v6604, %v6797
      %v6818 = vmul.f32 %v6605, %v6797
      %v6819 = vmul.f32 %v6606, %v6797
      %v6820 = vmul.f32 %v6607, %v6797
      %v6821 = vmul.f32 %v6608, %v6797
      %v6822 = vmul.f32 %v6609, %v6797
      %v6823 = vmul.f32 %v6610, %v6797
      %v6824 = vmul.f32 %v6611, %v6797
      %v6825 = vmul.f32 %v6612, %v6797
      %v6826 = vmul.f32 %v6613, %v6797
      %v6827 = vmul.f32 %v6614, %v6797
      %v6828 = vmul.f32 %v6615, %v6797
      %v6829 = vmul.f32 %v6616, %v6797
      %v6830 = vld [vmem:[%s8] sm:$0x1]
      %v6832 = vlaneseq
      %v6833 = vshrl.u32 %v6832, 7
      %v6834 = vsub.s32 0, %v6833
      %v6835 = vrot.slane %v6830, %v6834
      %v6837 = vadd.f32 %v6798, %v6835
      %v6838 = vadd.f32 %v6799, %v6835
      %v6839 = vadd.f32 %v6800, %v6835
      %v6840 = vadd.f32 %v6801, %v6835
      %v6841 = vadd.f32 %v6802, %v6835
      %v6842 = vadd.f32 %v6803, %v6835
      %v6843 = vadd.f32 %v6804, %v6835
      %v6844 = vadd.f32 %v6805, %v6835
      %v6845 = vadd.f32 %v6806, %v6835
      %v6846 = vadd.f32 %v6807, %v6835
      %v6847 = vadd.f32 %v6808, %v6835
      %v6848 = vadd.f32 %v6809, %v6835
      %v6849 = vadd.f32 %v6810, %v6835
      %v6850 = vadd.f32 %v6811, %v6835
      %v6851 = vadd.f32 %v6812, %v6835
      %v6852 = vadd.f32 %v6813, %v6835
      %v6853 = vadd.f32 %v6814, %v6835
      %v6854 = vadd.f32 %v6815, %v6835
      %v6855 = vadd.f32 %v6816, %v6835
      %v6856 = vadd.f32 %v6817, %v6835
      %v6857 = vadd.f32 %v6818, %v6835
      %v6858 = vadd.f32 %v6819, %v6835
      %v6859 = vadd.f32 %v6820, %v6835
      %v6860 = vadd.f32 %v6821, %v6835
      %v6861 = vadd.f32 %v6822, %v6835
      %v6862 = vadd.f32 %v6823, %v6835
      %v6863 = vadd.f32 %v6824, %v6835
      %v6864 = vadd.f32 %v6825, %v6835
      %v6865 = vadd.f32 %v6826, %v6835
      %v6866 = vadd.f32 %v6827, %v6835
      %v6867 = vadd.f32 %v6828, %v6835
      %v6868 = vadd.f32 %v6829, %v6835
      %v6869 = vpack.c.bf16 %v6838, %v6837
      %v6870 = vpack.c.bf16 %v6840, %v6839
      %v6871 = vpack.c.bf16 %v6842, %v6841
      %v6872 = vpack.c.bf16 %v6844, %v6843
      %v6873 = vpack.c.bf16 %v6846, %v6845
      %v6874 = vpack.c.bf16 %v6848, %v6847
      %v6875 = vpack.c.bf16 %v6850, %v6849
      %v6876 = vpack.c.bf16 %v6852, %v6851
      %v6877 = vpack.c.bf16 %v6854, %v6853
      %v6878 = vpack.c.bf16 %v6856, %v6855
      %v6879 = vpack.c.bf16 %v6858, %v6857
      %v6880 = vpack.c.bf16 %v6860, %v6859
      %v6881 = vpack.c.bf16 %v6862, %v6861
      %v6882 = vpack.c.bf16 %v6864, %v6863
      %v6883 = vpack.c.bf16 %v6866, %v6865
      %v6884 = vpack.c.bf16 %v6868, %v6867
      %v6901 = vunpack.c.l.b16 %v6869
      %v6902 = vunpack.c.h.b16 %v6869
      %v6903 = vunpack.c.l.b16 %v6870
      %v6904 = vunpack.c.h.b16 %v6870
      %v6905 = vunpack.c.l.b16 %v6871
      %v6906 = vunpack.c.h.b16 %v6871
      %v6907 = vunpack.c.l.b16 %v6872
      %v6908 = vunpack.c.h.b16 %v6872
      %v6909 = vunpack.c.l.b16 %v6873
      %v6910 = vunpack.c.h.b16 %v6873
      %v6911 = vunpack.c.l.b16 %v6874
      %v6912 = vunpack.c.h.b16 %v6874
      %v6913 = vunpack.c.l.b16 %v6875
      %v6914 = vunpack.c.h.b16 %v6875
      %v6915 = vunpack.c.l.b16 %v6876
      %v6916 = vunpack.c.h.b16 %v6876
      %v6917 = vunpack.c.l.b16 %v6877
      %v6918 = vunpack.c.h.b16 %v6877
      %v6919 = vunpack.c.l.b16 %v6878
      %v6920 = vunpack.c.h.b16 %v6878
      %v6921 = vunpack.c.l.b16 %v6879
      %v6922 = vunpack.c.h.b16 %v6879
      %v6923 = vunpack.c.l.b16 %v6880
      %v6924 = vunpack.c.h.b16 %v6880
      %v6925 = vunpack.c.l.b16 %v6881
      %v6926 = vunpack.c.h.b16 %v6881
      %v6927 = vunpack.c.l.b16 %v6882
      %v6928 = vunpack.c.h.b16 %v6882
      %v6929 = vunpack.c.l.b16 %v6883
      %v6930 = vunpack.c.h.b16 %v6883
      %v6931 = vunpack.c.l.b16 %v6884
      %v6932 = vunpack.c.h.b16 %v6884
      %v6933 = vpack.c.b16 %v6901, %v6901
      %v6934 = vpack.c.b16 %v6902, %v6902
      %v6935 = vpack.c.b16 %v6903, %v6903
      %v6936 = vpack.c.b16 %v6904, %v6904
      %v6937 = vpack.c.b16 %v6905, %v6905
      %v6938 = vpack.c.b16 %v6906, %v6906
      %v6939 = vpack.c.b16 %v6907, %v6907
      %v6940 = vpack.c.b16 %v6908, %v6908
      %v6941 = vpack.c.b16 %v6909, %v6909
      %v6942 = vpack.c.b16 %v6910, %v6910
      %v6943 = vpack.c.b16 %v6911, %v6911
      %v6944 = vpack.c.b16 %v6912, %v6912
      %v6945 = vpack.c.b16 %v6913, %v6913
      %v6946 = vpack.c.b16 %v6914, %v6914
      %v6947 = vpack.c.b16 %v6915, %v6915
      %v6948 = vpack.c.b16 %v6916, %v6916
      %v6949 = vpack.c.b16 %v6917, %v6917
      %v6950 = vpack.c.b16 %v6918, %v6918
      %v6951 = vpack.c.b16 %v6919, %v6919
      %v6952 = vpack.c.b16 %v6920, %v6920
      %v6953 = vpack.c.b16 %v6921, %v6921
      %v6954 = vpack.c.b16 %v6922, %v6922
      %v6955 = vpack.c.b16 %v6923, %v6923
      %v6956 = vpack.c.b16 %v6924, %v6924
      %v6957 = vpack.c.b16 %v6925, %v6925
      %v6958 = vpack.c.b16 %v6926, %v6926
      %v6959 = vpack.c.b16 %v6927, %v6927
      %v6960 = vpack.c.b16 %v6928, %v6928
      %v6961 = vpack.c.b16 %v6929, %v6929
      %v6962 = vpack.c.b16 %v6930, %v6930
      %v6963 = vpack.c.b16 %v6931, %v6931
      %v6964 = vpack.c.b16 %v6932, %v6932
      %v6966 = vshrl.u32 %v6933, 16
      %v6968 = vrot.slane %v6966, 7
      %v6969 = vshll.u32 %v6933, 16
      %v6971 = vor.u32 %v6968, %v6969
      %v6972 = vrot.slane %v6968, 4
      %v6974 = vshrl.u32 %v6934, 16
      %v6976 = vrot.slane %v6974, 7
      %v6977 = vshll.u32 %v6934, 16
      %v6979 = vor.u32 %v6976, %v6977
      %v6980 = vsel %vm1378, %v6972, %v6979
      %v6981 = vrot.slane %v6976, 4
      %v6983 = vshrl.u32 %v6935, 16
      %v6985 = vrot.slane %v6983, 7
      %v6986 = vshll.u32 %v6935, 16
      %v6988 = vor.u32 %v6985, %v6986
      %v6989 = vrot.slane %v6985, 4
      %v6991 = vshrl.u32 %v6936, 16
      %v6993 = vrot.slane %v6991, 7
      %v6994 = vshll.u32 %v6936, 16
      %v6996 = vor.u32 %v6993, %v6994
      %v6997 = vsel %vm1378, %v6989, %v6996
      %v6998 = vrot.slane %v6993, 4
      %v7000 = vshrl.u32 %v6937, 16
      %v7002 = vrot.slane %v7000, 7
      %v7003 = vshll.u32 %v6937, 16
      %v7005 = vor.u32 %v7002, %v7003
      %v7006 = vrot.slane %v7002, 4
      %v7008 = vshrl.u32 %v6938, 16
      %v7010 = vrot.slane %v7008, 7
      %v7011 = vshll.u32 %v6938, 16
      %v7013 = vor.u32 %v7010, %v7011
      %v7014 = vsel %vm1378, %v7006, %v7013
      %v7015 = vrot.slane %v7010, 4
      %v7017 = vshrl.u32 %v6939, 16
      %v7019 = vrot.slane %v7017, 7
      %v7020 = vshll.u32 %v6939, 16
      %v7022 = vor.u32 %v7019, %v7020
      %v7023 = vrot.slane %v7019, 4
      %v7025 = vshrl.u32 %v6940, 16
      %v7027 = vrot.slane %v7025, 7
      %v7028 = vshll.u32 %v6940, 16
      %v7030 = vor.u32 %v7027, %v7028
      %v7031 = vsel %vm1378, %v7023, %v7030
      %v7032 = vrot.slane %v7027, 4
      %v7034 = vshrl.u32 %v6941, 16
      %v7036 = vrot.slane %v7034, 7
      %v7037 = vshll.u32 %v6941, 16
      %v7039 = vor.u32 %v7036, %v7037
      %v7040 = vrot.slane %v7036, 4
      %v7042 = vshrl.u32 %v6942, 16
      %v7044 = vrot.slane %v7042, 7
      %v7045 = vshll.u32 %v6942, 16
      %v7047 = vor.u32 %v7044, %v7045
      %v7048 = vsel %vm1378, %v7040, %v7047
      %v7049 = vrot.slane %v7044, 4
      %v7051 = vshrl.u32 %v6943, 16
      %v7053 = vrot.slane %v7051, 7
      %v7054 = vshll.u32 %v6943, 16
      %v7056 = vor.u32 %v7053, %v7054
      %v7057 = vrot.slane %v7053, 4
      %v7059 = vshrl.u32 %v6944, 16
      %v7061 = vrot.slane %v7059, 7
      %v7062 = vshll.u32 %v6944, 16
      %v7064 = vor.u32 %v7061, %v7062
      %v7065 = vsel %vm1378, %v7057, %v7064
      %v7066 = vrot.slane %v7061, 4
      %v7068 = vshrl.u32 %v6945, 16
      %v7070 = vrot.slane %v7068, 7
      %v7071 = vshll.u32 %v6945, 16
      %v7073 = vor.u32 %v7070, %v7071
      %v7074 = vrot.slane %v7070, 4
      %v7076 = vshrl.u32 %v6946, 16
      %v7078 = vrot.slane %v7076, 7
      %v7079 = vshll.u32 %v6946, 16
      %v7081 = vor.u32 %v7078, %v7079
      %v7082 = vsel %vm1378, %v7074, %v7081
      %v7083 = vrot.slane %v7078, 4
      %v7085 = vshrl.u32 %v6947, 16
      %v7087 = vrot.slane %v7085, 7
      %v7088 = vshll.u32 %v6947, 16
      %v7090 = vor.u32 %v7087, %v7088
      %v7091 = vrot.slane %v7087, 4
      %v7093 = vshrl.u32 %v6948, 16
      %v7095 = vrot.slane %v7093, 7
      %v7096 = vshll.u32 %v6948, 16
      %v7098 = vor.u32 %v7095, %v7096
      %v7099 = vsel %vm1378, %v7091, %v7098
      %v7100 = vrot.slane %v7095, 4
      %v7102 = vshrl.u32 %v6949, 16
      %v7104 = vrot.slane %v7102, 7
      %v7105 = vshll.u32 %v6949, 16
      %v7107 = vor.u32 %v7104, %v7105
      %v7108 = vrot.slane %v7104, 4
      %v7110 = vshrl.u32 %v6950, 16
      %v7112 = vrot.slane %v7110, 7
      %v7113 = vshll.u32 %v6950, 16
      %v7115 = vor.u32 %v7112, %v7113
      %v7116 = vsel %vm1378, %v7108, %v7115
      %v7117 = vrot.slane %v7112, 4
      %v7119 = vshrl.u32 %v6951, 16
      %v7121 = vrot.slane %v7119, 7
      %v7122 = vshll.u32 %v6951, 16
      %v7124 = vor.u32 %v7121, %v7122
      %v7125 = vrot.slane %v7121, 4
      %v7127 = vshrl.u32 %v6952, 16
      %v7129 = vrot.slane %v7127, 7
      %v7130 = vshll.u32 %v6952, 16
      %v7132 = vor.u32 %v7129, %v7130
      %v7133 = vsel %vm1378, %v7125, %v7132
      %v7134 = vrot.slane %v7129, 4
      %v7136 = vshrl.u32 %v6953, 16
      %v7138 = vrot.slane %v7136, 7
      %v7139 = vshll.u32 %v6953, 16
      %v7141 = vor.u32 %v7138, %v7139
      %v7142 = vrot.slane %v7138, 4
      %v7144 = vshrl.u32 %v6954, 16
      %v7146 = vrot.slane %v7144, 7
      %v7147 = vshll.u32 %v6954, 16
      %v7149 = vor.u32 %v7146, %v7147
      %v7150 = vsel %vm1378, %v7142, %v7149
      %v7151 = vrot.slane %v7146, 4
      %v7153 = vshrl.u32 %v6955, 16
      %v7155 = vrot.slane %v7153, 7
      %v7156 = vshll.u32 %v6955, 16
      %v7158 = vor.u32 %v7155, %v7156
      %v7159 = vrot.slane %v7155, 4
      %v7161 = vshrl.u32 %v6956, 16
      %v7163 = vrot.slane %v7161, 7
      %v7164 = vshll.u32 %v6956, 16
      %v7166 = vor.u32 %v7163, %v7164
      %v7167 = vsel %vm1378, %v7159, %v7166
      %v7168 = vrot.slane %v7163, 4
      %v7170 = vshrl.u32 %v6957, 16
      %v7172 = vrot.slane %v7170, 7
      %v7173 = vshll.u32 %v6957, 16
      %v7175 = vor.u32 %v7172, %v7173
      %v7176 = vrot.slane %v7172, 4
      %v7178 = vshrl.u32 %v6958, 16
      %v7180 = vrot.slane %v7178, 7
      %v7181 = vshll.u32 %v6958, 16
      %v7183 = vor.u32 %v7180, %v7181
      %v7184 = vsel %vm1378, %v7176, %v7183
      %v7185 = vrot.slane %v7180, 4
      %v7187 = vshrl.u32 %v6959, 16
      %v7189 = vrot.slane %v7187, 7
      %v7190 = vshll.u32 %v6959, 16
      %v7192 = vor.u32 %v7189, %v7190
      %v7193 = vrot.slane %v7189, 4
      %v7195 = vshrl.u32 %v6960, 16
      %v7197 = vrot.slane %v7195, 7
      %v7198 = vshll.u32 %v6960, 16
      %v7200 = vor.u32 %v7197, %v7198
      %v7201 = vsel %vm1378, %v7193, %v7200
      %v7202 = vrot.slane %v7197, 4
      %v7204 = vshrl.u32 %v6961, 16
      %v7206 = vrot.slane %v7204, 7
      %v7207 = vshll.u32 %v6961, 16
      %v7209 = vor.u32 %v7206, %v7207
      %v7210 = vrot.slane %v7206, 4
      %v7212 = vshrl.u32 %v6962, 16
      %v7214 = vrot.slane %v7212, 7
      %v7215 = vshll.u32 %v6962, 16
      %v7217 = vor.u32 %v7214, %v7215
      %v7218 = vsel %vm1378, %v7210, %v7217
      %v7219 = vrot.slane %v7214, 4
      %v7221 = vshrl.u32 %v6963, 16
      %v7223 = vrot.slane %v7221, 7
      %v7224 = vshll.u32 %v6963, 16
      %v7226 = vor.u32 %v7223, %v7224
      %v7227 = vrot.slane %v7223, 4
      %v7229 = vshrl.u32 %v6964, 16
      %v7231 = vrot.slane %v7229, 7
      %v7232 = vshll.u32 %v6964, 16
      %v7234 = vor.u32 %v7231, %v7232
      %v7235 = vsel %vm1378, %v7227, %v7234
      %v7236 = vrot.slane %v7231, 4
      %s7285 = scalar_lea.vmem [#allocation3], 12
      %vm7286 = vcmask 60416
      %vm7287 = vmand %vm7286, %vm447
      %v7288 = vld [vmem:[%s7285] sm:$0xf]
      %v7289 = vsel %vm7287, %v6971, %v7288
      %7290 = vst [vmem:[%s7285] sm:$0xf] %v7289
      %7291 = vst.msk [vmem:[%s7285 + $0x4] sm:$0xf] %vm503, %v6980
      %v7292 = vld [vmem:[%s7285 + $0x8] sm:$0x1]
      %v7293 = vsel %vm513, %v6981, %v7292
      %7294 = vst [vmem:[%s7285 + $0x8] sm:$0x1] %v7293
      %v7295 = vld [vmem:[%s7285 + $0xc] sm:$0xf]
      %v7296 = vsel %vm7287, %v6988, %v7295
      %7297 = vst [vmem:[%s7285 + $0xc] sm:$0xf] %v7296
      %7298 = vst.msk [vmem:[%s7285 + $0x10] sm:$0xf] %vm503, %v6997
      %v7299 = vld [vmem:[%s7285 + $0x14] sm:$0x1]
      %v7300 = vsel %vm513, %v6998, %v7299
      %7301 = vst [vmem:[%s7285 + $0x14] sm:$0x1] %v7300
      %v7302 = vld [vmem:[%s7285 + $0x18] sm:$0xf]
      %v7303 = vsel %vm7287, %v7005, %v7302
      %7304 = vst [vmem:[%s7285 + $0x18] sm:$0xf] %v7303
      %7305 = vst.msk [vmem:[%s7285 + $0x1c] sm:$0xf] %vm503, %v7014
      %v7306 = vld [vmem:[%s7285 + $0x20] sm:$0x1]
      %v7307 = vsel %vm513, %v7015, %v7306
      %7308 = vst [vmem:[%s7285 + $0x20] sm:$0x1] %v7307
      %v7309 = vld [vmem:[%s7285 + $0x24] sm:$0xf]
      %v7310 = vsel %vm7287, %v7022, %v7309
      %7311 = vst [vmem:[%s7285 + $0x24] sm:$0xf] %v7310
      %7312 = vst.msk [vmem:[%s7285 + $0x28] sm:$0xf] %vm503, %v7031
      %v7313 = vld [vmem:[%s7285 + $0x2c] sm:$0x1]
      %v7314 = vsel %vm513, %v7032, %v7313
      %7315 = vst [vmem:[%s7285 + $0x2c] sm:$0x1] %v7314
      %v7316 = vld [vmem:[%s7285 + $0x30] sm:$0xf]
      %v7317 = vsel %vm7287, %v7039, %v7316
      %7318 = vst [vmem:[%s7285 + $0x30] sm:$0xf] %v7317
      %7319 = vst.msk [vmem:[%s7285 + $0x34] sm:$0xf] %vm503, %v7048
      %v7320 = vld [vmem:[%s7285 + $0x38] sm:$0x1]
      %v7321 = vsel %vm513, %v7049, %v7320
      %7322 = vst [vmem:[%s7285 + $0x38] sm:$0x1] %v7321
      %v7323 = vld [vmem:[%s7285 + $0x3c] sm:$0xf]
      %v7324 = vsel %vm7287, %v7056, %v7323
      %7325 = vst [vmem:[%s7285 + $0x3c] sm:$0xf] %v7324
      %7326 = vst.msk [vmem:[%s7285 + $0x40] sm:$0xf] %vm503, %v7065
      %v7327 = vld [vmem:[%s7285 + $0x44] sm:$0x1]
      %v7328 = vsel %vm513, %v7066, %v7327
      %7329 = vst [vmem:[%s7285 + $0x44] sm:$0x1] %v7328
      %v7330 = vld [vmem:[%s7285 + $0x48] sm:$0xf]
      %v7331 = vsel %vm7287, %v7073, %v7330
      %7332 = vst [vmem:[%s7285 + $0x48] sm:$0xf] %v7331
      %7333 = vst.msk [vmem:[%s7285 + $0x4c] sm:$0xf] %vm503, %v7082
      %v7334 = vld [vmem:[%s7285 + $0x50] sm:$0x1]
      %v7335 = vsel %vm513, %v7083, %v7334
      %7336 = vst [vmem:[%s7285 + $0x50] sm:$0x1] %v7335
      %v7337 = vld [vmem:[%s7285 + $0x54] sm:$0xf]
      %v7338 = vsel %vm7287, %v7090, %v7337
      %7339 = vst [vmem:[%s7285 + $0x54] sm:$0xf] %v7338
      %7340 = vst.msk [vmem:[%s7285 + $0x58] sm:$0xf] %vm503, %v7099
      %v7341 = vld [vmem:[%s7285 + $0x5c] sm:$0x1]
      %v7342 = vsel %vm513, %v7100, %v7341
      %7343 = vst [vmem:[%s7285 + $0x5c] sm:$0x1] %v7342
      %v7344 = vld [vmem:[%s7285 + $0x60] sm:$0xf]
      %v7345 = vsel %vm7287, %v7107, %v7344
      %7346 = vst [vmem:[%s7285 + $0x60] sm:$0xf] %v7345
      %7347 = vst.msk [vmem:[%s7285 + $0x64] sm:$0xf] %vm503, %v7116
      %v7348 = vld [vmem:[%s7285 + $0x68] sm:$0x1]
      %v7349 = vsel %vm513, %v7117, %v7348
      %7350 = vst [vmem:[%s7285 + $0x68] sm:$0x1] %v7349
      %v7351 = vld [vmem:[%s7285 + $0x6c] sm:$0xf]
      %v7352 = vsel %vm7287, %v7124, %v7351
      %7353 = vst [vmem:[%s7285 + $0x6c] sm:$0xf] %v7352
      %7354 = vst.msk [vmem:[%s7285 + $0x70] sm:$0xf] %vm503, %v7133
      %v7355 = vld [vmem:[%s7285 + $0x74] sm:$0x1]
      %v7356 = vsel %vm513, %v7134, %v7355
      %7357 = vst [vmem:[%s7285 + $0x74] sm:$0x1] %v7356
      %v7358 = vld [vmem:[%s7285 + $0x78] sm:$0xf]
      %v7359 = vsel %vm7287, %v7141, %v7358
      %7360 = vst [vmem:[%s7285 + $0x78] sm:$0xf] %v7359
      %7361 = vst.msk [vmem:[%s7285 + $0x7c] sm:$0xf] %vm503, %v7150
      %v7362 = vld [vmem:[%s7285 + $0x80] sm:$0x1]
      %v7363 = vsel %vm513, %v7151, %v7362
      %7364 = vst [vmem:[%s7285 + $0x80] sm:$0x1] %v7363
      %v7365 = vld [vmem:[%s7285 + $0x84] sm:$0xf]
      %v7366 = vsel %vm7287, %v7158, %v7365
      %7367 = vst [vmem:[%s7285 + $0x84] sm:$0xf] %v7366
      %7368 = vst.msk [vmem:[%s7285 + $0x88] sm:$0xf] %vm503, %v7167
      %v7369 = vld [vmem:[%s7285 + $0x8c] sm:$0x1]
      %v7370 = vsel %vm513, %v7168, %v7369
      %7371 = vst [vmem:[%s7285 + $0x8c] sm:$0x1] %v7370
      %v7372 = vld [vmem:[%s7285 + $0x90] sm:$0xf]
      %v7373 = vsel %vm7287, %v7175, %v7372
      %7374 = vst [vmem:[%s7285 + $0x90] sm:$0xf] %v7373
      %7375 = vst.msk [vmem:[%s7285 + $0x94] sm:$0xf] %vm503, %v7184
      %v7376 = vld [vmem:[%s7285 + $0x98] sm:$0x1]
      %v7377 = vsel %vm513, %v7185, %v7376
      %7378 = vst [vmem:[%s7285 + $0x98] sm:$0x1] %v7377
      %v7379 = vld [vmem:[%s7285 + $0x9c] sm:$0xf]
      %v7380 = vsel %vm7287, %v7192, %v7379
      %7381 = vst [vmem:[%s7285 + $0x9c] sm:$0xf] %v7380
      %7382 = vst.msk [vmem:[%s7285 + $0xa0] sm:$0xf] %vm503, %v7201
      %v7383 = vld [vmem:[%s7285 + $0xa4] sm:$0x1]
      %v7384 = vsel %vm513, %v7202, %v7383
      %7385 = vst [vmem:[%s7285 + $0xa4] sm:$0x1] %v7384
      %v7386 = vld [vmem:[%s7285 + $0xa8] sm:$0xf]
      %v7387 = vsel %vm7287, %v7209, %v7386
      %7388 = vst [vmem:[%s7285 + $0xa8] sm:$0xf] %v7387
      %7389 = vst.msk [vmem:[%s7285 + $0xac] sm:$0xf] %vm503, %v7218
      %v7390 = vld [vmem:[%s7285 + $0xb0] sm:$0x1]
      %v7391 = vsel %vm513, %v7219, %v7390
      %7392 = vst [vmem:[%s7285 + $0xb0] sm:$0x1] %v7391
      %v7393 = vld [vmem:[%s7285 + $0xb4] sm:$0xf]
      %v7394 = vsel %vm7287, %v7226, %v7393
      %7395 = vst [vmem:[%s7285 + $0xb4] sm:$0xf] %v7394
      %7396 = vst.msk [vmem:[%s7285 + $0xb8] sm:$0xf] %vm503, %v7235
      %v7397 = vld [vmem:[%s7285 + $0xbc] sm:$0x1]
      %v7398 = vsel %vm513, %v7236, %v7397
      %7399 = vst [vmem:[%s7285 + $0xbc] sm:$0x1] %v7398
      %v7400 = vld [vmem:[#allocation3] sm:$0xf]
      %v7401 = vld [vmem:[#allocation3 + $0x4] sm:$0xf]
      %v7402 = vld [vmem:[#allocation3 + $0xc] sm:$0xf]
      %v7403 = vld [vmem:[#allocation3 + $0x10] sm:$0xf]
      %v7404 = vld [vmem:[#allocation3 + $0x18] sm:$0xf]
      %v7405 = vld [vmem:[#allocation3 + $0x1c] sm:$0xf]
      %v7406 = vld [vmem:[#allocation3 + $0x24] sm:$0xf]
      %v7407 = vld [vmem:[#allocation3 + $0x28] sm:$0xf]
      %v7408 = vld [vmem:[#allocation3 + $0x30] sm:$0xf]
      %v7409 = vld [vmem:[#allocation3 + $0x34] sm:$0xf]
      %v7410 = vld [vmem:[#allocation3 + $0x3c] sm:$0xf]
      %v7411 = vld [vmem:[#allocation3 + $0x40] sm:$0xf]
      %v7412 = vld [vmem:[#allocation3 + $0x48] sm:$0xf]
      %v7413 = vld [vmem:[#allocation3 + $0x4c] sm:$0xf]
      %v7414 = vld [vmem:[#allocation3 + $0x54] sm:$0xf]
      %v7415 = vld [vmem:[#allocation3 + $0x58] sm:$0xf]
      %v7416 = vld [vmem:[#allocation3 + $0x60] sm:$0xf]
      %v7417 = vld [vmem:[#allocation3 + $0x64] sm:$0xf]
      %v7418 = vld [vmem:[#allocation3 + $0x6c] sm:$0xf]
      %v7419 = vld [vmem:[#allocation3 + $0x70] sm:$0xf]
      %v7420 = vld [vmem:[#allocation3 + $0x78] sm:$0xf]
      %v7421 = vld [vmem:[#allocation3 + $0x7c] sm:$0xf]
      %v7422 = vld [vmem:[#allocation3 + $0x84] sm:$0xf]
      %v7423 = vld [vmem:[#allocation3 + $0x88] sm:$0xf]
      %v7424 = vld [vmem:[#allocation3 + $0x90] sm:$0xf]
      %v7425 = vld [vmem:[#allocation3 + $0x94] sm:$0xf]
      %v7426 = vld [vmem:[#allocation3 + $0x9c] sm:$0xf]
      %v7427 = vld [vmem:[#allocation3 + $0xa0] sm:$0xf]
      %v7428 = vld [vmem:[#allocation3 + $0xa8] sm:$0xf]
      %v7429 = vld [vmem:[#allocation3 + $0xac] sm:$0xf]
      %v7430 = vld [vmem:[#allocation3 + $0xb4] sm:$0xf]
      %v7431 = vld [vmem:[#allocation3 + $0xb8] sm:$0xf]
      %v7432 = vld [vmem:[%s9] sm:$0xf]
      %v7433 = vld [vmem:[#allocation3 + $0x8] sm:$0x1]
      %v7434 = vld [vmem:[#allocation3 + $0x14] sm:$0x1]
      %v7435 = vld [vmem:[#allocation3 + $0x20] sm:$0x1]
      %v7436 = vld [vmem:[#allocation3 + $0x2c] sm:$0x1]
      %v7437 = vld [vmem:[#allocation3 + $0x38] sm:$0x1]
      %v7438 = vld [vmem:[#allocation3 + $0x44] sm:$0x1]
      %v7439 = vld [vmem:[#allocation3 + $0x50] sm:$0x1]
      %v7440 = vld [vmem:[#allocation3 + $0x5c] sm:$0x1]
      %v7441 = vld [vmem:[#allocation3 + $0x68] sm:$0x1]
      %v7442 = vld [vmem:[#allocation3 + $0x74] sm:$0x1]
      %v7443 = vld [vmem:[#allocation3 + $0x80] sm:$0x1]
      %v7444 = vld [vmem:[#allocation3 + $0x8c] sm:$0x1]
      %v7445 = vld [vmem:[#allocation3 + $0x98] sm:$0x1]
      %v7446 = vld [vmem:[#allocation3 + $0xa4] sm:$0x1]
      %v7447 = vld [vmem:[#allocation3 + $0xb0] sm:$0x1]
      %v7448 = vld [vmem:[#allocation3 + $0xbc] sm:$0x1]
      %v7450 = vshrl.u32 %v7400, 16
      %v7452 = vrot.slane %v7450, 4
      %v7453 = vshll.u32 %v7400, 16
      %v7455 = vrot.slane %v7453, 5
      %v7456 = vor.u32 %v7452, %v7455
      %v7457 = vrot.slane %v7456, 4
      %v7459 = vshll.u32 %v7401, 16
      %v7461 = vrot.slane %v7459, 5
      %v7462 = vsel %vm1866, %v7457, %v7461
      %v7463 = vshrl.u32 %v7401, 16
      %v7465 = vrot.slane %v7463, 4
      %v7466 = vor.u32 %v7465, %v7461
      %v7467 = vrot.slane %v7466, 4
      %v7469 = vshll.u32 %v7433, 16
      %v7471 = vrot.slane %v7469, 5
      %v7472 = vsel %vm1866, %v7467, %v7471
      %v7474 = vshrl.u32 %v7402, 16
      %v7476 = vrot.slane %v7474, 4
      %v7477 = vshll.u32 %v7402, 16
      %v7479 = vrot.slane %v7477, 5
      %v7480 = vor.u32 %v7476, %v7479
      %v7481 = vrot.slane %v7480, 4
      %v7483 = vshll.u32 %v7403, 16
      %v7485 = vrot.slane %v7483, 5
      %v7486 = vsel %vm1866, %v7481, %v7485
      %v7487 = vshrl.u32 %v7403, 16
      %v7489 = vrot.slane %v7487, 4
      %v7490 = vor.u32 %v7489, %v7485
      %v7491 = vrot.slane %v7490, 4
      %v7493 = vshll.u32 %v7434, 16
      %v7495 = vrot.slane %v7493, 5
      %v7496 = vsel %vm1866, %v7491, %v7495
      %v7498 = vshrl.u32 %v7404, 16
      %v7500 = vrot.slane %v7498, 4
      %v7501 = vshll.u32 %v7404, 16
      %v7503 = vrot.slane %v7501, 5
      %v7504 = vor.u32 %v7500, %v7503
      %v7505 = vrot.slane %v7504, 4
      %v7507 = vshll.u32 %v7405, 16
      %v7509 = vrot.slane %v7507, 5
      %v7510 = vsel %vm1866, %v7505, %v7509
      %v7511 = vshrl.u32 %v7405, 16
      %v7513 = vrot.slane %v7511, 4
      %v7514 = vor.u32 %v7513, %v7509
      %v7515 = vrot.slane %v7514, 4
      %v7517 = vshll.u32 %v7435, 16
      %v7519 = vrot.slane %v7517, 5
      %v7520 = vsel %vm1866, %v7515, %v7519
      %v7522 = vshrl.u32 %v7406, 16
      %v7524 = vrot.slane %v7522, 4
      %v7525 = vshll.u32 %v7406, 16
      %v7527 = vrot.slane %v7525, 5
      %v7528 = vor.u32 %v7524, %v7527
      %v7529 = vrot.slane %v7528, 4
      %v7531 = vshll.u32 %v7407, 16
      %v7533 = vrot.slane %v7531, 5
      %v7534 = vsel %vm1866, %v7529, %v7533
      %v7535 = vshrl.u32 %v7407, 16
      %v7537 = vrot.slane %v7535, 4
      %v7538 = vor.u32 %v7537, %v7533
      %v7539 = vrot.slane %v7538, 4
      %v7541 = vshll.u32 %v7436, 16
      %v7543 = vrot.slane %v7541, 5
      %v7544 = vsel %vm1866, %v7539, %v7543
      %v7546 = vshrl.u32 %v7408, 16
      %v7548 = vrot.slane %v7546, 4
      %v7549 = vshll.u32 %v7408, 16
      %v7551 = vrot.slane %v7549, 5
      %v7552 = vor.u32 %v7548, %v7551
      %v7553 = vrot.slane %v7552, 4
      %v7555 = vshll.u32 %v7409, 16
      %v7557 = vrot.slane %v7555, 5
      %v7558 = vsel %vm1866, %v7553, %v7557
      %v7559 = vshrl.u32 %v7409, 16
      %v7561 = vrot.slane %v7559, 4
      %v7562 = vor.u32 %v7561, %v7557
      %v7563 = vrot.slane %v7562, 4
      %v7565 = vshll.u32 %v7437, 16
      %v7567 = vrot.slane %v7565, 5
      %v7568 = vsel %vm1866, %v7563, %v7567
      %v7570 = vshrl.u32 %v7410, 16
      %v7572 = vrot.slane %v7570, 4
      %v7573 = vshll.u32 %v7410, 16
      %v7575 = vrot.slane %v7573, 5
      %v7576 = vor.u32 %v7572, %v7575
      %v7577 = vrot.slane %v7576, 4
      %v7579 = vshll.u32 %v7411, 16
      %v7581 = vrot.slane %v7579, 5
      %v7582 = vsel %vm1866, %v7577, %v7581
      %v7583 = vshrl.u32 %v7411, 16
      %v7585 = vrot.slane %v7583, 4
      %v7586 = vor.u32 %v7585, %v7581
      %v7587 = vrot.slane %v7586, 4
      %v7589 = vshll.u32 %v7438, 16
      %v7591 = vrot.slane %v7589, 5
      %v7592 = vsel %vm1866, %v7587, %v7591
      %v7594 = vshrl.u32 %v7412, 16
      %v7596 = vrot.slane %v7594, 4
      %v7597 = vshll.u32 %v7412, 16
      %v7599 = vrot.slane %v7597, 5
      %v7600 = vor.u32 %v7596, %v7599
      %v7601 = vrot.slane %v7600, 4
      %v7603 = vshll.u32 %v7413, 16
      %v7605 = vrot.slane %v7603, 5
      %v7606 = vsel %vm1866, %v7601, %v7605
      %v7607 = vshrl.u32 %v7413, 16
      %v7609 = vrot.slane %v7607, 4
      %v7610 = vor.u32 %v7609, %v7605
      %v7611 = vrot.slane %v7610, 4
      %v7613 = vshll.u32 %v7439, 16
      %v7615 = vrot.slane %v7613, 5
      %v7616 = vsel %vm1866, %v7611, %v7615
      %v7618 = vshrl.u32 %v7414, 16
      %v7620 = vrot.slane %v7618, 4
      %v7621 = vshll.u32 %v7414, 16
      %v7623 = vrot.slane %v7621, 5
      %v7624 = vor.u32 %v7620, %v7623
      %v7625 = vrot.slane %v7624, 4
      %v7627 = vshll.u32 %v7415, 16
      %v7629 = vrot.slane %v7627, 5
      %v7630 = vsel %vm1866, %v7625, %v7629
      %v7631 = vshrl.u32 %v7415, 16
      %v7633 = vrot.slane %v7631, 4
      %v7634 = vor.u32 %v7633, %v7629
      %v7635 = vrot.slane %v7634, 4
      %v7637 = vshll.u32 %v7440, 16
      %v7639 = vrot.slane %v7637, 5
      %v7640 = vsel %vm1866, %v7635, %v7639
      %v7642 = vshrl.u32 %v7416, 16
      %v7644 = vrot.slane %v7642, 4
      %v7645 = vshll.u32 %v7416, 16
      %v7647 = vrot.slane %v7645, 5
      %v7648 = vor.u32 %v7644, %v7647
      %v7649 = vrot.slane %v7648, 4
      %v7651 = vshll.u32 %v7417, 16
      %v7653 = vrot.slane %v7651, 5
      %v7654 = vsel %vm1866, %v7649, %v7653
      %v7655 = vshrl.u32 %v7417, 16
      %v7657 = vrot.slane %v7655, 4
      %v7658 = vor.u32 %v7657, %v7653
      %v7659 = vrot.slane %v7658, 4
      %v7661 = vshll.u32 %v7441, 16
      %v7663 = vrot.slane %v7661, 5
      %v7664 = vsel %vm1866, %v7659, %v7663
      %v7666 = vshrl.u32 %v7418, 16
      %v7668 = vrot.slane %v7666, 4
      %v7669 = vshll.u32 %v7418, 16
      %v7671 = vrot.slane %v7669, 5
      %v7672 = vor.u32 %v7668, %v7671
      %v7673 = vrot.slane %v7672, 4
      %v7675 = vshll.u32 %v7419, 16
      %v7677 = vrot.slane %v7675, 5
      %v7678 = vsel %vm1866, %v7673, %v7677
      %v7679 = vshrl.u32 %v7419, 16
      %v7681 = vrot.slane %v7679, 4
      %v7682 = vor.u32 %v7681, %v7677
      %v7683 = vrot.slane %v7682, 4
      %v7685 = vshll.u32 %v7442, 16
      %v7687 = vrot.slane %v7685, 5
      %v7688 = vsel %vm1866, %v7683, %v7687
      %v7690 = vshrl.u32 %v7420, 16
      %v7692 = vrot.slane %v7690, 4
      %v7693 = vshll.u32 %v7420, 16
      %v7695 = vrot.slane %v7693, 5
      %v7696 = vor.u32 %v7692, %v7695
      %v7697 = vrot.slane %v7696, 4
      %v7699 = vshll.u32 %v7421, 16
      %v7701 = vrot.slane %v7699, 5
      %v7702 = vsel %vm1866, %v7697, %v7701
      %v7703 = vshrl.u32 %v7421, 16
      %v7705 = vrot.slane %v7703, 4
      %v7706 = vor.u32 %v7705, %v7701
      %v7707 = vrot.slane %v7706, 4
      %v7709 = vshll.u32 %v7443, 16
      %v7711 = vrot.slane %v7709, 5
      %v7712 = vsel %vm1866, %v7707, %v7711
      %v7714 = vshrl.u32 %v7422, 16
      %v7716 = vrot.slane %v7714, 4
      %v7717 = vshll.u32 %v7422, 16
      %v7719 = vrot.slane %v7717, 5
      %v7720 = vor.u32 %v7716, %v7719
      %v7721 = vrot.slane %v7720, 4
      %v7723 = vshll.u32 %v7423, 16
      %v7725 = vrot.slane %v7723, 5
      %v7726 = vsel %vm1866, %v7721, %v7725
      %v7727 = vshrl.u32 %v7423, 16
      %v7729 = vrot.slane %v7727, 4
      %v7730 = vor.u32 %v7729, %v7725
      %v7731 = vrot.slane %v7730, 4
      %v7733 = vshll.u32 %v7444, 16
      %v7735 = vrot.slane %v7733, 5
      %v7736 = vsel %vm1866, %v7731, %v7735
      %v7738 = vshrl.u32 %v7424, 16
      %v7740 = vrot.slane %v7738, 4
      %v7741 = vshll.u32 %v7424, 16
      %v7743 = vrot.slane %v7741, 5
      %v7744 = vor.u32 %v7740, %v7743
      %v7745 = vrot.slane %v7744, 4
      %v7747 = vshll.u32 %v7425, 16
      %v7749 = vrot.slane %v7747, 5
      %v7750 = vsel %vm1866, %v7745, %v7749
      %v7751 = vshrl.u32 %v7425, 16
      %v7753 = vrot.slane %v7751, 4
      %v7754 = vor.u32 %v7753, %v7749
      %v7755 = vrot.slane %v7754, 4
      %v7757 = vshll.u32 %v7445, 16
      %v7759 = vrot.slane %v7757, 5
      %v7760 = vsel %vm1866, %v7755, %v7759
      %v7762 = vshrl.u32 %v7426, 16
      %v7764 = vrot.slane %v7762, 4
      %v7765 = vshll.u32 %v7426, 16
      %v7767 = vrot.slane %v7765, 5
      %v7768 = vor.u32 %v7764, %v7767
      %v7769 = vrot.slane %v7768, 4
      %v7771 = vshll.u32 %v7427, 16
      %v7773 = vrot.slane %v7771, 5
      %v7774 = vsel %vm1866, %v7769, %v7773
      %v7775 = vshrl.u32 %v7427, 16
      %v7777 = vrot.slane %v7775, 4
      %v7778 = vor.u32 %v7777, %v7773
      %v7779 = vrot.slane %v7778, 4
      %v7781 = vshll.u32 %v7446, 16
      %v7783 = vrot.slane %v7781, 5
      %v7784 = vsel %vm1866, %v7779, %v7783
      %v7786 = vshrl.u32 %v7428, 16
      %v7788 = vrot.slane %v7786, 4
      %v7789 = vshll.u32 %v7428, 16
      %v7791 = vrot.slane %v7789, 5
      %v7792 = vor.u32 %v7788, %v7791
      %v7793 = vrot.slane %v7792, 4
      %v7795 = vshll.u32 %v7429, 16
      %v7797 = vrot.slane %v7795, 5
      %v7798 = vsel %vm1866, %v7793, %v7797
      %v7799 = vshrl.u32 %v7429, 16
      %v7801 = vrot.slane %v7799, 4
      %v7802 = vor.u32 %v7801, %v7797
      %v7803 = vrot.slane %v7802, 4
      %v7805 = vshll.u32 %v7447, 16
      %v7807 = vrot.slane %v7805, 5
      %v7808 = vsel %vm1866, %v7803, %v7807
      %v7810 = vshrl.u32 %v7430, 16
      %v7812 = vrot.slane %v7810, 4
      %v7813 = vshll.u32 %v7430, 16
      %v7815 = vrot.slane %v7813, 5
      %v7816 = vor.u32 %v7812, %v7815
      %v7817 = vrot.slane %v7816, 4
      %v7819 = vshll.u32 %v7431, 16
      %v7821 = vrot.slane %v7819, 5
      %v7822 = vsel %vm1866, %v7817, %v7821
      %v7823 = vshrl.u32 %v7431, 16
      %v7825 = vrot.slane %v7823, 4
      %v7826 = vor.u32 %v7825, %v7821
      %v7827 = vrot.slane %v7826, 4
      %v7829 = vshll.u32 %v7448, 16
      %v7831 = vrot.slane %v7829, 5
      %v7832 = vsel %vm1866, %v7827, %v7831
      %s7833 = scalar_lea.vmem %s9, 4
      %v7834 = vld [vmem:[%s7833] sm:$0xf]
      %v7835 = vunpack.c.l.b16 %v7462
      %v7836 = vunpack.c.l.b16 %v7472
      %v7837 = vunpack.c.l.b16 %v7486
      %v7838 = vunpack.c.l.b16 %v7496
      %v7839 = vunpack.c.l.b16 %v7510
      %v7840 = vunpack.c.l.b16 %v7520
      %v7841 = vunpack.c.l.b16 %v7534
      %v7842 = vunpack.c.l.b16 %v7544
      %v7843 = vunpack.c.l.b16 %v7558
      %v7844 = vunpack.c.l.b16 %v7568
      %v7845 = vunpack.c.l.b16 %v7582
      %v7846 = vunpack.c.l.b16 %v7592
      %v7847 = vunpack.c.l.b16 %v7606
      %v7848 = vunpack.c.l.b16 %v7616
      %v7849 = vunpack.c.l.b16 %v7630
      %v7850 = vunpack.c.l.b16 %v7640
      %v7851 = vunpack.c.l.b16 %v7654
      %v7852 = vunpack.c.l.b16 %v7664
      %v7853 = vunpack.c.l.b16 %v7678
      %v7854 = vunpack.c.l.b16 %v7688
      %v7855 = vunpack.c.l.b16 %v7702
      %v7856 = vunpack.c.l.b16 %v7712
      %v7857 = vunpack.c.l.b16 %v7726
      %v7858 = vunpack.c.l.b16 %v7736
      %v7859 = vunpack.c.l.b16 %v7750
      %v7860 = vunpack.c.l.b16 %v7760
      %v7861 = vunpack.c.l.b16 %v7774
      %v7862 = vunpack.c.l.b16 %v7784
      %v7863 = vunpack.c.l.b16 %v7798
      %v7864 = vunpack.c.l.b16 %v7808
      %v7865 = vunpack.c.l.b16 %v7822
      %v7866 = vunpack.c.l.b16 %v7832
      %v7867 = vpack.c.b16 %v7836, %v7835
      %v7868 = vpack.c.b16 %v7838, %v7837
      %v7869 = vpack.c.b16 %v7840, %v7839
      %v7870 = vpack.c.b16 %v7842, %v7841
      %v7871 = vpack.c.b16 %v7844, %v7843
      %v7872 = vpack.c.b16 %v7846, %v7845
      %v7873 = vpack.c.b16 %v7848, %v7847
      %v7874 = vpack.c.b16 %v7850, %v7849
      %v7875 = vpack.c.b16 %v7852, %v7851
      %v7876 = vpack.c.b16 %v7854, %v7853
      %v7877 = vpack.c.b16 %v7856, %v7855
      %v7878 = vpack.c.b16 %v7858, %v7857
      %v7879 = vpack.c.b16 %v7860, %v7859
      %v7880 = vpack.c.b16 %v7862, %v7861
      %v7881 = vpack.c.b16 %v7864, %v7863
      %v7882 = vpack.c.b16 %v7866, %v7865
      %v7884 = vsel %vm815, %v7834, 0
      %v7887 = vsel %vm815, %v7867, 0
      %v7890 = vsel %vm815, %v7868, 0
      %v7893 = vsel %vm815, %v7869, 0
      %v7896 = vsel %vm815, %v7870, 0
      %v7899 = vsel %vm815, %v7871, 0
      %v7902 = vsel %vm815, %v7872, 0
      %v7905 = vsel %vm815, %v7873, 0
      %v7908 = vsel %vm815, %v7874, 0
      %v7911 = vsel %vm815, %v7875, 0
      %v7914 = vsel %vm815, %v7876, 0
      %v7917 = vsel %vm815, %v7877, 0
      %v7920 = vsel %vm815, %v7878, 0
      %v7923 = vsel %vm815, %v7879, 0
      %v7926 = vsel %vm815, %v7880, 0
      %v7929 = vsel %vm815, %v7881, 0
      %v7932 = vsel %vm815, %v7882, 0
      %7934 = vmatprep.subr.bf16.mxu0 0
      %7935 = vmatpush1.bf16.xpose.msra.mxu0 %v7887
      %7936 = vmatprep.subr.bf16.mxu0 0
      %7937 = vmatpush1.bf16.xpose.msra.mxu0 %v7890
      %7938 = vmatprep.subr.bf16.mxu0 0
      %7939 = vmatpush1.bf16.xpose.msra.mxu0 %v7893
      %7940 = vmatprep.subr.bf16.mxu0 0
      %7941 = vmatpush1.bf16.xpose.msra.mxu0 %v7896
      %7942 = vmatprep.subr.bf16.mxu0 0
      %7943 = vmatpush1.bf16.xpose.msra.mxu0 %v7899
      %7944 = vmatprep.subr.bf16.mxu0 0
      %7945 = vmatpush1.bf16.xpose.msra.mxu0 %v7902
      %7946 = vmatprep.subr.bf16.mxu0 0
      %7947 = vmatpush1.bf16.xpose.msra.mxu0 %v7905
      %7948 = vmatprep.subr.bf16.mxu0 0
      %7949 = vmatpush1.bf16.xpose.msra.mxu0 %v7908
      %7950 = vmatprep.subr.bf16.mxu0 0
      %7951 = vmatpush1.bf16.xpose.msra.mxu0 %v7911
      %7952 = vmatprep.subr.bf16.mxu0 0
      %7953 = vmatpush1.bf16.xpose.msra.mxu0 %v7914
      %7954 = vmatprep.subr.bf16.mxu0 0
      %7955 = vmatpush1.bf16.xpose.msra.mxu0 %v7917
      %7956 = vmatprep.subr.bf16.mxu0 0
      %7957 = vmatpush1.bf16.xpose.msra.mxu0 %v7920
      %7958 = vmatprep.subr.bf16.mxu0 0
      %7959 = vmatpush1.bf16.xpose.msra.mxu0 %v7923
      %7960 = vmatprep.subr.bf16.mxu0 0
      %7961 = vmatpush1.bf16.xpose.msra.mxu0 %v7926
      %7962 = vmatprep.subr.bf16.mxu0 0
      %7963 = vmatpush1.bf16.xpose.msra.mxu0 %v7929
      %7964 = vmatprep.subr.bf16.mxu0 0
      %7965 = vmatpush1.bf16.xpose.msra.mxu0 %v7932
      %7966 = vmatprep.mubr.bf16.mxu0 0
      %7967 = vmatmul.mubr.bf16.gmra.mrb[0].mxu0 %v7884
      %v7968 = vpop.f32.mrb[0].mxu0
      %v7969 = vadd.f32 0.0, %v7968
      %v7970 = vpop.f32.mrb[0].mxu0
      %v7971 = vadd.f32 0.0, %v7970
      %v7972 = vpop.f32.mrb[0].mxu0
      %v7973 = vpop.f32.mrb[0].mxu0
      %7974 = vdwg.mxu0
      %v8007 = vunpack.c.l.b16 %v7400
      %v8008 = vunpack.c.l.b16 %v7401
      %v8009 = vunpack.c.l.b16 %v7402
      %v8010 = vunpack.c.l.b16 %v7403
      %v8011 = vunpack.c.l.b16 %v7404
      %v8012 = vunpack.c.l.b16 %v7405
      %v8013 = vunpack.c.l.b16 %v7406
      %v8014 = vunpack.c.l.b16 %v7407
      %v8015 = vunpack.c.l.b16 %v7408
      %v8016 = vunpack.c.l.b16 %v7409
      %v8017 = vunpack.c.l.b16 %v7410
      %v8018 = vunpack.c.l.b16 %v7411
      %v8019 = vunpack.c.l.b16 %v7412
      %v8020 = vunpack.c.l.b16 %v7413
      %v8021 = vunpack.c.l.b16 %v7414
      %v8022 = vunpack.c.l.b16 %v7415
      %v8023 = vunpack.c.l.b16 %v7416
      %v8024 = vunpack.c.l.b16 %v7417
      %v8025 = vunpack.c.l.b16 %v7418
      %v8026 = vunpack.c.l.b16 %v7419
      %v8027 = vunpack.c.l.b16 %v7420
      %v8028 = vunpack.c.l.b16 %v7421
      %v8029 = vunpack.c.l.b16 %v7422
      %v8030 = vunpack.c.l.b16 %v7423
      %v8031 = vunpack.c.l.b16 %v7424
      %v8032 = vunpack.c.l.b16 %v7425
      %v8033 = vunpack.c.l.b16 %v7426
      %v8034 = vunpack.c.l.b16 %v7427
      %v8035 = vunpack.c.l.b16 %v7428
      %v8036 = vunpack.c.l.b16 %v7429
      %v8037 = vunpack.c.l.b16 %v7430
      %v8038 = vunpack.c.l.b16 %v7431
      %v8039 = vpack.c.b16 %v8008, %v8007
      %v8040 = vpack.c.b16 %v8010, %v8009
      %v8041 = vpack.c.b16 %v8012, %v8011
      %v8042 = vpack.c.b16 %v8014, %v8013
      %v8043 = vpack.c.b16 %v8016, %v8015
      %v8044 = vpack.c.b16 %v8018, %v8017
      %v8045 = vpack.c.b16 %v8020, %v8019
      %v8046 = vpack.c.b16 %v8022, %v8021
      %v8047 = vpack.c.b16 %v8024, %v8023
      %v8048 = vpack.c.b16 %v8026, %v8025
      %v8049 = vpack.c.b16 %v8028, %v8027
      %v8050 = vpack.c.b16 %v8030, %v8029
      %v8051 = vpack.c.b16 %v8032, %v8031
      %v8052 = vpack.c.b16 %v8034, %v8033
      %v8053 = vpack.c.b16 %v8036, %v8035
      %v8054 = vpack.c.b16 %v8038, %v8037
      %v8056 = vsel %vm815, %v7432, 0
      %v8059 = vsel %vm815, %v8039, 0
      %v8062 = vsel %vm815, %v8040, 0
      %v8065 = vsel %vm815, %v8041, 0
      %v8068 = vsel %vm815, %v8042, 0
      %v8071 = vsel %vm815, %v8043, 0
      %v8074 = vsel %vm815, %v8044, 0
      %v8077 = vsel %vm815, %v8045, 0
      %v8080 = vsel %vm815, %v8046, 0
      %v8083 = vsel %vm815, %v8047, 0
      %v8086 = vsel %vm815, %v8048, 0
      %v8089 = vsel %vm815, %v8049, 0
      %v8092 = vsel %vm815, %v8050, 0
      %v8095 = vsel %vm815, %v8051, 0
      %v8098 = vsel %vm815, %v8052, 0
      %v8101 = vsel %vm815, %v8053, 0
      %v8104 = vsel %vm815, %v8054, 0
      %8106 = vmatprep.subr.bf16.mxu0 0
      %8107 = vmatpush1.bf16.xpose.msra.mxu0 %v8059
      %8108 = vmatprep.subr.bf16.mxu0 0
      %8109 = vmatpush1.bf16.xpose.msra.mxu0 %v8062
      %8110 = vmatprep.subr.bf16.mxu0 0
      %8111 = vmatpush1.bf16.xpose.msra.mxu0 %v8065
      %8112 = vmatprep.subr.bf16.mxu0 0
      %8113 = vmatpush1.bf16.xpose.msra.mxu0 %v8068
      %8114 = vmatprep.subr.bf16.mxu0 0
      %8115 = vmatpush1.bf16.xpose.msra.mxu0 %v8071
      %8116 = vmatprep.subr.bf16.mxu0 0
      %8117 = vmatpush1.bf16.xpose.msra.mxu0 %v8074
      %8118 = vmatprep.subr.bf16.mxu0 0
      %8119 = vmatpush1.bf16.xpose.msra.mxu0 %v8077
      %8120 = vmatprep.subr.bf16.mxu0 0
      %8121 = vmatpush1.bf16.xpose.msra.mxu0 %v8080
      %8122 = vmatprep.subr.bf16.mxu0 0
      %8123 = vmatpush1.bf16.xpose.msra.mxu0 %v8083
      %8124 = vmatprep.subr.bf16.mxu0 0
      %8125 = vmatpush1.bf16.xpose.msra.mxu0 %v8086
      %8126 = vmatprep.subr.bf16.mxu0 0
      %8127 = vmatpush1.bf16.xpose.msra.mxu0 %v8089
      %8128 = vmatprep.subr.bf16.mxu0 0
      %8129 = vmatpush1.bf16.xpose.msra.mxu0 %v8092
      %8130 = vmatprep.subr.bf16.mxu0 0
      %8131 = vmatpush1.bf16.xpose.msra.mxu0 %v8095
      %8132 = vmatprep.subr.bf16.mxu0 0
      %8133 = vmatpush1.bf16.xpose.msra.mxu0 %v8098
      %8134 = vmatprep.subr.bf16.mxu0 0
      %8135 = vmatpush1.bf16.xpose.msra.mxu0 %v8101
      %8136 = vmatprep.subr.bf16.mxu0 0
      %8137 = vmatpush1.bf16.xpose.msra.mxu0 %v8104
      %8138 = vmatprep.mubr.bf16.mxu0 0
      %8139 = vmatmul.mubr.bf16.gmra.mrb[0].mxu0 %v8056
      %v8140 = vpop.f32.mrb[0].mxu0
      %v8141 = vadd.f32 %v7969, %v8140
      %v8142 = vpop.f32.mrb[0].mxu0
      %v8143 = vadd.f32 %v7971, %v8142
      %v8144 = vpop.f32.mrb[0].mxu0
      %v8145 = vpop.f32.mrb[0].mxu0
      %8146 = vdwg.mxu0
      %v8147 = vld [vmem:[#allocation3] sm:$0xe]
      %v8148 = vld [vmem:[#allocation3 + $0xc] sm:$0xe]
      %v8149 = vld [vmem:[#allocation3 + $0x18] sm:$0xe]
      %v8150 = vld [vmem:[#allocation3 + $0x24] sm:$0xe]
      %v8151 = vld [vmem:[#allocation3 + $0x30] sm:$0xe]
      %v8152 = vld [vmem:[#allocation3 + $0x3c] sm:$0xe]
      %v8153 = vld [vmem:[#allocation3 + $0x48] sm:$0xe]
      %v8154 = vld [vmem:[#allocation3 + $0x54] sm:$0xe]
      %v8155 = vld [vmem:[#allocation3 + $0x60] sm:$0xe]
      %v8156 = vld [vmem:[#allocation3 + $0x6c] sm:$0xe]
      %v8157 = vld [vmem:[#allocation3 + $0x78] sm:$0xe]
      %v8158 = vld [vmem:[#allocation3 + $0x84] sm:$0xe]
      %v8159 = vld [vmem:[#allocation3 + $0x90] sm:$0xe]
      %v8160 = vld [vmem:[#allocation3 + $0x9c] sm:$0xe]
      %v8161 = vld [vmem:[#allocation3 + $0xa8] sm:$0xe]
      %v8162 = vld [vmem:[#allocation3 + $0xb4] sm:$0xe]
      %v8195 = vrot.slane %v8147, 5
      %v8196 = vrot.slane %v8195, 4
      %v8197 = vrot.slane %v7401, 5
      %v8198 = vsel %vm2862, %v8196, %v8197
      %v8199 = vrot.slane %v8197, 4
      %v8200 = vrot.slane %v7433, 5
      %v8201 = vsel %vm2862, %v8199, %v8200
      %v8202 = vrot.slane %v8148, 5
      %v8203 = vrot.slane %v8202, 4
      %v8204 = vrot.slane %v7403, 5
      %v8205 = vsel %vm2862, %v8203, %v8204
      %v8206 = vrot.slane %v8204, 4
      %v8207 = vrot.slane %v7434, 5
      %v8208 = vsel %vm2862, %v8206, %v8207
      %v8209 = vrot.slane %v8149, 5
      %v8210 = vrot.slane %v8209, 4
      %v8211 = vrot.slane %v7405, 5
      %v8212 = vsel %vm2862, %v8210, %v8211
      %v8213 = vrot.slane %v8211, 4
      %v8214 = vrot.slane %v7435, 5
      %v8215 = vsel %vm2862, %v8213, %v8214
      %v8216 = vrot.slane %v8150, 5
      %v8217 = vrot.slane %v8216, 4
      %v8218 = vrot.slane %v7407, 5
      %v8219 = vsel %vm2862, %v8217, %v8218
      %v8220 = vrot.slane %v8218, 4
      %v8221 = vrot.slane %v7436, 5
      %v8222 = vsel %vm2862, %v8220, %v8221
      %v8223 = vrot.slane %v8151, 5
      %v8224 = vrot.slane %v8223, 4
      %v8225 = vrot.slane %v7409, 5
      %v8226 = vsel %vm2862, %v8224, %v8225
      %v8227 = vrot.slane %v8225, 4
      %v8228 = vrot.slane %v7437, 5
      %v8229 = vsel %vm2862, %v8227, %v8228
      %v8230 = vrot.slane %v8152, 5
      %v8231 = vrot.slane %v8230, 4
      %v8232 = vrot.slane %v7411, 5
      %v8233 = vsel %vm2862, %v8231, %v8232
      %v8234 = vrot.slane %v8232, 4
      %v8235 = vrot.slane %v7438, 5
      %v8236 = vsel %vm2862, %v8234, %v8235
      %v8237 = vrot.slane %v8153, 5
      %v8238 = vrot.slane %v8237, 4
      %v8239 = vrot.slane %v7413, 5
      %v8240 = vsel %vm2862, %v8238, %v8239
      %v8241 = vrot.slane %v8239, 4
      %v8242 = vrot.slane %v7439, 5
      %v8243 = vsel %vm2862, %v8241, %v8242
      %v8244 = vrot.slane %v8154, 5
      %v8245 = vrot.slane %v8244, 4
      %v8246 = vrot.slane %v7415, 5
      %v8247 = vsel %vm2862, %v8245, %v8246
      %v8248 = vrot.slane %v8246, 4
      %v8249 = vrot.slane %v7440, 5
      %v8250 = vsel %vm2862, %v8248, %v8249
      %v8251 = vrot.slane %v8155, 5
      %v8252 = vrot.slane %v8251, 4
      %v8253 = vrot.slane %v7417, 5
      %v8254 = vsel %vm2862, %v8252, %v8253
      %v8255 = vrot.slane %v8253, 4
      %v8256 = vrot.slane %v7441, 5
      %v8257 = vsel %vm2862, %v8255, %v8256
      %v8258 = vrot.slane %v8156, 5
      %v8259 = vrot.slane %v8258, 4
      %v8260 = vrot.slane %v7419, 5
      %v8261 = vsel %vm2862, %v8259, %v8260
      %v8262 = vrot.slane %v8260, 4
      %v8263 = vrot.slane %v7442, 5
      %v8264 = vsel %vm2862, %v8262, %v8263
      %v8265 = vrot.slane %v8157, 5
      %v8266 = vrot.slane %v8265, 4
      %v8267 = vrot.slane %v7421, 5
      %v8268 = vsel %vm2862, %v8266, %v8267
      %v8269 = vrot.slane %v8267, 4
      %v8270 = vrot.slane %v7443, 5
      %v8271 = vsel %vm2862, %v8269, %v8270
      %v8272 = vrot.slane %v8158, 5
      %v8273 = vrot.slane %v8272, 4
      %v8274 = vrot.slane %v7423, 5
      %v8275 = vsel %vm2862, %v8273, %v8274
      %v8276 = vrot.slane %v8274, 4
      %v8277 = vrot.slane %v7444, 5
      %v8278 = vsel %vm2862, %v8276, %v8277
      %v8279 = vrot.slane %v8159, 5
      %v8280 = vrot.slane %v8279, 4
      %v8281 = vrot.slane %v7425, 5
      %v8282 = vsel %vm2862, %v8280, %v8281
      %v8283 = vrot.slane %v8281, 4
      %v8284 = vrot.slane %v7445, 5
      %v8285 = vsel %vm2862, %v8283, %v8284
      %v8286 = vrot.slane %v8160, 5
      %v8287 = vrot.slane %v8286, 4
      %v8288 = vrot.slane %v7427, 5
      %v8289 = vsel %vm2862, %v8287, %v8288
      %v8290 = vrot.slane %v8288, 4
      %v8291 = vrot.slane %v7446, 5
      %v8292 = vsel %vm2862, %v8290, %v8291
      %v8293 = vrot.slane %v8161, 5
      %v8294 = vrot.slane %v8293, 4
      %v8295 = vrot.slane %v7429, 5
      %v8296 = vsel %vm2862, %v8294, %v8295
      %v8297 = vrot.slane %v8295, 4
      %v8298 = vrot.slane %v7447, 5
      %v8299 = vsel %vm2862, %v8297, %v8298
      %v8300 = vrot.slane %v8162, 5
      %v8301 = vrot.slane %v8300, 4
      %v8302 = vrot.slane %v7431, 5
      %v8303 = vsel %vm2862, %v8301, %v8302
      %v8304 = vrot.slane %v8302, 4
      %v8305 = vrot.slane %v7448, 5
      %v8306 = vsel %vm2862, %v8304, %v8305
      %s8307 = scalar_lea.vmem %s9, 8
      %v8308 = vld [vmem:[%s8307] sm:$0xf]
      %v8309 = vunpack.c.l.b16 %v8198
      %v8310 = vunpack.c.l.b16 %v8201
      %v8311 = vunpack.c.l.b16 %v8205
      %v8312 = vunpack.c.l.b16 %v8208
      %v8313 = vunpack.c.l.b16 %v8212
      %v8314 = vunpack.c.l.b16 %v8215
      %v8315 = vunpack.c.l.b16 %v8219
      %v8316 = vunpack.c.l.b16 %v8222
      %v8317 = vunpack.c.l.b16 %v8226
      %v8318 = vunpack.c.l.b16 %v8229
      %v8319 = vunpack.c.l.b16 %v8233
      %v8320 = vunpack.c.l.b16 %v8236
      %v8321 = vunpack.c.l.b16 %v8240
      %v8322 = vunpack.c.l.b16 %v8243
      %v8323 = vunpack.c.l.b16 %v8247
      %v8324 = vunpack.c.l.b16 %v8250
      %v8325 = vunpack.c.l.b16 %v8254
      %v8326 = vunpack.c.l.b16 %v8257
      %v8327 = vunpack.c.l.b16 %v8261
      %v8328 = vunpack.c.l.b16 %v8264
      %v8329 = vunpack.c.l.b16 %v8268
      %v8330 = vunpack.c.l.b16 %v8271
      %v8331 = vunpack.c.l.b16 %v8275
      %v8332 = vunpack.c.l.b16 %v8278
      %v8333 = vunpack.c.l.b16 %v8282
      %v8334 = vunpack.c.l.b16 %v8285
      %v8335 = vunpack.c.l.b16 %v8289
      %v8336 = vunpack.c.l.b16 %v8292
      %v8337 = vunpack.c.l.b16 %v8296
      %v8338 = vunpack.c.l.b16 %v8299
      %v8339 = vunpack.c.l.b16 %v8303
      %v8340 = vunpack.c.l.b16 %v8306
      %v8341 = vpack.c.b16 %v8310, %v8309
      %v8342 = vpack.c.b16 %v8312, %v8311
      %v8343 = vpack.c.b16 %v8314, %v8313
      %v8344 = vpack.c.b16 %v8316, %v8315
      %v8345 = vpack.c.b16 %v8318, %v8317
      %v8346 = vpack.c.b16 %v8320, %v8319
      %v8347 = vpack.c.b16 %v8322, %v8321
      %v8348 = vpack.c.b16 %v8324, %v8323
      %v8349 = vpack.c.b16 %v8326, %v8325
      %v8350 = vpack.c.b16 %v8328, %v8327
      %v8351 = vpack.c.b16 %v8330, %v8329
      %v8352 = vpack.c.b16 %v8332, %v8331
      %v8353 = vpack.c.b16 %v8334, %v8333
      %v8354 = vpack.c.b16 %v8336, %v8335
      %v8355 = vpack.c.b16 %v8338, %v8337
      %v8356 = vpack.c.b16 %v8340, %v8339
      %v8358 = vsel %vm815, %v8308, 0
      %v8361 = vsel %vm815, %v8341, 0
      %v8364 = vsel %vm815, %v8342, 0
      %v8367 = vsel %vm815, %v8343, 0
      %v8370 = vsel %vm815, %v8344, 0
      %v8373 = vsel %vm815, %v8345, 0
      %v8376 = vsel %vm815, %v8346, 0
      %v8379 = vsel %vm815, %v8347, 0
      %v8382 = vsel %vm815, %v8348, 0
      %v8385 = vsel %vm815, %v8349, 0
      %v8388 = vsel %vm815, %v8350, 0
      %v8391 = vsel %vm815, %v8351, 0
      %v8394 = vsel %vm815, %v8352, 0
      %v8397 = vsel %vm815, %v8353, 0
      %v8400 = vsel %vm815, %v8354, 0
      %v8403 = vsel %vm815, %v8355, 0
      %v8406 = vsel %vm815, %v8356, 0
      %8408 = vmatprep.subr.bf16.mxu0 0
      %8409 = vmatpush1.bf16.xpose.msra.mxu0 %v8361
      %8410 = vmatprep.subr.bf16.mxu0 0
      %8411 = vmatpush1.bf16.xpose.msra.mxu0 %v8364
      %8412 = vmatprep.subr.bf16.mxu0 0
      %8413 = vmatpush1.bf16.xpose.msra.mxu0 %v8367
      %8414 = vmatprep.subr.bf16.mxu0 0
      %8415 = vmatpush1.bf16.xpose.msra.mxu0 %v8370
      %8416 = vmatprep.subr.bf16.mxu0 0
      %8417 = vmatpush1.bf16.xpose.msra.mxu0 %v8373
      %8418 = vmatprep.subr.bf16.mxu0 0
      %8419 = vmatpush1.bf16.xpose.msra.mxu0 %v8376
      %8420 = vmatprep.subr.bf16.mxu0 0
      %8421 = vmatpush1.bf16.xpose.msra.mxu0 %v8379
      %8422 = vmatprep.subr.bf16.mxu0 0
      %8423 = vmatpush1.bf16.xpose.msra.mxu0 %v8382
      %8424 = vmatprep.subr.bf16.mxu0 0
      %8425 = vmatpush1.bf16.xpose.msra.mxu0 %v8385
      %8426 = vmatprep.subr.bf16.mxu0 0
      %8427 = vmatpush1.bf16.xpose.msra.mxu0 %v8388
      %8428 = vmatprep.subr.bf16.mxu0 0
      %8429 = vmatpush1.bf16.xpose.msra.mxu0 %v8391
      %8430 = vmatprep.subr.bf16.mxu0 0
      %8431 = vmatpush1.bf16.xpose.msra.mxu0 %v8394
      %8432 = vmatprep.subr.bf16.mxu0 0
      %8433 = vmatpush1.bf16.xpose.msra.mxu0 %v8397
      %8434 = vmatprep.subr.bf16.mxu0 0
      %8435 = vmatpush1.bf16.xpose.msra.mxu0 %v8400
      %8436 = vmatprep.subr.bf16.mxu0 0
      %8437 = vmatpush1.bf16.xpose.msra.mxu0 %v8403
      %8438 = vmatprep.subr.bf16.mxu0 0
      %8439 = vmatpush1.bf16.xpose.msra.mxu0 %v8406
      %8440 = vmatprep.mubr.bf16.mxu0 0
      %8441 = vmatmul.mubr.bf16.gmra.mrb[0].mxu0 %v8358
      %v8442 = vpop.f32.mrb[0].mxu0
      %v8443 = vadd.f32 0.0, %v8442
      %v8444 = vpop.f32.mrb[0].mxu0
      %v8445 = vadd.f32 0.0, %v8444
      %v8446 = vpop.f32.mrb[0].mxu0
      %v8447 = vpop.f32.mrb[0].mxu0
      %8448 = vdwg.mxu0
      %v8449 = vadd.f32 %v8141, %v8443
      %v8450 = vadd.f32 %v8143, %v8445
      %v8451 = vld [vmem:[%s7285] sm:$0xf]
      %v8452 = vld [vmem:[%s7285 + $0x4] sm:$0xf]
      %v8453 = vld [vmem:[%s7285 + $0xc] sm:$0xf]
      %v8454 = vld [vmem:[%s7285 + $0x10] sm:$0xf]
      %v8455 = vld [vmem:[%s7285 + $0x18] sm:$0xf]
      %v8456 = vld [vmem:[%s7285 + $0x1c] sm:$0xf]
      %v8457 = vld [vmem:[%s7285 + $0x24] sm:$0xf]
      %v8458 = vld [vmem:[%s7285 + $0x28] sm:$0xf]
      %v8459 = vld [vmem:[%s7285 + $0x30] sm:$0xf]
      %v8460 = vld [vmem:[%s7285 + $0x34] sm:$0xf]
      %v8461 = vld [vmem:[%s7285 + $0x3c] sm:$0xf]
      %v8462 = vld [vmem:[%s7285 + $0x40] sm:$0xf]
      %v8463 = vld [vmem:[%s7285 + $0x48] sm:$0xf]
      %v8464 = vld [vmem:[%s7285 + $0x4c] sm:$0xf]
      %v8465 = vld [vmem:[%s7285 + $0x54] sm:$0xf]
      %v8466 = vld [vmem:[%s7285 + $0x58] sm:$0xf]
      %v8467 = vld [vmem:[%s7285 + $0x60] sm:$0xf]
      %v8468 = vld [vmem:[%s7285 + $0x64] sm:$0xf]
      %v8469 = vld [vmem:[%s7285 + $0x6c] sm:$0xf]
      %v8470 = vld [vmem:[%s7285 + $0x70] sm:$0xf]
      %v8471 = vld [vmem:[%s7285 + $0x78] sm:$0xf]
      %v8472 = vld [vmem:[%s7285 + $0x7c] sm:$0xf]
      %v8473 = vld [vmem:[%s7285 + $0x84] sm:$0xf]
      %v8474 = vld [vmem:[%s7285 + $0x88] sm:$0xf]
      %v8475 = vld [vmem:[%s7285 + $0x90] sm:$0xf]
      %v8476 = vld [vmem:[%s7285 + $0x94] sm:$0xf]
      %v8477 = vld [vmem:[%s7285 + $0x9c] sm:$0xf]
      %v8478 = vld [vmem:[%s7285 + $0xa0] sm:$0xf]
      %v8479 = vld [vmem:[%s7285 + $0xa8] sm:$0xf]
      %v8480 = vld [vmem:[%s7285 + $0xac] sm:$0xf]
      %v8481 = vld [vmem:[%s7285 + $0xb4] sm:$0xf]
      %v8482 = vld [vmem:[%s7285 + $0xb8] sm:$0xf]
      %s8483 = scalar_lea.vmem %s9, 12
      %v8484 = vld [vmem:[%s8483] sm:$0xf]
      %v8517 = vunpack.c.l.b16 %v8451
      %v8518 = vunpack.c.l.b16 %v8452
      %v8519 = vunpack.c.l.b16 %v8453
      %v8520 = vunpack.c.l.b16 %v8454
      %v8521 = vunpack.c.l.b16 %v8455
      %v8522 = vunpack.c.l.b16 %v8456
      %v8523 = vunpack.c.l.b16 %v8457
      %v8524 = vunpack.c.l.b16 %v8458
      %v8525 = vunpack.c.l.b16 %v8459
      %v8526 = vunpack.c.l.b16 %v8460
      %v8527 = vunpack.c.l.b16 %v8461
      %v8528 = vunpack.c.l.b16 %v8462
      %v8529 = vunpack.c.l.b16 %v8463
      %v8530 = vunpack.c.l.b16 %v8464
      %v8531 = vunpack.c.l.b16 %v8465
      %v8532 = vunpack.c.l.b16 %v8466
      %v8533 = vunpack.c.l.b16 %v8467
      %v8534 = vunpack.c.l.b16 %v8468
      %v8535 = vunpack.c.l.b16 %v8469
      %v8536 = vunpack.c.l.b16 %v8470
      %v8537 = vunpack.c.l.b16 %v8471
      %v8538 = vunpack.c.l.b16 %v8472
      %v8539 = vunpack.c.l.b16 %v8473
      %v8540 = vunpack.c.l.b16 %v8474
      %v8541 = vunpack.c.l.b16 %v8475
      %v8542 = vunpack.c.l.b16 %v8476
      %v8543 = vunpack.c.l.b16 %v8477
      %v8544 = vunpack.c.l.b16 %v8478
      %v8545 = vunpack.c.l.b16 %v8479
      %v8546 = vunpack.c.l.b16 %v8480
      %v8547 = vunpack.c.l.b16 %v8481
      %v8548 = vunpack.c.l.b16 %v8482
      %v8549 = vpack.c.b16 %v8518, %v8517
      %v8550 = vpack.c.b16 %v8520, %v8519
      %v8551 = vpack.c.b16 %v8522, %v8521
      %v8552 = vpack.c.b16 %v8524, %v8523
      %v8553 = vpack.c.b16 %v8526, %v8525
      %v8554 = vpack.c.b16 %v8528, %v8527
      %v8555 = vpack.c.b16 %v8530, %v8529
      %v8556 = vpack.c.b16 %v8532, %v8531
      %v8557 = vpack.c.b16 %v8534, %v8533
      %v8558 = vpack.c.b16 %v8536, %v8535
      %v8559 = vpack.c.b16 %v8538, %v8537
      %v8560 = vpack.c.b16 %v8540, %v8539
      %v8561 = vpack.c.b16 %v8542, %v8541
      %v8562 = vpack.c.b16 %v8544, %v8543
      %v8563 = vpack.c.b16 %v8546, %v8545
      %v8564 = vpack.c.b16 %v8548, %v8547
      %v8566 = vsel %vm815, %v8484, 0
      %v8569 = vsel %vm815, %v8549, 0
      %v8572 = vsel %vm815, %v8550, 0
      %v8575 = vsel %vm815, %v8551, 0
      %v8578 = vsel %vm815, %v8552, 0
      %v8581 = vsel %vm815, %v8553, 0
      %v8584 = vsel %vm815, %v8554, 0
      %v8587 = vsel %vm815, %v8555, 0
      %v8590 = vsel %vm815, %v8556, 0
      %v8593 = vsel %vm815, %v8557, 0
      %v8596 = vsel %vm815, %v8558, 0
      %v8599 = vsel %vm815, %v8559, 0
      %v8602 = vsel %vm815, %v8560, 0
      %v8605 = vsel %vm815, %v8561, 0
      %v8608 = vsel %vm815, %v8562, 0
      %v8611 = vsel %vm815, %v8563, 0
      %v8614 = vsel %vm815, %v8564, 0
      %8616 = vmatprep.subr.bf16.mxu0 0
      %8617 = vmatpush1.bf16.xpose.msra.mxu0 %v8569
      %8618 = vmatprep.subr.bf16.mxu0 0
      %8619 = vmatpush1.bf16.xpose.msra.mxu0 %v8572
      %8620 = vmatprep.subr.bf16.mxu0 0
      %8621 = vmatpush1.bf16.xpose.msra.mxu0 %v8575
      %8622 = vmatprep.subr.bf16.mxu0 0
      %8623 = vmatpush1.bf16.xpose.msra.mxu0 %v8578
      %8624 = vmatprep.subr.bf16.mxu0 0
      %8625 = vmatpush1.bf16.xpose.msra.mxu0 %v8581
      %8626 = vmatprep.subr.bf16.mxu0 0
      %8627 = vmatpush1.bf16.xpose.msra.mxu0 %v8584
      %8628 = vmatprep.subr.bf16.mxu0 0
      %8629 = vmatpush1.bf16.xpose.msra.mxu0 %v8587
      %8630 = vmatprep.subr.bf16.mxu0 0
      %8631 = vmatpush1.bf16.xpose.msra.mxu0 %v8590
      %8632 = vmatprep.subr.bf16.mxu0 0
      %8633 = vmatpush1.bf16.xpose.msra.mxu0 %v8593
      %8634 = vmatprep.subr.bf16.mxu0 0
      %8635 = vmatpush1.bf16.xpose.msra.mxu0 %v8596
      %8636 = vmatprep.subr.bf16.mxu0 0
      %8637 = vmatpush1.bf16.xpose.msra.mxu0 %v8599
      %8638 = vmatprep.subr.bf16.mxu0 0
      %8639 = vmatpush1.bf16.xpose.msra.mxu0 %v8602
      %8640 = vmatprep.subr.bf16.mxu0 0
      %8641 = vmatpush1.bf16.xpose.msra.mxu0 %v8605
      %8642 = vmatprep.subr.bf16.mxu0 0
      %8643 = vmatpush1.bf16.xpose.msra.mxu0 %v8608
      %8644 = vmatprep.subr.bf16.mxu0 0
      %8645 = vmatpush1.bf16.xpose.msra.mxu0 %v8611
      %8646 = vmatprep.subr.bf16.mxu0 0
      %8647 = vmatpush1.bf16.xpose.msra.mxu0 %v8614
      %8648 = vmatprep.mubr.bf16.mxu0 0
      %8649 = vmatmul.mubr.bf16.gmra.mrb[0].mxu0 %v8566
      %v8650 = vpop.f32.mrb[0].mxu0
      %v8651 = vadd.f32 0.0, %v8650
      %v8652 = vpop.f32.mrb[0].mxu0
      %v8653 = vadd.f32 0.0, %v8652
      %v8654 = vpop.f32.mrb[0].mxu0
      %v8655 = vpop.f32.mrb[0].mxu0
      %8656 = vdwg.mxu0
      %v8657 = vadd.f32 %v8449, %v8651
      %v8658 = vadd.f32 %v8450, %v8653
      %v8659 = vld [vmem:[%s7285] sm:$0xf]
      %v8660 = vld [vmem:[%s7285 + $0x4] sm:$0xf]
      %v8661 = vld [vmem:[%s7285 + $0x8] sm:$0x1]
      %v8662 = vld [vmem:[%s7285 + $0xc] sm:$0xf]
      %v8663 = vld [vmem:[%s7285 + $0x10] sm:$0xf]
      %v8664 = vld [vmem:[%s7285 + $0x14] sm:$0x1]
      %v8665 = vld [vmem:[%s7285 + $0x18] sm:$0xf]
      %v8666 = vld [vmem:[%s7285 + $0x1c] sm:$0xf]
      %v8667 = vld [vmem:[%s7285 + $0x20] sm:$0x1]
      %v8668 = vld [vmem:[%s7285 + $0x24] sm:$0xf]
      %v8669 = vld [vmem:[%s7285 + $0x28] sm:$0xf]
      %v8670 = vld [vmem:[%s7285 + $0x2c] sm:$0x1]
      %v8671 = vld [vmem:[%s7285 + $0x30] sm:$0xf]
      %v8672 = vld [vmem:[%s7285 + $0x34] sm:$0xf]
      %v8673 = vld [vmem:[%s7285 + $0x38] sm:$0x1]
      %v8674 = vld [vmem:[%s7285 + $0x3c] sm:$0xf]
      %v8675 = vld [vmem:[%s7285 + $0x40] sm:$0xf]
      %v8676 = vld [vmem:[%s7285 + $0x44] sm:$0x1]
      %v8677 = vld [vmem:[%s7285 + $0x48] sm:$0xf]
      %v8678 = vld [vmem:[%s7285 + $0x4c] sm:$0xf]
      %v8679 = vld [vmem:[%s7285 + $0x50] sm:$0x1]
      %v8680 = vld [vmem:[%s7285 + $0x54] sm:$0xf]
      %v8681 = vld [vmem:[%s7285 + $0x58] sm:$0xf]
      %v8682 = vld [vmem:[%s7285 + $0x5c] sm:$0x1]
      %v8683 = vld [vmem:[%s7285 + $0x60] sm:$0xf]
      %v8684 = vld [vmem:[%s7285 + $0x64] sm:$0xf]
      %v8685 = vld [vmem:[%s7285 + $0x68] sm:$0x1]
      %v8686 = vld [vmem:[%s7285 + $0x6c] sm:$0xf]
      %v8687 = vld [vmem:[%s7285 + $0x70] sm:$0xf]
      %v8688 = vld [vmem:[%s7285 + $0x74] sm:$0x1]
      %v8689 = vld [vmem:[%s7285 + $0x78] sm:$0xf]
      %v8690 = vld [vmem:[%s7285 + $0x7c] sm:$0xf]
      %v8691 = vld [vmem:[%s7285 + $0x80] sm:$0x1]
      %v8692 = vld [vmem:[%s7285 + $0x84] sm:$0xf]
      %v8693 = vld [vmem:[%s7285 + $0x88] sm:$0xf]
      %v8694 = vld [vmem:[%s7285 + $0x8c] sm:$0x1]
      %v8695 = vld [vmem:[%s7285 + $0x90] sm:$0xf]
      %v8696 = vld [vmem:[%s7285 + $0x94] sm:$0xf]
      %v8697 = vld [vmem:[%s7285 + $0x98] sm:$0x1]
      %v8698 = vld [vmem:[%s7285 + $0x9c] sm:$0xf]
      %v8699 = vld [vmem:[%s7285 + $0xa0] sm:$0xf]
      %v8700 = vld [vmem:[%s7285 + $0xa4] sm:$0x1]
      %v8701 = vld [vmem:[%s7285 + $0xa8] sm:$0xf]
      %v8702 = vld [vmem:[%s7285 + $0xac] sm:$0xf]
      %v8703 = vld [vmem:[%s7285 + $0xb0] sm:$0x1]
      %v8704 = vld [vmem:[%s7285 + $0xb4] sm:$0xf]
      %v8705 = vld [vmem:[%s7285 + $0xb8] sm:$0xf]
      %v8706 = vld [vmem:[%s7285 + $0xbc] sm:$0x1]
      %v8708 = vshrl.u32 %v8659, 16
      %v8710 = vrot.slane %v8708, 4
      %v8711 = vshll.u32 %v8659, 16
      %v8713 = vrot.slane %v8711, 5
      %v8714 = vor.u32 %v8710, %v8713
      %v8715 = vrot.slane %v8714, 4
      %v8717 = vshll.u32 %v8660, 16
      %v8719 = vrot.slane %v8717, 5
      %v8720 = vsel %vm1866, %v8715, %v8719
      %v8721 = vshrl.u32 %v8660, 16
      %v8723 = vrot.slane %v8721, 4
      %v8724 = vor.u32 %v8723, %v8719
      %v8725 = vrot.slane %v8724, 4
      %v8727 = vshll.u32 %v8661, 16
      %v8729 = vrot.slane %v8727, 5
      %v8730 = vsel %vm1866, %v8725, %v8729
      %v8732 = vshrl.u32 %v8662, 16
      %v8734 = vrot.slane %v8732, 4
      %v8735 = vshll.u32 %v8662, 16
      %v8737 = vrot.slane %v8735, 5
      %v8738 = vor.u32 %v8734, %v8737
      %v8739 = vrot.slane %v8738, 4
      %v8741 = vshll.u32 %v8663, 16
      %v8743 = vrot.slane %v8741, 5
      %v8744 = vsel %vm1866, %v8739, %v8743
      %v8745 = vshrl.u32 %v8663, 16
      %v8747 = vrot.slane %v8745, 4
      %v8748 = vor.u32 %v8747, %v8743
      %v8749 = vrot.slane %v8748, 4
      %v8751 = vshll.u32 %v8664, 16
      %v8753 = vrot.slane %v8751, 5
      %v8754 = vsel %vm1866, %v8749, %v8753
      %v8756 = vshrl.u32 %v8665, 16
      %v8758 = vrot.slane %v8756, 4
      %v8759 = vshll.u32 %v8665, 16
      %v8761 = vrot.slane %v8759, 5
      %v8762 = vor.u32 %v8758, %v8761
      %v8763 = vrot.slane %v8762, 4
      %v8765 = vshll.u32 %v8666, 16
      %v8767 = vrot.slane %v8765, 5
      %v8768 = vsel %vm1866, %v8763, %v8767
      %v8769 = vshrl.u32 %v8666, 16
      %v8771 = vrot.slane %v8769, 4
      %v8772 = vor.u32 %v8771, %v8767
      %v8773 = vrot.slane %v8772, 4
      %v8775 = vshll.u32 %v8667, 16
      %v8777 = vrot.slane %v8775, 5
      %v8778 = vsel %vm1866, %v8773, %v8777
      %v8780 = vshrl.u32 %v8668, 16
      %v8782 = vrot.slane %v8780, 4
      %v8783 = vshll.u32 %v8668, 16
      %v8785 = vrot.slane %v8783, 5
      %v8786 = vor.u32 %v8782, %v8785
      %v8787 = vrot.slane %v8786, 4
      %v8789 = vshll.u32 %v8669, 16
      %v8791 = vrot.slane %v8789, 5
      %v8792 = vsel %vm1866, %v8787, %v8791
      %v8793 = vshrl.u32 %v8669, 16
      %v8795 = vrot.slane %v8793, 4
      %v8796 = vor.u32 %v8795, %v8791
      %v8797 = vrot.slane %v8796, 4
      %v8799 = vshll.u32 %v8670, 16
      %v8801 = vrot.slane %v8799, 5
      %v8802 = vsel %vm1866, %v8797, %v8801
      %v8804 = vshrl.u32 %v8671, 16
      %v8806 = vrot.slane %v8804, 4
      %v8807 = vshll.u32 %v8671, 16
      %v8809 = vrot.slane %v8807, 5
      %v8810 = vor.u32 %v8806, %v8809
      %v8811 = vrot.slane %v8810, 4
      %v8813 = vshll.u32 %v8672, 16
      %v8815 = vrot.slane %v8813, 5
      %v8816 = vsel %vm1866, %v8811, %v8815
      %v8817 = vshrl.u32 %v8672, 16
      %v8819 = vrot.slane %v8817, 4
      %v8820 = vor.u32 %v8819, %v8815
      %v8821 = vrot.slane %v8820, 4
      %v8823 = vshll.u32 %v8673, 16
      %v8825 = vrot.slane %v8823, 5
      %v8826 = vsel %vm1866, %v8821, %v8825
      %v8828 = vshrl.u32 %v8674, 16
      %v8830 = vrot.slane %v8828, 4
      %v8831 = vshll.u32 %v8674, 16
      %v8833 = vrot.slane %v8831, 5
      %v8834 = vor.u32 %v8830, %v8833
      %v8835 = vrot.slane %v8834, 4
      %v8837 = vshll.u32 %v8675, 16
      %v8839 = vrot.slane %v8837, 5
      %v8840 = vsel %vm1866, %v8835, %v8839
      %v8841 = vshrl.u32 %v8675, 16
      %v8843 = vrot.slane %v8841, 4
      %v8844 = vor.u32 %v8843, %v8839
      %v8845 = vrot.slane %v8844, 4
      %v8847 = vshll.u32 %v8676, 16
      %v8849 = vrot.slane %v8847, 5
      %v8850 = vsel %vm1866, %v8845, %v8849
      %v8852 = vshrl.u32 %v8677, 16
      %v8854 = vrot.slane %v8852, 4
      %v8855 = vshll.u32 %v8677, 16
      %v8857 = vrot.slane %v8855, 5
      %v8858 = vor.u32 %v8854, %v8857
      %v8859 = vrot.slane %v8858, 4
      %v8861 = vshll.u32 %v8678, 16
      %v8863 = vrot.slane %v8861, 5
      %v8864 = vsel %vm1866, %v8859, %v8863
      %v8865 = vshrl.u32 %v8678, 16
      %v8867 = vrot.slane %v8865, 4
      %v8868 = vor.u32 %v8867, %v8863
      %v8869 = vrot.slane %v8868, 4
      %v8871 = vshll.u32 %v8679, 16
      %v8873 = vrot.slane %v8871, 5
      %v8874 = vsel %vm1866, %v8869, %v8873
      %v8876 = vshrl.u32 %v8680, 16
      %v8878 = vrot.slane %v8876, 4
      %v8879 = vshll.u32 %v8680, 16
      %v8881 = vrot.slane %v8879, 5
      %v8882 = vor.u32 %v8878, %v8881
      %v8883 = vrot.slane %v8882, 4
      %v8885 = vshll.u32 %v8681, 16
      %v8887 = vrot.slane %v8885, 5
      %v8888 = vsel %vm1866, %v8883, %v8887
      %v8889 = vshrl.u32 %v8681, 16
      %v8891 = vrot.slane %v8889, 4
      %v8892 = vor.u32 %v8891, %v8887
      %v8893 = vrot.slane %v8892, 4
      %v8895 = vshll.u32 %v8682, 16
      %v8897 = vrot.slane %v8895, 5
      %v8898 = vsel %vm1866, %v8893, %v8897
      %v8900 = vshrl.u32 %v8683, 16
      %v8902 = vrot.slane %v8900, 4
      %v8903 = vshll.u32 %v8683, 16
      %v8905 = vrot.slane %v8903, 5
      %v8906 = vor.u32 %v8902, %v8905
      %v8907 = vrot.slane %v8906, 4
      %v8909 = vshll.u32 %v8684, 16
      %v8911 = vrot.slane %v8909, 5
      %v8912 = vsel %vm1866, %v8907, %v8911
      %v8913 = vshrl.u32 %v8684, 16
      %v8915 = vrot.slane %v8913, 4
      %v8916 = vor.u32 %v8915, %v8911
      %v8917 = vrot.slane %v8916, 4
      %v8919 = vshll.u32 %v8685, 16
      %v8921 = vrot.slane %v8919, 5
      %v8922 = vsel %vm1866, %v8917, %v8921
      %v8924 = vshrl.u32 %v8686, 16
      %v8926 = vrot.slane %v8924, 4
      %v8927 = vshll.u32 %v8686, 16
      %v8929 = vrot.slane %v8927, 5
      %v8930 = vor.u32 %v8926, %v8929
      %v8931 = vrot.slane %v8930, 4
      %v8933 = vshll.u32 %v8687, 16
      %v8935 = vrot.slane %v8933, 5
      %v8936 = vsel %vm1866, %v8931, %v8935
      %v8937 = vshrl.u32 %v8687, 16
      %v8939 = vrot.slane %v8937, 4
      %v8940 = vor.u32 %v8939, %v8935
      %v8941 = vrot.slane %v8940, 4
      %v8943 = vshll.u32 %v8688, 16
      %v8945 = vrot.slane %v8943, 5
      %v8946 = vsel %vm1866, %v8941, %v8945
      %v8948 = vshrl.u32 %v8689, 16
      %v8950 = vrot.slane %v8948, 4
      %v8951 = vshll.u32 %v8689, 16
      %v8953 = vrot.slane %v8951, 5
      %v8954 = vor.u32 %v8950, %v8953
      %v8955 = vrot.slane %v8954, 4
      %v8957 = vshll.u32 %v8690, 16
      %v8959 = vrot.slane %v8957, 5
      %v8960 = vsel %vm1866, %v8955, %v8959
      %v8961 = vshrl.u32 %v8690, 16
      %v8963 = vrot.slane %v8961, 4
      %v8964 = vor.u32 %v8963, %v8959
      %v8965 = vrot.slane %v8964, 4
      %v8967 = vshll.u32 %v8691, 16
      %v8969 = vrot.slane %v8967, 5
      %v8970 = vsel %vm1866, %v8965, %v8969
      %v8972 = vshrl.u32 %v8692, 16
      %v8974 = vrot.slane %v8972, 4
      %v8975 = vshll.u32 %v8692, 16
      %v8977 = vrot.slane %v8975, 5
      %v8978 = vor.u32 %v8974, %v8977
      %v8979 = vrot.slane %v8978, 4
      %v8981 = vshll.u32 %v8693, 16
      %v8983 = vrot.slane %v8981, 5
      %v8984 = vsel %vm1866, %v8979, %v8983
      %v8985 = vshrl.u32 %v8693, 16
      %v8987 = vrot.slane %v8985, 4
      %v8988 = vor.u32 %v8987, %v8983
      %v8989 = vrot.slane %v8988, 4
      %v8991 = vshll.u32 %v8694, 16
      %v8993 = vrot.slane %v8991, 5
      %v8994 = vsel %vm1866, %v8989, %v8993
      %v8996 = vshrl.u32 %v8695, 16
      %v8998 = vrot.slane %v8996, 4
      %v8999 = vshll.u32 %v8695, 16
      %v9001 = vrot.slane %v8999, 5
      %v9002 = vor.u32 %v8998, %v9001
      %v9003 = vrot.slane %v9002, 4
      %v9005 = vshll.u32 %v8696, 16
      %v9007 = vrot.slane %v9005, 5
      %v9008 = vsel %vm1866, %v9003, %v9007
      %v9009 = vshrl.u32 %v8696, 16
      %v9011 = vrot.slane %v9009, 4
      %v9012 = vor.u32 %v9011, %v9007
      %v9013 = vrot.slane %v9012, 4
      %v9015 = vshll.u32 %v8697, 16
      %v9017 = vrot.slane %v9015, 5
      %v9018 = vsel %vm1866, %v9013, %v9017
      %v9020 = vshrl.u32 %v8698, 16
      %v9022 = vrot.slane %v9020, 4
      %v9023 = vshll.u32 %v8698, 16
      %v9025 = vrot.slane %v9023, 5
      %v9026 = vor.u32 %v9022, %v9025
      %v9027 = vrot.slane %v9026, 4
      %v9029 = vshll.u32 %v8699, 16
      %v9031 = vrot.slane %v9029, 5
      %v9032 = vsel %vm1866, %v9027, %v9031
      %v9033 = vshrl.u32 %v8699, 16
      %v9035 = vrot.slane %v9033, 4
      %v9036 = vor.u32 %v9035, %v9031
      %v9037 = vrot.slane %v9036, 4
      %v9039 = vshll.u32 %v8700, 16
      %v9041 = vrot.slane %v9039, 5
      %v9042 = vsel %vm1866, %v9037, %v9041
      %v9044 = vshrl.u32 %v8701, 16
      %v9046 = vrot.slane %v9044, 4
      %v9047 = vshll.u32 %v8701, 16
      %v9049 = vrot.slane %v9047, 5
      %v9050 = vor.u32 %v9046, %v9049
      %v9051 = vrot.slane %v9050, 4
      %v9053 = vshll.u32 %v8702, 16
      %v9055 = vrot.slane %v9053, 5
      %v9056 = vsel %vm1866, %v9051, %v9055
      %v9057 = vshrl.u32 %v8702, 16
      %v9059 = vrot.slane %v9057, 4
      %v9060 = vor.u32 %v9059, %v9055
      %v9061 = vrot.slane %v9060, 4
      %v9063 = vshll.u32 %v8703, 16
      %v9065 = vrot.slane %v9063, 5
      %v9066 = vsel %vm1866, %v9061, %v9065
      %v9068 = vshrl.u32 %v8704, 16
      %v9070 = vrot.slane %v9068, 4
      %v9071 = vshll.u32 %v8704, 16
      %v9073 = vrot.slane %v9071, 5
      %v9074 = vor.u32 %v9070, %v9073
      %v9075 = vrot.slane %v9074, 4
      %v9077 = vshll.u32 %v8705, 16
      %v9079 = vrot.slane %v9077, 5
      %v9080 = vsel %vm1866, %v9075, %v9079
      %v9081 = vshrl.u32 %v8705, 16
      %v9083 = vrot.slane %v9081, 4
      %v9084 = vor.u32 %v9083, %v9079
      %v9085 = vrot.slane %v9084, 4
      %v9087 = vshll.u32 %v8706, 16
      %v9089 = vrot.slane %v9087, 5
      %v9090 = vsel %vm1866, %v9085, %v9089
      %s9091 = scalar_lea.vmem %s9, 16
      %v9092 = vld [vmem:[%s9091] sm:$0xf]
      %v9093 = vunpack.c.l.b16 %v8720
      %v9094 = vunpack.c.l.b16 %v8730
      %v9095 = vunpack.c.l.b16 %v8744
      %v9096 = vunpack.c.l.b16 %v8754
      %v9097 = vunpack.c.l.b16 %v8768
      %v9098 = vunpack.c.l.b16 %v8778
      %v9099 = vunpack.c.l.b16 %v8792
      %v9100 = vunpack.c.l.b16 %v8802
      %v9101 = vunpack.c.l.b16 %v8816
      %v9102 = vunpack.c.l.b16 %v8826
      %v9103 = vunpack.c.l.b16 %v8840
      %v9104 = vunpack.c.l.b16 %v8850
      %v9105 = vunpack.c.l.b16 %v8864
      %v9106 = vunpack.c.l.b16 %v8874
      %v9107 = vunpack.c.l.b16 %v8888
      %v9108 = vunpack.c.l.b16 %v8898
      %v9109 = vunpack.c.l.b16 %v8912
      %v9110 = vunpack.c.l.b16 %v8922
      %v9111 = vunpack.c.l.b16 %v8936
      %v9112 = vunpack.c.l.b16 %v8946
      %v9113 = vunpack.c.l.b16 %v8960
      %v9114 = vunpack.c.l.b16 %v8970
      %v9115 = vunpack.c.l.b16 %v8984
      %v9116 = vunpack.c.l.b16 %v8994
      %v9117 = vunpack.c.l.b16 %v9008
      %v9118 = vunpack.c.l.b16 %v9018
      %v9119 = vunpack.c.l.b16 %v9032
      %v9120 = vunpack.c.l.b16 %v9042
      %v9121 = vunpack.c.l.b16 %v9056
      %v9122 = vunpack.c.l.b16 %v9066
      %v9123 = vunpack.c.l.b16 %v9080
      %v9124 = vunpack.c.l.b16 %v9090
      %v9125 = vpack.c.b16 %v9094, %v9093
      %v9126 = vpack.c.b16 %v9096, %v9095
      %v9127 = vpack.c.b16 %v9098, %v9097
      %v9128 = vpack.c.b16 %v9100, %v9099
      %v9129 = vpack.c.b16 %v9102, %v9101
      %v9130 = vpack.c.b16 %v9104, %v9103
      %v9131 = vpack.c.b16 %v9106, %v9105
      %v9132 = vpack.c.b16 %v9108, %v9107
      %v9133 = vpack.c.b16 %v9110, %v9109
      %v9134 = vpack.c.b16 %v9112, %v9111
      %v9135 = vpack.c.b16 %v9114, %v9113
      %v9136 = vpack.c.b16 %v9116, %v9115
      %v9137 = vpack.c.b16 %v9118, %v9117
      %v9138 = vpack.c.b16 %v9120, %v9119
      %v9139 = vpack.c.b16 %v9122, %v9121
      %v9140 = vpack.c.b16 %v9124, %v9123
      %v9142 = vsel %vm815, %v9092, 0
      %v9145 = vsel %vm815, %v9125, 0
      %v9148 = vsel %vm815, %v9126, 0
      %v9151 = vsel %vm815, %v9127, 0
      %v9154 = vsel %vm815, %v9128, 0
      %v9157 = vsel %vm815, %v9129, 0
      %v9160 = vsel %vm815, %v9130, 0
      %v9163 = vsel %vm815, %v9131, 0
      %v9166 = vsel %vm815, %v9132, 0
      %v9169 = vsel %vm815, %v9133, 0
      %v9172 = vsel %vm815, %v9134, 0
      %v9175 = vsel %vm815, %v9135, 0
      %v9178 = vsel %vm815, %v9136, 0
      %v9181 = vsel %vm815, %v9137, 0
      %v9184 = vsel %vm815, %v9138, 0
      %v9187 = vsel %vm815, %v9139, 0
      %v9190 = vsel %vm815, %v9140, 0
      %9192 = vmatprep.subr.bf16.mxu0 0
      %9193 = vmatpush1.bf16.xpose.msra.mxu0 %v9145
      %9194 = vmatprep.subr.bf16.mxu0 0
      %9195 = vmatpush1.bf16.xpose.msra.mxu0 %v9148
      %9196 = vmatprep.subr.bf16.mxu0 0
      %9197 = vmatpush1.bf16.xpose.msra.mxu0 %v9151
      %9198 = vmatprep.subr.bf16.mxu0 0
      %9199 = vmatpush1.bf16.xpose.msra.mxu0 %v9154
      %9200 = vmatprep.subr.bf16.mxu0 0
      %9201 = vmatpush1.bf16.xpose.msra.mxu0 %v9157
      %9202 = vmatprep.subr.bf16.mxu0 0
      %9203 = vmatpush1.bf16.xpose.msra.mxu0 %v9160
      %9204 = vmatprep.subr.bf16.mxu0 0
      %9205 = vmatpush1.bf16.xpose.msra.mxu0 %v9163
      %9206 = vmatprep.subr.bf16.mxu0 0
      %9207 = vmatpush1.bf16.xpose.msra.mxu0 %v9166
      %9208 = vmatprep.subr.bf16.mxu0 0
      %9209 = vmatpush1.bf16.xpose.msra.mxu0 %v9169
      %9210 = vmatprep.subr.bf16.mxu0 0
      %9211 = vmatpush1.bf16.xpose.msra.mxu0 %v9172
      %9212 = vmatprep.subr.bf16.mxu0 0
      %9213 = vmatpush1.bf16.xpose.msra.mxu0 %v9175
      %9214 = vmatprep.subr.bf16.mxu0 0
      %9215 = vmatpush1.bf16.xpose.msra.mxu0 %v9178
      %9216 = vmatprep.subr.bf16.mxu0 0
      %9217 = vmatpush1.bf16.xpose.msra.mxu0 %v9181
      %9218 = vmatprep.subr.bf16.mxu0 0
      %9219 = vmatpush1.bf16.xpose.msra.mxu0 %v9184
      %9220 = vmatprep.subr.bf16.mxu0 0
      %9221 = vmatpush1.bf16.xpose.msra.mxu0 %v9187
      %9222 = vmatprep.subr.bf16.mxu0 0
      %9223 = vmatpush1.bf16.xpose.msra.mxu0 %v9190
      %9224 = vmatprep.mubr.bf16.mxu0 0
      %9225 = vmatmul.mubr.bf16.gmra.mrb[0].mxu0 %v9142
      %v9226 = vpop.f32.mrb[0].mxu0
      %v9227 = vadd.f32 0.0, %v9226
      %v9228 = vpop.f32.mrb[0].mxu0
      %v9229 = vadd.f32 0.0, %v9228
      %v9230 = vpop.f32.mrb[0].mxu0
      %v9231 = vpop.f32.mrb[0].mxu0
      %9232 = vdwg.mxu0
      %v9233 = vadd.f32 %v8657, %v9227
      %v9234 = vadd.f32 %v8658, %v9229
      %v9235 = vld [vmem:[%s7285] sm:$0xe]
      %v9236 = vld [vmem:[%s7285 + $0xc] sm:$0xe]
      %v9237 = vld [vmem:[%s7285 + $0x18] sm:$0xe]
      %v9238 = vld [vmem:[%s7285 + $0x24] sm:$0xe]
      %v9239 = vld [vmem:[%s7285 + $0x30] sm:$0xe]
      %v9240 = vld [vmem:[%s7285 + $0x3c] sm:$0xe]
      %v9241 = vld [vmem:[%s7285 + $0x48] sm:$0xe]
      %v9242 = vld [vmem:[%s7285 + $0x54] sm:$0xe]
      %v9243 = vld [vmem:[%s7285 + $0x60] sm:$0xe]
      %v9244 = vld [vmem:[%s7285 + $0x6c] sm:$0xe]
      %v9245 = vld [vmem:[%s7285 + $0x78] sm:$0xe]
      %v9246 = vld [vmem:[%s7285 + $0x84] sm:$0xe]
      %v9247 = vld [vmem:[%s7285 + $0x90] sm:$0xe]
      %v9248 = vld [vmem:[%s7285 + $0x9c] sm:$0xe]
      %v9249 = vld [vmem:[%s7285 + $0xa8] sm:$0xe]
      %v9250 = vld [vmem:[%s7285 + $0xb4] sm:$0xe]
      %v9299 = vrot.slane %v9235, 5
      %v9300 = vrot.slane %v9299, 4
      %v9301 = vrot.slane %v8660, 5
      %v9302 = vsel %vm2862, %v9300, %v9301
      %v9303 = vrot.slane %v9301, 4
      %v9304 = vrot.slane %v8661, 5
      %v9305 = vsel %vm2862, %v9303, %v9304
      %v9306 = vrot.slane %v9236, 5
      %v9307 = vrot.slane %v9306, 4
      %v9308 = vrot.slane %v8663, 5
      %v9309 = vsel %vm2862, %v9307, %v9308
      %v9310 = vrot.slane %v9308, 4
      %v9311 = vrot.slane %v8664, 5
      %v9312 = vsel %vm2862, %v9310, %v9311
      %v9313 = vrot.slane %v9237, 5
      %v9314 = vrot.slane %v9313, 4
      %v9315 = vrot.slane %v8666, 5
      %v9316 = vsel %vm2862, %v9314, %v9315
      %v9317 = vrot.slane %v9315, 4
      %v9318 = vrot.slane %v8667, 5
      %v9319 = vsel %vm2862, %v9317, %v9318
      %v9320 = vrot.slane %v9238, 5
      %v9321 = vrot.slane %v9320, 4
      %v9322 = vrot.slane %v8669, 5
      %v9323 = vsel %vm2862, %v9321, %v9322
      %v9324 = vrot.slane %v9322, 4
      %v9325 = vrot.slane %v8670, 5
      %v9326 = vsel %vm2862, %v9324, %v9325
      %v9327 = vrot.slane %v9239, 5
      %v9328 = vrot.slane %v9327, 4
      %v9329 = vrot.slane %v8672, 5
      %v9330 = vsel %vm2862, %v9328, %v9329
      %v9331 = vrot.slane %v9329, 4
      %v9332 = vrot.slane %v8673, 5
      %v9333 = vsel %vm2862, %v9331, %v9332
      %v9334 = vrot.slane %v9240, 5
      %v9335 = vrot.slane %v9334, 4
      %v9336 = vrot.slane %v8675, 5
      %v9337 = vsel %vm2862, %v9335, %v9336
      %v9338 = vrot.slane %v9336, 4
      %v9339 = vrot.slane %v8676, 5
      %v9340 = vsel %vm2862, %v9338, %v9339
      %v9341 = vrot.slane %v9241, 5
      %v9342 = vrot.slane %v9341, 4
      %v9343 = vrot.slane %v8678, 5
      %v9344 = vsel %vm2862, %v9342, %v9343
      %v9345 = vrot.slane %v9343, 4
      %v9346 = vrot.slane %v8679, 5
      %v9347 = vsel %vm2862, %v9345, %v9346
      %v9348 = vrot.slane %v9242, 5
      %v9349 = vrot.slane %v9348, 4
      %v9350 = vrot.slane %v8681, 5
      %v9351 = vsel %vm2862, %v9349, %v9350
      %v9352 = vrot.slane %v9350, 4
      %v9353 = vrot.slane %v8682, 5
      %v9354 = vsel %vm2862, %v9352, %v9353
      %v9355 = vrot.slane %v9243, 5
      %v9356 = vrot.slane %v9355, 4
      %v9357 = vrot.slane %v8684, 5
      %v9358 = vsel %vm2862, %v9356, %v9357
      %v9359 = vrot.slane %v9357, 4
      %v9360 = vrot.slane %v8685, 5
      %v9361 = vsel %vm2862, %v9359, %v9360
      %v9362 = vrot.slane %v9244, 5
      %v9363 = vrot.slane %v9362, 4
      %v9364 = vrot.slane %v8687, 5
      %v9365 = vsel %vm2862, %v9363, %v9364
      %v9366 = vrot.slane %v9364, 4
      %v9367 = vrot.slane %v8688, 5
      %v9368 = vsel %vm2862, %v9366, %v9367
      %v9369 = vrot.slane %v9245, 5
      %v9370 = vrot.slane %v9369, 4
      %v9371 = vrot.slane %v8690, 5
      %v9372 = vsel %vm2862, %v9370, %v9371
      %v9373 = vrot.slane %v9371, 4
      %v9374 = vrot.slane %v8691, 5
      %v9375 = vsel %vm2862, %v9373, %v9374
      %v9376 = vrot.slane %v9246, 5
      %v9377 = vrot.slane %v9376, 4
      %v9378 = vrot.slane %v8693, 5
      %v9379 = vsel %vm2862, %v9377, %v9378
      %v9380 = vrot.slane %v9378, 4
      %v9381 = vrot.slane %v8694, 5
      %v9382 = vsel %vm2862, %v9380, %v9381
      %v9383 = vrot.slane %v9247, 5
      %v9384 = vrot.slane %v9383, 4
      %v9385 = vrot.slane %v8696, 5
      %v9386 = vsel %vm2862, %v9384, %v9385
      %v9387 = vrot.slane %v9385, 4
      %v9388 = vrot.slane %v8697, 5
      %v9389 = vsel %vm2862, %v9387, %v9388
      %v9390 = vrot.slane %v9248, 5
      %v9391 = vrot.slane %v9390, 4
      %v9392 = vrot.slane %v8699, 5
      %v9393 = vsel %vm2862, %v9391, %v9392
      %v9394 = vrot.slane %v9392, 4
      %v9395 = vrot.slane %v8700, 5
      %v9396 = vsel %vm2862, %v9394, %v9395
      %v9397 = vrot.slane %v9249, 5
      %v9398 = vrot.slane %v9397, 4
      %v9399 = vrot.slane %v8702, 5
      %v9400 = vsel %vm2862, %v9398, %v9399
      %v9401 = vrot.slane %v9399, 4
      %v9402 = vrot.slane %v8703, 5
      %v9403 = vsel %vm2862, %v9401, %v9402
      %v9404 = vrot.slane %v9250, 5
      %v9405 = vrot.slane %v9404, 4
      %v9406 = vrot.slane %v8705, 5
      %v9407 = vsel %vm2862, %v9405, %v9406
      %v9408 = vrot.slane %v9406, 4
      %v9409 = vrot.slane %v8706, 5
      %v9410 = vsel %vm2862, %v9408, %v9409
      %s9411 = scalar_lea.vmem %s9, 20
      %v9412 = vld [vmem:[%s9411] sm:$0xf]
      %v9413 = vunpack.c.l.b16 %v9302
      %v9414 = vunpack.c.l.b16 %v9305
      %v9415 = vunpack.c.l.b16 %v9309
      %v9416 = vunpack.c.l.b16 %v9312
      %v9417 = vunpack.c.l.b16 %v9316
      %v9418 = vunpack.c.l.b16 %v9319
      %v9419 = vunpack.c.l.b16 %v9323
      %v9420 = vunpack.c.l.b16 %v9326
      %v9421 = vunpack.c.l.b16 %v9330
      %v9422 = vunpack.c.l.b16 %v9333
      %v9423 = vunpack.c.l.b16 %v9337
      %v9424 = vunpack.c.l.b16 %v9340
      %v9425 = vunpack.c.l.b16 %v9344
      %v9426 = vunpack.c.l.b16 %v9347
      %v9427 = vunpack.c.l.b16 %v9351
      %v9428 = vunpack.c.l.b16 %v9354
      %v9429 = vunpack.c.l.b16 %v9358
      %v9430 = vunpack.c.l.b16 %v9361
      %v9431 = vunpack.c.l.b16 %v9365
      %v9432 = vunpack.c.l.b16 %v9368
      %v9433 = vunpack.c.l.b16 %v9372
      %v9434 = vunpack.c.l.b16 %v9375
      %v9435 = vunpack.c.l.b16 %v9379
      %v9436 = vunpack.c.l.b16 %v9382
      %v9437 = vunpack.c.l.b16 %v9386
      %v9438 = vunpack.c.l.b16 %v9389
      %v9439 = vunpack.c.l.b16 %v9393
      %v9440 = vunpack.c.l.b16 %v9396
      %v9441 = vunpack.c.l.b16 %v9400
      %v9442 = vunpack.c.l.b16 %v9403
      %v9443 = vunpack.c.l.b16 %v9407
      %v9444 = vunpack.c.l.b16 %v9410
      %v9445 = vpack.c.b16 %v9414, %v9413
      %v9446 = vpack.c.b16 %v9416, %v9415
      %v9447 = vpack.c.b16 %v9418, %v9417
      %v9448 = vpack.c.b16 %v9420, %v9419
      %v9449 = vpack.c.b16 %v9422, %v9421
      %v9450 = vpack.c.b16 %v9424, %v9423
      %v9451 = vpack.c.b16 %v9426, %v9425
      %v9452 = vpack.c.b16 %v9428, %v9427
      %v9453 = vpack.c.b16 %v9430, %v9429
      %v9454 = vpack.c.b16 %v9432, %v9431
      %v9455 = vpack.c.b16 %v9434, %v9433
      %v9456 = vpack.c.b16 %v9436, %v9435
      %v9457 = vpack.c.b16 %v9438, %v9437
      %v9458 = vpack.c.b16 %v9440, %v9439
      %v9459 = vpack.c.b16 %v9442, %v9441
      %v9460 = vpack.c.b16 %v9444, %v9443
      %v9462 = vsel %vm815, %v9412, 0
      %v9465 = vsel %vm815, %v9445, 0
      %v9468 = vsel %vm815, %v9446, 0
      %v9471 = vsel %vm815, %v9447, 0
      %v9474 = vsel %vm815, %v9448, 0
      %v9477 = vsel %vm815, %v9449, 0
      %v9480 = vsel %vm815, %v9450, 0
      %v9483 = vsel %vm815, %v9451, 0
      %v9486 = vsel %vm815, %v9452, 0
      %v9489 = vsel %vm815, %v9453, 0
      %v9492 = vsel %vm815, %v9454, 0
      %v9495 = vsel %vm815, %v9455, 0
      %v9498 = vsel %vm815, %v9456, 0
      %v9501 = vsel %vm815, %v9457, 0
      %v9504 = vsel %vm815, %v9458, 0
      %v9507 = vsel %vm815, %v9459, 0
      %v9510 = vsel %vm815, %v9460, 0
      %9512 = vmatprep.subr.bf16.mxu0 0
      %9513 = vmatpush1.bf16.xpose.msra.mxu0 %v9465
      %9514 = vmatprep.subr.bf16.mxu0 0
      %9515 = vmatpush1.bf16.xpose.msra.mxu0 %v9468
      %9516 = vmatprep.subr.bf16.mxu0 0
      %9517 = vmatpush1.bf16.xpose.msra.mxu0 %v9471
      %9518 = vmatprep.subr.bf16.mxu0 0
      %9519 = vmatpush1.bf16.xpose.msra.mxu0 %v9474
      %9520 = vmatprep.subr.bf16.mxu0 0
      %9521 = vmatpush1.bf16.xpose.msra.mxu0 %v9477
      %9522 = vmatprep.subr.bf16.mxu0 0
      %9523 = vmatpush1.bf16.xpose.msra.mxu0 %v9480
      %9524 = vmatprep.subr.bf16.mxu0 0
      %9525 = vmatpush1.bf16.xpose.msra.mxu0 %v9483
      %9526 = vmatprep.subr.bf16.mxu0 0
      %9527 = vmatpush1.bf16.xpose.msra.mxu0 %v9486
      %9528 = vmatprep.subr.bf16.mxu0 0
      %9529 = vmatpush1.bf16.xpose.msra.mxu0 %v9489
      %9530 = vmatprep.subr.bf16.mxu0 0
      %9531 = vmatpush1.bf16.xpose.msra.mxu0 %v9492
      %9532 = vmatprep.subr.bf16.mxu0 0
      %9533 = vmatpush1.bf16.xpose.msra.mxu0 %v9495
      %9534 = vmatprep.subr.bf16.mxu0 0
      %9535 = vmatpush1.bf16.xpose.msra.mxu0 %v9498
      %9536 = vmatprep.subr.bf16.mxu0 0
      %9537 = vmatpush1.bf16.xpose.msra.mxu0 %v9501
      %9538 = vmatprep.subr.bf16.mxu0 0
      %9539 = vmatpush1.bf16.xpose.msra.mxu0 %v9504
      %9540 = vmatprep.subr.bf16.mxu0 0
      %9541 = vmatpush1.bf16.xpose.msra.mxu0 %v9507
      %9542 = vmatprep.subr.bf16.mxu0 0
      %9543 = vmatpush1.bf16.xpose.msra.mxu0 %v9510
      %9544 = vmatprep.mubr.bf16.mxu0 0
      %9545 = vmatmul.mubr.bf16.gmra.mrb[0].mxu0 %v9462
      %v9546 = vpop.f32.mrb[0].mxu0
      %v9547 = vadd.f32 0.0, %v9546
      %v9548 = vpop.f32.mrb[0].mxu0
      %v9549 = vadd.f32 0.0, %v9548
      %v9550 = vpop.f32.mrb[0].mxu0
      %v9551 = vpop.f32.mrb[0].mxu0
      %9552 = vdwg.mxu0
      %v9553 = vadd.f32 %v9233, %v9547
      %v9554 = vadd.f32 %v9234, %v9549
      %s9555 = scalar_lea.vmem [#allocation3], 24
      %v9556 = vld [vmem:[%s9555] sm:$0xf]
      %v9557 = vld [vmem:[%s9555 + $0x4] sm:$0xf]
      %v9558 = vld [vmem:[%s9555 + $0xc] sm:$0xf]
      %v9559 = vld [vmem:[%s9555 + $0x10] sm:$0xf]
      %v9560 = vld [vmem:[%s9555 + $0x18] sm:$0xf]
      %v9561 = vld [vmem:[%s9555 + $0x1c] sm:$0xf]
      %v9562 = vld [vmem:[%s9555 + $0x24] sm:$0xf]
      %v9563 = vld [vmem:[%s9555 + $0x28] sm:$0xf]
      %v9564 = vld [vmem:[%s9555 + $0x30] sm:$0xf]
      %v9565 = vld [vmem:[%s9555 + $0x34] sm:$0xf]
      %v9566 = vld [vmem:[%s9555 + $0x3c] sm:$0xf]
      %v9567 = vld [vmem:[%s9555 + $0x40] sm:$0xf]
      %v9568 = vld [vmem:[%s9555 + $0x48] sm:$0xf]
      %v9569 = vld [vmem:[%s9555 + $0x4c] sm:$0xf]
      %v9570 = vld [vmem:[%s9555 + $0x54] sm:$0xf]
      %v9571 = vld [vmem:[%s9555 + $0x58] sm:$0xf]
      %v9572 = vld [vmem:[%s9555 + $0x60] sm:$0xf]
      %v9573 = vld [vmem:[%s9555 + $0x64] sm:$0xf]
      %v9574 = vld [vmem:[%s9555 + $0x6c] sm:$0xf]
      %v9575 = vld [vmem:[%s9555 + $0x70] sm:$0xf]
      %v9576 = vld [vmem:[%s9555 + $0x78] sm:$0xf]
      %v9577 = vld [vmem:[%s9555 + $0x7c] sm:$0xf]
      %v9578 = vld [vmem:[%s9555 + $0x84] sm:$0xf]
      %v9579 = vld [vmem:[%s9555 + $0x88] sm:$0xf]
      %v9580 = vld [vmem:[%s9555 + $0x90] sm:$0xf]
      %v9581 = vld [vmem:[%s9555 + $0x94] sm:$0xf]
      %v9582 = vld [vmem:[%s9555 + $0x9c] sm:$0xf]
      %v9583 = vld [vmem:[%s9555 + $0xa0] sm:$0xf]
      %v9584 = vld [vmem:[%s9555 + $0xa8] sm:$0xf]
      %v9585 = vld [vmem:[%s9555 + $0xac] sm:$0xf]
      %v9586 = vld [vmem:[%s9555 + $0xb4] sm:$0xf]
      %v9587 = vld [vmem:[%s9555 + $0xb8] sm:$0xf]
      %s9588 = scalar_lea.vmem %s9, 24
      %v9589 = vld [vmem:[%s9588] sm:$0xf]
      %v9622 = vunpack.c.l.b16 %v9556
      %v9623 = vunpack.c.l.b16 %v9557
      %v9624 = vunpack.c.l.b16 %v9558
      %v9625 = vunpack.c.l.b16 %v9559
      %v9626 = vunpack.c.l.b16 %v9560
      %v9627 = vunpack.c.l.b16 %v9561
      %v9628 = vunpack.c.l.b16 %v9562
      %v9629 = vunpack.c.l.b16 %v9563
      %v9630 = vunpack.c.l.b16 %v9564
      %v9631 = vunpack.c.l.b16 %v9565
      %v9632 = vunpack.c.l.b16 %v9566
      %v9633 = vunpack.c.l.b16 %v9567
      %v9634 = vunpack.c.l.b16 %v9568
      %v9635 = vunpack.c.l.b16 %v9569
      %v9636 = vunpack.c.l.b16 %v9570
      %v9637 = vunpack.c.l.b16 %v9571
      %v9638 = vunpack.c.l.b16 %v9572
      %v9639 = vunpack.c.l.b16 %v9573
      %v9640 = vunpack.c.l.b16 %v9574
      %v9641 = vunpack.c.l.b16 %v9575
      %v9642 = vunpack.c.l.b16 %v9576
      %v9643 = vunpack.c.l.b16 %v9577
      %v9644 = vunpack.c.l.b16 %v9578
      %v9645 = vunpack.c.l.b16 %v9579
      %v9646 = vunpack.c.l.b16 %v9580
      %v9647 = vunpack.c.l.b16 %v9581
      %v9648 = vunpack.c.l.b16 %v9582
      %v9649 = vunpack.c.l.b16 %v9583
      %v9650 = vunpack.c.l.b16 %v9584
      %v9651 = vunpack.c.l.b16 %v9585
      %v9652 = vunpack.c.l.b16 %v9586
      %v9653 = vunpack.c.l.b16 %v9587
      %v9654 = vpack.c.b16 %v9623, %v9622
      %v9655 = vpack.c.b16 %v9625, %v9624
      %v9656 = vpack.c.b16 %v9627, %v9626
      %v9657 = vpack.c.b16 %v9629, %v9628
      %v9658 = vpack.c.b16 %v9631, %v9630
      %v9659 = vpack.c.b16 %v9633, %v9632
      %v9660 = vpack.c.b16 %v9635, %v9634
      %v9661 = vpack.c.b16 %v9637, %v9636
      %v9662 = vpack.c.b16 %v9639, %v9638
      %v9663 = vpack.c.b16 %v9641, %v9640
      %v9664 = vpack.c.b16 %v9643, %v9642
      %v9665 = vpack.c.b16 %v9645, %v9644
      %v9666 = vpack.c.b16 %v9647, %v9646
      %v9667 = vpack.c.b16 %v9649, %v9648
      %v9668 = vpack.c.b16 %v9651, %v9650
      %v9669 = vpack.c.b16 %v9653, %v9652
      %v9671 = vsel %vm815, %v9589, 0
      %v9674 = vsel %vm815, %v9654, 0
      %v9677 = vsel %vm815, %v9655, 0
      %v9680 = vsel %vm815, %v9656, 0
      %v9683 = vsel %vm815, %v9657, 0
      %v9686 = vsel %vm815, %v9658, 0
      %v9689 = vsel %vm815, %v9659, 0
      %v9692 = vsel %vm815, %v9660, 0
      %v9695 = vsel %vm815, %v9661, 0
      %v9698 = vsel %vm815, %v9662, 0
      %v9701 = vsel %vm815, %v9663, 0
      %v9704 = vsel %vm815, %v9664, 0
      %v9707 = vsel %vm815, %v9665, 0
      %v9710 = vsel %vm815, %v9666, 0
      %v9713 = vsel %vm815, %v9667, 0
      %v9716 = vsel %vm815, %v9668, 0
      %v9719 = vsel %vm815, %v9669, 0
      %9721 = vmatprep.subr.bf16.mxu0 0
      %9722 = vmatpush1.bf16.xpose.msra.mxu0 %v9674
      %9723 = vmatprep.subr.bf16.mxu0 0
      %9724 = vmatpush1.bf16.xpose.msra.mxu0 %v9677
      %9725 = vmatprep.subr.bf16.mxu0 0
      %9726 = vmatpush1.bf16.xpose.msra.mxu0 %v9680
      %9727 = vmatprep.subr.bf16.mxu0 0
      %9728 = vmatpush1.bf16.xpose.msra.mxu0 %v9683
      %9729 = vmatprep.subr.bf16.mxu0 0
      %9730 = vmatpush1.bf16.xpose.msra.mxu0 %v9686
      %9731 = vmatprep.subr.bf16.mxu0 0
      %9732 = vmatpush1.bf16.xpose.msra.mxu0 %v9689
      %9733 = vmatprep.subr.bf16.mxu0 0
      %9734 = vmatpush1.bf16.xpose.msra.mxu0 %v9692
      %9735 = vmatprep.subr.bf16.mxu0 0
      %9736 = vmatpush1.bf16.xpose.msra.mxu0 %v9695
      %9737 = vmatprep.subr.bf16.mxu0 0
      %9738 = vmatpush1.bf16.xpose.msra.mxu0 %v9698
      %9739 = vmatprep.subr.bf16.mxu0 0
      %9740 = vmatpush1.bf16.xpose.msra.mxu0 %v9701
      %9741 = vmatprep.subr.bf16.mxu0 0
      %9742 = vmatpush1.bf16.xpose.msra.mxu0 %v9704
      %9743 = vmatprep.subr.bf16.mxu0 0
      %9744 = vmatpush1.bf16.xpose.msra.mxu0 %v9707
      %9745 = vmatprep.subr.bf16.mxu0 0
      %9746 = vmatpush1.bf16.xpose.msra.mxu0 %v9710
      %9747 = vmatprep.subr.bf16.mxu0 0
      %9748 = vmatpush1.bf16.xpose.msra.mxu0 %v9713
      %9749 = vmatprep.subr.bf16.mxu0 0
      %9750 = vmatpush1.bf16.xpose.msra.mxu0 %v9716
      %9751 = vmatprep.subr.bf16.mxu0 0
      %9752 = vmatpush1.bf16.xpose.msra.mxu0 %v9719
      %9753 = vmatprep.mubr.bf16.mxu0 0
      %9754 = vmatmul.mubr.bf16.gmra.mrb[0].mxu0 %v9671
      %v9755 = vpop.f32.mrb[0].mxu0
      %v9756 = vadd.f32 0.0, %v9755
      %v9757 = vpop.f32.mrb[0].mxu0
      %v9758 = vadd.f32 0.0, %v9757
      %v9759 = vpop.f32.mrb[0].mxu0
      %v9760 = vpop.f32.mrb[0].mxu0
      %9761 = vdwg.mxu0
      %v9762 = vadd.f32 %v9553, %v9756
      %v9763 = vadd.f32 %v9554, %v9758
      %v9764 = vld [vmem:[%s9555] sm:$0xf]
      %v9765 = vld [vmem:[%s9555 + $0x4] sm:$0xf]
      %v9766 = vld [vmem:[%s9555 + $0x8] sm:$0x1]
      %v9767 = vld [vmem:[%s9555 + $0xc] sm:$0xf]
      %v9768 = vld [vmem:[%s9555 + $0x10] sm:$0xf]
      %v9769 = vld [vmem:[%s9555 + $0x14] sm:$0x1]
      %v9770 = vld [vmem:[%s9555 + $0x18] sm:$0xf]
      %v9771 = vld [vmem:[%s9555 + $0x1c] sm:$0xf]
      %v9772 = vld [vmem:[%s9555 + $0x20] sm:$0x1]
      %v9773 = vld [vmem:[%s9555 + $0x24] sm:$0xf]
      %v9774 = vld [vmem:[%s9555 + $0x28] sm:$0xf]
      %v9775 = vld [vmem:[%s9555 + $0x2c] sm:$0x1]
      %v9776 = vld [vmem:[%s9555 + $0x30] sm:$0xf]
      %v9777 = vld [vmem:[%s9555 + $0x34] sm:$0xf]
      %v9778 = vld [vmem:[%s9555 + $0x38] sm:$0x1]
      %v9779 = vld [vmem:[%s9555 + $0x3c] sm:$0xf]
      %v9780 = vld [vmem:[%s9555 + $0x40] sm:$0xf]
      %v9781 = vld [vmem:[%s9555 + $0x44] sm:$0x1]
      %v9782 = vld [vmem:[%s9555 + $0x48] sm:$0xf]
      %v9783 = vld [vmem:[%s9555 + $0x4c] sm:$0xf]
      %v9784 = vld [vmem:[%s9555 + $0x50] sm:$0x1]
      %v9785 = vld [vmem:[%s9555 + $0x54] sm:$0xf]
      %v9786 = vld [vmem:[%s9555 + $0x58] sm:$0xf]
      %v9787 = vld [vmem:[%s9555 + $0x5c] sm:$0x1]
      %v9788 = vld [vmem:[%s9555 + $0x60] sm:$0xf]
      %v9789 = vld [vmem:[%s9555 + $0x64] sm:$0xf]
      %v9790 = vld [vmem:[%s9555 + $0x68] sm:$0x1]
      %v9791 = vld [vmem:[%s9555 + $0x6c] sm:$0xf]
      %v9792 = vld [vmem:[%s9555 + $0x70] sm:$0xf]
      %v9793 = vld [vmem:[%s9555 + $0x74] sm:$0x1]
      %v9794 = vld [vmem:[%s9555 + $0x78] sm:$0xf]
      %v9795 = vld [vmem:[%s9555 + $0x7c] sm:$0xf]
      %v9796 = vld [vmem:[%s9555 + $0x80] sm:$0x1]
      %v9797 = vld [vmem:[%s9555 + $0x84] sm:$0xf]
      %v9798 = vld [vmem:[%s9555 + $0x88] sm:$0xf]
      %v9799 = vld [vmem:[%s9555 + $0x8c] sm:$0x1]
      %v9800 = vld [vmem:[%s9555 + $0x90] sm:$0xf]
      %v9801 = vld [vmem:[%s9555 + $0x94] sm:$0xf]
      %v9802 = vld [vmem:[%s9555 + $0x98] sm:$0x1]
      %v9803 = vld [vmem:[%s9555 + $0x9c] sm:$0xf]
      %v9804 = vld [vmem:[%s9555 + $0xa0] sm:$0xf]
      %v9805 = vld [vmem:[%s9555 + $0xa4] sm:$0x1]
      %v9806 = vld [vmem:[%s9555 + $0xa8] sm:$0xf]
      %v9807 = vld [vmem:[%s9555 + $0xac] sm:$0xf]
      %v9808 = vld [vmem:[%s9555 + $0xb0] sm:$0x1]
      %v9809 = vld [vmem:[%s9555 + $0xb4] sm:$0xf]
      %v9810 = vld [vmem:[%s9555 + $0xb8] sm:$0xf]
      %v9811 = vld [vmem:[%s9555 + $0xbc] sm:$0x1]
      %v9813 = vshrl.u32 %v9764, 16
      %v9815 = vrot.slane %v9813, 4
      %v9816 = vshll.u32 %v9764, 16
      %v9818 = vrot.slane %v9816, 5
      %v9819 = vor.u32 %v9815, %v9818
      %v9820 = vrot.slane %v9819, 4
      %v9822 = vshll.u32 %v9765, 16
      %v9824 = vrot.slane %v9822, 5
      %v9825 = vsel %vm1866, %v9820, %v9824
      %v9826 = vshrl.u32 %v9765, 16
      %v9828 = vrot.slane %v9826, 4
      %v9829 = vor.u32 %v9828, %v9824
      %v9830 = vrot.slane %v9829, 4
      %v9832 = vshll.u32 %v9766, 16
      %v9834 = vrot.slane %v9832, 5
      %v9835 = vsel %vm1866, %v9830, %v9834
      %v9837 = vshrl.u32 %v9767, 16
      %v9839 = vrot.slane %v9837, 4
      %v9840 = vshll.u32 %v9767, 16
      %v9842 = vrot.slane %v9840, 5
      %v9843 = vor.u32 %v9839, %v9842
      %v9844 = vrot.slane %v9843, 4
      %v9846 = vshll.u32 %v9768, 16
      %v9848 = vrot.slane %v9846, 5
      %v9849 = vsel %vm1866, %v9844, %v9848
      %v9850 = vshrl.u32 %v9768, 16
      %v9852 = vrot.slane %v9850, 4
      %v9853 = vor.u32 %v9852, %v9848
      %v9854 = vrot.slane %v9853, 4
      %v9856 = vshll.u32 %v9769, 16
      %v9858 = vrot.slane %v9856, 5
      %v9859 = vsel %vm1866, %v9854, %v9858
      %v9861 = vshrl.u32 %v9770, 16
      %v9863 = vrot.slane %v9861, 4
      %v9864 = vshll.u32 %v9770, 16
      %v9866 = vrot.slane %v9864, 5
      %v9867 = vor.u32 %v9863, %v9866
      %v9868 = vrot.slane %v9867, 4
      %v9870 = vshll.u32 %v9771, 16
      %v9872 = vrot.slane %v9870, 5
      %v9873 = vsel %vm1866, %v9868, %v9872
      %v9874 = vshrl.u32 %v9771, 16
      %v9876 = vrot.slane %v9874, 4
      %v9877 = vor.u32 %v9876, %v9872
      %v9878 = vrot.slane %v9877, 4
      %v9880 = vshll.u32 %v9772, 16
      %v9882 = vrot.slane %v9880, 5
      %v9883 = vsel %vm1866, %v9878, %v9882
      %v9885 = vshrl.u32 %v9773, 16
      %v9887 = vrot.slane %v9885, 4
      %v9888 = vshll.u32 %v9773, 16
      %v9890 = vrot.slane %v9888, 5
      %v9891 = vor.u32 %v9887, %v9890
      %v9892 = vrot.slane %v9891, 4
      %v9894 = vshll.u32 %v9774, 16
      %v9896 = vrot.slane %v9894, 5
      %v9897 = vsel %vm1866, %v9892, %v9896
      %v9898 = vshrl.u32 %v9774, 16
      %v9900 = vrot.slane %v9898, 4
      %v9901 = vor.u32 %v9900, %v9896
      %v9902 = vrot.slane %v9901, 4
      %v9904 = vshll.u32 %v9775, 16
      %v9906 = vrot.slane %v9904, 5
      %v9907 = vsel %vm1866, %v9902, %v9906
      %v9909 = vshrl.u32 %v9776, 16
      %v9911 = vrot.slane %v9909, 4
      %v9912 = vshll.u32 %v9776, 16
      %v9914 = vrot.slane %v9912, 5
      %v9915 = vor.u32 %v9911, %v9914
      %v9916 = vrot.slane %v9915, 4
      %v9918 = vshll.u32 %v9777, 16
      %v9920 = vrot.slane %v9918, 5
      %v9921 = vsel %vm1866, %v9916, %v9920
      %v9922 = vshrl.u32 %v9777, 16
      %v9924 = vrot.slane %v9922, 4
      %v9925 = vor.u32 %v9924, %v9920
      %v9926 = vrot.slane %v9925, 4
      %v9928 = vshll.u32 %v9778, 16
      %v9930 = vrot.slane %v9928, 5
      %v9931 = vsel %vm1866, %v9926, %v9930
      %v9933 = vshrl.u32 %v9779, 16
      %v9935 = vrot.slane %v9933, 4
      %v9936 = vshll.u32 %v9779, 16
      %v9938 = vrot.slane %v9936, 5
      %v9939 = vor.u32 %v9935, %v9938
      %v9940 = vrot.slane %v9939, 4
      %v9942 = vshll.u32 %v9780, 16
      %v9944 = vrot.slane %v9942, 5
      %v9945 = vsel %vm1866, %v9940, %v9944
      %v9946 = vshrl.u32 %v9780, 16
      %v9948 = vrot.slane %v9946, 4
      %v9949 = vor.u32 %v9948, %v9944
      %v9950 = vrot.slane %v9949, 4
      %v9952 = vshll.u32 %v9781, 16
      %v9954 = vrot.slane %v9952, 5
      %v9955 = vsel %vm1866, %v9950, %v9954
      %v9957 = vshrl.u32 %v9782, 16
      %v9959 = vrot.slane %v9957, 4
      %v9960 = vshll.u32 %v9782, 16
      %v9962 = vrot.slane %v9960, 5
      %v9963 = vor.u32 %v9959, %v9962
      %v9964 = vrot.slane %v9963, 4
      %v9966 = vshll.u32 %v9783, 16
      %v9968 = vrot.slane %v9966, 5
      %v9969 = vsel %vm1866, %v9964, %v9968
      %v9970 = vshrl.u32 %v9783, 16
      %v9972 = vrot.slane %v9970, 4
      %v9973 = vor.u32 %v9972, %v9968
      %v9974 = vrot.slane %v9973, 4
      %v9976 = vshll.u32 %v9784, 16
      %v9978 = vrot.slane %v9976, 5
      %v9979 = vsel %vm1866, %v9974, %v9978
      %v9981 = vshrl.u32 %v9785, 16
      %v9983 = vrot.slane %v9981, 4
      %v9984 = vshll.u32 %v9785, 16
      %v9986 = vrot.slane %v9984, 5
      %v9987 = vor.u32 %v9983, %v9986
      %v9988 = vrot.slane %v9987, 4
      %v9990 = vshll.u32 %v9786, 16
      %v9992 = vrot.slane %v9990, 5
      %v9993 = vsel %vm1866, %v9988, %v9992
      %v9994 = vshrl.u32 %v9786, 16
      %v9996 = vrot.slane %v9994, 4
      %v9997 = vor.u32 %v9996, %v9992
      %v9998 = vrot.slane %v9997, 4
      %v10000 = vshll.u32 %v9787, 16
      %v10002 = vrot.slane %v10000, 5
      %v10003 = vsel %vm1866, %v9998, %v10002
      %v10005 = vshrl.u32 %v9788, 16
      %v10007 = vrot.slane %v10005, 4
      %v10008 = vshll.u32 %v9788, 16
      %v10010 = vrot.slane %v10008, 5
      %v10011 = vor.u32 %v10007, %v10010
      %v10012 = vrot.slane %v10011, 4
      %v10014 = vshll.u32 %v9789, 16
      %v10016 = vrot.slane %v10014, 5
      %v10017 = vsel %vm1866, %v10012, %v10016
      %v10018 = vshrl.u32 %v9789, 16
      %v10020 = vrot.slane %v10018, 4
      %v10021 = vor.u32 %v10020, %v10016
      %v10022 = vrot.slane %v10021, 4
      %v10024 = vshll.u32 %v9790, 16
      %v10026 = vrot.slane %v10024, 5
      %v10027 = vsel %vm1866, %v10022, %v10026
      %v10029 = vshrl.u32 %v9791, 16
      %v10031 = vrot.slane %v10029, 4
      %v10032 = vshll.u32 %v9791, 16
      %v10034 = vrot.slane %v10032, 5
      %v10035 = vor.u32 %v10031, %v10034
      %v10036 = vrot.slane %v10035, 4
      %v10038 = vshll.u32 %v9792, 16
      %v10040 = vrot.slane %v10038, 5
      %v10041 = vsel %vm1866, %v10036, %v10040
      %v10042 = vshrl.u32 %v9792, 16
      %v10044 = vrot.slane %v10042, 4
      %v10045 = vor.u32 %v10044, %v10040
      %v10046 = vrot.slane %v10045, 4
      %v10048 = vshll.u32 %v9793, 16
      %v10050 = vrot.slane %v10048, 5
      %v10051 = vsel %vm1866, %v10046, %v10050
      %v10053 = vshrl.u32 %v9794, 16
      %v10055 = vrot.slane %v10053, 4
      %v10056 = vshll.u32 %v9794, 16
      %v10058 = vrot.slane %v10056, 5
      %v10059 = vor.u32 %v10055, %v10058
      %v10060 = vrot.slane %v10059, 4
      %v10062 = vshll.u32 %v9795, 16
      %v10064 = vrot.slane %v10062, 5
      %v10065 = vsel %vm1866, %v10060, %v10064
      %v10066 = vshrl.u32 %v9795, 16
      %v10068 = vrot.slane %v10066, 4
      %v10069 = vor.u32 %v10068, %v10064
      %v10070 = vrot.slane %v10069, 4
      %v10072 = vshll.u32 %v9796, 16
      %v10074 = vrot.slane %v10072, 5
      %v10075 = vsel %vm1866, %v10070, %v10074
      %v10077 = vshrl.u32 %v9797, 16
      %v10079 = vrot.slane %v10077, 4
      %v10080 = vshll.u32 %v9797, 16
      %v10082 = vrot.slane %v10080, 5
      %v10083 = vor.u32 %v10079, %v10082
      %v10084 = vrot.slane %v10083, 4
      %v10086 = vshll.u32 %v9798, 16
      %v10088 = vrot.slane %v10086, 5
      %v10089 = vsel %vm1866, %v10084, %v10088
      %v10090 = vshrl.u32 %v9798, 16
      %v10092 = vrot.slane %v10090, 4
      %v10093 = vor.u32 %v10092, %v10088
      %v10094 = vrot.slane %v10093, 4
      %v10096 = vshll.u32 %v9799, 16
      %v10098 = vrot.slane %v10096, 5
      %v10099 = vsel %vm1866, %v10094, %v10098
      %v10101 = vshrl.u32 %v9800, 16
      %v10103 = vrot.slane %v10101, 4
      %v10104 = vshll.u32 %v9800, 16
      %v10106 = vrot.slane %v10104, 5
      %v10107 = vor.u32 %v10103, %v10106
      %v10108 = vrot.slane %v10107, 4
      %v10110 = vshll.u32 %v9801, 16
      %v10112 = vrot.slane %v10110, 5
      %v10113 = vsel %vm1866, %v10108, %v10112
      %v10114 = vshrl.u32 %v9801, 16
      %v10116 = vrot.slane %v10114, 4
      %v10117 = vor.u32 %v10116, %v10112
      %v10118 = vrot.slane %v10117, 4
      %v10120 = vshll.u32 %v9802, 16
      %v10122 = vrot.slane %v10120, 5
      %v10123 = vsel %vm1866, %v10118, %v10122
      %v10125 = vshrl.u32 %v9803, 16
      %v10127 = vrot.slane %v10125, 4
      %v10128 = vshll.u32 %v9803, 16
      %v10130 = vrot.slane %v10128, 5
      %v10131 = vor.u32 %v10127, %v10130
      %v10132 = vrot.slane %v10131, 4
      %v10134 = vshll.u32 %v9804, 16
      %v10136 = vrot.slane %v10134, 5
      %v10137 = vsel %vm1866, %v10132, %v10136
      %v10138 = vshrl.u32 %v9804, 16
      %v10140 = vrot.slane %v10138, 4
      %v10141 = vor.u32 %v10140, %v10136
      %v10142 = vrot.slane %v10141, 4
      %v10144 = vshll.u32 %v9805, 16
      %v10146 = vrot.slane %v10144, 5
      %v10147 = vsel %vm1866, %v10142, %v10146
      %v10149 = vshrl.u32 %v9806, 16
      %v10151 = vrot.slane %v10149, 4
      %v10152 = vshll.u32 %v9806, 16
      %v10154 = vrot.slane %v10152, 5
      %v10155 = vor.u32 %v10151, %v10154
      %v10156 = vrot.slane %v10155, 4
      %v10158 = vshll.u32 %v9807, 16
      %v10160 = vrot.slane %v10158, 5
      %v10161 = vsel %vm1866, %v10156, %v10160
      %v10162 = vshrl.u32 %v9807, 16
      %v10164 = vrot.slane %v10162, 4
      %v10165 = vor.u32 %v10164, %v10160
      %v10166 = vrot.slane %v10165, 4
      %v10168 = vshll.u32 %v9808, 16
      %v10170 = vrot.slane %v10168, 5
      %v10171 = vsel %vm1866, %v10166, %v10170
      %v10173 = vshrl.u32 %v9809, 16
      %v10175 = vrot.slane %v10173, 4
      %v10176 = vshll.u32 %v9809, 16
      %v10178 = vrot.slane %v10176, 5
      %v10179 = vor.u32 %v10175, %v10178
      %v10180 = vrot.slane %v10179, 4
      %v10182 = vshll.u32 %v9810, 16
      %v10184 = vrot.slane %v10182, 5
      %v10185 = vsel %vm1866, %v10180, %v10184
      %v10186 = vshrl.u32 %v9810, 16
      %v10188 = vrot.slane %v10186, 4
      %v10189 = vor.u32 %v10188, %v10184
      %v10190 = vrot.slane %v10189, 4
      %v10192 = vshll.u32 %v9811, 16
      %v10194 = vrot.slane %v10192, 5
      %v10195 = vsel %vm1866, %v10190, %v10194
      %s10196 = scalar_lea.vmem %s9, 28
      %v10197 = vld [vmem:[%s10196] sm:$0xf]
      %v10198 = vunpack.c.l.b16 %v9825
      %v10199 = vunpack.c.l.b16 %v9835
      %v10200 = vunpack.c.l.b16 %v9849
      %v10201 = vunpack.c.l.b16 %v9859
      %v10202 = vunpack.c.l.b16 %v9873
      %v10203 = vunpack.c.l.b16 %v9883
      %v10204 = vunpack.c.l.b16 %v9897
      %v10205 = vunpack.c.l.b16 %v9907
      %v10206 = vunpack.c.l.b16 %v9921
      %v10207 = vunpack.c.l.b16 %v9931
      %v10208 = vunpack.c.l.b16 %v9945
      %v10209 = vunpack.c.l.b16 %v9955
      %v10210 = vunpack.c.l.b16 %v9969
      %v10211 = vunpack.c.l.b16 %v9979
      %v10212 = vunpack.c.l.b16 %v9993
      %v10213 = vunpack.c.l.b16 %v10003
      %v10214 = vunpack.c.l.b16 %v10017
      %v10215 = vunpack.c.l.b16 %v10027
      %v10216 = vunpack.c.l.b16 %v10041
      %v10217 = vunpack.c.l.b16 %v10051
      %v10218 = vunpack.c.l.b16 %v10065
      %v10219 = vunpack.c.l.b16 %v10075
      %v10220 = vunpack.c.l.b16 %v10089
      %v10221 = vunpack.c.l.b16 %v10099
      %v10222 = vunpack.c.l.b16 %v10113
      %v10223 = vunpack.c.l.b16 %v10123
      %v10224 = vunpack.c.l.b16 %v10137
      %v10225 = vunpack.c.l.b16 %v10147
      %v10226 = vunpack.c.l.b16 %v10161
      %v10227 = vunpack.c.l.b16 %v10171
      %v10228 = vunpack.c.l.b16 %v10185
      %v10229 = vunpack.c.l.b16 %v10195
      %v10230 = vpack.c.b16 %v10199, %v10198
      %v10231 = vpack.c.b16 %v10201, %v10200
      %v10232 = vpack.c.b16 %v10203, %v10202
      %v10233 = vpack.c.b16 %v10205, %v10204
      %v10234 = vpack.c.b16 %v10207, %v10206
      %v10235 = vpack.c.b16 %v10209, %v10208
      %v10236 = vpack.c.b16 %v10211, %v10210
      %v10237 = vpack.c.b16 %v10213, %v10212
      %v10238 = vpack.c.b16 %v10215, %v10214
      %v10239 = vpack.c.b16 %v10217, %v10216
      %v10240 = vpack.c.b16 %v10219, %v10218
      %v10241 = vpack.c.b16 %v10221, %v10220
      %v10242 = vpack.c.b16 %v10223, %v10222
      %v10243 = vpack.c.b16 %v10225, %v10224
      %v10244 = vpack.c.b16 %v10227, %v10226
      %v10245 = vpack.c.b16 %v10229, %v10228
      %v10247 = vsel %vm815, %v10197, 0
      %v10250 = vsel %vm815, %v10230, 0
      %v10253 = vsel %vm815, %v10231, 0
      %v10256 = vsel %vm815, %v10232, 0
      %v10259 = vsel %vm815, %v10233, 0
      %v10262 = vsel %vm815, %v10234, 0
      %v10265 = vsel %vm815, %v10235, 0
      %v10268 = vsel %vm815, %v10236, 0
      %v10271 = vsel %vm815, %v10237, 0
      %v10274 = vsel %vm815, %v10238, 0
      %v10277 = vsel %vm815, %v10239, 0
      %v10280 = vsel %vm815, %v10240, 0
      %v10283 = vsel %vm815, %v10241, 0
      %v10286 = vsel %vm815, %v10242, 0
      %v10289 = vsel %vm815, %v10243, 0
      %v10292 = vsel %vm815, %v10244, 0
      %v10295 = vsel %vm815, %v10245, 0
      %10297 = vmatprep.subr.bf16.mxu0 0
      %10298 = vmatpush1.bf16.xpose.msra.mxu0 %v10250
      %10299 = vmatprep.subr.bf16.mxu0 0
      %10300 = vmatpush1.bf16.xpose.msra.mxu0 %v10253
      %10301 = vmatprep.subr.bf16.mxu0 0
      %10302 = vmatpush1.bf16.xpose.msra.mxu0 %v10256
      %10303 = vmatprep.subr.bf16.mxu0 0
      %10304 = vmatpush1.bf16.xpose.msra.mxu0 %v10259
      %10305 = vmatprep.subr.bf16.mxu0 0
      %10306 = vmatpush1.bf16.xpose.msra.mxu0 %v10262
      %10307 = vmatprep.subr.bf16.mxu0 0
      %10308 = vmatpush1.bf16.xpose.msra.mxu0 %v10265
      %10309 = vmatprep.subr.bf16.mxu0 0
      %10310 = vmatpush1.bf16.xpose.msra.mxu0 %v10268
      %10311 = vmatprep.subr.bf16.mxu0 0
      %10312 = vmatpush1.bf16.xpose.msra.mxu0 %v10271
      %10313 = vmatprep.subr.bf16.mxu0 0
      %10314 = vmatpush1.bf16.xpose.msra.mxu0 %v10274
      %10315 = vmatprep.subr.bf16.mxu0 0
      %10316 = vmatpush1.bf16.xpose.msra.mxu0 %v10277
      %10317 = vmatprep.subr.bf16.mxu0 0
      %10318 = vmatpush1.bf16.xpose.msra.mxu0 %v10280
      %10319 = vmatprep.subr.bf16.mxu0 0
      %10320 = vmatpush1.bf16.xpose.msra.mxu0 %v10283
      %10321 = vmatprep.subr.bf16.mxu0 0
      %10322 = vmatpush1.bf16.xpose.msra.mxu0 %v10286
      %10323 = vmatprep.subr.bf16.mxu0 0
      %10324 = vmatpush1.bf16.xpose.msra.mxu0 %v10289
      %10325 = vmatprep.subr.bf16.mxu0 0
      %10326 = vmatpush1.bf16.xpose.msra.mxu0 %v10292
      %10327 = vmatprep.subr.bf16.mxu0 0
      %10328 = vmatpush1.bf16.xpose.msra.mxu0 %v10295
      %10329 = vmatprep.mubr.bf16.mxu0 0
      %10330 = vmatmul.mubr.bf16.gmra.mrb[0].mxu0 %v10247
      %v10331 = vpop.f32.mrb[0].mxu0
      %v10332 = vadd.f32 0.0, %v10331
      %v10333 = vpop.f32.mrb[0].mxu0
      %v10334 = vadd.f32 0.0, %v10333
      %v10335 = vpop.f32.mrb[0].mxu0
      %v10336 = vpop.f32.mrb[0].mxu0
      %10337 = vdwg.mxu0
      %v10338 = vadd.f32 %v9762, %v10332
      %v10339 = vadd.f32 %v9763, %v10334
      %v10340 = vld [vmem:[%s9555] sm:$0xe]
      %v10341 = vld [vmem:[%s9555 + $0xc] sm:$0xe]
      %v10342 = vld [vmem:[%s9555 + $0x18] sm:$0xe]
      %v10343 = vld [vmem:[%s9555 + $0x24] sm:$0xe]
      %v10344 = vld [vmem:[%s9555 + $0x30] sm:$0xe]
      %v10345 = vld [vmem:[%s9555 + $0x3c] sm:$0xe]
      %v10346 = vld [vmem:[%s9555 + $0x48] sm:$0xe]
      %v10347 = vld [vmem:[%s9555 + $0x54] sm:$0xe]
      %v10348 = vld [vmem:[%s9555 + $0x60] sm:$0xe]
      %v10349 = vld [vmem:[%s9555 + $0x6c] sm:$0xe]
      %v10350 = vld [vmem:[%s9555 + $0x78] sm:$0xe]
      %v10351 = vld [vmem:[%s9555 + $0x84] sm:$0xe]
      %v10352 = vld [vmem:[%s9555 + $0x90] sm:$0xe]
      %v10353 = vld [vmem:[%s9555 + $0x9c] sm:$0xe]
      %v10354 = vld [vmem:[%s9555 + $0xa8] sm:$0xe]
      %v10355 = vld [vmem:[%s9555 + $0xb4] sm:$0xe]
      %v10404 = vrot.slane %v10340, 5
      %v10405 = vrot.slane %v10404, 4
      %v10406 = vrot.slane %v9765, 5
      %v10407 = vsel %vm2862, %v10405, %v10406
      %v10408 = vrot.slane %v10406, 4
      %v10409 = vrot.slane %v9766, 5
      %v10410 = vsel %vm2862, %v10408, %v10409
      %v10411 = vrot.slane %v10341, 5
      %v10412 = vrot.slane %v10411, 4
      %v10413 = vrot.slane %v9768, 5
      %v10414 = vsel %vm2862, %v10412, %v10413
      %v10415 = vrot.slane %v10413, 4
      %v10416 = vrot.slane %v9769, 5
      %v10417 = vsel %vm2862, %v10415, %v10416
      %v10418 = vrot.slane %v10342, 5
      %v10419 = vrot.slane %v10418, 4
      %v10420 = vrot.slane %v9771, 5
      %v10421 = vsel %vm2862, %v10419, %v10420
      %v10422 = vrot.slane %v10420, 4
      %v10423 = vrot.slane %v9772, 5
      %v10424 = vsel %vm2862, %v10422, %v10423
      %v10425 = vrot.slane %v10343, 5
      %v10426 = vrot.slane %v10425, 4
      %v10427 = vrot.slane %v9774, 5
      %v10428 = vsel %vm2862, %v10426, %v10427
      %v10429 = vrot.slane %v10427, 4
      %v10430 = vrot.slane %v9775, 5
      %v10431 = vsel %vm2862, %v10429, %v10430
      %v10432 = vrot.slane %v10344, 5
      %v10433 = vrot.slane %v10432, 4
      %v10434 = vrot.slane %v9777, 5
      %v10435 = vsel %vm2862, %v10433, %v10434
      %v10436 = vrot.slane %v10434, 4
      %v10437 = vrot.slane %v9778, 5
      %v10438 = vsel %vm2862, %v10436, %v10437
      %v10439 = vrot.slane %v10345, 5
      %v10440 = vrot.slane %v10439, 4
      %v10441 = vrot.slane %v9780, 5
      %v10442 = vsel %vm2862, %v10440, %v10441
      %v10443 = vrot.slane %v10441, 4
      %v10444 = vrot.slane %v9781, 5
      %v10445 = vsel %vm2862, %v10443, %v10444
      %v10446 = vrot.slane %v10346, 5
      %v10447 = vrot.slane %v10446, 4
      %v10448 = vrot.slane %v9783, 5
      %v10449 = vsel %vm2862, %v10447, %v10448
      %v10450 = vrot.slane %v10448, 4
      %v10451 = vrot.slane %v9784, 5
      %v10452 = vsel %vm2862, %v10450, %v10451
      %v10453 = vrot.slane %v10347, 5
      %v10454 = vrot.slane %v10453, 4
      %v10455 = vrot.slane %v9786, 5
      %v10456 = vsel %vm2862, %v10454, %v10455
      %v10457 = vrot.slane %v10455, 4
      %v10458 = vrot.slane %v9787, 5
      %v10459 = vsel %vm2862, %v10457, %v10458
      %v10460 = vrot.slane %v10348, 5
      %v10461 = vrot.slane %v10460, 4
      %v10462 = vrot.slane %v9789, 5
      %v10463 = vsel %vm2862, %v10461, %v10462
      %v10464 = vrot.slane %v10462, 4
      %v10465 = vrot.slane %v9790, 5
      %v10466 = vsel %vm2862, %v10464, %v10465
      %v10467 = vrot.slane %v10349, 5
      %v10468 = vrot.slane %v10467, 4
      %v10469 = vrot.slane %v9792, 5
      %v10470 = vsel %vm2862, %v10468, %v10469
      %v10471 = vrot.slane %v10469, 4
      %v10472 = vrot.slane %v9793, 5
      %v10473 = vsel %vm2862, %v10471, %v10472
      %v10474 = vrot.slane %v10350, 5
      %v10475 = vrot.slane %v10474, 4
      %v10476 = vrot.slane %v9795, 5
      %v10477 = vsel %vm2862, %v10475, %v10476
      %v10478 = vrot.slane %v10476, 4
      %v10479 = vrot.slane %v9796, 5
      %v10480 = vsel %vm2862, %v10478, %v10479
      %v10481 = vrot.slane %v10351, 5
      %v10482 = vrot.slane %v10481, 4
      %v10483 = vrot.slane %v9798, 5
      %v10484 = vsel %vm2862, %v10482, %v10483
      %v10485 = vrot.slane %v10483, 4
      %v10486 = vrot.slane %v9799, 5
      %v10487 = vsel %vm2862, %v10485, %v10486
      %v10488 = vrot.slane %v10352, 5
      %v10489 = vrot.slane %v10488, 4
      %v10490 = vrot.slane %v9801, 5
      %v10491 = vsel %vm2862, %v10489, %v10490
      %v10492 = vrot.slane %v10490, 4
      %v10493 = vrot.slane %v9802, 5
      %v10494 = vsel %vm2862, %v10492, %v10493
      %v10495 = vrot.slane %v10353, 5
      %v10496 = vrot.slane %v10495, 4
      %v10497 = vrot.slane %v9804, 5
      %v10498 = vsel %vm2862, %v10496, %v10497
      %v10499 = vrot.slane %v10497, 4
      %v10500 = vrot.slane %v9805, 5
      %v10501 = vsel %vm2862, %v10499, %v10500
      %v10502 = vrot.slane %v10354, 5
      %v10503 = vrot.slane %v10502, 4
      %v10504 = vrot.slane %v9807, 5
      %v10505 = vsel %vm2862, %v10503, %v10504
      %v10506 = vrot.slane %v10504, 4
      %v10507 = vrot.slane %v9808, 5
      %v10508 = vsel %vm2862, %v10506, %v10507
      %v10509 = vrot.slane %v10355, 5
      %v10510 = vrot.slane %v10509, 4
      %v10511 = vrot.slane %v9810, 5
      %v10512 = vsel %vm2862, %v10510, %v10511
      %v10513 = vrot.slane %v10511, 4
      %v10514 = vrot.slane %v9811, 5
      %v10515 = vsel %vm2862, %v10513, %v10514
      %s10516 = scalar_lea.vmem %s9, 32
      %v10517 = vld [vmem:[%s10516] sm:$0xf]
      %v10518 = vunpack.c.l.b16 %v10407
      %v10519 = vunpack.c.l.b16 %v10410
      %v10520 = vunpack.c.l.b16 %v10414
      %v10521 = vunpack.c.l.b16 %v10417
      %v10522 = vunpack.c.l.b16 %v10421
      %v10523 = vunpack.c.l.b16 %v10424
      %v10524 = vunpack.c.l.b16 %v10428
      %v10525 = vunpack.c.l.b16 %v10431
      %v10526 = vunpack.c.l.b16 %v10435
      %v10527 = vunpack.c.l.b16 %v10438
      %v10528 = vunpack.c.l.b16 %v10442
      %v10529 = vunpack.c.l.b16 %v10445
      %v10530 = vunpack.c.l.b16 %v10449
      %v10531 = vunpack.c.l.b16 %v10452
      %v10532 = vunpack.c.l.b16 %v10456
      %v10533 = vunpack.c.l.b16 %v10459
      %v10534 = vunpack.c.l.b16 %v10463
      %v10535 = vunpack.c.l.b16 %v10466
      %v10536 = vunpack.c.l.b16 %v10470
      %v10537 = vunpack.c.l.b16 %v10473
      %v10538 = vunpack.c.l.b16 %v10477
      %v10539 = vunpack.c.l.b16 %v10480
      %v10540 = vunpack.c.l.b16 %v10484
      %v10541 = vunpack.c.l.b16 %v10487
      %v10542 = vunpack.c.l.b16 %v10491
      %v10543 = vunpack.c.l.b16 %v10494
      %v10544 = vunpack.c.l.b16 %v10498
      %v10545 = vunpack.c.l.b16 %v10501
      %v10546 = vunpack.c.l.b16 %v10505
      %v10547 = vunpack.c.l.b16 %v10508
      %v10548 = vunpack.c.l.b16 %v10512
      %v10549 = vunpack.c.l.b16 %v10515
      %v10550 = vpack.c.b16 %v10519, %v10518
      %v10551 = vpack.c.b16 %v10521, %v10520
      %v10552 = vpack.c.b16 %v10523, %v10522
      %v10553 = vpack.c.b16 %v10525, %v10524
      %v10554 = vpack.c.b16 %v10527, %v10526
      %v10555 = vpack.c.b16 %v10529, %v10528
      %v10556 = vpack.c.b16 %v10531, %v10530
      %v10557 = vpack.c.b16 %v10533, %v10532
      %v10558 = vpack.c.b16 %v10535, %v10534
      %v10559 = vpack.c.b16 %v10537, %v10536
      %v10560 = vpack.c.b16 %v10539, %v10538
      %v10561 = vpack.c.b16 %v10541, %v10540
      %v10562 = vpack.c.b16 %v10543, %v10542
      %v10563 = vpack.c.b16 %v10545, %v10544
      %v10564 = vpack.c.b16 %v10547, %v10546
      %v10565 = vpack.c.b16 %v10549, %v10548
      %v10567 = vsel %vm815, %v10517, 0
      %v10570 = vsel %vm815, %v10550, 0
      %v10573 = vsel %vm815, %v10551, 0
      %v10576 = vsel %vm815, %v10552, 0
      %v10579 = vsel %vm815, %v10553, 0
      %v10582 = vsel %vm815, %v10554, 0
      %v10585 = vsel %vm815, %v10555, 0
      %v10588 = vsel %vm815, %v10556, 0
      %v10591 = vsel %vm815, %v10557, 0
      %v10594 = vsel %vm815, %v10558, 0
      %v10597 = vsel %vm815, %v10559, 0
      %v10600 = vsel %vm815, %v10560, 0
      %v10603 = vsel %vm815, %v10561, 0
      %v10606 = vsel %vm815, %v10562, 0
      %v10609 = vsel %vm815, %v10563, 0
      %v10612 = vsel %vm815, %v10564, 0
      %v10615 = vsel %vm815, %v10565, 0
      %10617 = vmatprep.subr.bf16.mxu0 0
      %10618 = vmatpush1.bf16.xpose.msra.mxu0 %v10570
      %10619 = vmatprep.subr.bf16.mxu0 0
      %10620 = vmatpush1.bf16.xpose.msra.mxu0 %v10573
      %10621 = vmatprep.subr.bf16.mxu0 0
      %10622 = vmatpush1.bf16.xpose.msra.mxu0 %v10576
      %10623 = vmatprep.subr.bf16.mxu0 0
      %10624 = vmatpush1.bf16.xpose.msra.mxu0 %v10579
      %10625 = vmatprep.subr.bf16.mxu0 0
      %10626 = vmatpush1.bf16.xpose.msra.mxu0 %v10582
      %10627 = vmatprep.subr.bf16.mxu0 0
      %10628 = vmatpush1.bf16.xpose.msra.mxu0 %v10585
      %10629 = vmatprep.subr.bf16.mxu0 0
      %10630 = vmatpush1.bf16.xpose.msra.mxu0 %v10588
      %10631 = vmatprep.subr.bf16.mxu0 0
      %10632 = vmatpush1.bf16.xpose.msra.mxu0 %v10591
      %10633 = vmatprep.subr.bf16.mxu0 0
      %10634 = vmatpush1.bf16.xpose.msra.mxu0 %v10594
      %10635 = vmatprep.subr.bf16.mxu0 0
      %10636 = vmatpush1.bf16.xpose.msra.mxu0 %v10597
      %10637 = vmatprep.subr.bf16.mxu0 0
      %10638 = vmatpush1.bf16.xpose.msra.mxu0 %v10600
      %10639 = vmatprep.subr.bf16.mxu0 0
      %10640 = vmatpush1.bf16.xpose.msra.mxu0 %v10603
      %10641 = vmatprep.subr.bf16.mxu0 0
      %10642 = vmatpush1.bf16.xpose.msra.mxu0 %v10606
      %10643 = vmatprep.subr.bf16.mxu0 0
      %10644 = vmatpush1.bf16.xpose.msra.mxu0 %v10609
      %10645 = vmatprep.subr.bf16.mxu0 0
      %10646 = vmatpush1.bf16.xpose.msra.mxu0 %v10612
      %10647 = vmatprep.subr.bf16.mxu0 0
      %10648 = vmatpush1.bf16.xpose.msra.mxu0 %v10615
      %10649 = vmatprep.mubr.bf16.mxu0 0
      %10650 = vmatmul.mubr.bf16.gmra.mrb[0].mxu0 %v10567
      %v10651 = vpop.f32.mrb[0].mxu0
      %v10652 = vadd.f32 0.0, %v10651
      %v10653 = vpop.f32.mrb[0].mxu0
      %v10654 = vadd.f32 0.0, %v10653
      %v10655 = vpop.f32.mrb[0].mxu0
      %v10656 = vpop.f32.mrb[0].mxu0
      %10657 = vdwg.mxu0
      %v10658 = vadd.f32 %v10338, %v10652
      %v10659 = vadd.f32 %v10339, %v10654
      %v10660 = vmax.f32 %v10658, 0.0
      %v10661 = vmax.f32 %v10659, 0.0
      %10662 = vst [vmem:[%s379] sm:$0xff] %v10660
      %10663 = vst [vmem:[%s379 + $0x8] sm:$0xff] %v10661
      %p10664 = scmp.lt.s32.totalorder %s21, 1
      %s10665 = scalar_select %p10664, %s21, 1
      %s10666 = smul.addr %s10665, 2
      %s10667 = smul.addr %s10666, 8
      %s10668 = scalar_lea.vmem %s10, %s10667
      // Predicated region
      $region61: #{decoder_forward.1} parent=59 // pred_check
        %p10669 = pneg %p259
      $region62: #{decoder_forward.1} parent=59 // pred_check_branch
        %10671 = sbr.rel (%p10669) target = $region64
      $region63: #{decoder_forward.1} parent=59 // pred_region
        _
      $region64: #{decoder_forward.1} parent=59 // pred_fallthru
        _
    $region60: #{decoder_forward.1} parent=5 // pred_fallthru
      _
    %p10672 = scmp.le.s32.totalorder 2, %s16
    // Predicated region
    $region65: #{decoder_forward.1} parent=5 // pred_check
      %p10673 = pneg %p10672
    $region66: #{decoder_forward.1} parent=5 // pred_check_branch
      %10675 = sbr.rel (%p10673) target = $region68
    $region67: #{decoder_forward.1} parent=5 // pred_region
      %s10676 = ssub.s32 %s16, 2
      // Predicated region
      $region69: #{decoder_forward.1} parent=67 // pred_check
        %p10677 = pneg %p265
      $region70: #{decoder_forward.1} parent=67 // pred_check_branch
        %10679 = sbr.rel (%p10677) target = $region72
      $region71: #{decoder_forward.1} parent=67 // pred_region
        %p10680 = scmp.lt.s32.totalorder %s22, 1
        %s10681 = scalar_select %p10680, %s22, 1
        %s10682 = smul.addr %s10681, 2
        %s10683 = smul.addr %s10682, 8
        %s10684 = scalar_lea.vmem %s10, %s10683
      $region72: #{decoder_forward.1} parent=67 // pred_fallthru
        _
    $region68: #{decoder_forward.1} parent=5 // pred_fallthru
      _
  $region6: #{decoder_forward.1} parent=0 // loop_footer
    %s20 = sadd.s32 1, %s16
  $region7: #{decoder_forward.1} parent=0 // loop_footer_branch
    %15 = sbr.rel target = $region3
  $region8: #{decoder_forward.1} parent=0 // loop_exit
    _

</llo_original>
